<compile_context>
chip_gen: v7x
topology: tpu7x:2x2x1
jax: 0.10.0
libtpu: 0.0.40
codegen_flags: <defaults>
</compile_context>

<pallas_src>
import functools
import math

import numpy as np
import jax
import jax.numpy as jnp
from jax.experimental import pallas as pl
from jax.experimental.pallas import tpu as pltpu


def _layer_norm(h, gamma, beta, eps):
    """LayerNorm over the last dim (matches nn.LayerNorm, eps=1e-5). f32 math."""
    mean = jnp.mean(h, axis=-1, keepdims=True)
    centered = h - mean
    var = jnp.mean(centered * centered, axis=-1, keepdims=True)
    inv = jax.lax.rsqrt(var + eps)
    return centered * inv * gamma + beta


def _encoder_layer_kernel(
    x_ref,
    wqkv_ref, bqkv_ref, wo_ref, bo_ref,
    w1_ref, b1_ref, w2_ref, b2_ref,
    g1_ref, be1_ref, g2_ref, be2_ref,
    o_ref,
    *, num_heads, d_k, eps, compute_dtype, precision, approx_recip,
):
    model_dim = num_heads * d_k

    def mm(a, b):
        # MXU matmul: operands in compute_dtype (bf16 on the production path,
        # native single-pass MXU on v5e/v6e/v7x); accumulation always f32.
        return jnp.dot(a.astype(compute_dtype), b.astype(compute_dtype),
                       preferred_element_type=jnp.float32, precision=precision)

    def mm_nt(a, b):
        # a @ b.T without the explicit transpose: contract the last dim of
        # both operands (saves an XLU transpose per head).        (review #3)
        return jax.lax.dot_general(
            a.astype(compute_dtype), b.astype(compute_dtype),
            dimension_numbers=(((1,), (1,)), ((), ())),
            preferred_element_type=jnp.float32, precision=precision)

    x = x_ref[...].astype(jnp.float32)                       # (S, D)

    # --- packed Q/K/V projection: ONE (S,D)x(D,3D) MXU matmul (review #1).
    # The 1/sqrt(d_k) attention scale is already folded into the Q columns
    # and Q bias of the packed weight (review #10).
    qkv = mm(x, wqkv_ref[...]) + bqkv_ref[...]               # (S, 3D) f32
    q = qkv[:, :model_dim]
    k = qkv[:, model_dim:2 * model_dim]
    v = qkv[:, 2 * model_dim:]

    # --- per-head attention.  The head concatenate is gone: the W_O
    # projection is accumulated head-by-head, so there are no lane-dim
    # concatenates / masked selects on the 32-lane activations (review #2).
    # TODO(synk): at production dims (d_k >= 128, long S) move heads onto a
    # grid / leading batch axis and use flash-style (q_rows, kv_tiles) tiling
    # with an online-softmax (m, l, acc) carry in VMEM scratch; at d_k=8 a
    # batched dot_general lowers to the same tiny MXU ops, so the extra
    # relayouts are not worth it here.                      (review #2 / #11)
    wo = wo_ref[...]                                         # (D, D) resident
    o_proj = None
    for h in range(num_heads):
        lo = h * d_k
        q_h = q[:, lo:lo + d_k]
        k_h = k[:, lo:lo + d_k]
        v_h = v[:, lo:lo + d_k]
        s = mm_nt(q_h, k_h)                                  # (S, S) f32
        s = s - jnp.max(s, axis=-1, keepdims=True)           # stable softmax
        p = jnp.exp(s)
        denom = jnp.sum(p, axis=-1, keepdims=True)
        # divide -> EUP reciprocal (otherwise-idle slot); approx on the
        # production path, exact on the strict f32 check path.  (review #4)
        p = p * pl.reciprocal(denom, approx=approx_recip)
        head = mm(p, v_h)                                     # (S, d_k) f32
        part = mm(head, wo[lo:lo + d_k, :])                   # (S, D)  f32
        o_proj = part if o_proj is None else o_proj + part

    attn_out = o_proj + bo_ref[...]

    # --- residual + LayerNorm1 (kept in f32: bf16 elementwise gains nothing,
    # and v5e's VPU/EUP have no bf16 support at all).        (review v5e item)
    h1 = _layer_norm(attn_out + x, g1_ref[...], be1_ref[...], eps)

    # --- FFN (Linear -> ReLU -> Linear) + residual + LayerNorm2.
    # TODO(synk): at real dims (e.g. D=1024, ff=4096) tile w1/w2 over the ff
    # axis with an extra "arbitrary" reduction grid axis instead of keeping
    # whole f32 weights resident -- v7x only has 64 MiB VMEM.    (review #8)
    f = jnp.maximum(mm(h1, w1_ref[...]) + b1_ref[...], 0.0)
    g = mm(f, w2_ref[...]) + b2_ref[...]
    h2 = _layer_norm(g + h1, g2_ref[...], be2_ref[...], eps)

    o_ref[...] = h2.astype(o_ref.dtype)


def encoder_layer_forward(x, params, *, num_heads, eps=1e-5,
                          compute_dtype=jnp.float32):
    """Fused encoder layer.  x: (B, S, D) f32.  params: dict of f32 arrays.

    compute_dtype selects the MXU operand dtype:
      * jnp.float32  -> strict path, HIGHEST-precision multi-pass matmuls.
      * jnp.bfloat16 -> native single-pass MXU on v5e/v6e/v7x, halves resident
        weight VMEM; accumulation and all LayerNorm/softmax math stay f32.
    """
    B, S, D = x.shape
    if D % num_heads != 0:
        raise ValueError(f"model_dim={D} must be divisible by num_heads={num_heads}")
    d_k = D // num_heads
    compute_dtype = jnp.dtype(compute_dtype)
    strict_f32 = compute_dtype == jnp.dtype(jnp.float32)
    precision = (jax.lax.Precision.HIGHEST if strict_f32
                 else jax.lax.Precision.DEFAULT)

    f32 = jnp.float32
    scale = 1.0 / math.sqrt(d_k)

    def row(b):      # biases / LN params as (1, dim) for a clean 2-D VMEM layout
        return jnp.asarray(b, f32).reshape(1, -1)

    # Pack Q/K/V into one (D, 3D) weight + (1, 3D) bias; fold the 1/sqrt(d_k)
    # attention scale into the Q slice at build time.        (review #1, #10)
    wqkv = jnp.concatenate(
        [jnp.asarray(params["wq"], f32) * scale,
         jnp.asarray(params["wk"], f32),
         jnp.asarray(params["wv"], f32)], axis=1).astype(compute_dtype)
    bqkv = jnp.concatenate(
        [jnp.asarray(params["bq"], f32) * scale,
         jnp.asarray(params["bk"], f32),
         jnp.asarray(params["bv"], f32)]).reshape(1, -1).astype(f32)

    weights = [
        wqkv, bqkv,
        jnp.asarray(params["wo"], f32).astype(compute_dtype), row(params["bo"]),
        jnp.asarray(params["w1"], f32).astype(compute_dtype), row(params["b1"]),
        jnp.asarray(params["w2"], f32).astype(compute_dtype), row(params["b2"]),
        row(params["g1"]), row(params["be1"]),
        row(params["g2"]), row(params["be2"]),
    ]

    # Whole-array blocks with a constant index_map: each weight is DMA'd once
    # and stays resident in VMEM across the (parallel) batch grid.
    def resident(arr):
        return pl.BlockSpec(arr.shape, lambda b: (0, 0))

    kernel = functools.partial(
        _encoder_layer_kernel,
        num_heads=num_heads, d_k=d_k, eps=eps,
        compute_dtype=compute_dtype, precision=precision,
        approx_recip=not strict_f32)

    # Grid over batch: at B=2 this is two "parallel" steps -> both v7x
    # TensorCores get work; v5e/v6e simply loop.                 (review #9)
    # TODO(synk): for large B with small S*D, block several batch elements per
    # step (block_shape=(Bt, S, D)) to raise sublane/MXU fill and amortize the
    # ~0.35us per-step overhead; for long S switch to flash-style tiling
    # instead of materializing (S, S) scores.                (review #5 / #11)
    # TODO(synk): with D=32 the output store is a 32-of-128-lane masked vst;
    # at production dims (D >= 128) it is naturally lane-dense -- pad D or
    # write a lane-packed slab if a small-D deployment matters.  (review #6)
    return pl.pallas_call(
        kernel,
        out_shape=jax.ShapeDtypeStruct((B, S, D), x.dtype),
        grid=(B,),
        in_specs=[pl.BlockSpec((None, S, D), lambda b: (b, 0, 0))]
                 + [resident(w) for w in weights],
        out_specs=pl.BlockSpec((None, S, D), lambda b: (b, 0, 0)),
        compiler_params=pltpu.CompilerParams(
            dimension_semantics=("parallel",),
            vmem_limit_bytes=32 * 1024 * 1024,   # safe on v5e(16 MiB default)/v6e/v7x
        ),
    )(x, *weights)


def encoder_layer_ref(x, params, *, num_heads, eps=1e-5):
    """Pure-JAX reference matching the PyTorch EncoderLayer forward (eval mode).
    Precision is passed explicitly -- no global matmul-precision side effect."""
    hi = jax.lax.Precision.HIGHEST
    B, S, D = x.shape
    d_k = D // num_heads
    lin = lambda z, w, b: jnp.dot(z, w, precision=hi) + b

    q = lin(x, params["wq"], params["bq"]).reshape(B, S, num_heads, d_k).transpose(0, 2, 1, 3)
    k = lin(x, params["wk"], params["bk"]).reshape(B, S, num_heads, d_k).transpose(0, 2, 1, 3)
    v = lin(x, params["wv"], params["bv"]).reshape(B, S, num_heads, d_k).transpose(0, 2, 1, 3)
    scores = jnp.einsum("bhqd,bhkd->bhqk", q, k, precision=hi) / math.sqrt(d_k)
    w = jax.nn.softmax(scores, axis=-1)
    attn = jnp.einsum("bhqk,bhkd->bhqd", w, v,
                      precision=hi).transpose(0, 2, 1, 3).reshape(B, S, D)
    attn = lin(attn, params["wo"], params["bo"])

    def ln(z, g, b):
        m = z.mean(-1, keepdims=True)
        var = ((z - m) ** 2).mean(-1, keepdims=True)
        return (z - m) / jnp.sqrt(var + eps) * g + b

    h1 = ln(attn + x, params["g1"], params["be1"])
    f = jnp.maximum(lin(h1, params["w1"], params["b1"]), 0.0)
    f = lin(f, params["w2"], params["b2"])
    return ln(f + h1, params["g2"], params["be2"])


if __name__ == "__main__":
    num_heads, model_dim, ff_dim = 4, 32, 64
    batch, seq = 2, 8

    root = jax.random.PRNGKey(0)
    ks = jax.random.split(root, 17)

    def rnd(key, shape, scale):
        return jax.random.normal(key, shape, dtype=jnp.float32) * scale

    params = {
        "wq": rnd(ks[0], (model_dim, model_dim), model_dim ** -0.5),
        "bq": rnd(ks[1], (model_dim,), 0.02),
        "wk": rnd(ks[2], (model_dim, model_dim), model_dim ** -0.5),
        "bk": rnd(ks[3], (model_dim,), 0.02),
        "wv": rnd(ks[4], (model_dim, model_dim), model_dim ** -0.5),
        "bv": rnd(ks[5], (model_dim,), 0.02),
        "wo": rnd(ks[6], (model_dim, model_dim), model_dim ** -0.5),
        "bo": rnd(ks[7], (model_dim,), 0.02),
        "w1": rnd(ks[8], (model_dim, ff_dim), model_dim ** -0.5),
        "b1": rnd(ks[9], (ff_dim,), 0.02),
        "w2": rnd(ks[10], (ff_dim, model_dim), ff_dim ** -0.5),
        "b2": rnd(ks[11], (model_dim,), 0.02),
        "g1": jnp.ones((model_dim,), jnp.float32) + rnd(ks[12], (model_dim,), 0.05),
        "be1": rnd(ks[13], (model_dim,), 0.02),
        "g2": jnp.ones((model_dim,), jnp.float32) + rnd(ks[14], (model_dim,), 0.05),
        "be2": rnd(ks[15], (model_dim,), 0.02),
    }

    x = jax.random.normal(ks[16], (batch, seq, model_dim), dtype=jnp.float32)

    ref = jax.block_until_ready(encoder_layer_ref(x, params, num_heads=num_heads))

    # Strict f32 path (HIGHEST-precision MXU passes) -- tight numerical check.
    out = jax.block_until_ready(
        encoder_layer_forward(x, params, num_heads=num_heads))
    assert out.shape == (batch, seq, model_dim)
    np.testing.assert_allclose(np.asarray(out), np.asarray(ref),
                               rtol=1e-3, atol=1e-3)

    # bf16-MXU-operand production path (f32 accumulation, f32 LN/softmax):
    # loose sanity band accounting for bf16 operand rounding.    (review #7)
    out_bf16 = jax.block_until_ready(
        encoder_layer_forward(x, params, num_heads=num_heads,
                              compute_dtype=jnp.bfloat16))
    np.testing.assert_allclose(np.asarray(out_bf16), np.asarray(ref),
                               rtol=1e-1, atol=1e-1)

    print("KERNEL_OK")
</pallas_src>

<mosaic_0001>
module attributes {stable_mosaic.version = 11 : i64} {
  func.func @_encoder_layer_kernel(%arg0: i32, %arg1: memref<1x8x32xf32, #tpu.memory_space<vmem>>, %arg2: memref<32x96xf32, #tpu.memory_space<vmem>>, %arg3: memref<1x96xf32, #tpu.memory_space<vmem>>, %arg4: memref<32x32xf32, #tpu.memory_space<vmem>>, %arg5: memref<1x32xf32, #tpu.memory_space<vmem>>, %arg6: memref<32x64xf32, #tpu.memory_space<vmem>>, %arg7: memref<1x64xf32, #tpu.memory_space<vmem>>, %arg8: memref<64x32xf32, #tpu.memory_space<vmem>>, %arg9: memref<1x32xf32, #tpu.memory_space<vmem>>, %arg10: memref<1x32xf32, #tpu.memory_space<vmem>>, %arg11: memref<1x32xf32, #tpu.memory_space<vmem>>, %arg12: memref<1x32xf32, #tpu.memory_space<vmem>>, %arg13: memref<1x32xf32, #tpu.memory_space<vmem>>, %arg14: memref<1x8x32xf32, #tpu.memory_space<vmem>>) attributes {dimension_semantics = [#tpu.dimension_semantics<parallel>], iteration_bounds = array<i64: 2>, scalar_prefetch = 0 : i64, scratch_operands = 0 : i64, tpu.core_type = #tpu.core_type<tc>, window_params = [{transform_indices = @transform_0, window_bounds = array<i64: 1, 8, 32>}, {pipeline_mode = #tpu.pipeline_mode<synchronous>, transform_indices = @transform_1, window_bounds = array<i64: 32, 96>}, {pipeline_mode = #tpu.pipeline_mode<synchronous>, transform_indices = @transform_2, window_bounds = array<i64: 1, 96>}, {pipeline_mode = #tpu.pipeline_mode<synchronous>, transform_indices = @transform_3, window_bounds = array<i64: 32, 32>}, {pipeline_mode = #tpu.pipeline_mode<synchronous>, transform_indices = @transform_4, window_bounds = array<i64: 1, 32>}, {pipeline_mode = #tpu.pipeline_mode<synchronous>, transform_indices = @transform_5, window_bounds = array<i64: 32, 64>}, {pipeline_mode = #tpu.pipeline_mode<synchronous>, transform_indices = @transform_6, window_bounds = array<i64: 1, 64>}, {pipeline_mode = #tpu.pipeline_mode<synchronous>, transform_indices = @transform_7, window_bounds = array<i64: 64, 32>}, {pipeline_mode = #tpu.pipeline_mode<synchronous>, transform_indices = @transform_8, window_bounds = array<i64: 1, 32>}, {pipeline_mode = #tpu.pipeline_mode<synchronous>, transform_indices = @transform_9, window_bounds = array<i64: 1, 32>}, {pipeline_mode = #tpu.pipeline_mode<synchronous>, transform_indices = @transform_10, window_bounds = array<i64: 1, 32>}, {pipeline_mode = #tpu.pipeline_mode<synchronous>, transform_indices = @transform_11, window_bounds = array<i64: 1, 32>}, {pipeline_mode = #tpu.pipeline_mode<synchronous>, transform_indices = @transform_12, window_bounds = array<i64: 1, 32>}, {transform_indices = @transform_13, window_bounds = array<i64: 1, 8, 32>}]} {
    %c0 = arith.constant 0 : index
    %c0_0 = arith.constant 0 : index
    %c0_1 = arith.constant 0 : index
    %0 = vector.load %arg1[%c0, %c0_0, %c0_1] : memref<1x8x32xf32, #tpu.memory_space<vmem>>, vector<1x8x32xf32>
    %1 = vector.shape_cast %0 : vector<1x8x32xf32> to vector<8x32xf32>
    %c0_2 = arith.constant 0 : index
    %c0_3 = arith.constant 0 : index
    %2 = vector.load %arg2[%c0_2, %c0_3] : memref<32x96xf32, #tpu.memory_space<vmem>>, vector<32x96xf32>
    %cst = arith.constant dense<0.000000e+00> : vector<8x96xf32>
    %3 = tpu.matmul %1, %2, %cst {dimension_numbers = #tpu.dot_dimension_numbers<[1], [0], [0], [1], [0, 0, 1, 1], [], []>, precision = #tpu.contract_precision<fp32>} : vector<8x32xf32>, vector<32x96xf32>, vector<8x96xf32> -> vector<8x96xf32>
    %c0_4 = arith.constant 0 : index
    %c0_5 = arith.constant 0 : index
    %4 = vector.load %arg3[%c0_4, %c0_5] : memref<1x96xf32, #tpu.memory_space<vmem>>, vector<1x96xf32>
    %5 = vector.broadcast %4 : vector<1x96xf32> to vector<8x96xf32>
    %6 = arith.addf %3, %5 : vector<8x96xf32>
    %7 = vector.extract_strided_slice %6 {offsets = [0, 0], sizes = [8, 32], strides = [1, 1]} : vector<8x96xf32> to vector<8x32xf32>
    %8 = vector.extract_strided_slice %6 {offsets = [0, 32], sizes = [8, 32], strides = [1, 1]} : vector<8x96xf32> to vector<8x32xf32>
    %9 = vector.extract_strided_slice %6 {offsets = [0, 64], sizes = [8, 32], strides = [1, 1]} : vector<8x96xf32> to vector<8x32xf32>
    %c0_6 = arith.constant 0 : index
    %c0_7 = arith.constant 0 : index
    %10 = vector.load %arg4[%c0_6, %c0_7] : memref<32x32xf32, #tpu.memory_space<vmem>>, vector<32x32xf32>
    %11 = vector.extract_strided_slice %7 {offsets = [0, 0], sizes = [8, 8], strides = [1, 1]} : vector<8x32xf32> to vector<8x8xf32>
    %12 = vector.extract_strided_slice %8 {offsets = [0, 0], sizes = [8, 8], strides = [1, 1]} : vector<8x32xf32> to vector<8x8xf32>
    %13 = vector.extract_strided_slice %9 {offsets = [0, 0], sizes = [8, 8], strides = [1, 1]} : vector<8x32xf32> to vector<8x8xf32>
    %cst_8 = arith.constant dense<0.000000e+00> : vector<8x8xf32>
    %14 = tpu.matmul %11, %12, %cst_8 {dimension_numbers = #tpu.dot_dimension_numbers<[1], [1], [0], [0], [0, 0, 1, 0], [], []>, precision = #tpu.contract_precision<fp32>} : vector<8x8xf32>, vector<8x8xf32>, vector<8x8xf32> -> vector<8x8xf32>
    %cst_9 = arith.constant dense<0xFF800000> : vector<8xf32>
    %15 = vector.multi_reduction <maximumf>, %14, %cst_9 [1] : vector<8x8xf32> to vector<8xf32>
    %16 = vector.shape_cast %15 : vector<8xf32> to vector<8x1xf32>
    %17 = vector.broadcast %16 : vector<8x1xf32> to vector<8x8xf32>
    %18 = arith.subf %14, %17 : vector<8x8xf32>
    %19 = math.exp %18 : vector<8x8xf32>
    %cst_10 = arith.constant dense<0.000000e+00> : vector<8xf32>
    %20 = vector.multi_reduction <add>, %19, %cst_10 [1] : vector<8x8xf32> to vector<8xf32>
    %21 = vector.shape_cast %20 : vector<8xf32> to vector<8x1xf32>
    %22 = tpu.reciprocal %21 : vector<8x1xf32> -> vector<8x1xf32>
    %23 = vector.broadcast %22 : vector<8x1xf32> to vector<8x8xf32>
    %24 = arith.mulf %19, %23 : vector<8x8xf32>
    %cst_11 = arith.constant dense<0.000000e+00> : vector<8x8xf32>
    %25 = tpu.matmul %24, %13, %cst_11 {dimension_numbers = #tpu.dot_dimension_numbers<[1], [0], [0], [1], [0, 0, 1, 1], [], []>, precision = #tpu.contract_precision<fp32>} : vector<8x8xf32>, vector<8x8xf32>, vector<8x8xf32> -> vector<8x8xf32>
    %26 = vector.extract_strided_slice %10 {offsets = [0, 0], sizes = [8, 32], strides = [1, 1]} : vector<32x32xf32> to vector<8x32xf32>
    %cst_12 = arith.constant dense<0.000000e+00> : vector<8x32xf32>
    %27 = tpu.matmul %25, %26, %cst_12 {dimension_numbers = #tpu.dot_dimension_numbers<[1], [0], [0], [1], [0, 0, 1, 1], [], []>, precision = #tpu.contract_precision<fp32>} : vector<8x8xf32>, vector<8x32xf32>, vector<8x32xf32> -> vector<8x32xf32>
    %28 = vector.extract_strided_slice %7 {offsets = [0, 8], sizes = [8, 8], strides = [1, 1]} : vector<8x32xf32> to vector<8x8xf32>
    %29 = vector.extract_strided_slice %8 {offsets = [0, 8], sizes = [8, 8], strides = [1, 1]} : vector<8x32xf32> to vector<8x8xf32>
    %30 = vector.extract_strided_slice %9 {offsets = [0, 8], sizes = [8, 8], strides = [1, 1]} : vector<8x32xf32> to vector<8x8xf32>
    %cst_13 = arith.constant dense<0.000000e+00> : vector<8x8xf32>
    %31 = tpu.matmul %28, %29, %cst_13 {dimension_numbers = #tpu.dot_dimension_numbers<[1], [1], [0], [0], [0, 0, 1, 0], [], []>, precision = #tpu.contract_precision<fp32>} : vector<8x8xf32>, vector<8x8xf32>, vector<8x8xf32> -> vector<8x8xf32>
    %cst_14 = arith.constant dense<0xFF800000> : vector<8xf32>
    %32 = vector.multi_reduction <maximumf>, %31, %cst_14 [1] : vector<8x8xf32> to vector<8xf32>
    %33 = vector.shape_cast %32 : vector<8xf32> to vector<8x1xf32>
    %34 = vector.broadcast %33 : vector<8x1xf32> to vector<8x8xf32>
    %35 = arith.subf %31, %34 : vector<8x8xf32>
    %36 = math.exp %35 : vector<8x8xf32>
    %cst_15 = arith.constant dense<0.000000e+00> : vector<8xf32>
    %37 = vector.multi_reduction <add>, %36, %cst_15 [1] : vector<8x8xf32> to vector<8xf32>
    %38 = vector.shape_cast %37 : vector<8xf32> to vector<8x1xf32>
    %39 = tpu.reciprocal %38 : vector<8x1xf32> -> vector<8x1xf32>
    %40 = vector.broadcast %39 : vector<8x1xf32> to vector<8x8xf32>
    %41 = arith.mulf %36, %40 : vector<8x8xf32>
    %cst_16 = arith.constant dense<0.000000e+00> : vector<8x8xf32>
    %42 = tpu.matmul %41, %30, %cst_16 {dimension_numbers = #tpu.dot_dimension_numbers<[1], [0], [0], [1], [0, 0, 1, 1], [], []>, precision = #tpu.contract_precision<fp32>} : vector<8x8xf32>, vector<8x8xf32>, vector<8x8xf32> -> vector<8x8xf32>
    %43 = vector.extract_strided_slice %10 {offsets = [8, 0], sizes = [8, 32], strides = [1, 1]} : vector<32x32xf32> to vector<8x32xf32>
    %cst_17 = arith.constant dense<0.000000e+00> : vector<8x32xf32>
    %44 = tpu.matmul %42, %43, %cst_17 {dimension_numbers = #tpu.dot_dimension_numbers<[1], [0], [0], [1], [0, 0, 1, 1], [], []>, precision = #tpu.contract_precision<fp32>} : vector<8x8xf32>, vector<8x32xf32>, vector<8x32xf32> -> vector<8x32xf32>
    %45 = arith.addf %27, %44 : vector<8x32xf32>
    %46 = vector.extract_strided_slice %7 {offsets = [0, 16], sizes = [8, 8], strides = [1, 1]} : vector<8x32xf32> to vector<8x8xf32>
    %47 = vector.extract_strided_slice %8 {offsets = [0, 16], sizes = [8, 8], strides = [1, 1]} : vector<8x32xf32> to vector<8x8xf32>
    %48 = vector.extract_strided_slice %9 {offsets = [0, 16], sizes = [8, 8], strides = [1, 1]} : vector<8x32xf32> to vector<8x8xf32>
    %cst_18 = arith.constant dense<0.000000e+00> : vector<8x8xf32>
    %49 = tpu.matmul %46, %47, %cst_18 {dimension_numbers = #tpu.dot_dimension_numbers<[1], [1], [0], [0], [0, 0, 1, 0], [], []>, precision = #tpu.contract_precision<fp32>} : vector<8x8xf32>, vector<8x8xf32>, vector<8x8xf32> -> vector<8x8xf32>
    %cst_19 = arith.constant dense<0xFF800000> : vector<8xf32>
    %50 = vector.multi_reduction <maximumf>, %49, %cst_19 [1] : vector<8x8xf32> to vector<8xf32>
    %51 = vector.shape_cast %50 : vector<8xf32> to vector<8x1xf32>
    %52 = vector.broadcast %51 : vector<8x1xf32> to vector<8x8xf32>
    %53 = arith.subf %49, %52 : vector<8x8xf32>
    %54 = math.exp %53 : vector<8x8xf32>
    %cst_20 = arith.constant dense<0.000000e+00> : vector<8xf32>
    %55 = vector.multi_reduction <add>, %54, %cst_20 [1] : vector<8x8xf32> to vector<8xf32>
    %56 = vector.shape_cast %55 : vector<8xf32> to vector<8x1xf32>
    %57 = tpu.reciprocal %56 : vector<8x1xf32> -> vector<8x1xf32>
    %58 = vector.broadcast %57 : vector<8x1xf32> to vector<8x8xf32>
    %59 = arith.mulf %54, %58 : vector<8x8xf32>
    %cst_21 = arith.constant dense<0.000000e+00> : vector<8x8xf32>
    %60 = tpu.matmul %59, %48, %cst_21 {dimension_numbers = #tpu.dot_dimension_numbers<[1], [0], [0], [1], [0, 0, 1, 1], [], []>, precision = #tpu.contract_precision<fp32>} : vector<8x8xf32>, vector<8x8xf32>, vector<8x8xf32> -> vector<8x8xf32>
    %61 = vector.extract_strided_slice %10 {offsets = [16, 0], sizes = [8, 32], strides = [1, 1]} : vector<32x32xf32> to vector<8x32xf32>
    %cst_22 = arith.constant dense<0.000000e+00> : vector<8x32xf32>
    %62 = tpu.matmul %60, %61, %cst_22 {dimension_numbers = #tpu.dot_dimension_numbers<[1], [0], [0], [1], [0, 0, 1, 1], [], []>, precision = #tpu.contract_precision<fp32>} : vector<8x8xf32>, vector<8x32xf32>, vector<8x32xf32> -> vector<8x32xf32>
    %63 = arith.addf %45, %62 : vector<8x32xf32>
    %64 = vector.extract_strided_slice %7 {offsets = [0, 24], sizes = [8, 8], strides = [1, 1]} : vector<8x32xf32> to vector<8x8xf32>
    %65 = vector.extract_strided_slice %8 {offsets = [0, 24], sizes = [8, 8], strides = [1, 1]} : vector<8x32xf32> to vector<8x8xf32>
    %66 = vector.extract_strided_slice %9 {offsets = [0, 24], sizes = [8, 8], strides = [1, 1]} : vector<8x32xf32> to vector<8x8xf32>
    %cst_23 = arith.constant dense<0.000000e+00> : vector<8x8xf32>
    %67 = tpu.matmul %64, %65, %cst_23 {dimension_numbers = #tpu.dot_dimension_numbers<[1], [1], [0], [0], [0, 0, 1, 0], [], []>, precision = #tpu.contract_precision<fp32>} : vector<8x8xf32>, vector<8x8xf32>, vector<8x8xf32> -> vector<8x8xf32>
    %cst_24 = arith.constant dense<0xFF800000> : vector<8xf32>
    %68 = vector.multi_reduction <maximumf>, %67, %cst_24 [1] : vector<8x8xf32> to vector<8xf32>
    %69 = vector.shape_cast %68 : vector<8xf32> to vector<8x1xf32>
    %70 = vector.broadcast %69 : vector<8x1xf32> to vector<8x8xf32>
    %71 = arith.subf %67, %70 : vector<8x8xf32>
    %72 = math.exp %71 : vector<8x8xf32>
    %cst_25 = arith.constant dense<0.000000e+00> : vector<8xf32>
    %73 = vector.multi_reduction <add>, %72, %cst_25 [1] : vector<8x8xf32> to vector<8xf32>
    %74 = vector.shape_cast %73 : vector<8xf32> to vector<8x1xf32>
    %75 = tpu.reciprocal %74 : vector<8x1xf32> -> vector<8x1xf32>
    %76 = vector.broadcast %75 : vector<8x1xf32> to vector<8x8xf32>
    %77 = arith.mulf %72, %76 : vector<8x8xf32>
    %cst_26 = arith.constant dense<0.000000e+00> : vector<8x8xf32>
    %78 = tpu.matmul %77, %66, %cst_26 {dimension_numbers = #tpu.dot_dimension_numbers<[1], [0], [0], [1], [0, 0, 1, 1], [], []>, precision = #tpu.contract_precision<fp32>} : vector<8x8xf32>, vector<8x8xf32>, vector<8x8xf32> -> vector<8x8xf32>
    %79 = vector.extract_strided_slice %10 {offsets = [24, 0], sizes = [8, 32], strides = [1, 1]} : vector<32x32xf32> to vector<8x32xf32>
    %cst_27 = arith.constant dense<0.000000e+00> : vector<8x32xf32>
    %80 = tpu.matmul %78, %79, %cst_27 {dimension_numbers = #tpu.dot_dimension_numbers<[1], [0], [0], [1], [0, 0, 1, 1], [], []>, precision = #tpu.contract_precision<fp32>} : vector<8x8xf32>, vector<8x32xf32>, vector<8x32xf32> -> vector<8x32xf32>
    %81 = arith.addf %63, %80 : vector<8x32xf32>
    %c0_28 = arith.constant 0 : index
    %c0_29 = arith.constant 0 : index
    %82 = vector.load %arg5[%c0_28, %c0_29] : memref<1x32xf32, #tpu.memory_space<vmem>>, vector<1x32xf32>
    %83 = vector.broadcast %82 : vector<1x32xf32> to vector<8x32xf32>
    %84 = arith.addf %81, %83 : vector<8x32xf32>
    %85 = arith.addf %84, %1 : vector<8x32xf32>
    %c0_30 = arith.constant 0 : index
    %c0_31 = arith.constant 0 : index
    %86 = vector.load %arg10[%c0_30, %c0_31] : memref<1x32xf32, #tpu.memory_space<vmem>>, vector<1x32xf32>
    %c0_32 = arith.constant 0 : index
    %c0_33 = arith.constant 0 : index
    %87 = vector.load %arg11[%c0_32, %c0_33] : memref<1x32xf32, #tpu.memory_space<vmem>>, vector<1x32xf32>
    %cst_34 = arith.constant dense<0.000000e+00> : vector<8xf32>
    %88 = vector.multi_reduction <add>, %85, %cst_34 [1] : vector<8x32xf32> to vector<8xf32>
    %89 = vector.shape_cast %88 : vector<8xf32> to vector<8x1xf32>
    %cst_35 = arith.constant 3.200000e+01 : f32
    %90 = vector.broadcast %cst_35 : f32 to vector<8x1xf32>
    %91 = arith.divf %89, %90 : vector<8x1xf32>
    %92 = vector.broadcast %91 : vector<8x1xf32> to vector<8x32xf32>
    %93 = arith.subf %85, %92 : vector<8x32xf32>
    %94 = arith.mulf %93, %93 : vector<8x32xf32>
    %cst_36 = arith.constant dense<0.000000e+00> : vector<8xf32>
    %95 = vector.multi_reduction <add>, %94, %cst_36 [1] : vector<8x32xf32> to vector<8xf32>
    %96 = vector.shape_cast %95 : vector<8xf32> to vector<8x1xf32>
    %cst_37 = arith.constant 3.200000e+01 : f32
    %97 = vector.broadcast %cst_37 : f32 to vector<8x1xf32>
    %98 = arith.divf %96, %97 : vector<8x1xf32>
    %cst_38 = arith.constant 9.99999974E-6 : f32
    %99 = vector.broadcast %cst_38 : f32 to vector<8x1xf32>
    %100 = arith.addf %98, %99 : vector<8x1xf32>
    %101 = math.rsqrt %100 : vector<8x1xf32>
    %102 = vector.broadcast %101 : vector<8x1xf32> to vector<8x32xf32>
    %103 = arith.mulf %93, %102 : vector<8x32xf32>
    %104 = vector.broadcast %86 : vector<1x32xf32> to vector<8x32xf32>
    %105 = arith.mulf %103, %104 : vector<8x32xf32>
    %106 = vector.broadcast %87 : vector<1x32xf32> to vector<8x32xf32>
    %107 = arith.addf %105, %106 : vector<8x32xf32>
    %c0_39 = arith.constant 0 : index
    %c0_40 = arith.constant 0 : index
    %108 = vector.load %arg6[%c0_39, %c0_40] : memref<32x64xf32, #tpu.memory_space<vmem>>, vector<32x64xf32>
    %cst_41 = arith.constant dense<0.000000e+00> : vector<8x64xf32>
    %109 = tpu.matmul %107, %108, %cst_41 {dimension_numbers = #tpu.dot_dimension_numbers<[1], [0], [0], [1], [0, 0, 1, 1], [], []>, precision = #tpu.contract_precision<fp32>} : vector<8x32xf32>, vector<32x64xf32>, vector<8x64xf32> -> vector<8x64xf32>
    %c0_42 = arith.constant 0 : index
    %c0_43 = arith.constant 0 : index
    %110 = vector.load %arg7[%c0_42, %c0_43] : memref<1x64xf32, #tpu.memory_space<vmem>>, vector<1x64xf32>
    %111 = vector.broadcast %110 : vector<1x64xf32> to vector<8x64xf32>
    %112 = arith.addf %109, %111 : vector<8x64xf32>
    %cst_44 = arith.constant 0.000000e+00 : f32
    %113 = vector.broadcast %cst_44 : f32 to vector<8x64xf32>
    %114 = arith.maximumf %112, %113 : vector<8x64xf32>
    %c0_45 = arith.constant 0 : index
    %c0_46 = arith.constant 0 : index
    %115 = vector.load %arg8[%c0_45, %c0_46] : memref<64x32xf32, #tpu.memory_space<vmem>>, vector<64x32xf32>
    %cst_47 = arith.constant dense<0.000000e+00> : vector<8x32xf32>
    %116 = tpu.matmul %114, %115, %cst_47 {dimension_numbers = #tpu.dot_dimension_numbers<[1], [0], [0], [1], [0, 0, 1, 1], [], []>, precision = #tpu.contract_precision<fp32>} : vector<8x64xf32>, vector<64x32xf32>, vector<8x32xf32> -> vector<8x32xf32>
    %c0_48 = arith.constant 0 : index
    %c0_49 = arith.constant 0 : index
    %117 = vector.load %arg9[%c0_48, %c0_49] : memref<1x32xf32, #tpu.memory_space<vmem>>, vector<1x32xf32>
    %118 = vector.broadcast %117 : vector<1x32xf32> to vector<8x32xf32>
    %119 = arith.addf %116, %118 : vector<8x32xf32>
    %120 = arith.addf %119, %107 : vector<8x32xf32>
    %c0_50 = arith.constant 0 : index
    %c0_51 = arith.constant 0 : index
    %121 = vector.load %arg12[%c0_50, %c0_51] : memref<1x32xf32, #tpu.memory_space<vmem>>, vector<1x32xf32>
    %c0_52 = arith.constant 0 : index
    %c0_53 = arith.constant 0 : index
    %122 = vector.load %arg13[%c0_52, %c0_53] : memref<1x32xf32, #tpu.memory_space<vmem>>, vector<1x32xf32>
    %cst_54 = arith.constant dense<0.000000e+00> : vector<8xf32>
    %123 = vector.multi_reduction <add>, %120, %cst_54 [1] : vector<8x32xf32> to vector<8xf32>
    %124 = vector.shape_cast %123 : vector<8xf32> to vector<8x1xf32>
    %cst_55 = arith.constant 3.200000e+01 : f32
    %125 = vector.broadcast %cst_55 : f32 to vector<8x1xf32>
    %126 = arith.divf %124, %125 : vector<8x1xf32>
    %127 = vector.broadcast %126 : vector<8x1xf32> to vector<8x32xf32>
    %128 = arith.subf %120, %127 : vector<8x32xf32>
    %129 = arith.mulf %128, %128 : vector<8x32xf32>
    %cst_56 = arith.constant dense<0.000000e+00> : vector<8xf32>
    %130 = vector.multi_reduction <add>, %129, %cst_56 [1] : vector<8x32xf32> to vector<8xf32>
    %131 = vector.shape_cast %130 : vector<8xf32> to vector<8x1xf32>
    %cst_57 = arith.constant 3.200000e+01 : f32
    %132 = vector.broadcast %cst_57 : f32 to vector<8x1xf32>
    %133 = arith.divf %131, %132 : vector<8x1xf32>
    %cst_58 = arith.constant 9.99999974E-6 : f32
    %134 = vector.broadcast %cst_58 : f32 to vector<8x1xf32>
    %135 = arith.addf %133, %134 : vector<8x1xf32>
    %136 = math.rsqrt %135 : vector<8x1xf32>
    %137 = vector.broadcast %136 : vector<8x1xf32> to vector<8x32xf32>
    %138 = arith.mulf %128, %137 : vector<8x32xf32>
    %139 = vector.broadcast %121 : vector<1x32xf32> to vector<8x32xf32>
    %140 = arith.mulf %138, %139 : vector<8x32xf32>
    %141 = vector.broadcast %122 : vector<1x32xf32> to vector<8x32xf32>
    %142 = arith.addf %140, %141 : vector<8x32xf32>
    %c0_59 = arith.constant 0 : index
    %c0_60 = arith.constant 0 : index
    %c0_61 = arith.constant 0 : index
    %143 = vector.load %arg14[%c0_59, %c0_60, %c0_61] : memref<1x8x32xf32, #tpu.memory_space<vmem>>, vector<1x8x32xf32>
    %144 = vector.shape_cast %143 : vector<1x8x32xf32> to vector<8x32xf32>
    %145 = vector.shape_cast %142 : vector<8x32xf32> to vector<1x8x32xf32>
    tpu.vector_store %arg14[%c0_59, %c0_60, %c0_61], %145 {strides = array<i32>} : memref<1x8x32xf32, #tpu.memory_space<vmem>>, vector<1x8x32xf32>,
    return
  }
  func.func @transform_0(%arg0: i32) -> (i32, i32, i32) {
    %c0_i32 = arith.constant 0 : i32
    %c0_i32_0 = arith.constant 0 : i32
    %c0_i32_1 = arith.constant 0 : i32
    return %arg0, %c0_i32, %c0_i32_0 : i32, i32, i32
  }
  func.func @transform_1(%arg0: i32) -> (i32, i32) {
    %c0_i32 = arith.constant 0 : i32
    %c0_i32_0 = arith.constant 0 : i32
    %c0_i32_1 = arith.constant 0 : i32
    return %c0_i32, %c0_i32_0 : i32, i32
  }
  func.func @transform_2(%arg0: i32) -> (i32, i32) {
    %c0_i32 = arith.constant 0 : i32
    %c0_i32_0 = arith.constant 0 : i32
    %c0_i32_1 = arith.constant 0 : i32
    return %c0_i32, %c0_i32_0 : i32, i32
  }
  func.func @transform_3(%arg0: i32) -> (i32, i32) {
    %c0_i32 = arith.constant 0 : i32
    %c0_i32_0 = arith.constant 0 : i32
    %c0_i32_1 = arith.constant 0 : i32
    return %c0_i32, %c0_i32_0 : i32, i32
  }
  func.func @transform_4(%arg0: i32) -> (i32, i32) {
    %c0_i32 = arith.constant 0 : i32
    %c0_i32_0 = arith.constant 0 : i32
    %c0_i32_1 = arith.constant 0 : i32
    return %c0_i32, %c0_i32_0 : i32, i32
  }
  func.func @transform_5(%arg0: i32) -> (i32, i32) {
    %c0_i32 = arith.constant 0 : i32
    %c0_i32_0 = arith.constant 0 : i32
    %c0_i32_1 = arith.constant 0 : i32
    return %c0_i32, %c0_i32_0 : i32, i32
  }
  func.func @transform_6(%arg0: i32) -> (i32, i32) {
    %c0_i32 = arith.constant 0 : i32
    %c0_i32_0 = arith.constant 0 : i32
    %c0_i32_1 = arith.constant 0 : i32
    return %c0_i32, %c0_i32_0 : i32, i32
  }
  func.func @transform_7(%arg0: i32) -> (i32, i32) {
    %c0_i32 = arith.constant 0 : i32
    %c0_i32_0 = arith.constant 0 : i32
    %c0_i32_1 = arith.constant 0 : i32
    return %c0_i32, %c0_i32_0 : i32, i32
  }
  func.func @transform_8(%arg0: i32) -> (i32, i32) {
    %c0_i32 = arith.constant 0 : i32
    %c0_i32_0 = arith.constant 0 : i32
    %c0_i32_1 = arith.constant 0 : i32
    return %c0_i32, %c0_i32_0 : i32, i32
  }
  func.func @transform_9(%arg0: i32) -> (i32, i32) {
    %c0_i32 = arith.constant 0 : i32
    %c0_i32_0 = arith.constant 0 : i32
    %c0_i32_1 = arith.constant 0 : i32
    return %c0_i32, %c0_i32_0 : i32, i32
  }
  func.func @transform_10(%arg0: i32) -> (i32, i32) {
    %c0_i32 = arith.constant 0 : i32
    %c0_i32_0 = arith.constant 0 : i32
    %c0_i32_1 = arith.constant 0 : i32
    return %c0_i32, %c0_i32_0 : i32, i32
  }
  func.func @transform_11(%arg0: i32) -> (i32, i32) {
    %c0_i32 = arith.constant 0 : i32
    %c0_i32_0 = arith.constant 0 : i32
    %c0_i32_1 = arith.constant 0 : i32
    return %c0_i32, %c0_i32_0 : i32, i32
  }
  func.func @transform_12(%arg0: i32) -> (i32, i32) {
    %c0_i32 = arith.constant 0 : i32
    %c0_i32_0 = arith.constant 0 : i32
    %c0_i32_1 = arith.constant 0 : i32
    return %c0_i32, %c0_i32_0 : i32, i32
  }
  func.func @transform_13(%arg0: i32) -> (i32, i32, i32) {
    %c0_i32 = arith.constant 0 : i32
    %c0_i32_0 = arith.constant 0 : i32
    %c0_i32_1 = arith.constant 0 : i32
    return %arg0, %c0_i32, %c0_i32_0 : i32, i32, i32
  }
}

</mosaic_0001>

<llo_original>
// kernel: tpu_custom_call.1
$region0: #{tpu_custom_call.1}
  #allocation0 [shape = 'u32[]', space=smem, size = 0x4, offset = 0x4, fixed_abs, tag = 'smem constant byte address 0x4 - core index']
  #allocation1 [shape = 'u32[144,128]{1,0:T(1,128)}', space=vmem, size = 0x12000, scoped, tag = 'internal scratch']
  %s0 = inlined_call_operand.hbm [shape: f32[2,8,32], index: 0, kind: input, shape index: {}]
  %s1 = inlined_call_operand.vmem [shape: f32[32,96], index: 1, kind: input, shape index: {}]
  %s2 = inlined_call_operand.vmem [shape: f32[1,96], index: 2, kind: input, shape index: {}]
  %s3 = inlined_call_operand.vmem [shape: f32[32,32], index: 3, kind: input, shape index: {}]
  %s4 = inlined_call_operand.vmem [shape: f32[1,32], index: 4, kind: input, shape index: {}]
  %s5 = inlined_call_operand.vmem [shape: f32[32,64], index: 5, kind: input, shape index: {}]
  %s6 = inlined_call_operand.vmem [shape: f32[1,64], index: 6, kind: input, shape index: {}]
  %s7 = inlined_call_operand.vmem [shape: f32[64,32], index: 7, kind: input, shape index: {}]
  %s8 = inlined_call_operand.vmem [shape: f32[1,32], index: 8, kind: input, shape index: {}]
  %s9 = inlined_call_operand.vmem [shape: f32[1,32], index: 9, kind: input, shape index: {}]
  %s10 = inlined_call_operand.vmem [shape: f32[1,32], index: 10, kind: input, shape index: {}]
  %s11 = inlined_call_operand.vmem [shape: f32[1,32], index: 11, kind: input, shape index: {}]
  %s12 = inlined_call_operand.vmem [shape: f32[1,32], index: 12, kind: input, shape index: {}]
  %s13 = inlined_call_operand.hbm [shape: f32[2,8,32], index: 13, kind: output, shape index: {}]
  %s14 = sld [smem:[#allocation0]]
  $region89: #{tpu_custom_call.1} parent=0
    _
  %s16 = ssub.s32 1, %s14
  %s17 = scalar_select 0, %s16, %s14
  $region1: #{tpu_custom_call.1} parent=0
    #allocation2 [shape = 'u8[8192]{0}', space=vmem, size = 0x2000, scoped, tag = 'input window, operand 0']
    #allocation3 [shape = 's32[2]{0}', space=sflag, size = 0x8, scoped, tag = 'scoped memory for tpu_custom_call.1']
    #allocation4 [shape = 's32[2]{0}', space=sflag, size = 0x8, scoped, tag = 'scoped memory for tpu_custom_call.1']
    #allocation5 [shape = 'u8[8192]{0}', space=vmem, size = 0x2000, scoped, tag = 'output window, operand 0']
    %18 = vsyncpa [#allocation3], 0
    %s19 = scalar_lea.sflag [#allocation3], 1
    %20 = vsyncpa %s19, 0
    %21 = vsyncpa [#allocation4], 0
    %s22 = scalar_lea.sflag [#allocation4], 1
    %23 = vsyncpa %s22, 0
    loop: start=0, step=1, limit=4
    $region2: #{tpu_custom_call.1} parent=1 // loop_pre_header
      _
    $region3: #{tpu_custom_call.1} parent=1 // loop_header
      %s25 = sphi 0, %s29
      %p26 = scmp.ge.s32.totalorder %s25, 4
      %s35 = sphi 0, %s37
      %s38 = sphi 0, %s35
      %s39 = sphi 0, %s38
      %s55 = sphi 0, %s39
      %s59 = sphi 0, %s59
      %s61 = sphi 0, %s59
      %s62 = sphi 0, %s61
      %s76 = sphi 0, %s62
      %s80 = sphi 0, %s80
      %s82 = sphi 0, %s80
      %s83 = sphi 0, %s82
      %s97 = sphi 0, %s83
      %s101 = sphi 0, %s101
      %s103 = sphi 0, %s101
      %s104 = sphi 0, %s103
      %s118 = sphi 0, %s104
      %s122 = sphi 0, %s122
      %s124 = sphi 0, %s122
      %s125 = sphi 0, %s124
      %s139 = sphi 0, %s125
      %s143 = sphi 0, %s143
      %s145 = sphi 0, %s143
      %s146 = sphi 0, %s145
      %s160 = sphi 0, %s146
      %s164 = sphi 0, %s164
      %s166 = sphi 0, %s164
      %s167 = sphi 0, %s166
      %s181 = sphi 0, %s167
      %s185 = sphi 0, %s185
      %s187 = sphi 0, %s185
      %s188 = sphi 0, %s187
      %s202 = sphi 0, %s188
      %s206 = sphi 0, %s206
      %s208 = sphi 0, %s206
      %s209 = sphi 0, %s208
      %s223 = sphi 0, %s209
      %s227 = sphi 0, %s227
      %s229 = sphi 0, %s227
      %s230 = sphi 0, %s229
      %s244 = sphi 0, %s230
      %s248 = sphi 0, %s248
      %s250 = sphi 0, %s248
      %s251 = sphi 0, %s250
      %s265 = sphi 0, %s251
      %s269 = sphi 0, %s269
      %s271 = sphi 0, %s269
      %s272 = sphi 0, %s271
      %s286 = sphi 0, %s272
      %s290 = sphi 0, %s290
      %s292 = sphi 0, %s290
      %s293 = sphi 0, %s292
      %s307 = sphi 0, %s293
      %s313 = sphi 0, %s315
      %s316 = sphi 0, %s313
      %s317 = sphi 0, %s316
      %s333 = sphi 0, %s317
    $region4: #{tpu_custom_call.1} parent=1 // loop_header_branch
      %28 = sbr.rel (%p26) target = $region8
    $region5: #{tpu_custom_call.1} parent=1 // loop_body
      %s30 = ssub.s32 %s25, 1
      %s31 = ssub.s32 %s25, 2
      %s32 = sadd.s32 %s25, 1
      %s33 = ssub.s32 %s25, %s32
      %p34 = scmp.eq.s32.totalorder %s33, 0
      %s36 = sadd.s32 %s35, 1
      %s37 = scalar_select %p34, %s35, %s36
      %p40 = pneg %p34
      %p41 = scmp.eq.s32.totalorder %s25, 1
      %p42 = por %p40, %p41
      %p43 = scmp.ne.s32.totalorder %s35, %s38
      %p44 = scmp.eq.s32.totalorder %s25, 0
      %p45 = por %p43, %p44
      %p46 = scmp.ne.s32.totalorder %s35, %s38
      %p47 = scmp.eq.s32.totalorder %s30, 1
      %p48 = por %p46, %p47
      %p49 = scmp.ne.s32.totalorder %s38, %s39
      %p50 = scmp.eq.s32.totalorder %s30, 0
      %p51 = por %p49, %p50
      %p52 = scmp.ne.s32.totalorder %s38, %s39
      %p53 = scmp.eq.s32.totalorder %s31, 1
      %p54 = por %p52, %p53
      %p56 = scmp.ne.s32.totalorder %s39, %s55
      %p57 = scmp.eq.s32.totalorder %s31, 0
      %p58 = por %p56, %p57
      %s60 = sadd.s32 %s59, 1
      %p63 = scmp.eq.s32.totalorder %s25, 1
      %p64 = scmp.ne.s32.totalorder %s59, %s61
      %p65 = scmp.eq.s32.totalorder %s25, 0
      %p66 = por %p64, %p65
      %p67 = scmp.ne.s32.totalorder %s59, %s61
      %p68 = scmp.eq.s32.totalorder %s30, 1
      %p69 = por %p67, %p68
      %p70 = scmp.ne.s32.totalorder %s61, %s62
      %p71 = scmp.eq.s32.totalorder %s30, 0
      %p72 = por %p70, %p71
      %p73 = scmp.ne.s32.totalorder %s61, %s62
      %p74 = scmp.eq.s32.totalorder %s31, 1
      %p75 = por %p73, %p74
      %p77 = scmp.ne.s32.totalorder %s62, %s76
      %p78 = scmp.eq.s32.totalorder %s31, 0
      %p79 = por %p77, %p78
      %s81 = sadd.s32 %s80, 1
      %p84 = scmp.eq.s32.totalorder %s25, 1
      %p85 = scmp.ne.s32.totalorder %s80, %s82
      %p86 = scmp.eq.s32.totalorder %s25, 0
      %p87 = por %p85, %p86
      %p88 = scmp.ne.s32.totalorder %s80, %s82
      %p89 = scmp.eq.s32.totalorder %s30, 1
      %p90 = por %p88, %p89
      %p91 = scmp.ne.s32.totalorder %s82, %s83
      %p92 = scmp.eq.s32.totalorder %s30, 0
      %p93 = por %p91, %p92
      %p94 = scmp.ne.s32.totalorder %s82, %s83
      %p95 = scmp.eq.s32.totalorder %s31, 1
      %p96 = por %p94, %p95
      %p98 = scmp.ne.s32.totalorder %s83, %s97
      %p99 = scmp.eq.s32.totalorder %s31, 0
      %p100 = por %p98, %p99
      %s102 = sadd.s32 %s101, 1
      %p105 = scmp.eq.s32.totalorder %s25, 1
      %p106 = scmp.ne.s32.totalorder %s101, %s103
      %p107 = scmp.eq.s32.totalorder %s25, 0
      %p108 = por %p106, %p107
      %p109 = scmp.ne.s32.totalorder %s101, %s103
      %p110 = scmp.eq.s32.totalorder %s30, 1
      %p111 = por %p109, %p110
      %p112 = scmp.ne.s32.totalorder %s103, %s104
      %p113 = scmp.eq.s32.totalorder %s30, 0
      %p114 = por %p112, %p113
      %p115 = scmp.ne.s32.totalorder %s103, %s104
      %p116 = scmp.eq.s32.totalorder %s31, 1
      %p117 = por %p115, %p116
      %p119 = scmp.ne.s32.totalorder %s104, %s118
      %p120 = scmp.eq.s32.totalorder %s31, 0
      %p121 = por %p119, %p120
      %s123 = sadd.s32 %s122, 1
      %p126 = scmp.eq.s32.totalorder %s25, 1
      %p127 = scmp.ne.s32.totalorder %s122, %s124
      %p128 = scmp.eq.s32.totalorder %s25, 0
      %p129 = por %p127, %p128
      %p130 = scmp.ne.s32.totalorder %s122, %s124
      %p131 = scmp.eq.s32.totalorder %s30, 1
      %p132 = por %p130, %p131
      %p133 = scmp.ne.s32.totalorder %s124, %s125
      %p134 = scmp.eq.s32.totalorder %s30, 0
      %p135 = por %p133, %p134
      %p136 = scmp.ne.s32.totalorder %s124, %s125
      %p137 = scmp.eq.s32.totalorder %s31, 1
      %p138 = por %p136, %p137
      %p140 = scmp.ne.s32.totalorder %s125, %s139
      %p141 = scmp.eq.s32.totalorder %s31, 0
      %p142 = por %p140, %p141
      %s144 = sadd.s32 %s143, 1
      %p147 = scmp.eq.s32.totalorder %s25, 1
      %p148 = scmp.ne.s32.totalorder %s143, %s145
      %p149 = scmp.eq.s32.totalorder %s25, 0
      %p150 = por %p148, %p149
      %p151 = scmp.ne.s32.totalorder %s143, %s145
      %p152 = scmp.eq.s32.totalorder %s30, 1
      %p153 = por %p151, %p152
      %p154 = scmp.ne.s32.totalorder %s145, %s146
      %p155 = scmp.eq.s32.totalorder %s30, 0
      %p156 = por %p154, %p155
      %p157 = scmp.ne.s32.totalorder %s145, %s146
      %p158 = scmp.eq.s32.totalorder %s31, 1
      %p159 = por %p157, %p158
      %p161 = scmp.ne.s32.totalorder %s146, %s160
      %p162 = scmp.eq.s32.totalorder %s31, 0
      %p163 = por %p161, %p162
      %s165 = sadd.s32 %s164, 1
      %p168 = scmp.eq.s32.totalorder %s25, 1
      %p169 = scmp.ne.s32.totalorder %s164, %s166
      %p170 = scmp.eq.s32.totalorder %s25, 0
      %p171 = por %p169, %p170
      %p172 = scmp.ne.s32.totalorder %s164, %s166
      %p173 = scmp.eq.s32.totalorder %s30, 1
      %p174 = por %p172, %p173
      %p175 = scmp.ne.s32.totalorder %s166, %s167
      %p176 = scmp.eq.s32.totalorder %s30, 0
      %p177 = por %p175, %p176
      %p178 = scmp.ne.s32.totalorder %s166, %s167
      %p179 = scmp.eq.s32.totalorder %s31, 1
      %p180 = por %p178, %p179
      %p182 = scmp.ne.s32.totalorder %s167, %s181
      %p183 = scmp.eq.s32.totalorder %s31, 0
      %p184 = por %p182, %p183
      %s186 = sadd.s32 %s185, 1
      %p189 = scmp.eq.s32.totalorder %s25, 1
      %p190 = scmp.ne.s32.totalorder %s185, %s187
      %p191 = scmp.eq.s32.totalorder %s25, 0
      %p192 = por %p190, %p191
      %p193 = scmp.ne.s32.totalorder %s185, %s187
      %p194 = scmp.eq.s32.totalorder %s30, 1
      %p195 = por %p193, %p194
      %p196 = scmp.ne.s32.totalorder %s187, %s188
      %p197 = scmp.eq.s32.totalorder %s30, 0
      %p198 = por %p196, %p197
      %p199 = scmp.ne.s32.totalorder %s187, %s188
      %p200 = scmp.eq.s32.totalorder %s31, 1
      %p201 = por %p199, %p200
      %p203 = scmp.ne.s32.totalorder %s188, %s202
      %p204 = scmp.eq.s32.totalorder %s31, 0
      %p205 = por %p203, %p204
      %s207 = sadd.s32 %s206, 1
      %p210 = scmp.eq.s32.totalorder %s25, 1
      %p211 = scmp.ne.s32.totalorder %s206, %s208
      %p212 = scmp.eq.s32.totalorder %s25, 0
      %p213 = por %p211, %p212
      %p214 = scmp.ne.s32.totalorder %s206, %s208
      %p215 = scmp.eq.s32.totalorder %s30, 1
      %p216 = por %p214, %p215
      %p217 = scmp.ne.s32.totalorder %s208, %s209
      %p218 = scmp.eq.s32.totalorder %s30, 0
      %p219 = por %p217, %p218
      %p220 = scmp.ne.s32.totalorder %s208, %s209
      %p221 = scmp.eq.s32.totalorder %s31, 1
      %p222 = por %p220, %p221
      %p224 = scmp.ne.s32.totalorder %s209, %s223
      %p225 = scmp.eq.s32.totalorder %s31, 0
      %p226 = por %p224, %p225
      %s228 = sadd.s32 %s227, 1
      %p231 = scmp.eq.s32.totalorder %s25, 1
      %p232 = scmp.ne.s32.totalorder %s227, %s229
      %p233 = scmp.eq.s32.totalorder %s25, 0
      %p234 = por %p232, %p233
      %p235 = scmp.ne.s32.totalorder %s227, %s229
      %p236 = scmp.eq.s32.totalorder %s30, 1
      %p237 = por %p235, %p236
      %p238 = scmp.ne.s32.totalorder %s229, %s230
      %p239 = scmp.eq.s32.totalorder %s30, 0
      %p240 = por %p238, %p239
      %p241 = scmp.ne.s32.totalorder %s229, %s230
      %p242 = scmp.eq.s32.totalorder %s31, 1
      %p243 = por %p241, %p242
      %p245 = scmp.ne.s32.totalorder %s230, %s244
      %p246 = scmp.eq.s32.totalorder %s31, 0
      %p247 = por %p245, %p246
      %s249 = sadd.s32 %s248, 1
      %p252 = scmp.eq.s32.totalorder %s25, 1
      %p253 = scmp.ne.s32.totalorder %s248, %s250
      %p254 = scmp.eq.s32.totalorder %s25, 0
      %p255 = por %p253, %p254
      %p256 = scmp.ne.s32.totalorder %s248, %s250
      %p257 = scmp.eq.s32.totalorder %s30, 1
      %p258 = por %p256, %p257
      %p259 = scmp.ne.s32.totalorder %s250, %s251
      %p260 = scmp.eq.s32.totalorder %s30, 0
      %p261 = por %p259, %p260
      %p262 = scmp.ne.s32.totalorder %s250, %s251
      %p263 = scmp.eq.s32.totalorder %s31, 1
      %p264 = por %p262, %p263
      %p266 = scmp.ne.s32.totalorder %s251, %s265
      %p267 = scmp.eq.s32.totalorder %s31, 0
      %p268 = por %p266, %p267
      %s270 = sadd.s32 %s269, 1
      %p273 = scmp.eq.s32.totalorder %s25, 1
      %p274 = scmp.ne.s32.totalorder %s269, %s271
      %p275 = scmp.eq.s32.totalorder %s25, 0
      %p276 = por %p274, %p275
      %p277 = scmp.ne.s32.totalorder %s269, %s271
      %p278 = scmp.eq.s32.totalorder %s30, 1
      %p279 = por %p277, %p278
      %p280 = scmp.ne.s32.totalorder %s271, %s272
      %p281 = scmp.eq.s32.totalorder %s30, 0
      %p282 = por %p280, %p281
      %p283 = scmp.ne.s32.totalorder %s271, %s272
      %p284 = scmp.eq.s32.totalorder %s31, 1
      %p285 = por %p283, %p284
      %p287 = scmp.ne.s32.totalorder %s272, %s286
      %p288 = scmp.eq.s32.totalorder %s31, 0
      %p289 = por %p287, %p288
      %s291 = sadd.s32 %s290, 1
      %p294 = scmp.eq.s32.totalorder %s25, 1
      %p295 = scmp.ne.s32.totalorder %s290, %s292
      %p296 = scmp.eq.s32.totalorder %s25, 0
      %p297 = por %p295, %p296
      %p298 = scmp.ne.s32.totalorder %s290, %s292
      %p299 = scmp.eq.s32.totalorder %s30, 1
      %p300 = por %p298, %p299
      %p301 = scmp.ne.s32.totalorder %s292, %s293
      %p302 = scmp.eq.s32.totalorder %s30, 0
      %p303 = por %p301, %p302
      %p304 = scmp.ne.s32.totalorder %s292, %s293
      %p305 = scmp.eq.s32.totalorder %s31, 1
      %p306 = por %p304, %p305
      %p308 = scmp.ne.s32.totalorder %s293, %s307
      %p309 = scmp.eq.s32.totalorder %s31, 0
      %p310 = por %p308, %p309
      %s311 = ssub.s32 %s25, %s32
      %p312 = scmp.eq.s32.totalorder %s311, 0
      %s314 = sadd.s32 %s313, 1
      %s315 = scalar_select %p312, %s313, %s314
      %p318 = pneg %p312
      %p319 = scmp.eq.s32.totalorder %s25, 1
      %p320 = por %p318, %p319
      %p321 = scmp.ne.s32.totalorder %s313, %s316
      %p322 = scmp.eq.s32.totalorder %s25, 0
      %p323 = por %p321, %p322
      %p324 = scmp.ne.s32.totalorder %s313, %s316
      %p325 = scmp.eq.s32.totalorder %s30, 1
      %p326 = por %p324, %p325
      %p327 = scmp.ne.s32.totalorder %s316, %s317
      %p328 = scmp.eq.s32.totalorder %s30, 0
      %p329 = por %p327, %p328
      %p330 = scmp.ne.s32.totalorder %s316, %s317
      %p331 = scmp.eq.s32.totalorder %s31, 1
      %p332 = por %p330, %p331
      %p334 = scmp.ne.s32.totalorder %s317, %s333
      %p335 = scmp.eq.s32.totalorder %s31, 0
      %p336 = por %p334, %p335
      %p337 = scmp.le.s32.totalorder 1, %s25
      %p338 = scmp.lt.s32.totalorder %s25, 3
      %p339 = pnand %p337, %p338
      %p340 = pneg %p339
      // Predicated region
      $region9: #{tpu_custom_call.1} parent=5 // pred_check
        _
      $region10: #{tpu_custom_call.1} parent=5 // pred_check_branch
        %342 = sbr.rel (%p339) target = $region12
      $region11: #{tpu_custom_call.1} parent=5 // pred_region
        %s343 = ssub.s32 %s25, 1
        // Predicated region
        $region13: #{tpu_custom_call.1} parent=11 // pred_check
          %p344 = pneg %p72
        $region14: #{tpu_custom_call.1} parent=11 // pred_check_branch
          %346 = sbr.rel (%p344) target = $region16
        $region15: #{tpu_custom_call.1} parent=11 // pred_region
          _
        $region16: #{tpu_custom_call.1} parent=11 // pred_fallthru
          _
        // Predicated region
        $region17: #{tpu_custom_call.1} parent=11 // pred_check
          %p347 = pneg %p93
        $region18: #{tpu_custom_call.1} parent=11 // pred_check_branch
          %349 = sbr.rel (%p347) target = $region20
        $region19: #{tpu_custom_call.1} parent=11 // pred_region
          _
        $region20: #{tpu_custom_call.1} parent=11 // pred_fallthru
          _
        // Predicated region
        $region21: #{tpu_custom_call.1} parent=11 // pred_check
          %p350 = pneg %p114
        $region22: #{tpu_custom_call.1} parent=11 // pred_check_branch
          %352 = sbr.rel (%p350) target = $region24
        $region23: #{tpu_custom_call.1} parent=11 // pred_region
          _
        $region24: #{tpu_custom_call.1} parent=11 // pred_fallthru
          _
        // Predicated region
        $region25: #{tpu_custom_call.1} parent=11 // pred_check
          %p353 = pneg %p135
        $region26: #{tpu_custom_call.1} parent=11 // pred_check_branch
          %355 = sbr.rel (%p353) target = $region28
        $region27: #{tpu_custom_call.1} parent=11 // pred_region
          _
        $region28: #{tpu_custom_call.1} parent=11 // pred_fallthru
          _
        // Predicated region
        $region29: #{tpu_custom_call.1} parent=11 // pred_check
          %p356 = pneg %p156
        $region30: #{tpu_custom_call.1} parent=11 // pred_check_branch
          %358 = sbr.rel (%p356) target = $region32
        $region31: #{tpu_custom_call.1} parent=11 // pred_region
          _
        $region32: #{tpu_custom_call.1} parent=11 // pred_fallthru
          _
        // Predicated region
        $region33: #{tpu_custom_call.1} parent=11 // pred_check
          %p359 = pneg %p177
        $region34: #{tpu_custom_call.1} parent=11 // pred_check_branch
          %361 = sbr.rel (%p359) target = $region36
        $region35: #{tpu_custom_call.1} parent=11 // pred_region
          _
        $region36: #{tpu_custom_call.1} parent=11 // pred_fallthru
          _
        // Predicated region
        $region37: #{tpu_custom_call.1} parent=11 // pred_check
          %p362 = pneg %p198
        $region38: #{tpu_custom_call.1} parent=11 // pred_check_branch
          %364 = sbr.rel (%p362) target = $region40
        $region39: #{tpu_custom_call.1} parent=11 // pred_region
          _
        $region40: #{tpu_custom_call.1} parent=11 // pred_fallthru
          _
        // Predicated region
        $region41: #{tpu_custom_call.1} parent=11 // pred_check
          %p365 = pneg %p219
        $region42: #{tpu_custom_call.1} parent=11 // pred_check_branch
          %367 = sbr.rel (%p365) target = $region44
        $region43: #{tpu_custom_call.1} parent=11 // pred_region
          _
        $region44: #{tpu_custom_call.1} parent=11 // pred_fallthru
          _
        // Predicated region
        $region45: #{tpu_custom_call.1} parent=11 // pred_check
          %p368 = pneg %p240
        $region46: #{tpu_custom_call.1} parent=11 // pred_check_branch
          %370 = sbr.rel (%p368) target = $region48
        $region47: #{tpu_custom_call.1} parent=11 // pred_region
          _
        $region48: #{tpu_custom_call.1} parent=11 // pred_fallthru
          _
        // Predicated region
        $region49: #{tpu_custom_call.1} parent=11 // pred_check
          %p371 = pneg %p261
        $region50: #{tpu_custom_call.1} parent=11 // pred_check_branch
          %373 = sbr.rel (%p371) target = $region52
        $region51: #{tpu_custom_call.1} parent=11 // pred_region
          _
        $region52: #{tpu_custom_call.1} parent=11 // pred_fallthru
          _
        // Predicated region
        $region53: #{tpu_custom_call.1} parent=11 // pred_check
          %p374 = pneg %p282
        $region54: #{tpu_custom_call.1} parent=11 // pred_check_branch
          %376 = sbr.rel (%p374) target = $region56
        $region55: #{tpu_custom_call.1} parent=11 // pred_region
          _
        $region56: #{tpu_custom_call.1} parent=11 // pred_fallthru
          _
        // Predicated region
        $region57: #{tpu_custom_call.1} parent=11 // pred_check
          %p377 = pneg %p303
        $region58: #{tpu_custom_call.1} parent=11 // pred_check_branch
          %379 = sbr.rel (%p377) target = $region60
        $region59: #{tpu_custom_call.1} parent=11 // pred_region
          _
        $region60: #{tpu_custom_call.1} parent=11 // pred_fallthru
          _
      $region12: #{tpu_custom_call.1} parent=5 // pred_fallthru
        _
      %p380 = scmp.lt.s32.totalorder %s25, 2
      // Predicated region
      $region61: #{tpu_custom_call.1} parent=5 // pred_check
        %p381 = pneg %p380
      $region62: #{tpu_custom_call.1} parent=5 // pred_check_branch
        %383 = sbr.rel (%p381) target = $region64
      $region63: #{tpu_custom_call.1} parent=5 // pred_region
        // Predicated region
        $region65: #{tpu_custom_call.1} parent=63 // pred_check
          %p384 = pneg %p45
        $region66: #{tpu_custom_call.1} parent=63 // pred_check_branch
          %386 = sbr.rel (%p384) target = $region68
        $region67: #{tpu_custom_call.1} parent=63 // pred_region
          %s387 = sand.u32 %s35, 1
          %s388 = scalar_lea.sflag [#allocation3], %s387
          %s389 = sand.u32 %s35, 1
          %s390 = smul.addr %s389, 8
          %s391 = scalar_lea.vmem [#allocation2], %s390
          %s393 = ssub.s32 128, 128
          %394 = vsyncadd %s388, %s393
          %s395 = smul.addr %s25, 128
          %s396 = scalar_lea.hbm %s0, %s395
          %s398 = sshll.u32 %s391, 4
          %s399 = int_to_ptr.vmem [resolvable:$true] %s398
          %401 = dma.hbm_to_vmem [thread:$0]  %s396, 128, %s399, %s388
        $region68: #{tpu_custom_call.1} parent=63 // pred_fallthru
          _
      $region64: #{tpu_custom_call.1} parent=5 // pred_fallthru
        _
      %p402 = scmp.le.s32.totalorder 1, %s25
      %p403 = scmp.lt.s32.totalorder %s25, 3
      %p404 = pnand %p402, %p403
      %p405 = pneg %p404
      // Predicated region
      $region69: #{tpu_custom_call.1} parent=5 // pred_check
        _
      $region70: #{tpu_custom_call.1} parent=5 // pred_check_branch
        %407 = sbr.rel (%p404) target = $region72
      $region71: #{tpu_custom_call.1} parent=5 // pred_region
        %s408 = ssub.s32 %s25, 1
        %s409 = sand.u32 %s38, 1
        %s410 = scalar_lea.sflag [#allocation3], %s409
        %s411 = sand.u32 %s38, 1
        %s412 = smul.addr %s411, 8
        %s413 = scalar_lea.vmem [#allocation2], %s412
        // Predicated region
        $region73: #{tpu_custom_call.1} parent=71 // pred_check
          %p414 = pneg %p51
        $region74: #{tpu_custom_call.1} parent=71 // pred_check_branch
          %416 = sbr.rel (%p414) target = $region76
        $region75: #{tpu_custom_call.1} parent=71 // pred_region
          %417 = dma.done %s410, 128
        $region76: #{tpu_custom_call.1} parent=71 // pred_fallthru
          _
        %s418 = sand.u32 %s38, 1
        %s419 = scalar_lea.sflag [#allocation3], %s418
        %s420 = sand.u32 %s38, 1
        %s421 = smul.addr %s420, 8
        %s422 = scalar_lea.vmem [#allocation2], %s421
        %p423 = pneg %p51
        %p424 = pneg %p48
        %p425 = pneg %p72
        %p426 = pneg %p69
        %p427 = pneg %p93
        %p428 = pneg %p90
        %p429 = pneg %p114
        %p430 = pneg %p111
        %p431 = pneg %p135
        %p432 = pneg %p132
        %p433 = pneg %p156
        %p434 = pneg %p153
        %p435 = pneg %p177
        %p436 = pneg %p174
        %p437 = pneg %p198
        %p438 = pneg %p195
        %p439 = pneg %p219
        %p440 = pneg %p216
        %p441 = pneg %p240
        %p442 = pneg %p237
        %p443 = pneg %p261
        %p444 = pneg %p258
        %p445 = pneg %p282
        %p446 = pneg %p279
        %p447 = pneg %p303
        %p448 = pneg %p300
        %p449 = pneg %p329
        %p450 = pneg %p326
        %s451 = sand.u32 %s316, 1
        %s452 = scalar_lea.sflag [#allocation4], %s451
        %s453 = sand.u32 %s316, 1
        %s454 = smul.addr %s453, 8
        %s455 = scalar_lea.vmem [#allocation5], %s454
        %v456 = vld [vmem:[%s413] sm:$0xff]
        %v457 = vld [vmem:[%s1] sm:$0xff]
        %v458 = vld [vmem:[%s1 + $0x8] sm:$0xff]
        %v459 = vld [vmem:[%s1 + $0x10] sm:$0xff]
        %v460 = vld [vmem:[%s1 + $0x18] sm:$0xff]
        %v461 = vld [vmem:[%s2] sm:$0x1]
        %v463 = vlaneseq
        %v464 = vshrl.u32 %v463, 7
        %v465 = vsub.s32 0, %v464
        %v466 = vrot.slane %v461, %v465
        %vm468 = vcmask 261120
        %v470 = vsel %vm468, %v456, 0
        %472 = vmatprep.subr.mxu0 0.0
        %v473 = vand.u32 %v457, 4294901760
        %474 = vmatpush1.msra.mxu0 %v473
        %475 = vmatprep.subr.mxu0 0.0
        %v476 = vand.u32 %v458, 4294901760
        %477 = vmatpush1.msra.mxu0 %v476
        %478 = vmatprep.subr.mxu0 0.0
        %v479 = vand.u32 %v459, 4294901760
        %480 = vmatpush1.msra.mxu0 %v479
        %481 = vmatprep.subr.mxu0 0.0
        %v482 = vand.u32 %v460, 4294901760
        %483 = vmatpush1.msra.mxu0 %v482
        %484 = vmatprep.subr.mxu0 0.0
        %485 = vmatpush1.msra.mxu0 0.0
        %486 = vmatprep.subr.mxu0 0.0
        %487 = vmatpush1.msra.mxu0 0.0
        %488 = vmatprep.subr.mxu0 0.0
        %489 = vmatpush1.msra.mxu0 0.0
        %490 = vmatprep.subr.mxu0 0.0
        %491 = vmatpush1.msra.mxu0 0.0
        %492 = vmatprep.subr.mxu0 0.0
        %493 = vmatpush1.msra.mxu0 0.0
        %494 = vmatprep.subr.mxu0 0.0
        %495 = vmatpush1.msra.mxu0 0.0
        %496 = vmatprep.subr.mxu0 0.0
        %497 = vmatpush1.msra.mxu0 0.0
        %498 = vmatprep.subr.mxu0 0.0
        %499 = vmatpush1.msra.mxu0 0.0
        %500 = vmatprep.subr.mxu0 0.0
        %501 = vmatpush1.msra.mxu0 0.0
        %502 = vmatprep.subr.mxu0 0.0
        %503 = vmatpush1.msra.mxu0 0.0
        %504 = vmatprep.subr.mxu0 0.0
        %505 = vmatpush1.msra.mxu0 0.0
        %506 = vmatprep.subr.mxu0 0.0
        %507 = vmatpush1.msra.mxu0 0.0
        %508 = vmatprep.subr.mxu0 0.0
        %509 = vmatpush1.msra.mxu0 0.0
        %510 = vmatprep.subr.mxu0 0.0
        %511 = vmatpush1.msra.mxu0 0.0
        %512 = vmatprep.subr.mxu0 0.0
        %513 = vmatpush1.msra.mxu0 0.0
        %514 = vmatprep.subr.mxu0 0.0
        %515 = vmatpush1.msra.mxu0 0.0
        %516 = vmatprep.subr.mxu0 0.0
        %517 = vmatpush1.msra.mxu0 0.0
        %518 = vmatprep.subr.mxu0 0.0
        %519 = vmatpush1.msra.mxu0 0.0
        %520 = vmatprep.subr.mxu0 0.0
        %521 = vmatpush1.msra.mxu0 0.0
        %522 = vmatprep.subr.mxu0 0.0
        %523 = vmatpush1.msra.mxu0 0.0
        %524 = vmatprep.subr.mxu0 0.0
        %525 = vmatpush1.msra.mxu0 0.0
        %526 = vmatprep.subr.mxu0 0.0
        %527 = vmatpush1.msra.mxu0 0.0
        %528 = vmatprep.subr.mxu0 0.0
        %529 = vmatpush1.msra.mxu0 0.0
        %530 = vmatprep.subr.mxu0 0.0
        %531 = vmatpush1.msra.mxu0 0.0
        %532 = vmatprep.subr.mxu0 0.0
        %533 = vmatpush1.msra.mxu0 0.0
        %534 = vmatprep.subr.mxu0 0.0
        %535 = vmatpush1.msra.mxu0 0.0
        %536 = vmatprep.subr.mxu0 0.0
        %537 = vmatpush1.msra.mxu0 0.0
        %538 = vmatprep.subr.mxu0 0.0
        %539 = vmatpush1.msra.mxu0 0.0
        %540 = vmatprep.mubr.f32.mxu0 0.0
        %v541 = vand.u32 %v470, 4294901760
        %v542 = vsub.f32 %v470, %v541
        %v543 = vand.u32 %v542, 4294901760
        %v544 = vsub.f32 %v542, %v543
        %v545 = vand.u32 %v544, 4294901760
        %546 = vmatmul.mubr.f32.gmra.mrb[0].mxu0 %v545
        %v547 = vpop.f32.mrb[0].mxu0
        %v548 = vadd.f32 %v466, %v547
        %v549 = vpop.f32.mrb[0].mxu0
        %550 = vdwg.mxu0
        %551 = vmatprep.subr.mxu0 0.0
        %v552 = vand.u32 %v457, 4294901760
        %v553 = vsub.f32 %v457, %v552
        %v554 = vand.u32 %v553, 4294901760
        %v555 = vsub.f32 %v553, %v554
        %v556 = vand.u32 %v555, 4294901760
        %557 = vmatpush1.msra.mxu0 %v556
        %558 = vmatprep.subr.mxu0 0.0
        %v559 = vand.u32 %v458, 4294901760
        %v560 = vsub.f32 %v458, %v559
        %v561 = vand.u32 %v560, 4294901760
        %v562 = vsub.f32 %v560, %v561
        %v563 = vand.u32 %v562, 4294901760
        %564 = vmatpush1.msra.mxu0 %v563
        %565 = vmatprep.subr.mxu0 0.0
        %v566 = vand.u32 %v459, 4294901760
        %v567 = vsub.f32 %v459, %v566
        %v568 = vand.u32 %v567, 4294901760
        %v569 = vsub.f32 %v567, %v568
        %v570 = vand.u32 %v569, 4294901760
        %571 = vmatpush1.msra.mxu0 %v570
        %572 = vmatprep.subr.mxu0 0.0
        %v573 = vand.u32 %v460, 4294901760
        %v574 = vsub.f32 %v460, %v573
        %v575 = vand.u32 %v574, 4294901760
        %v576 = vsub.f32 %v574, %v575
        %v577 = vand.u32 %v576, 4294901760
        %578 = vmatpush1.msra.mxu0 %v577
        %579 = vmatprep.subr.mxu0 0.0
        %580 = vmatpush1.msra.mxu0 0.0
        %581 = vmatprep.subr.mxu0 0.0
        %582 = vmatpush1.msra.mxu0 0.0
        %583 = vmatprep.subr.mxu0 0.0
        %584 = vmatpush1.msra.mxu0 0.0
        %585 = vmatprep.subr.mxu0 0.0
        %586 = vmatpush1.msra.mxu0 0.0
        %587 = vmatprep.subr.mxu0 0.0
        %588 = vmatpush1.msra.mxu0 0.0
        %589 = vmatprep.subr.mxu0 0.0
        %590 = vmatpush1.msra.mxu0 0.0
        %591 = vmatprep.subr.mxu0 0.0
        %592 = vmatpush1.msra.mxu0 0.0
        %593 = vmatprep.subr.mxu0 0.0
        %594 = vmatpush1.msra.mxu0 0.0
        %595 = vmatprep.subr.mxu0 0.0
        %596 = vmatpush1.msra.mxu0 0.0
        %597 = vmatprep.subr.mxu0 0.0
        %598 = vmatpush1.msra.mxu0 0.0
        %599 = vmatprep.subr.mxu0 0.0
        %600 = vmatpush1.msra.mxu0 0.0
        %601 = vmatprep.subr.mxu0 0.0
        %602 = vmatpush1.msra.mxu0 0.0
        %603 = vmatprep.subr.mxu0 0.0
        %604 = vmatpush1.msra.mxu0 0.0
        %605 = vmatprep.subr.mxu0 0.0
        %606 = vmatpush1.msra.mxu0 0.0
        %607 = vmatprep.subr.mxu0 0.0
        %608 = vmatpush1.msra.mxu0 0.0
        %609 = vmatprep.subr.mxu0 0.0
        %610 = vmatpush1.msra.mxu0 0.0
        %611 = vmatprep.subr.mxu0 0.0
        %612 = vmatpush1.msra.mxu0 0.0
        %613 = vmatprep.subr.mxu0 0.0
        %614 = vmatpush1.msra.mxu0 0.0
        %615 = vmatprep.subr.mxu0 0.0
        %616 = vmatpush1.msra.mxu0 0.0
        %617 = vmatprep.subr.mxu0 0.0
        %618 = vmatpush1.msra.mxu0 0.0
        %619 = vmatprep.subr.mxu0 0.0
        %620 = vmatpush1.msra.mxu0 0.0
        %621 = vmatprep.subr.mxu0 0.0
        %622 = vmatpush1.msra.mxu0 0.0
        %623 = vmatprep.subr.mxu0 0.0
        %624 = vmatpush1.msra.mxu0 0.0
        %625 = vmatprep.subr.mxu0 0.0
        %626 = vmatpush1.msra.mxu0 0.0
        %627 = vmatprep.subr.mxu0 0.0
        %628 = vmatpush1.msra.mxu0 0.0
        %629 = vmatprep.subr.mxu0 0.0
        %630 = vmatpush1.msra.mxu0 0.0
        %631 = vmatprep.subr.mxu0 0.0
        %632 = vmatpush1.msra.mxu0 0.0
        %633 = vmatprep.subr.mxu0 0.0
        %634 = vmatpush1.msra.mxu0 0.0
        %635 = vmatprep.mubr.f32.mxu0 0.0
        %v636 = vand.u32 %v470, 4294901760
        %637 = vmatmul.mubr.f32.gmra.mrb[0].mxu0 %v636
        %v638 = vpop.f32.mrb[0].mxu0
        %v639 = vadd.f32 %v548, %v638
        %v640 = vpop.f32.mrb[0].mxu0
        %641 = vdwg.mxu0
        %642 = vmatprep.subr.mxu0 0.0
        %v643 = vand.u32 %v457, 4294901760
        %v644 = vsub.f32 %v457, %v643
        %645 = vmatpush1.msra.mxu0 %v644
        %646 = vmatprep.subr.mxu0 0.0
        %v647 = vand.u32 %v458, 4294901760
        %v648 = vsub.f32 %v458, %v647
        %649 = vmatpush1.msra.mxu0 %v648
        %650 = vmatprep.subr.mxu0 0.0
        %v651 = vand.u32 %v459, 4294901760
        %v652 = vsub.f32 %v459, %v651
        %653 = vmatpush1.msra.mxu0 %v652
        %654 = vmatprep.subr.mxu0 0.0
        %v655 = vand.u32 %v460, 4294901760
        %v656 = vsub.f32 %v460, %v655
        %657 = vmatpush1.msra.mxu0 %v656
        %658 = vmatprep.subr.mxu0 0.0
        %659 = vmatpush1.msra.mxu0 0.0
        %660 = vmatprep.subr.mxu0 0.0
        %661 = vmatpush1.msra.mxu0 0.0
        %662 = vmatprep.subr.mxu0 0.0
        %663 = vmatpush1.msra.mxu0 0.0
        %664 = vmatprep.subr.mxu0 0.0
        %665 = vmatpush1.msra.mxu0 0.0
        %666 = vmatprep.subr.mxu0 0.0
        %667 = vmatpush1.msra.mxu0 0.0
        %668 = vmatprep.subr.mxu0 0.0
        %669 = vmatpush1.msra.mxu0 0.0
        %670 = vmatprep.subr.mxu0 0.0
        %671 = vmatpush1.msra.mxu0 0.0
        %672 = vmatprep.subr.mxu0 0.0
        %673 = vmatpush1.msra.mxu0 0.0
        %674 = vmatprep.subr.mxu0 0.0
        %675 = vmatpush1.msra.mxu0 0.0
        %676 = vmatprep.subr.mxu0 0.0
        %677 = vmatpush1.msra.mxu0 0.0
        %678 = vmatprep.subr.mxu0 0.0
        %679 = vmatpush1.msra.mxu0 0.0
        %680 = vmatprep.subr.mxu0 0.0
        %681 = vmatpush1.msra.mxu0 0.0
        %682 = vmatprep.subr.mxu0 0.0
        %683 = vmatpush1.msra.mxu0 0.0
        %684 = vmatprep.subr.mxu0 0.0
        %685 = vmatpush1.msra.mxu0 0.0
        %686 = vmatprep.subr.mxu0 0.0
        %687 = vmatpush1.msra.mxu0 0.0
        %688 = vmatprep.subr.mxu0 0.0
        %689 = vmatpush1.msra.mxu0 0.0
        %690 = vmatprep.subr.mxu0 0.0
        %691 = vmatpush1.msra.mxu0 0.0
        %692 = vmatprep.subr.mxu0 0.0
        %693 = vmatpush1.msra.mxu0 0.0
        %694 = vmatprep.subr.mxu0 0.0
        %695 = vmatpush1.msra.mxu0 0.0
        %696 = vmatprep.subr.mxu0 0.0
        %697 = vmatpush1.msra.mxu0 0.0
        %698 = vmatprep.subr.mxu0 0.0
        %699 = vmatpush1.msra.mxu0 0.0
        %700 = vmatprep.subr.mxu0 0.0
        %701 = vmatpush1.msra.mxu0 0.0
        %702 = vmatprep.subr.mxu0 0.0
        %703 = vmatpush1.msra.mxu0 0.0
        %704 = vmatprep.subr.mxu0 0.0
        %705 = vmatpush1.msra.mxu0 0.0
        %706 = vmatprep.subr.mxu0 0.0
        %707 = vmatpush1.msra.mxu0 0.0
        %708 = vmatprep.subr.mxu0 0.0
        %709 = vmatpush1.msra.mxu0 0.0
        %710 = vmatprep.subr.mxu0 0.0
        %711 = vmatpush1.msra.mxu0 0.0
        %712 = vmatprep.subr.mxu0 0.0
        %713 = vmatpush1.msra.mxu0 0.0
        %714 = vmatprep.mubr.f32.mxu0 0.0
        %v715 = vand.u32 %v470, 4294901760
        %v716 = vsub.f32 %v470, %v715
        %717 = vmatmul.mubr.f32.gmra.mrb[0].mxu0 %v716
        %v718 = vpop.f32.mrb[0].mxu0
        %v719 = vadd.f32 %v639, %v718
        %v720 = vpop.f32.mrb[0].mxu0
        %721 = vdwg.mxu0
        %722 = vmatprep.subr.mxu0 0.0
        %v723 = vand.u32 %v457, 4294901760
        %724 = vmatpush1.msra.mxu0 %v723
        %725 = vmatprep.subr.mxu0 0.0
        %v726 = vand.u32 %v458, 4294901760
        %727 = vmatpush1.msra.mxu0 %v726
        %728 = vmatprep.subr.mxu0 0.0
        %v729 = vand.u32 %v459, 4294901760
        %730 = vmatpush1.msra.mxu0 %v729
        %731 = vmatprep.subr.mxu0 0.0
        %v732 = vand.u32 %v460, 4294901760
        %733 = vmatpush1.msra.mxu0 %v732
        %734 = vmatprep.subr.mxu0 0.0
        %735 = vmatpush1.msra.mxu0 0.0
        %736 = vmatprep.subr.mxu0 0.0
        %737 = vmatpush1.msra.mxu0 0.0
        %738 = vmatprep.subr.mxu0 0.0
        %739 = vmatpush1.msra.mxu0 0.0
        %740 = vmatprep.subr.mxu0 0.0
        %741 = vmatpush1.msra.mxu0 0.0
        %742 = vmatprep.subr.mxu0 0.0
        %743 = vmatpush1.msra.mxu0 0.0
        %744 = vmatprep.subr.mxu0 0.0
        %745 = vmatpush1.msra.mxu0 0.0
        %746 = vmatprep.subr.mxu0 0.0
        %747 = vmatpush1.msra.mxu0 0.0
        %748 = vmatprep.subr.mxu0 0.0
        %749 = vmatpush1.msra.mxu0 0.0
        %750 = vmatprep.subr.mxu0 0.0
        %751 = vmatpush1.msra.mxu0 0.0
        %752 = vmatprep.subr.mxu0 0.0
        %753 = vmatpush1.msra.mxu0 0.0
        %754 = vmatprep.subr.mxu0 0.0
        %755 = vmatpush1.msra.mxu0 0.0
        %756 = vmatprep.subr.mxu0 0.0
        %757 = vmatpush1.msra.mxu0 0.0
        %758 = vmatprep.subr.mxu0 0.0
        %759 = vmatpush1.msra.mxu0 0.0
        %760 = vmatprep.subr.mxu0 0.0
        %761 = vmatpush1.msra.mxu0 0.0
        %762 = vmatprep.subr.mxu0 0.0
        %763 = vmatpush1.msra.mxu0 0.0
        %764 = vmatprep.subr.mxu0 0.0
        %765 = vmatpush1.msra.mxu0 0.0
        %766 = vmatprep.subr.mxu0 0.0
        %767 = vmatpush1.msra.mxu0 0.0
        %768 = vmatprep.subr.mxu0 0.0
        %769 = vmatpush1.msra.mxu0 0.0
        %770 = vmatprep.subr.mxu0 0.0
        %771 = vmatpush1.msra.mxu0 0.0
        %772 = vmatprep.subr.mxu0 0.0
        %773 = vmatpush1.msra.mxu0 0.0
        %774 = vmatprep.subr.mxu0 0.0
        %775 = vmatpush1.msra.mxu0 0.0
        %776 = vmatprep.subr.mxu0 0.0
        %777 = vmatpush1.msra.mxu0 0.0
        %778 = vmatprep.subr.mxu0 0.0
        %779 = vmatpush1.msra.mxu0 0.0
        %780 = vmatprep.subr.mxu0 0.0
        %781 = vmatpush1.msra.mxu0 0.0
        %782 = vmatprep.subr.mxu0 0.0
        %783 = vmatpush1.msra.mxu0 0.0
        %784 = vmatprep.subr.mxu0 0.0
        %785 = vmatpush1.msra.mxu0 0.0
        %786 = vmatprep.subr.mxu0 0.0
        %787 = vmatpush1.msra.mxu0 0.0
        %788 = vmatprep.subr.mxu0 0.0
        %789 = vmatpush1.msra.mxu0 0.0
        %790 = vmatprep.mubr.f32.mxu0 0.0
        %v791 = vand.u32 %v470, 4294901760
        %v792 = vsub.f32 %v470, %v791
        %v793 = vand.u32 %v792, 4294901760
        %794 = vmatmul.mubr.f32.gmra.mrb[0].mxu0 %v793
        %v795 = vpop.f32.mrb[0].mxu0
        %v796 = vadd.f32 %v719, %v795
        %v797 = vpop.f32.mrb[0].mxu0
        %798 = vdwg.mxu0
        %799 = vmatprep.subr.mxu0 0.0
        %v800 = vand.u32 %v457, 4294901760
        %v801 = vsub.f32 %v457, %v800
        %v802 = vand.u32 %v801, 4294901760
        %803 = vmatpush1.msra.mxu0 %v802
        %804 = vmatprep.subr.mxu0 0.0
        %v805 = vand.u32 %v458, 4294901760
        %v806 = vsub.f32 %v458, %v805
        %v807 = vand.u32 %v806, 4294901760
        %808 = vmatpush1.msra.mxu0 %v807
        %809 = vmatprep.subr.mxu0 0.0
        %v810 = vand.u32 %v459, 4294901760
        %v811 = vsub.f32 %v459, %v810
        %v812 = vand.u32 %v811, 4294901760
        %813 = vmatpush1.msra.mxu0 %v812
        %814 = vmatprep.subr.mxu0 0.0
        %v815 = vand.u32 %v460, 4294901760
        %v816 = vsub.f32 %v460, %v815
        %v817 = vand.u32 %v816, 4294901760
        %818 = vmatpush1.msra.mxu0 %v817
        %819 = vmatprep.subr.mxu0 0.0
        %820 = vmatpush1.msra.mxu0 0.0
        %821 = vmatprep.subr.mxu0 0.0
        %822 = vmatpush1.msra.mxu0 0.0
        %823 = vmatprep.subr.mxu0 0.0
        %824 = vmatpush1.msra.mxu0 0.0
        %825 = vmatprep.subr.mxu0 0.0
        %826 = vmatpush1.msra.mxu0 0.0
        %827 = vmatprep.subr.mxu0 0.0
        %828 = vmatpush1.msra.mxu0 0.0
        %829 = vmatprep.subr.mxu0 0.0
        %830 = vmatpush1.msra.mxu0 0.0
        %831 = vmatprep.subr.mxu0 0.0
        %832 = vmatpush1.msra.mxu0 0.0
        %833 = vmatprep.subr.mxu0 0.0
        %834 = vmatpush1.msra.mxu0 0.0
        %835 = vmatprep.subr.mxu0 0.0
        %836 = vmatpush1.msra.mxu0 0.0
        %837 = vmatprep.subr.mxu0 0.0
        %838 = vmatpush1.msra.mxu0 0.0
        %839 = vmatprep.subr.mxu0 0.0
        %840 = vmatpush1.msra.mxu0 0.0
        %841 = vmatprep.subr.mxu0 0.0
        %842 = vmatpush1.msra.mxu0 0.0
        %843 = vmatprep.subr.mxu0 0.0
        %844 = vmatpush1.msra.mxu0 0.0
        %845 = vmatprep.subr.mxu0 0.0
        %846 = vmatpush1.msra.mxu0 0.0
        %847 = vmatprep.subr.mxu0 0.0
        %848 = vmatpush1.msra.mxu0 0.0
        %849 = vmatprep.subr.mxu0 0.0
        %850 = vmatpush1.msra.mxu0 0.0
        %851 = vmatprep.subr.mxu0 0.0
        %852 = vmatpush1.msra.mxu0 0.0
        %853 = vmatprep.subr.mxu0 0.0
        %854 = vmatpush1.msra.mxu0 0.0
        %855 = vmatprep.subr.mxu0 0.0
        %856 = vmatpush1.msra.mxu0 0.0
        %857 = vmatprep.subr.mxu0 0.0
        %858 = vmatpush1.msra.mxu0 0.0
        %859 = vmatprep.subr.mxu0 0.0
        %860 = vmatpush1.msra.mxu0 0.0
        %861 = vmatprep.subr.mxu0 0.0
        %862 = vmatpush1.msra.mxu0 0.0
        %863 = vmatprep.subr.mxu0 0.0
        %864 = vmatpush1.msra.mxu0 0.0
        %865 = vmatprep.subr.mxu0 0.0
        %866 = vmatpush1.msra.mxu0 0.0
        %867 = vmatprep.subr.mxu0 0.0
        %868 = vmatpush1.msra.mxu0 0.0
        %869 = vmatprep.subr.mxu0 0.0
        %870 = vmatpush1.msra.mxu0 0.0
        %871 = vmatprep.subr.mxu0 0.0
        %872 = vmatpush1.msra.mxu0 0.0
        %873 = vmatprep.subr.mxu0 0.0
        %874 = vmatpush1.msra.mxu0 0.0
        %875 = vmatprep.mubr.f32.mxu0 0.0
        %v876 = vand.u32 %v470, 4294901760
        %877 = vmatmul.mubr.f32.gmra.mrb[0].mxu0 %v876
        %v878 = vpop.f32.mrb[0].mxu0
        %v879 = vadd.f32 %v796, %v878
        %v880 = vpop.f32.mrb[0].mxu0
        %881 = vdwg.mxu0
        %882 = vmatprep.subr.mxu0 0.0
        %v883 = vand.u32 %v457, 4294901760
        %884 = vmatpush1.msra.mxu0 %v883
        %885 = vmatprep.subr.mxu0 0.0
        %v886 = vand.u32 %v458, 4294901760
        %887 = vmatpush1.msra.mxu0 %v886
        %888 = vmatprep.subr.mxu0 0.0
        %v889 = vand.u32 %v459, 4294901760
        %890 = vmatpush1.msra.mxu0 %v889
        %891 = vmatprep.subr.mxu0 0.0
        %v892 = vand.u32 %v460, 4294901760
        %893 = vmatpush1.msra.mxu0 %v892
        %894 = vmatprep.subr.mxu0 0.0
        %895 = vmatpush1.msra.mxu0 0.0
        %896 = vmatprep.subr.mxu0 0.0
        %897 = vmatpush1.msra.mxu0 0.0
        %898 = vmatprep.subr.mxu0 0.0
        %899 = vmatpush1.msra.mxu0 0.0
        %900 = vmatprep.subr.mxu0 0.0
        %901 = vmatpush1.msra.mxu0 0.0
        %902 = vmatprep.subr.mxu0 0.0
        %903 = vmatpush1.msra.mxu0 0.0
        %904 = vmatprep.subr.mxu0 0.0
        %905 = vmatpush1.msra.mxu0 0.0
        %906 = vmatprep.subr.mxu0 0.0
        %907 = vmatpush1.msra.mxu0 0.0
        %908 = vmatprep.subr.mxu0 0.0
        %909 = vmatpush1.msra.mxu0 0.0
        %910 = vmatprep.subr.mxu0 0.0
        %911 = vmatpush1.msra.mxu0 0.0
        %912 = vmatprep.subr.mxu0 0.0
        %913 = vmatpush1.msra.mxu0 0.0
        %914 = vmatprep.subr.mxu0 0.0
        %915 = vmatpush1.msra.mxu0 0.0
        %916 = vmatprep.subr.mxu0 0.0
        %917 = vmatpush1.msra.mxu0 0.0
        %918 = vmatprep.subr.mxu0 0.0
        %919 = vmatpush1.msra.mxu0 0.0
        %920 = vmatprep.subr.mxu0 0.0
        %921 = vmatpush1.msra.mxu0 0.0
        %922 = vmatprep.subr.mxu0 0.0
        %923 = vmatpush1.msra.mxu0 0.0
        %924 = vmatprep.subr.mxu0 0.0
        %925 = vmatpush1.msra.mxu0 0.0
        %926 = vmatprep.subr.mxu0 0.0
        %927 = vmatpush1.msra.mxu0 0.0
        %928 = vmatprep.subr.mxu0 0.0
        %929 = vmatpush1.msra.mxu0 0.0
        %930 = vmatprep.subr.mxu0 0.0
        %931 = vmatpush1.msra.mxu0 0.0
        %932 = vmatprep.subr.mxu0 0.0
        %933 = vmatpush1.msra.mxu0 0.0
        %934 = vmatprep.subr.mxu0 0.0
        %935 = vmatpush1.msra.mxu0 0.0
        %936 = vmatprep.subr.mxu0 0.0
        %937 = vmatpush1.msra.mxu0 0.0
        %938 = vmatprep.subr.mxu0 0.0
        %939 = vmatpush1.msra.mxu0 0.0
        %940 = vmatprep.subr.mxu0 0.0
        %941 = vmatpush1.msra.mxu0 0.0
        %942 = vmatprep.subr.mxu0 0.0
        %943 = vmatpush1.msra.mxu0 0.0
        %944 = vmatprep.subr.mxu0 0.0
        %945 = vmatpush1.msra.mxu0 0.0
        %946 = vmatprep.subr.mxu0 0.0
        %947 = vmatpush1.msra.mxu0 0.0
        %948 = vmatprep.subr.mxu0 0.0
        %949 = vmatpush1.msra.mxu0 0.0
        %950 = vmatprep.mubr.f32.mxu0 0.0
        %v951 = vand.u32 %v470, 4294901760
        %952 = vmatmul.mubr.f32.gmra.mrb[0].mxu0 %v951
        %v953 = vpop.f32.mrb[0].mxu0
        %v954 = vadd.f32 %v879, %v953
        %v955 = vpop.f32.mrb[0].mxu0
        %956 = vdwg.mxu0
        %v957 = vld [vmem:[%s3] sm:$0xff]
        %v958 = vld [vmem:[%s3 + $0x8] sm:$0xff]
        %v959 = vld [vmem:[%s3 + $0x10] sm:$0xff]
        %v960 = vld [vmem:[%s3 + $0x18] sm:$0xff]
        %962 = vrot.lane.b32.xlu0 %v954, 96
        %v963 = vpop.permute.xlu0 %962
        %vm964 = vcmask 64512
        %v965 = vsel %vm964, %v954, 0
        %v967 = vsel %vm964, %v963, 0
        %969 = vmatprep.subr.mxu0 0.0
        %v970 = vand.u32 %v967, 4294901760
        %971 = vmatpush1.xpose.msra.mxu0 %v970
        %972 = vmatprep.subr.mxu0 0.0
        %973 = vmatpush1.xpose.msra.mxu0 0.0
        %974 = vmatprep.subr.mxu0 0.0
        %975 = vmatpush1.xpose.msra.mxu0 0.0
        %976 = vmatprep.subr.mxu0 0.0
        %977 = vmatpush1.xpose.msra.mxu0 0.0
        %978 = vmatprep.subr.mxu0 0.0
        %979 = vmatpush1.xpose.msra.mxu0 0.0
        %980 = vmatprep.subr.mxu0 0.0
        %981 = vmatpush1.xpose.msra.mxu0 0.0
        %982 = vmatprep.subr.mxu0 0.0
        %983 = vmatpush1.xpose.msra.mxu0 0.0
        %984 = vmatprep.subr.mxu0 0.0
        %985 = vmatpush1.xpose.msra.mxu0 0.0
        %986 = vmatprep.subr.mxu0 0.0
        %987 = vmatpush1.xpose.msra.mxu0 0.0
        %988 = vmatprep.subr.mxu0 0.0
        %989 = vmatpush1.xpose.msra.mxu0 0.0
        %990 = vmatprep.subr.mxu0 0.0
        %991 = vmatpush1.xpose.msra.mxu0 0.0
        %992 = vmatprep.subr.mxu0 0.0
        %993 = vmatpush1.xpose.msra.mxu0 0.0
        %994 = vmatprep.subr.mxu0 0.0
        %995 = vmatpush1.xpose.msra.mxu0 0.0
        %996 = vmatprep.subr.mxu0 0.0
        %997 = vmatpush1.xpose.msra.mxu0 0.0
        %998 = vmatprep.subr.mxu0 0.0
        %999 = vmatpush1.xpose.msra.mxu0 0.0
        %1000 = vmatprep.subr.mxu0 0.0
        %1001 = vmatpush1.xpose.msra.mxu0 0.0
        %1002 = vmatprep.subr.mxu0 0.0
        %1003 = vmatpush1.xpose.msra.mxu0 0.0
        %1004 = vmatprep.subr.mxu0 0.0
        %1005 = vmatpush1.xpose.msra.mxu0 0.0
        %1006 = vmatprep.subr.mxu0 0.0
        %1007 = vmatpush1.xpose.msra.mxu0 0.0
        %1008 = vmatprep.subr.mxu0 0.0
        %1009 = vmatpush1.xpose.msra.mxu0 0.0
        %1010 = vmatprep.subr.mxu0 0.0
        %1011 = vmatpush1.xpose.msra.mxu0 0.0
        %1012 = vmatprep.subr.mxu0 0.0
        %1013 = vmatpush1.xpose.msra.mxu0 0.0
        %1014 = vmatprep.subr.mxu0 0.0
        %1015 = vmatpush1.xpose.msra.mxu0 0.0
        %1016 = vmatprep.subr.mxu0 0.0
        %1017 = vmatpush1.xpose.msra.mxu0 0.0
        %1018 = vmatprep.subr.mxu0 0.0
        %1019 = vmatpush1.xpose.msra.mxu0 0.0
        %1020 = vmatprep.subr.mxu0 0.0
        %1021 = vmatpush1.xpose.msra.mxu0 0.0
        %1022 = vmatprep.subr.mxu0 0.0
        %1023 = vmatpush1.xpose.msra.mxu0 0.0
        %1024 = vmatprep.subr.mxu0 0.0
        %1025 = vmatpush1.xpose.msra.mxu0 0.0
        %1026 = vmatprep.subr.mxu0 0.0
        %1027 = vmatpush1.xpose.msra.mxu0 0.0
        %1028 = vmatprep.subr.mxu0 0.0
        %1029 = vmatpush1.xpose.msra.mxu0 0.0
        %1030 = vmatprep.subr.mxu0 0.0
        %1031 = vmatpush1.xpose.msra.mxu0 0.0
        %1032 = vmatprep.subr.mxu0 0.0
        %1033 = vmatpush1.xpose.msra.mxu0 0.0
        %1034 = vmatprep.mubr.f32.mxu0 0.0
        %v1035 = vand.u32 %v965, 4294901760
        %v1036 = vsub.f32 %v965, %v1035
        %v1037 = vand.u32 %v1036, 4294901760
        %v1038 = vsub.f32 %v1036, %v1037
        %v1039 = vand.u32 %v1038, 4294901760
        %1040 = vmatmul.mubr.f32.gmra.mrb[0].mxu0 %v1039
        %v1041 = vpop.f32.mrb[0].mxu0
        %v1042 = vadd.f32 0.0, %v1041
        %v1043 = vpop.f32.mrb[0].mxu0
        %1044 = vdwg.mxu0
        %1045 = vmatprep.subr.mxu0 0.0
        %v1046 = vand.u32 %v967, 4294901760
        %v1047 = vsub.f32 %v967, %v1046
        %v1048 = vand.u32 %v1047, 4294901760
        %v1049 = vsub.f32 %v1047, %v1048
        %v1050 = vand.u32 %v1049, 4294901760
        %1051 = vmatpush1.xpose.msra.mxu0 %v1050
        %1052 = vmatprep.subr.mxu0 0.0
        %1053 = vmatpush1.xpose.msra.mxu0 0.0
        %1054 = vmatprep.subr.mxu0 0.0
        %1055 = vmatpush1.xpose.msra.mxu0 0.0
        %1056 = vmatprep.subr.mxu0 0.0
        %1057 = vmatpush1.xpose.msra.mxu0 0.0
        %1058 = vmatprep.subr.mxu0 0.0
        %1059 = vmatpush1.xpose.msra.mxu0 0.0
        %1060 = vmatprep.subr.mxu0 0.0
        %1061 = vmatpush1.xpose.msra.mxu0 0.0
        %1062 = vmatprep.subr.mxu0 0.0
        %1063 = vmatpush1.xpose.msra.mxu0 0.0
        %1064 = vmatprep.subr.mxu0 0.0
        %1065 = vmatpush1.xpose.msra.mxu0 0.0
        %1066 = vmatprep.subr.mxu0 0.0
        %1067 = vmatpush1.xpose.msra.mxu0 0.0
        %1068 = vmatprep.subr.mxu0 0.0
        %1069 = vmatpush1.xpose.msra.mxu0 0.0
        %1070 = vmatprep.subr.mxu0 0.0
        %1071 = vmatpush1.xpose.msra.mxu0 0.0
        %1072 = vmatprep.subr.mxu0 0.0
        %1073 = vmatpush1.xpose.msra.mxu0 0.0
        %1074 = vmatprep.subr.mxu0 0.0
        %1075 = vmatpush1.xpose.msra.mxu0 0.0
        %1076 = vmatprep.subr.mxu0 0.0
        %1077 = vmatpush1.xpose.msra.mxu0 0.0
        %1078 = vmatprep.subr.mxu0 0.0
        %1079 = vmatpush1.xpose.msra.mxu0 0.0
        %1080 = vmatprep.subr.mxu0 0.0
        %1081 = vmatpush1.xpose.msra.mxu0 0.0
        %1082 = vmatprep.subr.mxu0 0.0
        %1083 = vmatpush1.xpose.msra.mxu0 0.0
        %1084 = vmatprep.subr.mxu0 0.0
        %1085 = vmatpush1.xpose.msra.mxu0 0.0
        %1086 = vmatprep.subr.mxu0 0.0
        %1087 = vmatpush1.xpose.msra.mxu0 0.0
        %1088 = vmatprep.subr.mxu0 0.0
        %1089 = vmatpush1.xpose.msra.mxu0 0.0
        %1090 = vmatprep.subr.mxu0 0.0
        %1091 = vmatpush1.xpose.msra.mxu0 0.0
        %1092 = vmatprep.subr.mxu0 0.0
        %1093 = vmatpush1.xpose.msra.mxu0 0.0
        %1094 = vmatprep.subr.mxu0 0.0
        %1095 = vmatpush1.xpose.msra.mxu0 0.0
        %1096 = vmatprep.subr.mxu0 0.0
        %1097 = vmatpush1.xpose.msra.mxu0 0.0
        %1098 = vmatprep.subr.mxu0 0.0
        %1099 = vmatpush1.xpose.msra.mxu0 0.0
        %1100 = vmatprep.subr.mxu0 0.0
        %1101 = vmatpush1.xpose.msra.mxu0 0.0
        %1102 = vmatprep.subr.mxu0 0.0
        %1103 = vmatpush1.xpose.msra.mxu0 0.0
        %1104 = vmatprep.subr.mxu0 0.0
        %1105 = vmatpush1.xpose.msra.mxu0 0.0
        %1106 = vmatprep.subr.mxu0 0.0
        %1107 = vmatpush1.xpose.msra.mxu0 0.0
        %1108 = vmatprep.subr.mxu0 0.0
        %1109 = vmatpush1.xpose.msra.mxu0 0.0
        %1110 = vmatprep.subr.mxu0 0.0
        %1111 = vmatpush1.xpose.msra.mxu0 0.0
        %1112 = vmatprep.subr.mxu0 0.0
        %1113 = vmatpush1.xpose.msra.mxu0 0.0
        %1114 = vmatprep.mubr.f32.mxu0 0.0
        %v1115 = vand.u32 %v965, 4294901760
        %1116 = vmatmul.mubr.f32.gmra.mrb[0].mxu0 %v1115
        %v1117 = vpop.f32.mrb[0].mxu0
        %v1118 = vadd.f32 %v1042, %v1117
        %v1119 = vpop.f32.mrb[0].mxu0
        %1120 = vdwg.mxu0
        %1121 = vmatprep.subr.mxu0 0.0
        %v1122 = vand.u32 %v967, 4294901760
        %v1123 = vsub.f32 %v967, %v1122
        %1124 = vmatpush1.xpose.msra.mxu0 %v1123
        %1125 = vmatprep.subr.mxu0 0.0
        %1126 = vmatpush1.xpose.msra.mxu0 0.0
        %1127 = vmatprep.subr.mxu0 0.0
        %1128 = vmatpush1.xpose.msra.mxu0 0.0
        %1129 = vmatprep.subr.mxu0 0.0
        %1130 = vmatpush1.xpose.msra.mxu0 0.0
        %1131 = vmatprep.subr.mxu0 0.0
        %1132 = vmatpush1.xpose.msra.mxu0 0.0
        %1133 = vmatprep.subr.mxu0 0.0
        %1134 = vmatpush1.xpose.msra.mxu0 0.0
        %1135 = vmatprep.subr.mxu0 0.0
        %1136 = vmatpush1.xpose.msra.mxu0 0.0
        %1137 = vmatprep.subr.mxu0 0.0
        %1138 = vmatpush1.xpose.msra.mxu0 0.0
        %1139 = vmatprep.subr.mxu0 0.0
        %1140 = vmatpush1.xpose.msra.mxu0 0.0
        %1141 = vmatprep.subr.mxu0 0.0
        %1142 = vmatpush1.xpose.msra.mxu0 0.0
        %1143 = vmatprep.subr.mxu0 0.0
        %1144 = vmatpush1.xpose.msra.mxu0 0.0
        %1145 = vmatprep.subr.mxu0 0.0
        %1146 = vmatpush1.xpose.msra.mxu0 0.0
        %1147 = vmatprep.subr.mxu0 0.0
        %1148 = vmatpush1.xpose.msra.mxu0 0.0
        %1149 = vmatprep.subr.mxu0 0.0
        %1150 = vmatpush1.xpose.msra.mxu0 0.0
        %1151 = vmatprep.subr.mxu0 0.0
        %1152 = vmatpush1.xpose.msra.mxu0 0.0
        %1153 = vmatprep.subr.mxu0 0.0
        %1154 = vmatpush1.xpose.msra.mxu0 0.0
        %1155 = vmatprep.subr.mxu0 0.0
        %1156 = vmatpush1.xpose.msra.mxu0 0.0
        %1157 = vmatprep.subr.mxu0 0.0
        %1158 = vmatpush1.xpose.msra.mxu0 0.0
        %1159 = vmatprep.subr.mxu0 0.0
        %1160 = vmatpush1.xpose.msra.mxu0 0.0
        %1161 = vmatprep.subr.mxu0 0.0
        %1162 = vmatpush1.xpose.msra.mxu0 0.0
        %1163 = vmatprep.subr.mxu0 0.0
        %1164 = vmatpush1.xpose.msra.mxu0 0.0
        %1165 = vmatprep.subr.mxu0 0.0
        %1166 = vmatpush1.xpose.msra.mxu0 0.0
        %1167 = vmatprep.subr.mxu0 0.0
        %1168 = vmatpush1.xpose.msra.mxu0 0.0
        %1169 = vmatprep.subr.mxu0 0.0
        %1170 = vmatpush1.xpose.msra.mxu0 0.0
        %1171 = vmatprep.subr.mxu0 0.0
        %1172 = vmatpush1.xpose.msra.mxu0 0.0
        %1173 = vmatprep.subr.mxu0 0.0
        %1174 = vmatpush1.xpose.msra.mxu0 0.0
        %1175 = vmatprep.subr.mxu0 0.0
        %1176 = vmatpush1.xpose.msra.mxu0 0.0
        %1177 = vmatprep.subr.mxu0 0.0
        %1178 = vmatpush1.xpose.msra.mxu0 0.0
        %1179 = vmatprep.subr.mxu0 0.0
        %1180 = vmatpush1.xpose.msra.mxu0 0.0
        %1181 = vmatprep.subr.mxu0 0.0
        %1182 = vmatpush1.xpose.msra.mxu0 0.0
        %1183 = vmatprep.subr.mxu0 0.0
        %1184 = vmatpush1.xpose.msra.mxu0 0.0
        %1185 = vmatprep.subr.mxu0 0.0
        %1186 = vmatpush1.xpose.msra.mxu0 0.0
        %1187 = vmatprep.mubr.f32.mxu0 0.0
        %v1188 = vand.u32 %v965, 4294901760
        %v1189 = vsub.f32 %v965, %v1188
        %1190 = vmatmul.mubr.f32.gmra.mrb[0].mxu0 %v1189
        %v1191 = vpop.f32.mrb[0].mxu0
        %v1192 = vadd.f32 %v1118, %v1191
        %v1193 = vpop.f32.mrb[0].mxu0
        %1194 = vdwg.mxu0
        %1195 = vmatprep.subr.mxu0 0.0
        %v1196 = vand.u32 %v967, 4294901760
        %1197 = vmatpush1.xpose.msra.mxu0 %v1196
        %1198 = vmatprep.subr.mxu0 0.0
        %1199 = vmatpush1.xpose.msra.mxu0 0.0
        %1200 = vmatprep.subr.mxu0 0.0
        %1201 = vmatpush1.xpose.msra.mxu0 0.0
        %1202 = vmatprep.subr.mxu0 0.0
        %1203 = vmatpush1.xpose.msra.mxu0 0.0
        %1204 = vmatprep.subr.mxu0 0.0
        %1205 = vmatpush1.xpose.msra.mxu0 0.0
        %1206 = vmatprep.subr.mxu0 0.0
        %1207 = vmatpush1.xpose.msra.mxu0 0.0
        %1208 = vmatprep.subr.mxu0 0.0
        %1209 = vmatpush1.xpose.msra.mxu0 0.0
        %1210 = vmatprep.subr.mxu0 0.0
        %1211 = vmatpush1.xpose.msra.mxu0 0.0
        %1212 = vmatprep.subr.mxu0 0.0
        %1213 = vmatpush1.xpose.msra.mxu0 0.0
        %1214 = vmatprep.subr.mxu0 0.0
        %1215 = vmatpush1.xpose.msra.mxu0 0.0
        %1216 = vmatprep.subr.mxu0 0.0
        %1217 = vmatpush1.xpose.msra.mxu0 0.0
        %1218 = vmatprep.subr.mxu0 0.0
        %1219 = vmatpush1.xpose.msra.mxu0 0.0
        %1220 = vmatprep.subr.mxu0 0.0
        %1221 = vmatpush1.xpose.msra.mxu0 0.0
        %1222 = vmatprep.subr.mxu0 0.0
        %1223 = vmatpush1.xpose.msra.mxu0 0.0
        %1224 = vmatprep.subr.mxu0 0.0
        %1225 = vmatpush1.xpose.msra.mxu0 0.0
        %1226 = vmatprep.subr.mxu0 0.0
        %1227 = vmatpush1.xpose.msra.mxu0 0.0
        %1228 = vmatprep.subr.mxu0 0.0
        %1229 = vmatpush1.xpose.msra.mxu0 0.0
        %1230 = vmatprep.subr.mxu0 0.0
        %1231 = vmatpush1.xpose.msra.mxu0 0.0
        %1232 = vmatprep.subr.mxu0 0.0
        %1233 = vmatpush1.xpose.msra.mxu0 0.0
        %1234 = vmatprep.subr.mxu0 0.0
        %1235 = vmatpush1.xpose.msra.mxu0 0.0
        %1236 = vmatprep.subr.mxu0 0.0
        %1237 = vmatpush1.xpose.msra.mxu0 0.0
        %1238 = vmatprep.subr.mxu0 0.0
        %1239 = vmatpush1.xpose.msra.mxu0 0.0
        %1240 = vmatprep.subr.mxu0 0.0
        %1241 = vmatpush1.xpose.msra.mxu0 0.0
        %1242 = vmatprep.subr.mxu0 0.0
        %1243 = vmatpush1.xpose.msra.mxu0 0.0
        %1244 = vmatprep.subr.mxu0 0.0
        %1245 = vmatpush1.xpose.msra.mxu0 0.0
        %1246 = vmatprep.subr.mxu0 0.0
        %1247 = vmatpush1.xpose.msra.mxu0 0.0
        %1248 = vmatprep.subr.mxu0 0.0
        %1249 = vmatpush1.xpose.msra.mxu0 0.0
        %1250 = vmatprep.subr.mxu0 0.0
        %1251 = vmatpush1.xpose.msra.mxu0 0.0
        %1252 = vmatprep.subr.mxu0 0.0
        %1253 = vmatpush1.xpose.msra.mxu0 0.0
        %1254 = vmatprep.subr.mxu0 0.0
        %1255 = vmatpush1.xpose.msra.mxu0 0.0
        %1256 = vmatprep.subr.mxu0 0.0
        %1257 = vmatpush1.xpose.msra.mxu0 0.0
        %1258 = vmatprep.subr.mxu0 0.0
        %1259 = vmatpush1.xpose.msra.mxu0 0.0
        %1260 = vmatprep.mubr.f32.mxu0 0.0
        %v1261 = vand.u32 %v965, 4294901760
        %v1262 = vsub.f32 %v965, %v1261
        %v1263 = vand.u32 %v1262, 4294901760
        %1264 = vmatmul.mubr.f32.gmra.mrb[0].mxu0 %v1263
        %v1265 = vpop.f32.mrb[0].mxu0
        %v1266 = vadd.f32 %v1192, %v1265
        %v1267 = vpop.f32.mrb[0].mxu0
        %1268 = vdwg.mxu0
        %1269 = vmatprep.subr.mxu0 0.0
        %v1270 = vand.u32 %v967, 4294901760
        %v1271 = vsub.f32 %v967, %v1270
        %v1272 = vand.u32 %v1271, 4294901760
        %1273 = vmatpush1.xpose.msra.mxu0 %v1272
        %1274 = vmatprep.subr.mxu0 0.0
        %1275 = vmatpush1.xpose.msra.mxu0 0.0
        %1276 = vmatprep.subr.mxu0 0.0
        %1277 = vmatpush1.xpose.msra.mxu0 0.0
        %1278 = vmatprep.subr.mxu0 0.0
        %1279 = vmatpush1.xpose.msra.mxu0 0.0
        %1280 = vmatprep.subr.mxu0 0.0
        %1281 = vmatpush1.xpose.msra.mxu0 0.0
        %1282 = vmatprep.subr.mxu0 0.0
        %1283 = vmatpush1.xpose.msra.mxu0 0.0
        %1284 = vmatprep.subr.mxu0 0.0
        %1285 = vmatpush1.xpose.msra.mxu0 0.0
        %1286 = vmatprep.subr.mxu0 0.0
        %1287 = vmatpush1.xpose.msra.mxu0 0.0
        %1288 = vmatprep.subr.mxu0 0.0
        %1289 = vmatpush1.xpose.msra.mxu0 0.0
        %1290 = vmatprep.subr.mxu0 0.0
        %1291 = vmatpush1.xpose.msra.mxu0 0.0
        %1292 = vmatprep.subr.mxu0 0.0
        %1293 = vmatpush1.xpose.msra.mxu0 0.0
        %1294 = vmatprep.subr.mxu0 0.0
        %1295 = vmatpush1.xpose.msra.mxu0 0.0
        %1296 = vmatprep.subr.mxu0 0.0
        %1297 = vmatpush1.xpose.msra.mxu0 0.0
        %1298 = vmatprep.subr.mxu0 0.0
        %1299 = vmatpush1.xpose.msra.mxu0 0.0
        %1300 = vmatprep.subr.mxu0 0.0
        %1301 = vmatpush1.xpose.msra.mxu0 0.0
        %1302 = vmatprep.subr.mxu0 0.0
        %1303 = vmatpush1.xpose.msra.mxu0 0.0
        %1304 = vmatprep.subr.mxu0 0.0
        %1305 = vmatpush1.xpose.msra.mxu0 0.0
        %1306 = vmatprep.subr.mxu0 0.0
        %1307 = vmatpush1.xpose.msra.mxu0 0.0
        %1308 = vmatprep.subr.mxu0 0.0
        %1309 = vmatpush1.xpose.msra.mxu0 0.0
        %1310 = vmatprep.subr.mxu0 0.0
        %1311 = vmatpush1.xpose.msra.mxu0 0.0
        %1312 = vmatprep.subr.mxu0 0.0
        %1313 = vmatpush1.xpose.msra.mxu0 0.0
        %1314 = vmatprep.subr.mxu0 0.0
        %1315 = vmatpush1.xpose.msra.mxu0 0.0
        %1316 = vmatprep.subr.mxu0 0.0
        %1317 = vmatpush1.xpose.msra.mxu0 0.0
        %1318 = vmatprep.subr.mxu0 0.0
        %1319 = vmatpush1.xpose.msra.mxu0 0.0
        %1320 = vmatprep.subr.mxu0 0.0
        %1321 = vmatpush1.xpose.msra.mxu0 0.0
        %1322 = vmatprep.subr.mxu0 0.0
        %1323 = vmatpush1.xpose.msra.mxu0 0.0
        %1324 = vmatprep.subr.mxu0 0.0
        %1325 = vmatpush1.xpose.msra.mxu0 0.0
        %1326 = vmatprep.subr.mxu0 0.0
        %1327 = vmatpush1.xpose.msra.mxu0 0.0
        %1328 = vmatprep.subr.mxu0 0.0
        %1329 = vmatpush1.xpose.msra.mxu0 0.0
        %1330 = vmatprep.subr.mxu0 0.0
        %1331 = vmatpush1.xpose.msra.mxu0 0.0
        %1332 = vmatprep.subr.mxu0 0.0
        %1333 = vmatpush1.xpose.msra.mxu0 0.0
        %1334 = vmatprep.subr.mxu0 0.0
        %1335 = vmatpush1.xpose.msra.mxu0 0.0
        %1336 = vmatprep.mubr.f32.mxu0 0.0
        %v1337 = vand.u32 %v965, 4294901760
        %1338 = vmatmul.mubr.f32.gmra.mrb[0].mxu0 %v1337
        %v1339 = vpop.f32.mrb[0].mxu0
        %v1340 = vadd.f32 %v1266, %v1339
        %v1341 = vpop.f32.mrb[0].mxu0
        %1342 = vdwg.mxu0
        %1343 = vmatprep.subr.mxu0 0.0
        %v1344 = vand.u32 %v967, 4294901760
        %1345 = vmatpush1.xpose.msra.mxu0 %v1344
        %1346 = vmatprep.subr.mxu0 0.0
        %1347 = vmatpush1.xpose.msra.mxu0 0.0
        %1348 = vmatprep.subr.mxu0 0.0
        %1349 = vmatpush1.xpose.msra.mxu0 0.0
        %1350 = vmatprep.subr.mxu0 0.0
        %1351 = vmatpush1.xpose.msra.mxu0 0.0
        %1352 = vmatprep.subr.mxu0 0.0
        %1353 = vmatpush1.xpose.msra.mxu0 0.0
        %1354 = vmatprep.subr.mxu0 0.0
        %1355 = vmatpush1.xpose.msra.mxu0 0.0
        %1356 = vmatprep.subr.mxu0 0.0
        %1357 = vmatpush1.xpose.msra.mxu0 0.0
        %1358 = vmatprep.subr.mxu0 0.0
        %1359 = vmatpush1.xpose.msra.mxu0 0.0
        %1360 = vmatprep.subr.mxu0 0.0
        %1361 = vmatpush1.xpose.msra.mxu0 0.0
        %1362 = vmatprep.subr.mxu0 0.0
        %1363 = vmatpush1.xpose.msra.mxu0 0.0
        %1364 = vmatprep.subr.mxu0 0.0
        %1365 = vmatpush1.xpose.msra.mxu0 0.0
        %1366 = vmatprep.subr.mxu0 0.0
        %1367 = vmatpush1.xpose.msra.mxu0 0.0
        %1368 = vmatprep.subr.mxu0 0.0
        %1369 = vmatpush1.xpose.msra.mxu0 0.0
        %1370 = vmatprep.subr.mxu0 0.0
        %1371 = vmatpush1.xpose.msra.mxu0 0.0
        %1372 = vmatprep.subr.mxu0 0.0
        %1373 = vmatpush1.xpose.msra.mxu0 0.0
        %1374 = vmatprep.subr.mxu0 0.0
        %1375 = vmatpush1.xpose.msra.mxu0 0.0
        %1376 = vmatprep.subr.mxu0 0.0
        %1377 = vmatpush1.xpose.msra.mxu0 0.0
        %1378 = vmatprep.subr.mxu0 0.0
        %1379 = vmatpush1.xpose.msra.mxu0 0.0
        %1380 = vmatprep.subr.mxu0 0.0
        %1381 = vmatpush1.xpose.msra.mxu0 0.0
        %1382 = vmatprep.subr.mxu0 0.0
        %1383 = vmatpush1.xpose.msra.mxu0 0.0
        %1384 = vmatprep.subr.mxu0 0.0
        %1385 = vmatpush1.xpose.msra.mxu0 0.0
        %1386 = vmatprep.subr.mxu0 0.0
        %1387 = vmatpush1.xpose.msra.mxu0 0.0
        %1388 = vmatprep.subr.mxu0 0.0
        %1389 = vmatpush1.xpose.msra.mxu0 0.0
        %1390 = vmatprep.subr.mxu0 0.0
        %1391 = vmatpush1.xpose.msra.mxu0 0.0
        %1392 = vmatprep.subr.mxu0 0.0
        %1393 = vmatpush1.xpose.msra.mxu0 0.0
        %1394 = vmatprep.subr.mxu0 0.0
        %1395 = vmatpush1.xpose.msra.mxu0 0.0
        %1396 = vmatprep.subr.mxu0 0.0
        %1397 = vmatpush1.xpose.msra.mxu0 0.0
        %1398 = vmatprep.subr.mxu0 0.0
        %1399 = vmatpush1.xpose.msra.mxu0 0.0
        %1400 = vmatprep.subr.mxu0 0.0
        %1401 = vmatpush1.xpose.msra.mxu0 0.0
        %1402 = vmatprep.subr.mxu0 0.0
        %1403 = vmatpush1.xpose.msra.mxu0 0.0
        %1404 = vmatprep.subr.mxu0 0.0
        %1405 = vmatpush1.xpose.msra.mxu0 0.0
        %1406 = vmatprep.subr.mxu0 0.0
        %1407 = vmatpush1.xpose.msra.mxu0 0.0
        %1408 = vmatprep.mubr.f32.mxu0 0.0
        %v1409 = vand.u32 %v965, 4294901760
        %1410 = vmatmul.mubr.f32.gmra.mrb[0].mxu0 %v1409
        %v1411 = vpop.f32.mrb[0].mxu0
        %v1412 = vadd.f32 %v1340, %v1411
        %v1413 = vpop.f32.mrb[0].mxu0
        %1414 = vdwg.mxu0
        %v1415 = vsel %vm964, %v1412, -inf
        %1416 = vmax.xlane.f32.xlu0 %v1415
        %v1417 = vpop.xlane.xlu0 %1416
        %v1418 = vsub.f32 %v1412, %v1417
        %v1419 = vmul.f32 %v1418, 1.442695
        %v1420 = vpow.pop %v1419
        %v1421 = vsel %vm964, %v1420, 0.0
        %1422 = vadd.xlane.f32.xlu0 %v1421
        %v1423 = vpop.xlane.xlu0 %1422
        %v1424 = vrcp.pop %v1423
        %v1425 = vmul.f32 %v1420, %v1424
        %1426 = vrot.lane.b32.xlu0 %v954, 64
        %v1427 = vpop.permute.xlu0 %1426
        %v1430 = vsel %vm964, %v1425, 0
        %1432 = vmatprep.subr.mxu0 0.0
        %v1433 = vand.u32 %v1427, 4294901760
        %1434 = vmatpush1.msra.mxu0 %v1433
        %1435 = vmatprep.subr.mxu0 0.0
        %1436 = vmatpush1.msra.mxu0 0.0
        %1437 = vmatprep.subr.mxu0 0.0
        %1438 = vmatpush1.msra.mxu0 0.0
        %1439 = vmatprep.subr.mxu0 0.0
        %1440 = vmatpush1.msra.mxu0 0.0
        %1441 = vmatprep.subr.mxu0 0.0
        %1442 = vmatpush1.msra.mxu0 0.0
        %1443 = vmatprep.subr.mxu0 0.0
        %1444 = vmatpush1.msra.mxu0 0.0
        %1445 = vmatprep.subr.mxu0 0.0
        %1446 = vmatpush1.msra.mxu0 0.0
        %1447 = vmatprep.subr.mxu0 0.0
        %1448 = vmatpush1.msra.mxu0 0.0
        %1449 = vmatprep.subr.mxu0 0.0
        %1450 = vmatpush1.msra.mxu0 0.0
        %1451 = vmatprep.subr.mxu0 0.0
        %1452 = vmatpush1.msra.mxu0 0.0
        %1453 = vmatprep.subr.mxu0 0.0
        %1454 = vmatpush1.msra.mxu0 0.0
        %1455 = vmatprep.subr.mxu0 0.0
        %1456 = vmatpush1.msra.mxu0 0.0
        %1457 = vmatprep.subr.mxu0 0.0
        %1458 = vmatpush1.msra.mxu0 0.0
        %1459 = vmatprep.subr.mxu0 0.0
        %1460 = vmatpush1.msra.mxu0 0.0
        %1461 = vmatprep.subr.mxu0 0.0
        %1462 = vmatpush1.msra.mxu0 0.0
        %1463 = vmatprep.subr.mxu0 0.0
        %1464 = vmatpush1.msra.mxu0 0.0
        %1465 = vmatprep.subr.mxu0 0.0
        %1466 = vmatpush1.msra.mxu0 0.0
        %1467 = vmatprep.subr.mxu0 0.0
        %1468 = vmatpush1.msra.mxu0 0.0
        %1469 = vmatprep.subr.mxu0 0.0
        %1470 = vmatpush1.msra.mxu0 0.0
        %1471 = vmatprep.subr.mxu0 0.0
        %1472 = vmatpush1.msra.mxu0 0.0
        %1473 = vmatprep.subr.mxu0 0.0
        %1474 = vmatpush1.msra.mxu0 0.0
        %1475 = vmatprep.subr.mxu0 0.0
        %1476 = vmatpush1.msra.mxu0 0.0
        %1477 = vmatprep.subr.mxu0 0.0
        %1478 = vmatpush1.msra.mxu0 0.0
        %1479 = vmatprep.subr.mxu0 0.0
        %1480 = vmatpush1.msra.mxu0 0.0
        %1481 = vmatprep.subr.mxu0 0.0
        %1482 = vmatpush1.msra.mxu0 0.0
        %1483 = vmatprep.subr.mxu0 0.0
        %1484 = vmatpush1.msra.mxu0 0.0
        %1485 = vmatprep.subr.mxu0 0.0
        %1486 = vmatpush1.msra.mxu0 0.0
        %1487 = vmatprep.subr.mxu0 0.0
        %1488 = vmatpush1.msra.mxu0 0.0
        %1489 = vmatprep.subr.mxu0 0.0
        %1490 = vmatpush1.msra.mxu0 0.0
        %1491 = vmatprep.subr.mxu0 0.0
        %1492 = vmatpush1.msra.mxu0 0.0
        %1493 = vmatprep.subr.mxu0 0.0
        %1494 = vmatpush1.msra.mxu0 0.0
        %1495 = vmatprep.subr.mxu0 0.0
        %1496 = vmatpush1.msra.mxu0 0.0
        %1497 = vmatprep.mubr.f32.mxu0 0.0
        %v1498 = vand.u32 %v1430, 4294901760
        %v1499 = vsub.f32 %v1430, %v1498
        %v1500 = vand.u32 %v1499, 4294901760
        %v1501 = vsub.f32 %v1499, %v1500
        %v1502 = vand.u32 %v1501, 4294901760
        %1503 = vmatmul.mubr.f32.gmra.mrb[0].mxu0 %v1502
        %v1504 = vpop.f32.mrb[0].mxu0
        %v1505 = vadd.f32 0.0, %v1504
        %v1506 = vpop.f32.mrb[0].mxu0
        %1507 = vdwg.mxu0
        %1508 = vmatprep.subr.mxu0 0.0
        %v1509 = vand.u32 %v1427, 4294901760
        %v1510 = vsub.f32 %v1427, %v1509
        %v1511 = vand.u32 %v1510, 4294901760
        %v1512 = vsub.f32 %v1510, %v1511
        %v1513 = vand.u32 %v1512, 4294901760
        %1514 = vmatpush1.msra.mxu0 %v1513
        %1515 = vmatprep.subr.mxu0 0.0
        %1516 = vmatpush1.msra.mxu0 0.0
        %1517 = vmatprep.subr.mxu0 0.0
        %1518 = vmatpush1.msra.mxu0 0.0
        %1519 = vmatprep.subr.mxu0 0.0
        %1520 = vmatpush1.msra.mxu0 0.0
        %1521 = vmatprep.subr.mxu0 0.0
        %1522 = vmatpush1.msra.mxu0 0.0
        %1523 = vmatprep.subr.mxu0 0.0
        %1524 = vmatpush1.msra.mxu0 0.0
        %1525 = vmatprep.subr.mxu0 0.0
        %1526 = vmatpush1.msra.mxu0 0.0
        %1527 = vmatprep.subr.mxu0 0.0
        %1528 = vmatpush1.msra.mxu0 0.0
        %1529 = vmatprep.subr.mxu0 0.0
        %1530 = vmatpush1.msra.mxu0 0.0
        %1531 = vmatprep.subr.mxu0 0.0
        %1532 = vmatpush1.msra.mxu0 0.0
        %1533 = vmatprep.subr.mxu0 0.0
        %1534 = vmatpush1.msra.mxu0 0.0
        %1535 = vmatprep.subr.mxu0 0.0
        %1536 = vmatpush1.msra.mxu0 0.0
        %1537 = vmatprep.subr.mxu0 0.0
        %1538 = vmatpush1.msra.mxu0 0.0
        %1539 = vmatprep.subr.mxu0 0.0
        %1540 = vmatpush1.msra.mxu0 0.0
        %1541 = vmatprep.subr.mxu0 0.0
        %1542 = vmatpush1.msra.mxu0 0.0
        %1543 = vmatprep.subr.mxu0 0.0
        %1544 = vmatpush1.msra.mxu0 0.0
        %1545 = vmatprep.subr.mxu0 0.0
        %1546 = vmatpush1.msra.mxu0 0.0
        %1547 = vmatprep.subr.mxu0 0.0
        %1548 = vmatpush1.msra.mxu0 0.0
        %1549 = vmatprep.subr.mxu0 0.0
        %1550 = vmatpush1.msra.mxu0 0.0
        %1551 = vmatprep.subr.mxu0 0.0
        %1552 = vmatpush1.msra.mxu0 0.0
        %1553 = vmatprep.subr.mxu0 0.0
        %1554 = vmatpush1.msra.mxu0 0.0
        %1555 = vmatprep.subr.mxu0 0.0
        %1556 = vmatpush1.msra.mxu0 0.0
        %1557 = vmatprep.subr.mxu0 0.0
        %1558 = vmatpush1.msra.mxu0 0.0
        %1559 = vmatprep.subr.mxu0 0.0
        %1560 = vmatpush1.msra.mxu0 0.0
        %1561 = vmatprep.subr.mxu0 0.0
        %1562 = vmatpush1.msra.mxu0 0.0
        %1563 = vmatprep.subr.mxu0 0.0
        %1564 = vmatpush1.msra.mxu0 0.0
        %1565 = vmatprep.subr.mxu0 0.0
        %1566 = vmatpush1.msra.mxu0 0.0
        %1567 = vmatprep.subr.mxu0 0.0
        %1568 = vmatpush1.msra.mxu0 0.0
        %1569 = vmatprep.subr.mxu0 0.0
        %1570 = vmatpush1.msra.mxu0 0.0
        %1571 = vmatprep.subr.mxu0 0.0
        %1572 = vmatpush1.msra.mxu0 0.0
        %1573 = vmatprep.subr.mxu0 0.0
        %1574 = vmatpush1.msra.mxu0 0.0
        %1575 = vmatprep.subr.mxu0 0.0
        %1576 = vmatpush1.msra.mxu0 0.0
        %1577 = vmatprep.mubr.f32.mxu0 0.0
        %v1578 = vand.u32 %v1430, 4294901760
        %1579 = vmatmul.mubr.f32.gmra.mrb[0].mxu0 %v1578
        %v1580 = vpop.f32.mrb[0].mxu0
        %v1581 = vadd.f32 %v1505, %v1580
        %v1582 = vpop.f32.mrb[0].mxu0
        %1583 = vdwg.mxu0
        %1584 = vmatprep.subr.mxu0 0.0
        %v1585 = vand.u32 %v1427, 4294901760
        %v1586 = vsub.f32 %v1427, %v1585
        %1587 = vmatpush1.msra.mxu0 %v1586
        %1588 = vmatprep.subr.mxu0 0.0
        %1589 = vmatpush1.msra.mxu0 0.0
        %1590 = vmatprep.subr.mxu0 0.0
        %1591 = vmatpush1.msra.mxu0 0.0
        %1592 = vmatprep.subr.mxu0 0.0
        %1593 = vmatpush1.msra.mxu0 0.0
        %1594 = vmatprep.subr.mxu0 0.0
        %1595 = vmatpush1.msra.mxu0 0.0
        %1596 = vmatprep.subr.mxu0 0.0
        %1597 = vmatpush1.msra.mxu0 0.0
        %1598 = vmatprep.subr.mxu0 0.0
        %1599 = vmatpush1.msra.mxu0 0.0
        %1600 = vmatprep.subr.mxu0 0.0
        %1601 = vmatpush1.msra.mxu0 0.0
        %1602 = vmatprep.subr.mxu0 0.0
        %1603 = vmatpush1.msra.mxu0 0.0
        %1604 = vmatprep.subr.mxu0 0.0
        %1605 = vmatpush1.msra.mxu0 0.0
        %1606 = vmatprep.subr.mxu0 0.0
        %1607 = vmatpush1.msra.mxu0 0.0
        %1608 = vmatprep.subr.mxu0 0.0
        %1609 = vmatpush1.msra.mxu0 0.0
        %1610 = vmatprep.subr.mxu0 0.0
        %1611 = vmatpush1.msra.mxu0 0.0
        %1612 = vmatprep.subr.mxu0 0.0
        %1613 = vmatpush1.msra.mxu0 0.0
        %1614 = vmatprep.subr.mxu0 0.0
        %1615 = vmatpush1.msra.mxu0 0.0
        %1616 = vmatprep.subr.mxu0 0.0
        %1617 = vmatpush1.msra.mxu0 0.0
        %1618 = vmatprep.subr.mxu0 0.0
        %1619 = vmatpush1.msra.mxu0 0.0
        %1620 = vmatprep.subr.mxu0 0.0
        %1621 = vmatpush1.msra.mxu0 0.0
        %1622 = vmatprep.subr.mxu0 0.0
        %1623 = vmatpush1.msra.mxu0 0.0
        %1624 = vmatprep.subr.mxu0 0.0
        %1625 = vmatpush1.msra.mxu0 0.0
        %1626 = vmatprep.subr.mxu0 0.0
        %1627 = vmatpush1.msra.mxu0 0.0
        %1628 = vmatprep.subr.mxu0 0.0
        %1629 = vmatpush1.msra.mxu0 0.0
        %1630 = vmatprep.subr.mxu0 0.0
        %1631 = vmatpush1.msra.mxu0 0.0
        %1632 = vmatprep.subr.mxu0 0.0
        %1633 = vmatpush1.msra.mxu0 0.0
        %1634 = vmatprep.subr.mxu0 0.0
        %1635 = vmatpush1.msra.mxu0 0.0
        %1636 = vmatprep.subr.mxu0 0.0
        %1637 = vmatpush1.msra.mxu0 0.0
        %1638 = vmatprep.subr.mxu0 0.0
        %1639 = vmatpush1.msra.mxu0 0.0
        %1640 = vmatprep.subr.mxu0 0.0
        %1641 = vmatpush1.msra.mxu0 0.0
        %1642 = vmatprep.subr.mxu0 0.0
        %1643 = vmatpush1.msra.mxu0 0.0
        %1644 = vmatprep.subr.mxu0 0.0
        %1645 = vmatpush1.msra.mxu0 0.0
        %1646 = vmatprep.subr.mxu0 0.0
        %1647 = vmatpush1.msra.mxu0 0.0
        %1648 = vmatprep.subr.mxu0 0.0
        %1649 = vmatpush1.msra.mxu0 0.0
        %1650 = vmatprep.mubr.f32.mxu0 0.0
        %v1651 = vand.u32 %v1430, 4294901760
        %v1652 = vsub.f32 %v1430, %v1651
        %1653 = vmatmul.mubr.f32.gmra.mrb[0].mxu0 %v1652
        %v1654 = vpop.f32.mrb[0].mxu0
        %v1655 = vadd.f32 %v1581, %v1654
        %v1656 = vpop.f32.mrb[0].mxu0
        %1657 = vdwg.mxu0
        %1658 = vmatprep.subr.mxu0 0.0
        %v1659 = vand.u32 %v1427, 4294901760
        %1660 = vmatpush1.msra.mxu0 %v1659
        %1661 = vmatprep.subr.mxu0 0.0
        %1662 = vmatpush1.msra.mxu0 0.0
        %1663 = vmatprep.subr.mxu0 0.0
        %1664 = vmatpush1.msra.mxu0 0.0
        %1665 = vmatprep.subr.mxu0 0.0
        %1666 = vmatpush1.msra.mxu0 0.0
        %1667 = vmatprep.subr.mxu0 0.0
        %1668 = vmatpush1.msra.mxu0 0.0
        %1669 = vmatprep.subr.mxu0 0.0
        %1670 = vmatpush1.msra.mxu0 0.0
        %1671 = vmatprep.subr.mxu0 0.0
        %1672 = vmatpush1.msra.mxu0 0.0
        %1673 = vmatprep.subr.mxu0 0.0
        %1674 = vmatpush1.msra.mxu0 0.0
        %1675 = vmatprep.subr.mxu0 0.0
        %1676 = vmatpush1.msra.mxu0 0.0
        %1677 = vmatprep.subr.mxu0 0.0
        %1678 = vmatpush1.msra.mxu0 0.0
        %1679 = vmatprep.subr.mxu0 0.0
        %1680 = vmatpush1.msra.mxu0 0.0
        %1681 = vmatprep.subr.mxu0 0.0
        %1682 = vmatpush1.msra.mxu0 0.0
        %1683 = vmatprep.subr.mxu0 0.0
        %1684 = vmatpush1.msra.mxu0 0.0
        %1685 = vmatprep.subr.mxu0 0.0
        %1686 = vmatpush1.msra.mxu0 0.0
        %1687 = vmatprep.subr.mxu0 0.0
        %1688 = vmatpush1.msra.mxu0 0.0
        %1689 = vmatprep.subr.mxu0 0.0
        %1690 = vmatpush1.msra.mxu0 0.0
        %1691 = vmatprep.subr.mxu0 0.0
        %1692 = vmatpush1.msra.mxu0 0.0
        %1693 = vmatprep.subr.mxu0 0.0
        %1694 = vmatpush1.msra.mxu0 0.0
        %1695 = vmatprep.subr.mxu0 0.0
        %1696 = vmatpush1.msra.mxu0 0.0
        %1697 = vmatprep.subr.mxu0 0.0
        %1698 = vmatpush1.msra.mxu0 0.0
        %1699 = vmatprep.subr.mxu0 0.0
        %1700 = vmatpush1.msra.mxu0 0.0
        %1701 = vmatprep.subr.mxu0 0.0
        %1702 = vmatpush1.msra.mxu0 0.0
        %1703 = vmatprep.subr.mxu0 0.0
        %1704 = vmatpush1.msra.mxu0 0.0
        %1705 = vmatprep.subr.mxu0 0.0
        %1706 = vmatpush1.msra.mxu0 0.0
        %1707 = vmatprep.subr.mxu0 0.0
        %1708 = vmatpush1.msra.mxu0 0.0
        %1709 = vmatprep.subr.mxu0 0.0
        %1710 = vmatpush1.msra.mxu0 0.0
        %1711 = vmatprep.subr.mxu0 0.0
        %1712 = vmatpush1.msra.mxu0 0.0
        %1713 = vmatprep.subr.mxu0 0.0
        %1714 = vmatpush1.msra.mxu0 0.0
        %1715 = vmatprep.subr.mxu0 0.0
        %1716 = vmatpush1.msra.mxu0 0.0
        %1717 = vmatprep.subr.mxu0 0.0
        %1718 = vmatpush1.msra.mxu0 0.0
        %1719 = vmatprep.subr.mxu0 0.0
        %1720 = vmatpush1.msra.mxu0 0.0
        %1721 = vmatprep.subr.mxu0 0.0
        %1722 = vmatpush1.msra.mxu0 0.0
        %1723 = vmatprep.mubr.f32.mxu0 0.0
        %v1724 = vand.u32 %v1430, 4294901760
        %v1725 = vsub.f32 %v1430, %v1724
        %v1726 = vand.u32 %v1725, 4294901760
        %1727 = vmatmul.mubr.f32.gmra.mrb[0].mxu0 %v1726
        %v1728 = vpop.f32.mrb[0].mxu0
        %v1729 = vadd.f32 %v1655, %v1728
        %v1730 = vpop.f32.mrb[0].mxu0
        %1731 = vdwg.mxu0
        %1732 = vmatprep.subr.mxu0 0.0
        %v1733 = vand.u32 %v1427, 4294901760
        %v1734 = vsub.f32 %v1427, %v1733
        %v1735 = vand.u32 %v1734, 4294901760
        %1736 = vmatpush1.msra.mxu0 %v1735
        %1737 = vmatprep.subr.mxu0 0.0
        %1738 = vmatpush1.msra.mxu0 0.0
        %1739 = vmatprep.subr.mxu0 0.0
        %1740 = vmatpush1.msra.mxu0 0.0
        %1741 = vmatprep.subr.mxu0 0.0
        %1742 = vmatpush1.msra.mxu0 0.0
        %1743 = vmatprep.subr.mxu0 0.0
        %1744 = vmatpush1.msra.mxu0 0.0
        %1745 = vmatprep.subr.mxu0 0.0
        %1746 = vmatpush1.msra.mxu0 0.0
        %1747 = vmatprep.subr.mxu0 0.0
        %1748 = vmatpush1.msra.mxu0 0.0
        %1749 = vmatprep.subr.mxu0 0.0
        %1750 = vmatpush1.msra.mxu0 0.0
        %1751 = vmatprep.subr.mxu0 0.0
        %1752 = vmatpush1.msra.mxu0 0.0
        %1753 = vmatprep.subr.mxu0 0.0
        %1754 = vmatpush1.msra.mxu0 0.0
        %1755 = vmatprep.subr.mxu0 0.0
        %1756 = vmatpush1.msra.mxu0 0.0
        %1757 = vmatprep.subr.mxu0 0.0
        %1758 = vmatpush1.msra.mxu0 0.0
        %1759 = vmatprep.subr.mxu0 0.0
        %1760 = vmatpush1.msra.mxu0 0.0
        %1761 = vmatprep.subr.mxu0 0.0
        %1762 = vmatpush1.msra.mxu0 0.0
        %1763 = vmatprep.subr.mxu0 0.0
        %1764 = vmatpush1.msra.mxu0 0.0
        %1765 = vmatprep.subr.mxu0 0.0
        %1766 = vmatpush1.msra.mxu0 0.0
        %1767 = vmatprep.subr.mxu0 0.0
        %1768 = vmatpush1.msra.mxu0 0.0
        %1769 = vmatprep.subr.mxu0 0.0
        %1770 = vmatpush1.msra.mxu0 0.0
        %1771 = vmatprep.subr.mxu0 0.0
        %1772 = vmatpush1.msra.mxu0 0.0
        %1773 = vmatprep.subr.mxu0 0.0
        %1774 = vmatpush1.msra.mxu0 0.0
        %1775 = vmatprep.subr.mxu0 0.0
        %1776 = vmatpush1.msra.mxu0 0.0
        %1777 = vmatprep.subr.mxu0 0.0
        %1778 = vmatpush1.msra.mxu0 0.0
        %1779 = vmatprep.subr.mxu0 0.0
        %1780 = vmatpush1.msra.mxu0 0.0
        %1781 = vmatprep.subr.mxu0 0.0
        %1782 = vmatpush1.msra.mxu0 0.0
        %1783 = vmatprep.subr.mxu0 0.0
        %1784 = vmatpush1.msra.mxu0 0.0
        %1785 = vmatprep.subr.mxu0 0.0
        %1786 = vmatpush1.msra.mxu0 0.0
        %1787 = vmatprep.subr.mxu0 0.0
        %1788 = vmatpush1.msra.mxu0 0.0
        %1789 = vmatprep.subr.mxu0 0.0
        %1790 = vmatpush1.msra.mxu0 0.0
        %1791 = vmatprep.subr.mxu0 0.0
        %1792 = vmatpush1.msra.mxu0 0.0
        %1793 = vmatprep.subr.mxu0 0.0
        %1794 = vmatpush1.msra.mxu0 0.0
        %1795 = vmatprep.subr.mxu0 0.0
        %1796 = vmatpush1.msra.mxu0 0.0
        %1797 = vmatprep.subr.mxu0 0.0
        %1798 = vmatpush1.msra.mxu0 0.0
        %1799 = vmatprep.mubr.f32.mxu0 0.0
        %v1800 = vand.u32 %v1430, 4294901760
        %1801 = vmatmul.mubr.f32.gmra.mrb[0].mxu0 %v1800
        %v1802 = vpop.f32.mrb[0].mxu0
        %v1803 = vadd.f32 %v1729, %v1802
        %v1804 = vpop.f32.mrb[0].mxu0
        %1805 = vdwg.mxu0
        %1806 = vmatprep.subr.mxu0 0.0
        %v1807 = vand.u32 %v1427, 4294901760
        %1808 = vmatpush1.msra.mxu0 %v1807
        %1809 = vmatprep.subr.mxu0 0.0
        %1810 = vmatpush1.msra.mxu0 0.0
        %1811 = vmatprep.subr.mxu0 0.0
        %1812 = vmatpush1.msra.mxu0 0.0
        %1813 = vmatprep.subr.mxu0 0.0
        %1814 = vmatpush1.msra.mxu0 0.0
        %1815 = vmatprep.subr.mxu0 0.0
        %1816 = vmatpush1.msra.mxu0 0.0
        %1817 = vmatprep.subr.mxu0 0.0
        %1818 = vmatpush1.msra.mxu0 0.0
        %1819 = vmatprep.subr.mxu0 0.0
        %1820 = vmatpush1.msra.mxu0 0.0
        %1821 = vmatprep.subr.mxu0 0.0
        %1822 = vmatpush1.msra.mxu0 0.0
        %1823 = vmatprep.subr.mxu0 0.0
        %1824 = vmatpush1.msra.mxu0 0.0
        %1825 = vmatprep.subr.mxu0 0.0
        %1826 = vmatpush1.msra.mxu0 0.0
        %1827 = vmatprep.subr.mxu0 0.0
        %1828 = vmatpush1.msra.mxu0 0.0
        %1829 = vmatprep.subr.mxu0 0.0
        %1830 = vmatpush1.msra.mxu0 0.0
        %1831 = vmatprep.subr.mxu0 0.0
        %1832 = vmatpush1.msra.mxu0 0.0
        %1833 = vmatprep.subr.mxu0 0.0
        %1834 = vmatpush1.msra.mxu0 0.0
        %1835 = vmatprep.subr.mxu0 0.0
        %1836 = vmatpush1.msra.mxu0 0.0
        %1837 = vmatprep.subr.mxu0 0.0
        %1838 = vmatpush1.msra.mxu0 0.0
        %1839 = vmatprep.subr.mxu0 0.0
        %1840 = vmatpush1.msra.mxu0 0.0
        %1841 = vmatprep.subr.mxu0 0.0
        %1842 = vmatpush1.msra.mxu0 0.0
        %1843 = vmatprep.subr.mxu0 0.0
        %1844 = vmatpush1.msra.mxu0 0.0
        %1845 = vmatprep.subr.mxu0 0.0
        %1846 = vmatpush1.msra.mxu0 0.0
        %1847 = vmatprep.subr.mxu0 0.0
        %1848 = vmatpush1.msra.mxu0 0.0
        %1849 = vmatprep.subr.mxu0 0.0
        %1850 = vmatpush1.msra.mxu0 0.0
        %1851 = vmatprep.subr.mxu0 0.0
        %1852 = vmatpush1.msra.mxu0 0.0
        %1853 = vmatprep.subr.mxu0 0.0
        %1854 = vmatpush1.msra.mxu0 0.0
        %1855 = vmatprep.subr.mxu0 0.0
        %1856 = vmatpush1.msra.mxu0 0.0
        %1857 = vmatprep.subr.mxu0 0.0
        %1858 = vmatpush1.msra.mxu0 0.0
        %1859 = vmatprep.subr.mxu0 0.0
        %1860 = vmatpush1.msra.mxu0 0.0
        %1861 = vmatprep.subr.mxu0 0.0
        %1862 = vmatpush1.msra.mxu0 0.0
        %1863 = vmatprep.subr.mxu0 0.0
        %1864 = vmatpush1.msra.mxu0 0.0
        %1865 = vmatprep.subr.mxu0 0.0
        %1866 = vmatpush1.msra.mxu0 0.0
        %1867 = vmatprep.subr.mxu0 0.0
        %1868 = vmatpush1.msra.mxu0 0.0
        %1869 = vmatprep.subr.mxu0 0.0
        %1870 = vmatpush1.msra.mxu0 0.0
        %1871 = vmatprep.mubr.f32.mxu0 0.0
        %v1872 = vand.u32 %v1430, 4294901760
        %1873 = vmatmul.mubr.f32.gmra.mrb[0].mxu0 %v1872
        %v1874 = vpop.f32.mrb[0].mxu0
        %v1875 = vadd.f32 %v1803, %v1874
        %v1876 = vpop.f32.mrb[0].mxu0
        %1877 = vdwg.mxu0
        %1878 = vrot.lane.b32.xlu0 %v954, 120
        %v1879 = vpop.permute.xlu0 %1878
        %1880 = vrot.lane.b32.xlu0 %v954, 88
        %v1881 = vpop.permute.xlu0 %1880
        %v1882 = vsel %vm964, %v1879, 0
        %v1884 = vsel %vm964, %v1881, 0
        %1886 = vmatprep.subr.mxu0 0.0
        %v1887 = vand.u32 %v1884, 4294901760
        %1888 = vmatpush1.xpose.msra.mxu0 %v1887
        %1889 = vmatprep.subr.mxu0 0.0
        %1890 = vmatpush1.xpose.msra.mxu0 0.0
        %1891 = vmatprep.subr.mxu0 0.0
        %1892 = vmatpush1.xpose.msra.mxu0 0.0
        %1893 = vmatprep.subr.mxu0 0.0
        %1894 = vmatpush1.xpose.msra.mxu0 0.0
        %1895 = vmatprep.subr.mxu0 0.0
        %1896 = vmatpush1.xpose.msra.mxu0 0.0
        %1897 = vmatprep.subr.mxu0 0.0
        %1898 = vmatpush1.xpose.msra.mxu0 0.0
        %1899 = vmatprep.subr.mxu0 0.0
        %1900 = vmatpush1.xpose.msra.mxu0 0.0
        %1901 = vmatprep.subr.mxu0 0.0
        %1902 = vmatpush1.xpose.msra.mxu0 0.0
        %1903 = vmatprep.subr.mxu0 0.0
        %1904 = vmatpush1.xpose.msra.mxu0 0.0
        %1905 = vmatprep.subr.mxu0 0.0
        %1906 = vmatpush1.xpose.msra.mxu0 0.0
        %1907 = vmatprep.subr.mxu0 0.0
        %1908 = vmatpush1.xpose.msra.mxu0 0.0
        %1909 = vmatprep.subr.mxu0 0.0
        %1910 = vmatpush1.xpose.msra.mxu0 0.0
        %1911 = vmatprep.subr.mxu0 0.0
        %1912 = vmatpush1.xpose.msra.mxu0 0.0
        %1913 = vmatprep.subr.mxu0 0.0
        %1914 = vmatpush1.xpose.msra.mxu0 0.0
        %1915 = vmatprep.subr.mxu0 0.0
        %1916 = vmatpush1.xpose.msra.mxu0 0.0
        %1917 = vmatprep.subr.mxu0 0.0
        %1918 = vmatpush1.xpose.msra.mxu0 0.0
        %1919 = vmatprep.subr.mxu0 0.0
        %1920 = vmatpush1.xpose.msra.mxu0 0.0
        %1921 = vmatprep.subr.mxu0 0.0
        %1922 = vmatpush1.xpose.msra.mxu0 0.0
        %1923 = vmatprep.subr.mxu0 0.0
        %1924 = vmatpush1.xpose.msra.mxu0 0.0
        %1925 = vmatprep.subr.mxu0 0.0
        %1926 = vmatpush1.xpose.msra.mxu0 0.0
        %1927 = vmatprep.subr.mxu0 0.0
        %1928 = vmatpush1.xpose.msra.mxu0 0.0
        %1929 = vmatprep.subr.mxu0 0.0
        %1930 = vmatpush1.xpose.msra.mxu0 0.0
        %1931 = vmatprep.subr.mxu0 0.0
        %1932 = vmatpush1.xpose.msra.mxu0 0.0
        %1933 = vmatprep.subr.mxu0 0.0
        %1934 = vmatpush1.xpose.msra.mxu0 0.0
        %1935 = vmatprep.subr.mxu0 0.0
        %1936 = vmatpush1.xpose.msra.mxu0 0.0
        %1937 = vmatprep.subr.mxu0 0.0
        %1938 = vmatpush1.xpose.msra.mxu0 0.0
        %1939 = vmatprep.subr.mxu0 0.0
        %1940 = vmatpush1.xpose.msra.mxu0 0.0
        %1941 = vmatprep.subr.mxu0 0.0
        %1942 = vmatpush1.xpose.msra.mxu0 0.0
        %1943 = vmatprep.subr.mxu0 0.0
        %1944 = vmatpush1.xpose.msra.mxu0 0.0
        %1945 = vmatprep.subr.mxu0 0.0
        %1946 = vmatpush1.xpose.msra.mxu0 0.0
        %1947 = vmatprep.subr.mxu0 0.0
        %1948 = vmatpush1.xpose.msra.mxu0 0.0
        %1949 = vmatprep.subr.mxu0 0.0
        %1950 = vmatpush1.xpose.msra.mxu0 0.0
        %1951 = vmatprep.mubr.f32.mxu0 0.0
        %v1952 = vand.u32 %v1882, 4294901760
        %v1953 = vsub.f32 %v1882, %v1952
        %v1954 = vand.u32 %v1953, 4294901760
        %v1955 = vsub.f32 %v1953, %v1954
        %v1956 = vand.u32 %v1955, 4294901760
        %1957 = vmatmul.mubr.f32.gmra.mrb[0].mxu0 %v1956
        %v1958 = vpop.f32.mrb[0].mxu0
        %v1959 = vadd.f32 0.0, %v1958
        %v1960 = vpop.f32.mrb[0].mxu0
        %1961 = vdwg.mxu0
        %1962 = vmatprep.subr.mxu0 0.0
        %v1963 = vand.u32 %v1884, 4294901760
        %v1964 = vsub.f32 %v1884, %v1963
        %v1965 = vand.u32 %v1964, 4294901760
        %v1966 = vsub.f32 %v1964, %v1965
        %v1967 = vand.u32 %v1966, 4294901760
        %1968 = vmatpush1.xpose.msra.mxu0 %v1967
        %1969 = vmatprep.subr.mxu0 0.0
        %1970 = vmatpush1.xpose.msra.mxu0 0.0
        %1971 = vmatprep.subr.mxu0 0.0
        %1972 = vmatpush1.xpose.msra.mxu0 0.0
        %1973 = vmatprep.subr.mxu0 0.0
        %1974 = vmatpush1.xpose.msra.mxu0 0.0
        %1975 = vmatprep.subr.mxu0 0.0
        %1976 = vmatpush1.xpose.msra.mxu0 0.0
        %1977 = vmatprep.subr.mxu0 0.0
        %1978 = vmatpush1.xpose.msra.mxu0 0.0
        %1979 = vmatprep.subr.mxu0 0.0
        %1980 = vmatpush1.xpose.msra.mxu0 0.0
        %1981 = vmatprep.subr.mxu0 0.0
        %1982 = vmatpush1.xpose.msra.mxu0 0.0
        %1983 = vmatprep.subr.mxu0 0.0
        %1984 = vmatpush1.xpose.msra.mxu0 0.0
        %1985 = vmatprep.subr.mxu0 0.0
        %1986 = vmatpush1.xpose.msra.mxu0 0.0
        %1987 = vmatprep.subr.mxu0 0.0
        %1988 = vmatpush1.xpose.msra.mxu0 0.0
        %1989 = vmatprep.subr.mxu0 0.0
        %1990 = vmatpush1.xpose.msra.mxu0 0.0
        %1991 = vmatprep.subr.mxu0 0.0
        %1992 = vmatpush1.xpose.msra.mxu0 0.0
        %1993 = vmatprep.subr.mxu0 0.0
        %1994 = vmatpush1.xpose.msra.mxu0 0.0
        %1995 = vmatprep.subr.mxu0 0.0
        %1996 = vmatpush1.xpose.msra.mxu0 0.0
        %1997 = vmatprep.subr.mxu0 0.0
        %1998 = vmatpush1.xpose.msra.mxu0 0.0
        %1999 = vmatprep.subr.mxu0 0.0
        %2000 = vmatpush1.xpose.msra.mxu0 0.0
        %2001 = vmatprep.subr.mxu0 0.0
        %2002 = vmatpush1.xpose.msra.mxu0 0.0
        %2003 = vmatprep.subr.mxu0 0.0
        %2004 = vmatpush1.xpose.msra.mxu0 0.0
        %2005 = vmatprep.subr.mxu0 0.0
        %2006 = vmatpush1.xpose.msra.mxu0 0.0
        %2007 = vmatprep.subr.mxu0 0.0
        %2008 = vmatpush1.xpose.msra.mxu0 0.0
        %2009 = vmatprep.subr.mxu0 0.0
        %2010 = vmatpush1.xpose.msra.mxu0 0.0
        %2011 = vmatprep.subr.mxu0 0.0
        %2012 = vmatpush1.xpose.msra.mxu0 0.0
        %2013 = vmatprep.subr.mxu0 0.0
        %2014 = vmatpush1.xpose.msra.mxu0 0.0
        %2015 = vmatprep.subr.mxu0 0.0
        %2016 = vmatpush1.xpose.msra.mxu0 0.0
        %2017 = vmatprep.subr.mxu0 0.0
        %2018 = vmatpush1.xpose.msra.mxu0 0.0
        %2019 = vmatprep.subr.mxu0 0.0
        %2020 = vmatpush1.xpose.msra.mxu0 0.0
        %2021 = vmatprep.subr.mxu0 0.0
        %2022 = vmatpush1.xpose.msra.mxu0 0.0
        %2023 = vmatprep.subr.mxu0 0.0
        %2024 = vmatpush1.xpose.msra.mxu0 0.0
        %2025 = vmatprep.subr.mxu0 0.0
        %2026 = vmatpush1.xpose.msra.mxu0 0.0
        %2027 = vmatprep.subr.mxu0 0.0
        %2028 = vmatpush1.xpose.msra.mxu0 0.0
        %2029 = vmatprep.subr.mxu0 0.0
        %2030 = vmatpush1.xpose.msra.mxu0 0.0
        %2031 = vmatprep.mubr.f32.mxu0 0.0
        %v2032 = vand.u32 %v1882, 4294901760
        %2033 = vmatmul.mubr.f32.gmra.mrb[0].mxu0 %v2032
        %v2034 = vpop.f32.mrb[0].mxu0
        %v2035 = vadd.f32 %v1959, %v2034
        %v2036 = vpop.f32.mrb[0].mxu0
        %2037 = vdwg.mxu0
        %2038 = vmatprep.subr.mxu0 0.0
        %v2039 = vand.u32 %v1884, 4294901760
        %v2040 = vsub.f32 %v1884, %v2039
        %2041 = vmatpush1.xpose.msra.mxu0 %v2040
        %2042 = vmatprep.subr.mxu0 0.0
        %2043 = vmatpush1.xpose.msra.mxu0 0.0
        %2044 = vmatprep.subr.mxu0 0.0
        %2045 = vmatpush1.xpose.msra.mxu0 0.0
        %2046 = vmatprep.subr.mxu0 0.0
        %2047 = vmatpush1.xpose.msra.mxu0 0.0
        %2048 = vmatprep.subr.mxu0 0.0
        %2049 = vmatpush1.xpose.msra.mxu0 0.0
        %2050 = vmatprep.subr.mxu0 0.0
        %2051 = vmatpush1.xpose.msra.mxu0 0.0
        %2052 = vmatprep.subr.mxu0 0.0
        %2053 = vmatpush1.xpose.msra.mxu0 0.0
        %2054 = vmatprep.subr.mxu0 0.0
        %2055 = vmatpush1.xpose.msra.mxu0 0.0
        %2056 = vmatprep.subr.mxu0 0.0
        %2057 = vmatpush1.xpose.msra.mxu0 0.0
        %2058 = vmatprep.subr.mxu0 0.0
        %2059 = vmatpush1.xpose.msra.mxu0 0.0
        %2060 = vmatprep.subr.mxu0 0.0
        %2061 = vmatpush1.xpose.msra.mxu0 0.0
        %2062 = vmatprep.subr.mxu0 0.0
        %2063 = vmatpush1.xpose.msra.mxu0 0.0
        %2064 = vmatprep.subr.mxu0 0.0
        %2065 = vmatpush1.xpose.msra.mxu0 0.0
        %2066 = vmatprep.subr.mxu0 0.0
        %2067 = vmatpush1.xpose.msra.mxu0 0.0
        %2068 = vmatprep.subr.mxu0 0.0
        %2069 = vmatpush1.xpose.msra.mxu0 0.0
        %2070 = vmatprep.subr.mxu0 0.0
        %2071 = vmatpush1.xpose.msra.mxu0 0.0
        %2072 = vmatprep.subr.mxu0 0.0
        %2073 = vmatpush1.xpose.msra.mxu0 0.0
        %2074 = vmatprep.subr.mxu0 0.0
        %2075 = vmatpush1.xpose.msra.mxu0 0.0
        %2076 = vmatprep.subr.mxu0 0.0
        %2077 = vmatpush1.xpose.msra.mxu0 0.0
        %2078 = vmatprep.subr.mxu0 0.0
        %2079 = vmatpush1.xpose.msra.mxu0 0.0
        %2080 = vmatprep.subr.mxu0 0.0
        %2081 = vmatpush1.xpose.msra.mxu0 0.0
        %2082 = vmatprep.subr.mxu0 0.0
        %2083 = vmatpush1.xpose.msra.mxu0 0.0
        %2084 = vmatprep.subr.mxu0 0.0
        %2085 = vmatpush1.xpose.msra.mxu0 0.0
        %2086 = vmatprep.subr.mxu0 0.0
        %2087 = vmatpush1.xpose.msra.mxu0 0.0
        %2088 = vmatprep.subr.mxu0 0.0
        %2089 = vmatpush1.xpose.msra.mxu0 0.0
        %2090 = vmatprep.subr.mxu0 0.0
        %2091 = vmatpush1.xpose.msra.mxu0 0.0
        %2092 = vmatprep.subr.mxu0 0.0
        %2093 = vmatpush1.xpose.msra.mxu0 0.0
        %2094 = vmatprep.subr.mxu0 0.0
        %2095 = vmatpush1.xpose.msra.mxu0 0.0
        %2096 = vmatprep.subr.mxu0 0.0
        %2097 = vmatpush1.xpose.msra.mxu0 0.0
        %2098 = vmatprep.subr.mxu0 0.0
        %2099 = vmatpush1.xpose.msra.mxu0 0.0
        %2100 = vmatprep.subr.mxu0 0.0
        %2101 = vmatpush1.xpose.msra.mxu0 0.0
        %2102 = vmatprep.subr.mxu0 0.0
        %2103 = vmatpush1.xpose.msra.mxu0 0.0
        %2104 = vmatprep.mubr.f32.mxu0 0.0
        %v2105 = vand.u32 %v1882, 4294901760
        %v2106 = vsub.f32 %v1882, %v2105
        %2107 = vmatmul.mubr.f32.gmra.mrb[0].mxu0 %v2106
        %v2108 = vpop.f32.mrb[0].mxu0
        %v2109 = vadd.f32 %v2035, %v2108
        %v2110 = vpop.f32.mrb[0].mxu0
        %2111 = vdwg.mxu0
        %2112 = vmatprep.subr.mxu0 0.0
        %v2113 = vand.u32 %v1884, 4294901760
        %2114 = vmatpush1.xpose.msra.mxu0 %v2113
        %2115 = vmatprep.subr.mxu0 0.0
        %2116 = vmatpush1.xpose.msra.mxu0 0.0
        %2117 = vmatprep.subr.mxu0 0.0
        %2118 = vmatpush1.xpose.msra.mxu0 0.0
        %2119 = vmatprep.subr.mxu0 0.0
        %2120 = vmatpush1.xpose.msra.mxu0 0.0
        %2121 = vmatprep.subr.mxu0 0.0
        %2122 = vmatpush1.xpose.msra.mxu0 0.0
        %2123 = vmatprep.subr.mxu0 0.0
        %2124 = vmatpush1.xpose.msra.mxu0 0.0
        %2125 = vmatprep.subr.mxu0 0.0
        %2126 = vmatpush1.xpose.msra.mxu0 0.0
        %2127 = vmatprep.subr.mxu0 0.0
        %2128 = vmatpush1.xpose.msra.mxu0 0.0
        %2129 = vmatprep.subr.mxu0 0.0
        %2130 = vmatpush1.xpose.msra.mxu0 0.0
        %2131 = vmatprep.subr.mxu0 0.0
        %2132 = vmatpush1.xpose.msra.mxu0 0.0
        %2133 = vmatprep.subr.mxu0 0.0
        %2134 = vmatpush1.xpose.msra.mxu0 0.0
        %2135 = vmatprep.subr.mxu0 0.0
        %2136 = vmatpush1.xpose.msra.mxu0 0.0
        %2137 = vmatprep.subr.mxu0 0.0
        %2138 = vmatpush1.xpose.msra.mxu0 0.0
        %2139 = vmatprep.subr.mxu0 0.0
        %2140 = vmatpush1.xpose.msra.mxu0 0.0
        %2141 = vmatprep.subr.mxu0 0.0
        %2142 = vmatpush1.xpose.msra.mxu0 0.0
        %2143 = vmatprep.subr.mxu0 0.0
        %2144 = vmatpush1.xpose.msra.mxu0 0.0
        %2145 = vmatprep.subr.mxu0 0.0
        %2146 = vmatpush1.xpose.msra.mxu0 0.0
        %2147 = vmatprep.subr.mxu0 0.0
        %2148 = vmatpush1.xpose.msra.mxu0 0.0
        %2149 = vmatprep.subr.mxu0 0.0
        %2150 = vmatpush1.xpose.msra.mxu0 0.0
        %2151 = vmatprep.subr.mxu0 0.0
        %2152 = vmatpush1.xpose.msra.mxu0 0.0
        %2153 = vmatprep.subr.mxu0 0.0
        %2154 = vmatpush1.xpose.msra.mxu0 0.0
        %2155 = vmatprep.subr.mxu0 0.0
        %2156 = vmatpush1.xpose.msra.mxu0 0.0
        %2157 = vmatprep.subr.mxu0 0.0
        %2158 = vmatpush1.xpose.msra.mxu0 0.0
        %2159 = vmatprep.subr.mxu0 0.0
        %2160 = vmatpush1.xpose.msra.mxu0 0.0
        %2161 = vmatprep.subr.mxu0 0.0
        %2162 = vmatpush1.xpose.msra.mxu0 0.0
        %2163 = vmatprep.subr.mxu0 0.0
        %2164 = vmatpush1.xpose.msra.mxu0 0.0
        %2165 = vmatprep.subr.mxu0 0.0
        %2166 = vmatpush1.xpose.msra.mxu0 0.0
        %2167 = vmatprep.subr.mxu0 0.0
        %2168 = vmatpush1.xpose.msra.mxu0 0.0
        %2169 = vmatprep.subr.mxu0 0.0
        %2170 = vmatpush1.xpose.msra.mxu0 0.0
        %2171 = vmatprep.subr.mxu0 0.0
        %2172 = vmatpush1.xpose.msra.mxu0 0.0
        %2173 = vmatprep.subr.mxu0 0.0
        %2174 = vmatpush1.xpose.msra.mxu0 0.0
        %2175 = vmatprep.subr.mxu0 0.0
        %2176 = vmatpush1.xpose.msra.mxu0 0.0
        %2177 = vmatprep.mubr.f32.mxu0 0.0
        %v2178 = vand.u32 %v1882, 4294901760
        %v2179 = vsub.f32 %v1882, %v2178
        %v2180 = vand.u32 %v2179, 4294901760
        %2181 = vmatmul.mubr.f32.gmra.mrb[0].mxu0 %v2180
        %v2182 = vpop.f32.mrb[0].mxu0
        %v2183 = vadd.f32 %v2109, %v2182
        %v2184 = vpop.f32.mrb[0].mxu0
        %2185 = vdwg.mxu0
        %2186 = vmatprep.subr.mxu0 0.0
        %v2187 = vand.u32 %v1884, 4294901760
        %v2188 = vsub.f32 %v1884, %v2187
        %v2189 = vand.u32 %v2188, 4294901760
        %2190 = vmatpush1.xpose.msra.mxu0 %v2189
        %2191 = vmatprep.subr.mxu0 0.0
        %2192 = vmatpush1.xpose.msra.mxu0 0.0
        %2193 = vmatprep.subr.mxu0 0.0
        %2194 = vmatpush1.xpose.msra.mxu0 0.0
        %2195 = vmatprep.subr.mxu0 0.0
        %2196 = vmatpush1.xpose.msra.mxu0 0.0
        %2197 = vmatprep.subr.mxu0 0.0
        %2198 = vmatpush1.xpose.msra.mxu0 0.0
        %2199 = vmatprep.subr.mxu0 0.0
        %2200 = vmatpush1.xpose.msra.mxu0 0.0
        %2201 = vmatprep.subr.mxu0 0.0
        %2202 = vmatpush1.xpose.msra.mxu0 0.0
        %2203 = vmatprep.subr.mxu0 0.0
        %2204 = vmatpush1.xpose.msra.mxu0 0.0
        %2205 = vmatprep.subr.mxu0 0.0
        %2206 = vmatpush1.xpose.msra.mxu0 0.0
        %2207 = vmatprep.subr.mxu0 0.0
        %2208 = vmatpush1.xpose.msra.mxu0 0.0
        %2209 = vmatprep.subr.mxu0 0.0
        %2210 = vmatpush1.xpose.msra.mxu0 0.0
        %2211 = vmatprep.subr.mxu0 0.0
        %2212 = vmatpush1.xpose.msra.mxu0 0.0
        %2213 = vmatprep.subr.mxu0 0.0
        %2214 = vmatpush1.xpose.msra.mxu0 0.0
        %2215 = vmatprep.subr.mxu0 0.0
        %2216 = vmatpush1.xpose.msra.mxu0 0.0
        %2217 = vmatprep.subr.mxu0 0.0
        %2218 = vmatpush1.xpose.msra.mxu0 0.0
        %2219 = vmatprep.subr.mxu0 0.0
        %2220 = vmatpush1.xpose.msra.mxu0 0.0
        %2221 = vmatprep.subr.mxu0 0.0
        %2222 = vmatpush1.xpose.msra.mxu0 0.0
        %2223 = vmatprep.subr.mxu0 0.0
        %2224 = vmatpush1.xpose.msra.mxu0 0.0
        %2225 = vmatprep.subr.mxu0 0.0
        %2226 = vmatpush1.xpose.msra.mxu0 0.0
        %2227 = vmatprep.subr.mxu0 0.0
        %2228 = vmatpush1.xpose.msra.mxu0 0.0
        %2229 = vmatprep.subr.mxu0 0.0
        %2230 = vmatpush1.xpose.msra.mxu0 0.0
        %2231 = vmatprep.subr.mxu0 0.0
        %2232 = vmatpush1.xpose.msra.mxu0 0.0
        %2233 = vmatprep.subr.mxu0 0.0
        %2234 = vmatpush1.xpose.msra.mxu0 0.0
        %2235 = vmatprep.subr.mxu0 0.0
        %2236 = vmatpush1.xpose.msra.mxu0 0.0
        %2237 = vmatprep.subr.mxu0 0.0
        %2238 = vmatpush1.xpose.msra.mxu0 0.0
        %2239 = vmatprep.subr.mxu0 0.0
        %2240 = vmatpush1.xpose.msra.mxu0 0.0
        %2241 = vmatprep.subr.mxu0 0.0
        %2242 = vmatpush1.xpose.msra.mxu0 0.0
        %2243 = vmatprep.subr.mxu0 0.0
        %2244 = vmatpush1.xpose.msra.mxu0 0.0
        %2245 = vmatprep.subr.mxu0 0.0
        %2246 = vmatpush1.xpose.msra.mxu0 0.0
        %2247 = vmatprep.subr.mxu0 0.0
        %2248 = vmatpush1.xpose.msra.mxu0 0.0
        %2249 = vmatprep.subr.mxu0 0.0
        %2250 = vmatpush1.xpose.msra.mxu0 0.0
        %2251 = vmatprep.subr.mxu0 0.0
        %2252 = vmatpush1.xpose.msra.mxu0 0.0
        %2253 = vmatprep.mubr.f32.mxu0 0.0
        %v2254 = vand.u32 %v1882, 4294901760
        %2255 = vmatmul.mubr.f32.gmra.mrb[0].mxu0 %v2254
        %v2256 = vpop.f32.mrb[0].mxu0
        %v2257 = vadd.f32 %v2183, %v2256
        %v2258 = vpop.f32.mrb[0].mxu0
        %2259 = vdwg.mxu0
        %2260 = vmatprep.subr.mxu0 0.0
        %v2261 = vand.u32 %v1884, 4294901760
        %2262 = vmatpush1.xpose.msra.mxu0 %v2261
        %2263 = vmatprep.subr.mxu0 0.0
        %2264 = vmatpush1.xpose.msra.mxu0 0.0
        %2265 = vmatprep.subr.mxu0 0.0
        %2266 = vmatpush1.xpose.msra.mxu0 0.0
        %2267 = vmatprep.subr.mxu0 0.0
        %2268 = vmatpush1.xpose.msra.mxu0 0.0
        %2269 = vmatprep.subr.mxu0 0.0
        %2270 = vmatpush1.xpose.msra.mxu0 0.0
        %2271 = vmatprep.subr.mxu0 0.0
        %2272 = vmatpush1.xpose.msra.mxu0 0.0
        %2273 = vmatprep.subr.mxu0 0.0
        %2274 = vmatpush1.xpose.msra.mxu0 0.0
        %2275 = vmatprep.subr.mxu0 0.0
        %2276 = vmatpush1.xpose.msra.mxu0 0.0
        %2277 = vmatprep.subr.mxu0 0.0
        %2278 = vmatpush1.xpose.msra.mxu0 0.0
        %2279 = vmatprep.subr.mxu0 0.0
        %2280 = vmatpush1.xpose.msra.mxu0 0.0
        %2281 = vmatprep.subr.mxu0 0.0
        %2282 = vmatpush1.xpose.msra.mxu0 0.0
        %2283 = vmatprep.subr.mxu0 0.0
        %2284 = vmatpush1.xpose.msra.mxu0 0.0
        %2285 = vmatprep.subr.mxu0 0.0
        %2286 = vmatpush1.xpose.msra.mxu0 0.0
        %2287 = vmatprep.subr.mxu0 0.0
        %2288 = vmatpush1.xpose.msra.mxu0 0.0
        %2289 = vmatprep.subr.mxu0 0.0
        %2290 = vmatpush1.xpose.msra.mxu0 0.0
        %2291 = vmatprep.subr.mxu0 0.0
        %2292 = vmatpush1.xpose.msra.mxu0 0.0
        %2293 = vmatprep.subr.mxu0 0.0
        %2294 = vmatpush1.xpose.msra.mxu0 0.0
        %2295 = vmatprep.subr.mxu0 0.0
        %2296 = vmatpush1.xpose.msra.mxu0 0.0
        %2297 = vmatprep.subr.mxu0 0.0
        %2298 = vmatpush1.xpose.msra.mxu0 0.0
        %2299 = vmatprep.subr.mxu0 0.0
        %2300 = vmatpush1.xpose.msra.mxu0 0.0
        %2301 = vmatprep.subr.mxu0 0.0
        %2302 = vmatpush1.xpose.msra.mxu0 0.0
        %2303 = vmatprep.subr.mxu0 0.0
        %2304 = vmatpush1.xpose.msra.mxu0 0.0
        %2305 = vmatprep.subr.mxu0 0.0
        %2306 = vmatpush1.xpose.msra.mxu0 0.0
        %2307 = vmatprep.subr.mxu0 0.0
        %2308 = vmatpush1.xpose.msra.mxu0 0.0
        %2309 = vmatprep.subr.mxu0 0.0
        %2310 = vmatpush1.xpose.msra.mxu0 0.0
        %2311 = vmatprep.subr.mxu0 0.0
        %2312 = vmatpush1.xpose.msra.mxu0 0.0
        %2313 = vmatprep.subr.mxu0 0.0
        %2314 = vmatpush1.xpose.msra.mxu0 0.0
        %2315 = vmatprep.subr.mxu0 0.0
        %2316 = vmatpush1.xpose.msra.mxu0 0.0
        %2317 = vmatprep.subr.mxu0 0.0
        %2318 = vmatpush1.xpose.msra.mxu0 0.0
        %2319 = vmatprep.subr.mxu0 0.0
        %2320 = vmatpush1.xpose.msra.mxu0 0.0
        %2321 = vmatprep.subr.mxu0 0.0
        %2322 = vmatpush1.xpose.msra.mxu0 0.0
        %2323 = vmatprep.subr.mxu0 0.0
        %2324 = vmatpush1.xpose.msra.mxu0 0.0
        %2325 = vmatprep.mubr.f32.mxu0 0.0
        %v2326 = vand.u32 %v1882, 4294901760
        %2327 = vmatmul.mubr.f32.gmra.mrb[0].mxu0 %v2326
        %v2328 = vpop.f32.mrb[0].mxu0
        %v2329 = vadd.f32 %v2257, %v2328
        %v2330 = vpop.f32.mrb[0].mxu0
        %2331 = vdwg.mxu0
        %v2332 = vsel %vm964, %v2329, -inf
        %2333 = vmax.xlane.f32.xlu0 %v2332
        %v2334 = vpop.xlane.xlu0 %2333
        %v2335 = vsub.f32 %v2329, %v2334
        %v2336 = vmul.f32 %v2335, 1.442695
        %v2337 = vpow.pop %v2336
        %v2338 = vsel %vm964, %v2337, 0.0
        %2339 = vadd.xlane.f32.xlu0 %v2338
        %v2340 = vpop.xlane.xlu0 %2339
        %v2341 = vrcp.pop %v2340
        %v2342 = vmul.f32 %v2337, %v2341
        %2343 = vrot.lane.b32.xlu0 %v954, 56
        %v2344 = vpop.permute.xlu0 %2343
        %v2347 = vsel %vm964, %v2342, 0
        %2349 = vmatprep.subr.mxu0 0.0
        %v2350 = vand.u32 %v2344, 4294901760
        %2351 = vmatpush1.msra.mxu0 %v2350
        %2352 = vmatprep.subr.mxu0 0.0
        %2353 = vmatpush1.msra.mxu0 0.0
        %2354 = vmatprep.subr.mxu0 0.0
        %2355 = vmatpush1.msra.mxu0 0.0
        %2356 = vmatprep.subr.mxu0 0.0
        %2357 = vmatpush1.msra.mxu0 0.0
        %2358 = vmatprep.subr.mxu0 0.0
        %2359 = vmatpush1.msra.mxu0 0.0
        %2360 = vmatprep.subr.mxu0 0.0
        %2361 = vmatpush1.msra.mxu0 0.0
        %2362 = vmatprep.subr.mxu0 0.0
        %2363 = vmatpush1.msra.mxu0 0.0
        %2364 = vmatprep.subr.mxu0 0.0
        %2365 = vmatpush1.msra.mxu0 0.0
        %2366 = vmatprep.subr.mxu0 0.0
        %2367 = vmatpush1.msra.mxu0 0.0
        %2368 = vmatprep.subr.mxu0 0.0
        %2369 = vmatpush1.msra.mxu0 0.0
        %2370 = vmatprep.subr.mxu0 0.0
        %2371 = vmatpush1.msra.mxu0 0.0
        %2372 = vmatprep.subr.mxu0 0.0
        %2373 = vmatpush1.msra.mxu0 0.0
        %2374 = vmatprep.subr.mxu0 0.0
        %2375 = vmatpush1.msra.mxu0 0.0
        %2376 = vmatprep.subr.mxu0 0.0
        %2377 = vmatpush1.msra.mxu0 0.0
        %2378 = vmatprep.subr.mxu0 0.0
        %2379 = vmatpush1.msra.mxu0 0.0
        %2380 = vmatprep.subr.mxu0 0.0
        %2381 = vmatpush1.msra.mxu0 0.0
        %2382 = vmatprep.subr.mxu0 0.0
        %2383 = vmatpush1.msra.mxu0 0.0
        %2384 = vmatprep.subr.mxu0 0.0
        %2385 = vmatpush1.msra.mxu0 0.0
        %2386 = vmatprep.subr.mxu0 0.0
        %2387 = vmatpush1.msra.mxu0 0.0
        %2388 = vmatprep.subr.mxu0 0.0
        %2389 = vmatpush1.msra.mxu0 0.0
        %2390 = vmatprep.subr.mxu0 0.0
        %2391 = vmatpush1.msra.mxu0 0.0
        %2392 = vmatprep.subr.mxu0 0.0
        %2393 = vmatpush1.msra.mxu0 0.0
        %2394 = vmatprep.subr.mxu0 0.0
        %2395 = vmatpush1.msra.mxu0 0.0
        %2396 = vmatprep.subr.mxu0 0.0
        %2397 = vmatpush1.msra.mxu0 0.0
        %2398 = vmatprep.subr.mxu0 0.0
        %2399 = vmatpush1.msra.mxu0 0.0
        %2400 = vmatprep.subr.mxu0 0.0
        %2401 = vmatpush1.msra.mxu0 0.0
        %2402 = vmatprep.subr.mxu0 0.0
        %2403 = vmatpush1.msra.mxu0 0.0
        %2404 = vmatprep.subr.mxu0 0.0
        %2405 = vmatpush1.msra.mxu0 0.0
        %2406 = vmatprep.subr.mxu0 0.0
        %2407 = vmatpush1.msra.mxu0 0.0
        %2408 = vmatprep.subr.mxu0 0.0
        %2409 = vmatpush1.msra.mxu0 0.0
        %2410 = vmatprep.subr.mxu0 0.0
        %2411 = vmatpush1.msra.mxu0 0.0
        %2412 = vmatprep.subr.mxu0 0.0
        %2413 = vmatpush1.msra.mxu0 0.0
        %2414 = vmatprep.mubr.f32.mxu0 0.0
        %v2415 = vand.u32 %v2347, 4294901760
        %v2416 = vsub.f32 %v2347, %v2415
        %v2417 = vand.u32 %v2416, 4294901760
        %v2418 = vsub.f32 %v2416, %v2417
        %v2419 = vand.u32 %v2418, 4294901760
        %2420 = vmatmul.mubr.f32.gmra.mrb[0].mxu0 %v2419
        %v2421 = vpop.f32.mrb[0].mxu0
        %v2422 = vadd.f32 0.0, %v2421
        %v2423 = vpop.f32.mrb[0].mxu0
        %2424 = vdwg.mxu0
        %2425 = vmatprep.subr.mxu0 0.0
        %v2426 = vand.u32 %v2344, 4294901760
        %v2427 = vsub.f32 %v2344, %v2426
        %v2428 = vand.u32 %v2427, 4294901760
        %v2429 = vsub.f32 %v2427, %v2428
        %v2430 = vand.u32 %v2429, 4294901760
        %2431 = vmatpush1.msra.mxu0 %v2430
        %2432 = vmatprep.subr.mxu0 0.0
        %2433 = vmatpush1.msra.mxu0 0.0
        %2434 = vmatprep.subr.mxu0 0.0
        %2435 = vmatpush1.msra.mxu0 0.0
        %2436 = vmatprep.subr.mxu0 0.0
        %2437 = vmatpush1.msra.mxu0 0.0
        %2438 = vmatprep.subr.mxu0 0.0
        %2439 = vmatpush1.msra.mxu0 0.0
        %2440 = vmatprep.subr.mxu0 0.0
        %2441 = vmatpush1.msra.mxu0 0.0
        %2442 = vmatprep.subr.mxu0 0.0
        %2443 = vmatpush1.msra.mxu0 0.0
        %2444 = vmatprep.subr.mxu0 0.0
        %2445 = vmatpush1.msra.mxu0 0.0
        %2446 = vmatprep.subr.mxu0 0.0
        %2447 = vmatpush1.msra.mxu0 0.0
        %2448 = vmatprep.subr.mxu0 0.0
        %2449 = vmatpush1.msra.mxu0 0.0
        %2450 = vmatprep.subr.mxu0 0.0
        %2451 = vmatpush1.msra.mxu0 0.0
        %2452 = vmatprep.subr.mxu0 0.0
        %2453 = vmatpush1.msra.mxu0 0.0
        %2454 = vmatprep.subr.mxu0 0.0
        %2455 = vmatpush1.msra.mxu0 0.0
        %2456 = vmatprep.subr.mxu0 0.0
        %2457 = vmatpush1.msra.mxu0 0.0
        %2458 = vmatprep.subr.mxu0 0.0
        %2459 = vmatpush1.msra.mxu0 0.0
        %2460 = vmatprep.subr.mxu0 0.0
        %2461 = vmatpush1.msra.mxu0 0.0
        %2462 = vmatprep.subr.mxu0 0.0
        %2463 = vmatpush1.msra.mxu0 0.0
        %2464 = vmatprep.subr.mxu0 0.0
        %2465 = vmatpush1.msra.mxu0 0.0
        %2466 = vmatprep.subr.mxu0 0.0
        %2467 = vmatpush1.msra.mxu0 0.0
        %2468 = vmatprep.subr.mxu0 0.0
        %2469 = vmatpush1.msra.mxu0 0.0
        %2470 = vmatprep.subr.mxu0 0.0
        %2471 = vmatpush1.msra.mxu0 0.0
        %2472 = vmatprep.subr.mxu0 0.0
        %2473 = vmatpush1.msra.mxu0 0.0
        %2474 = vmatprep.subr.mxu0 0.0
        %2475 = vmatpush1.msra.mxu0 0.0
        %2476 = vmatprep.subr.mxu0 0.0
        %2477 = vmatpush1.msra.mxu0 0.0
        %2478 = vmatprep.subr.mxu0 0.0
        %2479 = vmatpush1.msra.mxu0 0.0
        %2480 = vmatprep.subr.mxu0 0.0
        %2481 = vmatpush1.msra.mxu0 0.0
        %2482 = vmatprep.subr.mxu0 0.0
        %2483 = vmatpush1.msra.mxu0 0.0
        %2484 = vmatprep.subr.mxu0 0.0
        %2485 = vmatpush1.msra.mxu0 0.0
        %2486 = vmatprep.subr.mxu0 0.0
        %2487 = vmatpush1.msra.mxu0 0.0
        %2488 = vmatprep.subr.mxu0 0.0
        %2489 = vmatpush1.msra.mxu0 0.0
        %2490 = vmatprep.subr.mxu0 0.0
        %2491 = vmatpush1.msra.mxu0 0.0
        %2492 = vmatprep.subr.mxu0 0.0
        %2493 = vmatpush1.msra.mxu0 0.0
        %2494 = vmatprep.mubr.f32.mxu0 0.0
        %v2495 = vand.u32 %v2347, 4294901760
        %2496 = vmatmul.mubr.f32.gmra.mrb[0].mxu0 %v2495
        %v2497 = vpop.f32.mrb[0].mxu0
        %v2498 = vadd.f32 %v2422, %v2497
        %v2499 = vpop.f32.mrb[0].mxu0
        %2500 = vdwg.mxu0
        %2501 = vmatprep.subr.mxu0 0.0
        %v2502 = vand.u32 %v2344, 4294901760
        %v2503 = vsub.f32 %v2344, %v2502
        %2504 = vmatpush1.msra.mxu0 %v2503
        %2505 = vmatprep.subr.mxu0 0.0
        %2506 = vmatpush1.msra.mxu0 0.0
        %2507 = vmatprep.subr.mxu0 0.0
        %2508 = vmatpush1.msra.mxu0 0.0
        %2509 = vmatprep.subr.mxu0 0.0
        %2510 = vmatpush1.msra.mxu0 0.0
        %2511 = vmatprep.subr.mxu0 0.0
        %2512 = vmatpush1.msra.mxu0 0.0
        %2513 = vmatprep.subr.mxu0 0.0
        %2514 = vmatpush1.msra.mxu0 0.0
        %2515 = vmatprep.subr.mxu0 0.0
        %2516 = vmatpush1.msra.mxu0 0.0
        %2517 = vmatprep.subr.mxu0 0.0
        %2518 = vmatpush1.msra.mxu0 0.0
        %2519 = vmatprep.subr.mxu0 0.0
        %2520 = vmatpush1.msra.mxu0 0.0
        %2521 = vmatprep.subr.mxu0 0.0
        %2522 = vmatpush1.msra.mxu0 0.0
        %2523 = vmatprep.subr.mxu0 0.0
        %2524 = vmatpush1.msra.mxu0 0.0
        %2525 = vmatprep.subr.mxu0 0.0
        %2526 = vmatpush1.msra.mxu0 0.0
        %2527 = vmatprep.subr.mxu0 0.0
        %2528 = vmatpush1.msra.mxu0 0.0
        %2529 = vmatprep.subr.mxu0 0.0
        %2530 = vmatpush1.msra.mxu0 0.0
        %2531 = vmatprep.subr.mxu0 0.0
        %2532 = vmatpush1.msra.mxu0 0.0
        %2533 = vmatprep.subr.mxu0 0.0
        %2534 = vmatpush1.msra.mxu0 0.0
        %2535 = vmatprep.subr.mxu0 0.0
        %2536 = vmatpush1.msra.mxu0 0.0
        %2537 = vmatprep.subr.mxu0 0.0
        %2538 = vmatpush1.msra.mxu0 0.0
        %2539 = vmatprep.subr.mxu0 0.0
        %2540 = vmatpush1.msra.mxu0 0.0
        %2541 = vmatprep.subr.mxu0 0.0
        %2542 = vmatpush1.msra.mxu0 0.0
        %2543 = vmatprep.subr.mxu0 0.0
        %2544 = vmatpush1.msra.mxu0 0.0
        %2545 = vmatprep.subr.mxu0 0.0
        %2546 = vmatpush1.msra.mxu0 0.0
        %2547 = vmatprep.subr.mxu0 0.0
        %2548 = vmatpush1.msra.mxu0 0.0
        %2549 = vmatprep.subr.mxu0 0.0
        %2550 = vmatpush1.msra.mxu0 0.0
        %2551 = vmatprep.subr.mxu0 0.0
        %2552 = vmatpush1.msra.mxu0 0.0
        %2553 = vmatprep.subr.mxu0 0.0
        %2554 = vmatpush1.msra.mxu0 0.0
        %2555 = vmatprep.subr.mxu0 0.0
        %2556 = vmatpush1.msra.mxu0 0.0
        %2557 = vmatprep.subr.mxu0 0.0
        %2558 = vmatpush1.msra.mxu0 0.0
        %2559 = vmatprep.subr.mxu0 0.0
        %2560 = vmatpush1.msra.mxu0 0.0
        %2561 = vmatprep.subr.mxu0 0.0
        %2562 = vmatpush1.msra.mxu0 0.0
        %2563 = vmatprep.subr.mxu0 0.0
        %2564 = vmatpush1.msra.mxu0 0.0
        %2565 = vmatprep.subr.mxu0 0.0
        %2566 = vmatpush1.msra.mxu0 0.0
        %2567 = vmatprep.mubr.f32.mxu0 0.0
        %v2568 = vand.u32 %v2347, 4294901760
        %v2569 = vsub.f32 %v2347, %v2568
        %2570 = vmatmul.mubr.f32.gmra.mrb[0].mxu0 %v2569
        %v2571 = vpop.f32.mrb[0].mxu0
        %v2572 = vadd.f32 %v2498, %v2571
        %v2573 = vpop.f32.mrb[0].mxu0
        %2574 = vdwg.mxu0
        %2575 = vmatprep.subr.mxu0 0.0
        %v2576 = vand.u32 %v2344, 4294901760
        %2577 = vmatpush1.msra.mxu0 %v2576
        %2578 = vmatprep.subr.mxu0 0.0
        %2579 = vmatpush1.msra.mxu0 0.0
        %2580 = vmatprep.subr.mxu0 0.0
        %2581 = vmatpush1.msra.mxu0 0.0
        %2582 = vmatprep.subr.mxu0 0.0
        %2583 = vmatpush1.msra.mxu0 0.0
        %2584 = vmatprep.subr.mxu0 0.0
        %2585 = vmatpush1.msra.mxu0 0.0
        %2586 = vmatprep.subr.mxu0 0.0
        %2587 = vmatpush1.msra.mxu0 0.0
        %2588 = vmatprep.subr.mxu0 0.0
        %2589 = vmatpush1.msra.mxu0 0.0
        %2590 = vmatprep.subr.mxu0 0.0
        %2591 = vmatpush1.msra.mxu0 0.0
        %2592 = vmatprep.subr.mxu0 0.0
        %2593 = vmatpush1.msra.mxu0 0.0
        %2594 = vmatprep.subr.mxu0 0.0
        %2595 = vmatpush1.msra.mxu0 0.0
        %2596 = vmatprep.subr.mxu0 0.0
        %2597 = vmatpush1.msra.mxu0 0.0
        %2598 = vmatprep.subr.mxu0 0.0
        %2599 = vmatpush1.msra.mxu0 0.0
        %2600 = vmatprep.subr.mxu0 0.0
        %2601 = vmatpush1.msra.mxu0 0.0
        %2602 = vmatprep.subr.mxu0 0.0
        %2603 = vmatpush1.msra.mxu0 0.0
        %2604 = vmatprep.subr.mxu0 0.0
        %2605 = vmatpush1.msra.mxu0 0.0
        %2606 = vmatprep.subr.mxu0 0.0
        %2607 = vmatpush1.msra.mxu0 0.0
        %2608 = vmatprep.subr.mxu0 0.0
        %2609 = vmatpush1.msra.mxu0 0.0
        %2610 = vmatprep.subr.mxu0 0.0
        %2611 = vmatpush1.msra.mxu0 0.0
        %2612 = vmatprep.subr.mxu0 0.0
        %2613 = vmatpush1.msra.mxu0 0.0
        %2614 = vmatprep.subr.mxu0 0.0
        %2615 = vmatpush1.msra.mxu0 0.0
        %2616 = vmatprep.subr.mxu0 0.0
        %2617 = vmatpush1.msra.mxu0 0.0
        %2618 = vmatprep.subr.mxu0 0.0
        %2619 = vmatpush1.msra.mxu0 0.0
        %2620 = vmatprep.subr.mxu0 0.0
        %2621 = vmatpush1.msra.mxu0 0.0
        %2622 = vmatprep.subr.mxu0 0.0
        %2623 = vmatpush1.msra.mxu0 0.0
        %2624 = vmatprep.subr.mxu0 0.0
        %2625 = vmatpush1.msra.mxu0 0.0
        %2626 = vmatprep.subr.mxu0 0.0
        %2627 = vmatpush1.msra.mxu0 0.0
        %2628 = vmatprep.subr.mxu0 0.0
        %2629 = vmatpush1.msra.mxu0 0.0
        %2630 = vmatprep.subr.mxu0 0.0
        %2631 = vmatpush1.msra.mxu0 0.0
        %2632 = vmatprep.subr.mxu0 0.0
        %2633 = vmatpush1.msra.mxu0 0.0
        %2634 = vmatprep.subr.mxu0 0.0
        %2635 = vmatpush1.msra.mxu0 0.0
        %2636 = vmatprep.subr.mxu0 0.0
        %2637 = vmatpush1.msra.mxu0 0.0
        %2638 = vmatprep.subr.mxu0 0.0
        %2639 = vmatpush1.msra.mxu0 0.0
        %2640 = vmatprep.mubr.f32.mxu0 0.0
        %v2641 = vand.u32 %v2347, 4294901760
        %v2642 = vsub.f32 %v2347, %v2641
        %v2643 = vand.u32 %v2642, 4294901760
        %2644 = vmatmul.mubr.f32.gmra.mrb[0].mxu0 %v2643
        %v2645 = vpop.f32.mrb[0].mxu0
        %v2646 = vadd.f32 %v2572, %v2645
        %v2647 = vpop.f32.mrb[0].mxu0
        %2648 = vdwg.mxu0
        %2649 = vmatprep.subr.mxu0 0.0
        %v2650 = vand.u32 %v2344, 4294901760
        %v2651 = vsub.f32 %v2344, %v2650
        %v2652 = vand.u32 %v2651, 4294901760
        %2653 = vmatpush1.msra.mxu0 %v2652
        %2654 = vmatprep.subr.mxu0 0.0
        %2655 = vmatpush1.msra.mxu0 0.0
        %2656 = vmatprep.subr.mxu0 0.0
        %2657 = vmatpush1.msra.mxu0 0.0
        %2658 = vmatprep.subr.mxu0 0.0
        %2659 = vmatpush1.msra.mxu0 0.0
        %2660 = vmatprep.subr.mxu0 0.0
        %2661 = vmatpush1.msra.mxu0 0.0
        %2662 = vmatprep.subr.mxu0 0.0
        %2663 = vmatpush1.msra.mxu0 0.0
        %2664 = vmatprep.subr.mxu0 0.0
        %2665 = vmatpush1.msra.mxu0 0.0
        %2666 = vmatprep.subr.mxu0 0.0
        %2667 = vmatpush1.msra.mxu0 0.0
        %2668 = vmatprep.subr.mxu0 0.0
        %2669 = vmatpush1.msra.mxu0 0.0
        %2670 = vmatprep.subr.mxu0 0.0
        %2671 = vmatpush1.msra.mxu0 0.0
        %2672 = vmatprep.subr.mxu0 0.0
        %2673 = vmatpush1.msra.mxu0 0.0
        %2674 = vmatprep.subr.mxu0 0.0
        %2675 = vmatpush1.msra.mxu0 0.0
        %2676 = vmatprep.subr.mxu0 0.0
        %2677 = vmatpush1.msra.mxu0 0.0
        %2678 = vmatprep.subr.mxu0 0.0
        %2679 = vmatpush1.msra.mxu0 0.0
        %2680 = vmatprep.subr.mxu0 0.0
        %2681 = vmatpush1.msra.mxu0 0.0
        %2682 = vmatprep.subr.mxu0 0.0
        %2683 = vmatpush1.msra.mxu0 0.0
        %2684 = vmatprep.subr.mxu0 0.0
        %2685 = vmatpush1.msra.mxu0 0.0
        %2686 = vmatprep.subr.mxu0 0.0
        %2687 = vmatpush1.msra.mxu0 0.0
        %2688 = vmatprep.subr.mxu0 0.0
        %2689 = vmatpush1.msra.mxu0 0.0
        %2690 = vmatprep.subr.mxu0 0.0
        %2691 = vmatpush1.msra.mxu0 0.0
        %2692 = vmatprep.subr.mxu0 0.0
        %2693 = vmatpush1.msra.mxu0 0.0
        %2694 = vmatprep.subr.mxu0 0.0
        %2695 = vmatpush1.msra.mxu0 0.0
        %2696 = vmatprep.subr.mxu0 0.0
        %2697 = vmatpush1.msra.mxu0 0.0
        %2698 = vmatprep.subr.mxu0 0.0
        %2699 = vmatpush1.msra.mxu0 0.0
        %2700 = vmatprep.subr.mxu0 0.0
        %2701 = vmatpush1.msra.mxu0 0.0
        %2702 = vmatprep.subr.mxu0 0.0
        %2703 = vmatpush1.msra.mxu0 0.0
        %2704 = vmatprep.subr.mxu0 0.0
        %2705 = vmatpush1.msra.mxu0 0.0
        %2706 = vmatprep.subr.mxu0 0.0
        %2707 = vmatpush1.msra.mxu0 0.0
        %2708 = vmatprep.subr.mxu0 0.0
        %2709 = vmatpush1.msra.mxu0 0.0
        %2710 = vmatprep.subr.mxu0 0.0
        %2711 = vmatpush1.msra.mxu0 0.0
        %2712 = vmatprep.subr.mxu0 0.0
        %2713 = vmatpush1.msra.mxu0 0.0
        %2714 = vmatprep.subr.mxu0 0.0
        %2715 = vmatpush1.msra.mxu0 0.0
        %2716 = vmatprep.mubr.f32.mxu0 0.0
        %v2717 = vand.u32 %v2347, 4294901760
        %2718 = vmatmul.mubr.f32.gmra.mrb[0].mxu0 %v2717
        %v2719 = vpop.f32.mrb[0].mxu0
        %v2720 = vadd.f32 %v2646, %v2719
        %v2721 = vpop.f32.mrb[0].mxu0
        %2722 = vdwg.mxu0
        %2723 = vmatprep.subr.mxu0 0.0
        %v2724 = vand.u32 %v2344, 4294901760
        %2725 = vmatpush1.msra.mxu0 %v2724
        %2726 = vmatprep.subr.mxu0 0.0
        %2727 = vmatpush1.msra.mxu0 0.0
        %2728 = vmatprep.subr.mxu0 0.0
        %2729 = vmatpush1.msra.mxu0 0.0
        %2730 = vmatprep.subr.mxu0 0.0
        %2731 = vmatpush1.msra.mxu0 0.0
        %2732 = vmatprep.subr.mxu0 0.0
        %2733 = vmatpush1.msra.mxu0 0.0
        %2734 = vmatprep.subr.mxu0 0.0
        %2735 = vmatpush1.msra.mxu0 0.0
        %2736 = vmatprep.subr.mxu0 0.0
        %2737 = vmatpush1.msra.mxu0 0.0
        %2738 = vmatprep.subr.mxu0 0.0
        %2739 = vmatpush1.msra.mxu0 0.0
        %2740 = vmatprep.subr.mxu0 0.0
        %2741 = vmatpush1.msra.mxu0 0.0
        %2742 = vmatprep.subr.mxu0 0.0
        %2743 = vmatpush1.msra.mxu0 0.0
        %2744 = vmatprep.subr.mxu0 0.0
        %2745 = vmatpush1.msra.mxu0 0.0
        %2746 = vmatprep.subr.mxu0 0.0
        %2747 = vmatpush1.msra.mxu0 0.0
        %2748 = vmatprep.subr.mxu0 0.0
        %2749 = vmatpush1.msra.mxu0 0.0
        %2750 = vmatprep.subr.mxu0 0.0
        %2751 = vmatpush1.msra.mxu0 0.0
        %2752 = vmatprep.subr.mxu0 0.0
        %2753 = vmatpush1.msra.mxu0 0.0
        %2754 = vmatprep.subr.mxu0 0.0
        %2755 = vmatpush1.msra.mxu0 0.0
        %2756 = vmatprep.subr.mxu0 0.0
        %2757 = vmatpush1.msra.mxu0 0.0
        %2758 = vmatprep.subr.mxu0 0.0
        %2759 = vmatpush1.msra.mxu0 0.0
        %2760 = vmatprep.subr.mxu0 0.0
        %2761 = vmatpush1.msra.mxu0 0.0
        %2762 = vmatprep.subr.mxu0 0.0
        %2763 = vmatpush1.msra.mxu0 0.0
        %2764 = vmatprep.subr.mxu0 0.0
        %2765 = vmatpush1.msra.mxu0 0.0
        %2766 = vmatprep.subr.mxu0 0.0
        %2767 = vmatpush1.msra.mxu0 0.0
        %2768 = vmatprep.subr.mxu0 0.0
        %2769 = vmatpush1.msra.mxu0 0.0
        %2770 = vmatprep.subr.mxu0 0.0
        %2771 = vmatpush1.msra.mxu0 0.0
        %2772 = vmatprep.subr.mxu0 0.0
        %2773 = vmatpush1.msra.mxu0 0.0
        %2774 = vmatprep.subr.mxu0 0.0
        %2775 = vmatpush1.msra.mxu0 0.0
        %2776 = vmatprep.subr.mxu0 0.0
        %2777 = vmatpush1.msra.mxu0 0.0
        %2778 = vmatprep.subr.mxu0 0.0
        %2779 = vmatpush1.msra.mxu0 0.0
        %2780 = vmatprep.subr.mxu0 0.0
        %2781 = vmatpush1.msra.mxu0 0.0
        %2782 = vmatprep.subr.mxu0 0.0
        %2783 = vmatpush1.msra.mxu0 0.0
        %2784 = vmatprep.subr.mxu0 0.0
        %2785 = vmatpush1.msra.mxu0 0.0
        %2786 = vmatprep.subr.mxu0 0.0
        %2787 = vmatpush1.msra.mxu0 0.0
        %2788 = vmatprep.mubr.f32.mxu0 0.0
        %v2789 = vand.u32 %v2347, 4294901760
        %2790 = vmatmul.mubr.f32.gmra.mrb[0].mxu0 %v2789
        %v2791 = vpop.f32.mrb[0].mxu0
        %v2792 = vadd.f32 %v2720, %v2791
        %v2793 = vpop.f32.mrb[0].mxu0
        %2794 = vdwg.mxu0
        %v2796 = vsel %vm964, %v2792, 0
        %2798 = vmatprep.subr.mxu0 0.0
        %v2799 = vand.u32 %v958, 4294901760
        %2800 = vmatpush1.msra.mxu0 %v2799
        %2801 = vmatprep.subr.mxu0 0.0
        %2802 = vmatpush1.msra.mxu0 0.0
        %2803 = vmatprep.subr.mxu0 0.0
        %2804 = vmatpush1.msra.mxu0 0.0
        %2805 = vmatprep.subr.mxu0 0.0
        %2806 = vmatpush1.msra.mxu0 0.0
        %2807 = vmatprep.subr.mxu0 0.0
        %2808 = vmatpush1.msra.mxu0 0.0
        %2809 = vmatprep.subr.mxu0 0.0
        %2810 = vmatpush1.msra.mxu0 0.0
        %2811 = vmatprep.subr.mxu0 0.0
        %2812 = vmatpush1.msra.mxu0 0.0
        %2813 = vmatprep.subr.mxu0 0.0
        %2814 = vmatpush1.msra.mxu0 0.0
        %2815 = vmatprep.subr.mxu0 0.0
        %2816 = vmatpush1.msra.mxu0 0.0
        %2817 = vmatprep.subr.mxu0 0.0
        %2818 = vmatpush1.msra.mxu0 0.0
        %2819 = vmatprep.subr.mxu0 0.0
        %2820 = vmatpush1.msra.mxu0 0.0
        %2821 = vmatprep.subr.mxu0 0.0
        %2822 = vmatpush1.msra.mxu0 0.0
        %2823 = vmatprep.subr.mxu0 0.0
        %2824 = vmatpush1.msra.mxu0 0.0
        %2825 = vmatprep.subr.mxu0 0.0
        %2826 = vmatpush1.msra.mxu0 0.0
        %2827 = vmatprep.subr.mxu0 0.0
        %2828 = vmatpush1.msra.mxu0 0.0
        %2829 = vmatprep.subr.mxu0 0.0
        %2830 = vmatpush1.msra.mxu0 0.0
        %2831 = vmatprep.subr.mxu0 0.0
        %2832 = vmatpush1.msra.mxu0 0.0
        %2833 = vmatprep.subr.mxu0 0.0
        %2834 = vmatpush1.msra.mxu0 0.0
        %2835 = vmatprep.subr.mxu0 0.0
        %2836 = vmatpush1.msra.mxu0 0.0
        %2837 = vmatprep.subr.mxu0 0.0
        %2838 = vmatpush1.msra.mxu0 0.0
        %2839 = vmatprep.subr.mxu0 0.0
        %2840 = vmatpush1.msra.mxu0 0.0
        %2841 = vmatprep.subr.mxu0 0.0
        %2842 = vmatpush1.msra.mxu0 0.0
        %2843 = vmatprep.subr.mxu0 0.0
        %2844 = vmatpush1.msra.mxu0 0.0
        %2845 = vmatprep.subr.mxu0 0.0
        %2846 = vmatpush1.msra.mxu0 0.0
        %2847 = vmatprep.subr.mxu0 0.0
        %2848 = vmatpush1.msra.mxu0 0.0
        %2849 = vmatprep.subr.mxu0 0.0
        %2850 = vmatpush1.msra.mxu0 0.0
        %2851 = vmatprep.subr.mxu0 0.0
        %2852 = vmatpush1.msra.mxu0 0.0
        %2853 = vmatprep.subr.mxu0 0.0
        %2854 = vmatpush1.msra.mxu0 0.0
        %2855 = vmatprep.subr.mxu0 0.0
        %2856 = vmatpush1.msra.mxu0 0.0
        %2857 = vmatprep.subr.mxu0 0.0
        %2858 = vmatpush1.msra.mxu0 0.0
        %2859 = vmatprep.subr.mxu0 0.0
        %2860 = vmatpush1.msra.mxu0 0.0
        %2861 = vmatprep.subr.mxu0 0.0
        %2862 = vmatpush1.msra.mxu0 0.0
        %2863 = vmatprep.mubr.f32.mxu0 0.0
        %v2864 = vand.u32 %v2796, 4294901760
        %v2865 = vsub.f32 %v2796, %v2864
        %v2866 = vand.u32 %v2865, 4294901760
        %v2867 = vsub.f32 %v2865, %v2866
        %v2868 = vand.u32 %v2867, 4294901760
        %2869 = vmatmul.mubr.f32.gmra.mrb[0].mxu0 %v2868
        %v2870 = vpop.f32.mrb[0].mxu0
        %v2871 = vadd.f32 0.0, %v2870
        %v2872 = vpop.f32.mrb[0].mxu0
        %2873 = vdwg.mxu0
        %2874 = vmatprep.subr.mxu0 0.0
        %v2875 = vand.u32 %v958, 4294901760
        %v2876 = vsub.f32 %v958, %v2875
        %v2877 = vand.u32 %v2876, 4294901760
        %v2878 = vsub.f32 %v2876, %v2877
        %v2879 = vand.u32 %v2878, 4294901760
        %2880 = vmatpush1.msra.mxu0 %v2879
        %2881 = vmatprep.subr.mxu0 0.0
        %2882 = vmatpush1.msra.mxu0 0.0
        %2883 = vmatprep.subr.mxu0 0.0
        %2884 = vmatpush1.msra.mxu0 0.0
        %2885 = vmatprep.subr.mxu0 0.0
        %2886 = vmatpush1.msra.mxu0 0.0
        %2887 = vmatprep.subr.mxu0 0.0
        %2888 = vmatpush1.msra.mxu0 0.0
        %2889 = vmatprep.subr.mxu0 0.0
        %2890 = vmatpush1.msra.mxu0 0.0
        %2891 = vmatprep.subr.mxu0 0.0
        %2892 = vmatpush1.msra.mxu0 0.0
        %2893 = vmatprep.subr.mxu0 0.0
        %2894 = vmatpush1.msra.mxu0 0.0
        %2895 = vmatprep.subr.mxu0 0.0
        %2896 = vmatpush1.msra.mxu0 0.0
        %2897 = vmatprep.subr.mxu0 0.0
        %2898 = vmatpush1.msra.mxu0 0.0
        %2899 = vmatprep.subr.mxu0 0.0
        %2900 = vmatpush1.msra.mxu0 0.0
        %2901 = vmatprep.subr.mxu0 0.0
        %2902 = vmatpush1.msra.mxu0 0.0
        %2903 = vmatprep.subr.mxu0 0.0
        %2904 = vmatpush1.msra.mxu0 0.0
        %2905 = vmatprep.subr.mxu0 0.0
        %2906 = vmatpush1.msra.mxu0 0.0
        %2907 = vmatprep.subr.mxu0 0.0
        %2908 = vmatpush1.msra.mxu0 0.0
        %2909 = vmatprep.subr.mxu0 0.0
        %2910 = vmatpush1.msra.mxu0 0.0
        %2911 = vmatprep.subr.mxu0 0.0
        %2912 = vmatpush1.msra.mxu0 0.0
        %2913 = vmatprep.subr.mxu0 0.0
        %2914 = vmatpush1.msra.mxu0 0.0
        %2915 = vmatprep.subr.mxu0 0.0
        %2916 = vmatpush1.msra.mxu0 0.0
        %2917 = vmatprep.subr.mxu0 0.0
        %2918 = vmatpush1.msra.mxu0 0.0
        %2919 = vmatprep.subr.mxu0 0.0
        %2920 = vmatpush1.msra.mxu0 0.0
        %2921 = vmatprep.subr.mxu0 0.0
        %2922 = vmatpush1.msra.mxu0 0.0
        %2923 = vmatprep.subr.mxu0 0.0
        %2924 = vmatpush1.msra.mxu0 0.0
        %2925 = vmatprep.subr.mxu0 0.0
        %2926 = vmatpush1.msra.mxu0 0.0
        %2927 = vmatprep.subr.mxu0 0.0
        %2928 = vmatpush1.msra.mxu0 0.0
        %2929 = vmatprep.subr.mxu0 0.0
        %2930 = vmatpush1.msra.mxu0 0.0
        %2931 = vmatprep.subr.mxu0 0.0
        %2932 = vmatpush1.msra.mxu0 0.0
        %2933 = vmatprep.subr.mxu0 0.0
        %2934 = vmatpush1.msra.mxu0 0.0
        %2935 = vmatprep.subr.mxu0 0.0
        %2936 = vmatpush1.msra.mxu0 0.0
        %2937 = vmatprep.subr.mxu0 0.0
        %2938 = vmatpush1.msra.mxu0 0.0
        %2939 = vmatprep.subr.mxu0 0.0
        %2940 = vmatpush1.msra.mxu0 0.0
        %2941 = vmatprep.subr.mxu0 0.0
        %2942 = vmatpush1.msra.mxu0 0.0
        %2943 = vmatprep.mubr.f32.mxu0 0.0
        %v2944 = vand.u32 %v2796, 4294901760
        %2945 = vmatmul.mubr.f32.gmra.mrb[0].mxu0 %v2944
        %v2946 = vpop.f32.mrb[0].mxu0
        %v2947 = vadd.f32 %v2871, %v2946
        %v2948 = vpop.f32.mrb[0].mxu0
        %2949 = vdwg.mxu0
        %2950 = vmatprep.subr.mxu0 0.0
        %v2951 = vand.u32 %v958, 4294901760
        %v2952 = vsub.f32 %v958, %v2951
        %2953 = vmatpush1.msra.mxu0 %v2952
        %2954 = vmatprep.subr.mxu0 0.0
        %2955 = vmatpush1.msra.mxu0 0.0
        %2956 = vmatprep.subr.mxu0 0.0
        %2957 = vmatpush1.msra.mxu0 0.0
        %2958 = vmatprep.subr.mxu0 0.0
        %2959 = vmatpush1.msra.mxu0 0.0
        %2960 = vmatprep.subr.mxu0 0.0
        %2961 = vmatpush1.msra.mxu0 0.0
        %2962 = vmatprep.subr.mxu0 0.0
        %2963 = vmatpush1.msra.mxu0 0.0
        %2964 = vmatprep.subr.mxu0 0.0
        %2965 = vmatpush1.msra.mxu0 0.0
        %2966 = vmatprep.subr.mxu0 0.0
        %2967 = vmatpush1.msra.mxu0 0.0
        %2968 = vmatprep.subr.mxu0 0.0
        %2969 = vmatpush1.msra.mxu0 0.0
        %2970 = vmatprep.subr.mxu0 0.0
        %2971 = vmatpush1.msra.mxu0 0.0
        %2972 = vmatprep.subr.mxu0 0.0
        %2973 = vmatpush1.msra.mxu0 0.0
        %2974 = vmatprep.subr.mxu0 0.0
        %2975 = vmatpush1.msra.mxu0 0.0
        %2976 = vmatprep.subr.mxu0 0.0
        %2977 = vmatpush1.msra.mxu0 0.0
        %2978 = vmatprep.subr.mxu0 0.0
        %2979 = vmatpush1.msra.mxu0 0.0
        %2980 = vmatprep.subr.mxu0 0.0
        %2981 = vmatpush1.msra.mxu0 0.0
        %2982 = vmatprep.subr.mxu0 0.0
        %2983 = vmatpush1.msra.mxu0 0.0
        %2984 = vmatprep.subr.mxu0 0.0
        %2985 = vmatpush1.msra.mxu0 0.0
        %2986 = vmatprep.subr.mxu0 0.0
        %2987 = vmatpush1.msra.mxu0 0.0
        %2988 = vmatprep.subr.mxu0 0.0
        %2989 = vmatpush1.msra.mxu0 0.0
        %2990 = vmatprep.subr.mxu0 0.0
        %2991 = vmatpush1.msra.mxu0 0.0
        %2992 = vmatprep.subr.mxu0 0.0
        %2993 = vmatpush1.msra.mxu0 0.0
        %2994 = vmatprep.subr.mxu0 0.0
        %2995 = vmatpush1.msra.mxu0 0.0
        %2996 = vmatprep.subr.mxu0 0.0
        %2997 = vmatpush1.msra.mxu0 0.0
        %2998 = vmatprep.subr.mxu0 0.0
        %2999 = vmatpush1.msra.mxu0 0.0
        %3000 = vmatprep.subr.mxu0 0.0
        %3001 = vmatpush1.msra.mxu0 0.0
        %3002 = vmatprep.subr.mxu0 0.0
        %3003 = vmatpush1.msra.mxu0 0.0
        %3004 = vmatprep.subr.mxu0 0.0
        %3005 = vmatpush1.msra.mxu0 0.0
        %3006 = vmatprep.subr.mxu0 0.0
        %3007 = vmatpush1.msra.mxu0 0.0
        %3008 = vmatprep.subr.mxu0 0.0
        %3009 = vmatpush1.msra.mxu0 0.0
        %3010 = vmatprep.subr.mxu0 0.0
        %3011 = vmatpush1.msra.mxu0 0.0
        %3012 = vmatprep.subr.mxu0 0.0
        %3013 = vmatpush1.msra.mxu0 0.0
        %3014 = vmatprep.subr.mxu0 0.0
        %3015 = vmatpush1.msra.mxu0 0.0
        %3016 = vmatprep.mubr.f32.mxu0 0.0
        %v3017 = vand.u32 %v2796, 4294901760
        %v3018 = vsub.f32 %v2796, %v3017
        %3019 = vmatmul.mubr.f32.gmra.mrb[0].mxu0 %v3018
        %v3020 = vpop.f32.mrb[0].mxu0
        %v3021 = vadd.f32 %v2947, %v3020
        %v3022 = vpop.f32.mrb[0].mxu0
        %3023 = vdwg.mxu0
        %3024 = vmatprep.subr.mxu0 0.0
        %v3025 = vand.u32 %v958, 4294901760
        %3026 = vmatpush1.msra.mxu0 %v3025
        %3027 = vmatprep.subr.mxu0 0.0
        %3028 = vmatpush1.msra.mxu0 0.0
        %3029 = vmatprep.subr.mxu0 0.0
        %3030 = vmatpush1.msra.mxu0 0.0
        %3031 = vmatprep.subr.mxu0 0.0
        %3032 = vmatpush1.msra.mxu0 0.0
        %3033 = vmatprep.subr.mxu0 0.0
        %3034 = vmatpush1.msra.mxu0 0.0
        %3035 = vmatprep.subr.mxu0 0.0
        %3036 = vmatpush1.msra.mxu0 0.0
        %3037 = vmatprep.subr.mxu0 0.0
        %3038 = vmatpush1.msra.mxu0 0.0
        %3039 = vmatprep.subr.mxu0 0.0
        %3040 = vmatpush1.msra.mxu0 0.0
        %3041 = vmatprep.subr.mxu0 0.0
        %3042 = vmatpush1.msra.mxu0 0.0
        %3043 = vmatprep.subr.mxu0 0.0
        %3044 = vmatpush1.msra.mxu0 0.0
        %3045 = vmatprep.subr.mxu0 0.0
        %3046 = vmatpush1.msra.mxu0 0.0
        %3047 = vmatprep.subr.mxu0 0.0
        %3048 = vmatpush1.msra.mxu0 0.0
        %3049 = vmatprep.subr.mxu0 0.0
        %3050 = vmatpush1.msra.mxu0 0.0
        %3051 = vmatprep.subr.mxu0 0.0
        %3052 = vmatpush1.msra.mxu0 0.0
        %3053 = vmatprep.subr.mxu0 0.0
        %3054 = vmatpush1.msra.mxu0 0.0
        %3055 = vmatprep.subr.mxu0 0.0
        %3056 = vmatpush1.msra.mxu0 0.0
        %3057 = vmatprep.subr.mxu0 0.0
        %3058 = vmatpush1.msra.mxu0 0.0
        %3059 = vmatprep.subr.mxu0 0.0
        %3060 = vmatpush1.msra.mxu0 0.0
        %3061 = vmatprep.subr.mxu0 0.0
        %3062 = vmatpush1.msra.mxu0 0.0
        %3063 = vmatprep.subr.mxu0 0.0
        %3064 = vmatpush1.msra.mxu0 0.0
        %3065 = vmatprep.subr.mxu0 0.0
        %3066 = vmatpush1.msra.mxu0 0.0
        %3067 = vmatprep.subr.mxu0 0.0
        %3068 = vmatpush1.msra.mxu0 0.0
        %3069 = vmatprep.subr.mxu0 0.0
        %3070 = vmatpush1.msra.mxu0 0.0
        %3071 = vmatprep.subr.mxu0 0.0
        %3072 = vmatpush1.msra.mxu0 0.0
        %3073 = vmatprep.subr.mxu0 0.0
        %3074 = vmatpush1.msra.mxu0 0.0
        %3075 = vmatprep.subr.mxu0 0.0
        %3076 = vmatpush1.msra.mxu0 0.0
        %3077 = vmatprep.subr.mxu0 0.0
        %3078 = vmatpush1.msra.mxu0 0.0
        %3079 = vmatprep.subr.mxu0 0.0
        %3080 = vmatpush1.msra.mxu0 0.0
        %3081 = vmatprep.subr.mxu0 0.0
        %3082 = vmatpush1.msra.mxu0 0.0
        %3083 = vmatprep.subr.mxu0 0.0
        %3084 = vmatpush1.msra.mxu0 0.0
        %3085 = vmatprep.subr.mxu0 0.0
        %3086 = vmatpush1.msra.mxu0 0.0
        %3087 = vmatprep.subr.mxu0 0.0
        %3088 = vmatpush1.msra.mxu0 0.0
        %3089 = vmatprep.mubr.f32.mxu0 0.0
        %v3090 = vand.u32 %v2796, 4294901760
        %v3091 = vsub.f32 %v2796, %v3090
        %v3092 = vand.u32 %v3091, 4294901760
        %3093 = vmatmul.mubr.f32.gmra.mrb[0].mxu0 %v3092
        %v3094 = vpop.f32.mrb[0].mxu0
        %v3095 = vadd.f32 %v3021, %v3094
        %v3096 = vpop.f32.mrb[0].mxu0
        %3097 = vdwg.mxu0
        %3098 = vmatprep.subr.mxu0 0.0
        %v3099 = vand.u32 %v958, 4294901760
        %v3100 = vsub.f32 %v958, %v3099
        %v3101 = vand.u32 %v3100, 4294901760
        %3102 = vmatpush1.msra.mxu0 %v3101
        %3103 = vmatprep.subr.mxu0 0.0
        %3104 = vmatpush1.msra.mxu0 0.0
        %3105 = vmatprep.subr.mxu0 0.0
        %3106 = vmatpush1.msra.mxu0 0.0
        %3107 = vmatprep.subr.mxu0 0.0
        %3108 = vmatpush1.msra.mxu0 0.0
        %3109 = vmatprep.subr.mxu0 0.0
        %3110 = vmatpush1.msra.mxu0 0.0
        %3111 = vmatprep.subr.mxu0 0.0
        %3112 = vmatpush1.msra.mxu0 0.0
        %3113 = vmatprep.subr.mxu0 0.0
        %3114 = vmatpush1.msra.mxu0 0.0
        %3115 = vmatprep.subr.mxu0 0.0
        %3116 = vmatpush1.msra.mxu0 0.0
        %3117 = vmatprep.subr.mxu0 0.0
        %3118 = vmatpush1.msra.mxu0 0.0
        %3119 = vmatprep.subr.mxu0 0.0
        %3120 = vmatpush1.msra.mxu0 0.0
        %3121 = vmatprep.subr.mxu0 0.0
        %3122 = vmatpush1.msra.mxu0 0.0
        %3123 = vmatprep.subr.mxu0 0.0
        %3124 = vmatpush1.msra.mxu0 0.0
        %3125 = vmatprep.subr.mxu0 0.0
        %3126 = vmatpush1.msra.mxu0 0.0
        %3127 = vmatprep.subr.mxu0 0.0
        %3128 = vmatpush1.msra.mxu0 0.0
        %3129 = vmatprep.subr.mxu0 0.0
        %3130 = vmatpush1.msra.mxu0 0.0
        %3131 = vmatprep.subr.mxu0 0.0
        %3132 = vmatpush1.msra.mxu0 0.0
        %3133 = vmatprep.subr.mxu0 0.0
        %3134 = vmatpush1.msra.mxu0 0.0
        %3135 = vmatprep.subr.mxu0 0.0
        %3136 = vmatpush1.msra.mxu0 0.0
        %3137 = vmatprep.subr.mxu0 0.0
        %3138 = vmatpush1.msra.mxu0 0.0
        %3139 = vmatprep.subr.mxu0 0.0
        %3140 = vmatpush1.msra.mxu0 0.0
        %3141 = vmatprep.subr.mxu0 0.0
        %3142 = vmatpush1.msra.mxu0 0.0
        %3143 = vmatprep.subr.mxu0 0.0
        %3144 = vmatpush1.msra.mxu0 0.0
        %3145 = vmatprep.subr.mxu0 0.0
        %3146 = vmatpush1.msra.mxu0 0.0
        %3147 = vmatprep.subr.mxu0 0.0
        %3148 = vmatpush1.msra.mxu0 0.0
        %3149 = vmatprep.subr.mxu0 0.0
        %3150 = vmatpush1.msra.mxu0 0.0
        %3151 = vmatprep.subr.mxu0 0.0
        %3152 = vmatpush1.msra.mxu0 0.0
        %3153 = vmatprep.subr.mxu0 0.0
        %3154 = vmatpush1.msra.mxu0 0.0
        %3155 = vmatprep.subr.mxu0 0.0
        %3156 = vmatpush1.msra.mxu0 0.0
        %3157 = vmatprep.subr.mxu0 0.0
        %3158 = vmatpush1.msra.mxu0 0.0
        %3159 = vmatprep.subr.mxu0 0.0
        %3160 = vmatpush1.msra.mxu0 0.0
        %3161 = vmatprep.subr.mxu0 0.0
        %3162 = vmatpush1.msra.mxu0 0.0
        %3163 = vmatprep.subr.mxu0 0.0
        %3164 = vmatpush1.msra.mxu0 0.0
        %3165 = vmatprep.mubr.f32.mxu0 0.0
        %v3166 = vand.u32 %v2796, 4294901760
        %3167 = vmatmul.mubr.f32.gmra.mrb[0].mxu0 %v3166
        %v3168 = vpop.f32.mrb[0].mxu0
        %v3169 = vadd.f32 %v3095, %v3168
        %v3170 = vpop.f32.mrb[0].mxu0
        %3171 = vdwg.mxu0
        %3172 = vmatprep.subr.mxu0 0.0
        %v3173 = vand.u32 %v958, 4294901760
        %3174 = vmatpush1.msra.mxu0 %v3173
        %3175 = vmatprep.subr.mxu0 0.0
        %3176 = vmatpush1.msra.mxu0 0.0
        %3177 = vmatprep.subr.mxu0 0.0
        %3178 = vmatpush1.msra.mxu0 0.0
        %3179 = vmatprep.subr.mxu0 0.0
        %3180 = vmatpush1.msra.mxu0 0.0
        %3181 = vmatprep.subr.mxu0 0.0
        %3182 = vmatpush1.msra.mxu0 0.0
        %3183 = vmatprep.subr.mxu0 0.0
        %3184 = vmatpush1.msra.mxu0 0.0
        %3185 = vmatprep.subr.mxu0 0.0
        %3186 = vmatpush1.msra.mxu0 0.0
        %3187 = vmatprep.subr.mxu0 0.0
        %3188 = vmatpush1.msra.mxu0 0.0
        %3189 = vmatprep.subr.mxu0 0.0
        %3190 = vmatpush1.msra.mxu0 0.0
        %3191 = vmatprep.subr.mxu0 0.0
        %3192 = vmatpush1.msra.mxu0 0.0
        %3193 = vmatprep.subr.mxu0 0.0
        %3194 = vmatpush1.msra.mxu0 0.0
        %3195 = vmatprep.subr.mxu0 0.0
        %3196 = vmatpush1.msra.mxu0 0.0
        %3197 = vmatprep.subr.mxu0 0.0
        %3198 = vmatpush1.msra.mxu0 0.0
        %3199 = vmatprep.subr.mxu0 0.0
        %3200 = vmatpush1.msra.mxu0 0.0
        %3201 = vmatprep.subr.mxu0 0.0
        %3202 = vmatpush1.msra.mxu0 0.0
        %3203 = vmatprep.subr.mxu0 0.0
        %3204 = vmatpush1.msra.mxu0 0.0
        %3205 = vmatprep.subr.mxu0 0.0
        %3206 = vmatpush1.msra.mxu0 0.0
        %3207 = vmatprep.subr.mxu0 0.0
        %3208 = vmatpush1.msra.mxu0 0.0
        %3209 = vmatprep.subr.mxu0 0.0
        %3210 = vmatpush1.msra.mxu0 0.0
        %3211 = vmatprep.subr.mxu0 0.0
        %3212 = vmatpush1.msra.mxu0 0.0
        %3213 = vmatprep.subr.mxu0 0.0
        %3214 = vmatpush1.msra.mxu0 0.0
        %3215 = vmatprep.subr.mxu0 0.0
        %3216 = vmatpush1.msra.mxu0 0.0
        %3217 = vmatprep.subr.mxu0 0.0
        %3218 = vmatpush1.msra.mxu0 0.0
        %3219 = vmatprep.subr.mxu0 0.0
        %3220 = vmatpush1.msra.mxu0 0.0
        %3221 = vmatprep.subr.mxu0 0.0
        %3222 = vmatpush1.msra.mxu0 0.0
        %3223 = vmatprep.subr.mxu0 0.0
        %3224 = vmatpush1.msra.mxu0 0.0
        %3225 = vmatprep.subr.mxu0 0.0
        %3226 = vmatpush1.msra.mxu0 0.0
        %3227 = vmatprep.subr.mxu0 0.0
        %3228 = vmatpush1.msra.mxu0 0.0
        %3229 = vmatprep.subr.mxu0 0.0
        %3230 = vmatpush1.msra.mxu0 0.0
        %3231 = vmatprep.subr.mxu0 0.0
        %3232 = vmatpush1.msra.mxu0 0.0
        %3233 = vmatprep.subr.mxu0 0.0
        %3234 = vmatpush1.msra.mxu0 0.0
        %3235 = vmatprep.subr.mxu0 0.0
        %3236 = vmatpush1.msra.mxu0 0.0
        %3237 = vmatprep.mubr.f32.mxu0 0.0
        %v3238 = vand.u32 %v2796, 4294901760
        %3239 = vmatmul.mubr.f32.gmra.mrb[0].mxu0 %v3238
        %v3240 = vpop.f32.mrb[0].mxu0
        %v3241 = vadd.f32 %v3169, %v3240
        %v3242 = vpop.f32.mrb[0].mxu0
        %3243 = vdwg.mxu0
        %v3245 = vsel %vm964, %v1875, 0
        %3247 = vmatprep.subr.mxu0 0.0
        %v3248 = vand.u32 %v957, 4294901760
        %3249 = vmatpush1.msra.mxu0 %v3248
        %3250 = vmatprep.subr.mxu0 0.0
        %3251 = vmatpush1.msra.mxu0 0.0
        %3252 = vmatprep.subr.mxu0 0.0
        %3253 = vmatpush1.msra.mxu0 0.0
        %3254 = vmatprep.subr.mxu0 0.0
        %3255 = vmatpush1.msra.mxu0 0.0
        %3256 = vmatprep.subr.mxu0 0.0
        %3257 = vmatpush1.msra.mxu0 0.0
        %3258 = vmatprep.subr.mxu0 0.0
        %3259 = vmatpush1.msra.mxu0 0.0
        %3260 = vmatprep.subr.mxu0 0.0
        %3261 = vmatpush1.msra.mxu0 0.0
        %3262 = vmatprep.subr.mxu0 0.0
        %3263 = vmatpush1.msra.mxu0 0.0
        %3264 = vmatprep.subr.mxu0 0.0
        %3265 = vmatpush1.msra.mxu0 0.0
        %3266 = vmatprep.subr.mxu0 0.0
        %3267 = vmatpush1.msra.mxu0 0.0
        %3268 = vmatprep.subr.mxu0 0.0
        %3269 = vmatpush1.msra.mxu0 0.0
        %3270 = vmatprep.subr.mxu0 0.0
        %3271 = vmatpush1.msra.mxu0 0.0
        %3272 = vmatprep.subr.mxu0 0.0
        %3273 = vmatpush1.msra.mxu0 0.0
        %3274 = vmatprep.subr.mxu0 0.0
        %3275 = vmatpush1.msra.mxu0 0.0
        %3276 = vmatprep.subr.mxu0 0.0
        %3277 = vmatpush1.msra.mxu0 0.0
        %3278 = vmatprep.subr.mxu0 0.0
        %3279 = vmatpush1.msra.mxu0 0.0
        %3280 = vmatprep.subr.mxu0 0.0
        %3281 = vmatpush1.msra.mxu0 0.0
        %3282 = vmatprep.subr.mxu0 0.0
        %3283 = vmatpush1.msra.mxu0 0.0
        %3284 = vmatprep.subr.mxu0 0.0
        %3285 = vmatpush1.msra.mxu0 0.0
        %3286 = vmatprep.subr.mxu0 0.0
        %3287 = vmatpush1.msra.mxu0 0.0
        %3288 = vmatprep.subr.mxu0 0.0
        %3289 = vmatpush1.msra.mxu0 0.0
        %3290 = vmatprep.subr.mxu0 0.0
        %3291 = vmatpush1.msra.mxu0 0.0
        %3292 = vmatprep.subr.mxu0 0.0
        %3293 = vmatpush1.msra.mxu0 0.0
        %3294 = vmatprep.subr.mxu0 0.0
        %3295 = vmatpush1.msra.mxu0 0.0
        %3296 = vmatprep.subr.mxu0 0.0
        %3297 = vmatpush1.msra.mxu0 0.0
        %3298 = vmatprep.subr.mxu0 0.0
        %3299 = vmatpush1.msra.mxu0 0.0
        %3300 = vmatprep.subr.mxu0 0.0
        %3301 = vmatpush1.msra.mxu0 0.0
        %3302 = vmatprep.subr.mxu0 0.0
        %3303 = vmatpush1.msra.mxu0 0.0
        %3304 = vmatprep.subr.mxu0 0.0
        %3305 = vmatpush1.msra.mxu0 0.0
        %3306 = vmatprep.subr.mxu0 0.0
        %3307 = vmatpush1.msra.mxu0 0.0
        %3308 = vmatprep.subr.mxu0 0.0
        %3309 = vmatpush1.msra.mxu0 0.0
        %3310 = vmatprep.subr.mxu0 0.0
        %3311 = vmatpush1.msra.mxu0 0.0
        %3312 = vmatprep.mubr.f32.mxu0 0.0
        %v3313 = vand.u32 %v3245, 4294901760
        %v3314 = vsub.f32 %v3245, %v3313
        %v3315 = vand.u32 %v3314, 4294901760
        %v3316 = vsub.f32 %v3314, %v3315
        %v3317 = vand.u32 %v3316, 4294901760
        %3318 = vmatmul.mubr.f32.gmra.mrb[0].mxu0 %v3317
        %v3319 = vpop.f32.mrb[0].mxu0
        %v3320 = vadd.f32 %v3241, %v3319
        %v3321 = vpop.f32.mrb[0].mxu0
        %3322 = vdwg.mxu0
        %3323 = vmatprep.subr.mxu0 0.0
        %v3324 = vand.u32 %v957, 4294901760
        %v3325 = vsub.f32 %v957, %v3324
        %v3326 = vand.u32 %v3325, 4294901760
        %v3327 = vsub.f32 %v3325, %v3326
        %v3328 = vand.u32 %v3327, 4294901760
        %3329 = vmatpush1.msra.mxu0 %v3328
        %3330 = vmatprep.subr.mxu0 0.0
        %3331 = vmatpush1.msra.mxu0 0.0
        %3332 = vmatprep.subr.mxu0 0.0
        %3333 = vmatpush1.msra.mxu0 0.0
        %3334 = vmatprep.subr.mxu0 0.0
        %3335 = vmatpush1.msra.mxu0 0.0
        %3336 = vmatprep.subr.mxu0 0.0
        %3337 = vmatpush1.msra.mxu0 0.0
        %3338 = vmatprep.subr.mxu0 0.0
        %3339 = vmatpush1.msra.mxu0 0.0
        %3340 = vmatprep.subr.mxu0 0.0
        %3341 = vmatpush1.msra.mxu0 0.0
        %3342 = vmatprep.subr.mxu0 0.0
        %3343 = vmatpush1.msra.mxu0 0.0
        %3344 = vmatprep.subr.mxu0 0.0
        %3345 = vmatpush1.msra.mxu0 0.0
        %3346 = vmatprep.subr.mxu0 0.0
        %3347 = vmatpush1.msra.mxu0 0.0
        %3348 = vmatprep.subr.mxu0 0.0
        %3349 = vmatpush1.msra.mxu0 0.0
        %3350 = vmatprep.subr.mxu0 0.0
        %3351 = vmatpush1.msra.mxu0 0.0
        %3352 = vmatprep.subr.mxu0 0.0
        %3353 = vmatpush1.msra.mxu0 0.0
        %3354 = vmatprep.subr.mxu0 0.0
        %3355 = vmatpush1.msra.mxu0 0.0
        %3356 = vmatprep.subr.mxu0 0.0
        %3357 = vmatpush1.msra.mxu0 0.0
        %3358 = vmatprep.subr.mxu0 0.0
        %3359 = vmatpush1.msra.mxu0 0.0
        %3360 = vmatprep.subr.mxu0 0.0
        %3361 = vmatpush1.msra.mxu0 0.0
        %3362 = vmatprep.subr.mxu0 0.0
        %3363 = vmatpush1.msra.mxu0 0.0
        %3364 = vmatprep.subr.mxu0 0.0
        %3365 = vmatpush1.msra.mxu0 0.0
        %3366 = vmatprep.subr.mxu0 0.0
        %3367 = vmatpush1.msra.mxu0 0.0
        %3368 = vmatprep.subr.mxu0 0.0
        %3369 = vmatpush1.msra.mxu0 0.0
        %3370 = vmatprep.subr.mxu0 0.0
        %3371 = vmatpush1.msra.mxu0 0.0
        %3372 = vmatprep.subr.mxu0 0.0
        %3373 = vmatpush1.msra.mxu0 0.0
        %3374 = vmatprep.subr.mxu0 0.0
        %3375 = vmatpush1.msra.mxu0 0.0
        %3376 = vmatprep.subr.mxu0 0.0
        %3377 = vmatpush1.msra.mxu0 0.0
        %3378 = vmatprep.subr.mxu0 0.0
        %3379 = vmatpush1.msra.mxu0 0.0
        %3380 = vmatprep.subr.mxu0 0.0
        %3381 = vmatpush1.msra.mxu0 0.0
        %3382 = vmatprep.subr.mxu0 0.0
        %3383 = vmatpush1.msra.mxu0 0.0
        %3384 = vmatprep.subr.mxu0 0.0
        %3385 = vmatpush1.msra.mxu0 0.0
        %3386 = vmatprep.subr.mxu0 0.0
        %3387 = vmatpush1.msra.mxu0 0.0
        %3388 = vmatprep.subr.mxu0 0.0
        %3389 = vmatpush1.msra.mxu0 0.0
        %3390 = vmatprep.subr.mxu0 0.0
        %3391 = vmatpush1.msra.mxu0 0.0
        %3392 = vmatprep.mubr.f32.mxu0 0.0
        %v3393 = vand.u32 %v3245, 4294901760
        %3394 = vmatmul.mubr.f32.gmra.mrb[0].mxu0 %v3393
        %v3395 = vpop.f32.mrb[0].mxu0
        %v3396 = vadd.f32 %v3320, %v3395
        %v3397 = vpop.f32.mrb[0].mxu0
        %3398 = vdwg.mxu0
        %3399 = vmatprep.subr.mxu0 0.0
        %v3400 = vand.u32 %v957, 4294901760
        %v3401 = vsub.f32 %v957, %v3400
        %3402 = vmatpush1.msra.mxu0 %v3401
        %3403 = vmatprep.subr.mxu0 0.0
        %3404 = vmatpush1.msra.mxu0 0.0
        %3405 = vmatprep.subr.mxu0 0.0
        %3406 = vmatpush1.msra.mxu0 0.0
        %3407 = vmatprep.subr.mxu0 0.0
        %3408 = vmatpush1.msra.mxu0 0.0
        %3409 = vmatprep.subr.mxu0 0.0
        %3410 = vmatpush1.msra.mxu0 0.0
        %3411 = vmatprep.subr.mxu0 0.0
        %3412 = vmatpush1.msra.mxu0 0.0
        %3413 = vmatprep.subr.mxu0 0.0
        %3414 = vmatpush1.msra.mxu0 0.0
        %3415 = vmatprep.subr.mxu0 0.0
        %3416 = vmatpush1.msra.mxu0 0.0
        %3417 = vmatprep.subr.mxu0 0.0
        %3418 = vmatpush1.msra.mxu0 0.0
        %3419 = vmatprep.subr.mxu0 0.0
        %3420 = vmatpush1.msra.mxu0 0.0
        %3421 = vmatprep.subr.mxu0 0.0
        %3422 = vmatpush1.msra.mxu0 0.0
        %3423 = vmatprep.subr.mxu0 0.0
        %3424 = vmatpush1.msra.mxu0 0.0
        %3425 = vmatprep.subr.mxu0 0.0
        %3426 = vmatpush1.msra.mxu0 0.0
        %3427 = vmatprep.subr.mxu0 0.0
        %3428 = vmatpush1.msra.mxu0 0.0
        %3429 = vmatprep.subr.mxu0 0.0
        %3430 = vmatpush1.msra.mxu0 0.0
        %3431 = vmatprep.subr.mxu0 0.0
        %3432 = vmatpush1.msra.mxu0 0.0
        %3433 = vmatprep.subr.mxu0 0.0
        %3434 = vmatpush1.msra.mxu0 0.0
        %3435 = vmatprep.subr.mxu0 0.0
        %3436 = vmatpush1.msra.mxu0 0.0
        %3437 = vmatprep.subr.mxu0 0.0
        %3438 = vmatpush1.msra.mxu0 0.0
        %3439 = vmatprep.subr.mxu0 0.0
        %3440 = vmatpush1.msra.mxu0 0.0
        %3441 = vmatprep.subr.mxu0 0.0
        %3442 = vmatpush1.msra.mxu0 0.0
        %3443 = vmatprep.subr.mxu0 0.0
        %3444 = vmatpush1.msra.mxu0 0.0
        %3445 = vmatprep.subr.mxu0 0.0
        %3446 = vmatpush1.msra.mxu0 0.0
        %3447 = vmatprep.subr.mxu0 0.0
        %3448 = vmatpush1.msra.mxu0 0.0
        %3449 = vmatprep.subr.mxu0 0.0
        %3450 = vmatpush1.msra.mxu0 0.0
        %3451 = vmatprep.subr.mxu0 0.0
        %3452 = vmatpush1.msra.mxu0 0.0
        %3453 = vmatprep.subr.mxu0 0.0
        %3454 = vmatpush1.msra.mxu0 0.0
        %3455 = vmatprep.subr.mxu0 0.0
        %3456 = vmatpush1.msra.mxu0 0.0
        %3457 = vmatprep.subr.mxu0 0.0
        %3458 = vmatpush1.msra.mxu0 0.0
        %3459 = vmatprep.subr.mxu0 0.0
        %3460 = vmatpush1.msra.mxu0 0.0
        %3461 = vmatprep.subr.mxu0 0.0
        %3462 = vmatpush1.msra.mxu0 0.0
        %3463 = vmatprep.subr.mxu0 0.0
        %3464 = vmatpush1.msra.mxu0 0.0
        %3465 = vmatprep.mubr.f32.mxu0 0.0
        %v3466 = vand.u32 %v3245, 4294901760
        %v3467 = vsub.f32 %v3245, %v3466
        %3468 = vmatmul.mubr.f32.gmra.mrb[0].mxu0 %v3467
        %v3469 = vpop.f32.mrb[0].mxu0
        %v3470 = vadd.f32 %v3396, %v3469
        %v3471 = vpop.f32.mrb[0].mxu0
        %3472 = vdwg.mxu0
        %3473 = vmatprep.subr.mxu0 0.0
        %v3474 = vand.u32 %v957, 4294901760
        %3475 = vmatpush1.msra.mxu0 %v3474
        %3476 = vmatprep.subr.mxu0 0.0
        %3477 = vmatpush1.msra.mxu0 0.0
        %3478 = vmatprep.subr.mxu0 0.0
        %3479 = vmatpush1.msra.mxu0 0.0
        %3480 = vmatprep.subr.mxu0 0.0
        %3481 = vmatpush1.msra.mxu0 0.0
        %3482 = vmatprep.subr.mxu0 0.0
        %3483 = vmatpush1.msra.mxu0 0.0
        %3484 = vmatprep.subr.mxu0 0.0
        %3485 = vmatpush1.msra.mxu0 0.0
        %3486 = vmatprep.subr.mxu0 0.0
        %3487 = vmatpush1.msra.mxu0 0.0
        %3488 = vmatprep.subr.mxu0 0.0
        %3489 = vmatpush1.msra.mxu0 0.0
        %3490 = vmatprep.subr.mxu0 0.0
        %3491 = vmatpush1.msra.mxu0 0.0
        %3492 = vmatprep.subr.mxu0 0.0
        %3493 = vmatpush1.msra.mxu0 0.0
        %3494 = vmatprep.subr.mxu0 0.0
        %3495 = vmatpush1.msra.mxu0 0.0
        %3496 = vmatprep.subr.mxu0 0.0
        %3497 = vmatpush1.msra.mxu0 0.0
        %3498 = vmatprep.subr.mxu0 0.0
        %3499 = vmatpush1.msra.mxu0 0.0
        %3500 = vmatprep.subr.mxu0 0.0
        %3501 = vmatpush1.msra.mxu0 0.0
        %3502 = vmatprep.subr.mxu0 0.0
        %3503 = vmatpush1.msra.mxu0 0.0
        %3504 = vmatprep.subr.mxu0 0.0
        %3505 = vmatpush1.msra.mxu0 0.0
        %3506 = vmatprep.subr.mxu0 0.0
        %3507 = vmatpush1.msra.mxu0 0.0
        %3508 = vmatprep.subr.mxu0 0.0
        %3509 = vmatpush1.msra.mxu0 0.0
        %3510 = vmatprep.subr.mxu0 0.0
        %3511 = vmatpush1.msra.mxu0 0.0
        %3512 = vmatprep.subr.mxu0 0.0
        %3513 = vmatpush1.msra.mxu0 0.0
        %3514 = vmatprep.subr.mxu0 0.0
        %3515 = vmatpush1.msra.mxu0 0.0
        %3516 = vmatprep.subr.mxu0 0.0
        %3517 = vmatpush1.msra.mxu0 0.0
        %3518 = vmatprep.subr.mxu0 0.0
        %3519 = vmatpush1.msra.mxu0 0.0
        %3520 = vmatprep.subr.mxu0 0.0
        %3521 = vmatpush1.msra.mxu0 0.0
        %3522 = vmatprep.subr.mxu0 0.0
        %3523 = vmatpush1.msra.mxu0 0.0
        %3524 = vmatprep.subr.mxu0 0.0
        %3525 = vmatpush1.msra.mxu0 0.0
        %3526 = vmatprep.subr.mxu0 0.0
        %3527 = vmatpush1.msra.mxu0 0.0
        %3528 = vmatprep.subr.mxu0 0.0
        %3529 = vmatpush1.msra.mxu0 0.0
        %3530 = vmatprep.subr.mxu0 0.0
        %3531 = vmatpush1.msra.mxu0 0.0
        %3532 = vmatprep.subr.mxu0 0.0
        %3533 = vmatpush1.msra.mxu0 0.0
        %3534 = vmatprep.subr.mxu0 0.0
        %3535 = vmatpush1.msra.mxu0 0.0
        %3536 = vmatprep.subr.mxu0 0.0
        %3537 = vmatpush1.msra.mxu0 0.0
        %3538 = vmatprep.mubr.f32.mxu0 0.0
        %v3539 = vand.u32 %v3245, 4294901760
        %v3540 = vsub.f32 %v3245, %v3539
        %v3541 = vand.u32 %v3540, 4294901760
        %3542 = vmatmul.mubr.f32.gmra.mrb[0].mxu0 %v3541
        %v3543 = vpop.f32.mrb[0].mxu0
        %v3544 = vadd.f32 %v3470, %v3543
        %v3545 = vpop.f32.mrb[0].mxu0
        %3546 = vdwg.mxu0
        %3547 = vmatprep.subr.mxu0 0.0
        %v3548 = vand.u32 %v957, 4294901760
        %v3549 = vsub.f32 %v957, %v3548
        %v3550 = vand.u32 %v3549, 4294901760
        %3551 = vmatpush1.msra.mxu0 %v3550
        %3552 = vmatprep.subr.mxu0 0.0
        %3553 = vmatpush1.msra.mxu0 0.0
        %3554 = vmatprep.subr.mxu0 0.0
        %3555 = vmatpush1.msra.mxu0 0.0
        %3556 = vmatprep.subr.mxu0 0.0
        %3557 = vmatpush1.msra.mxu0 0.0
        %3558 = vmatprep.subr.mxu0 0.0
        %3559 = vmatpush1.msra.mxu0 0.0
        %3560 = vmatprep.subr.mxu0 0.0
        %3561 = vmatpush1.msra.mxu0 0.0
        %3562 = vmatprep.subr.mxu0 0.0
        %3563 = vmatpush1.msra.mxu0 0.0
        %3564 = vmatprep.subr.mxu0 0.0
        %3565 = vmatpush1.msra.mxu0 0.0
        %3566 = vmatprep.subr.mxu0 0.0
        %3567 = vmatpush1.msra.mxu0 0.0
        %3568 = vmatprep.subr.mxu0 0.0
        %3569 = vmatpush1.msra.mxu0 0.0
        %3570 = vmatprep.subr.mxu0 0.0
        %3571 = vmatpush1.msra.mxu0 0.0
        %3572 = vmatprep.subr.mxu0 0.0
        %3573 = vmatpush1.msra.mxu0 0.0
        %3574 = vmatprep.subr.mxu0 0.0
        %3575 = vmatpush1.msra.mxu0 0.0
        %3576 = vmatprep.subr.mxu0 0.0
        %3577 = vmatpush1.msra.mxu0 0.0
        %3578 = vmatprep.subr.mxu0 0.0
        %3579 = vmatpush1.msra.mxu0 0.0
        %3580 = vmatprep.subr.mxu0 0.0
        %3581 = vmatpush1.msra.mxu0 0.0
        %3582 = vmatprep.subr.mxu0 0.0
        %3583 = vmatpush1.msra.mxu0 0.0
        %3584 = vmatprep.subr.mxu0 0.0
        %3585 = vmatpush1.msra.mxu0 0.0
        %3586 = vmatprep.subr.mxu0 0.0
        %3587 = vmatpush1.msra.mxu0 0.0
        %3588 = vmatprep.subr.mxu0 0.0
        %3589 = vmatpush1.msra.mxu0 0.0
        %3590 = vmatprep.subr.mxu0 0.0
        %3591 = vmatpush1.msra.mxu0 0.0
        %3592 = vmatprep.subr.mxu0 0.0
        %3593 = vmatpush1.msra.mxu0 0.0
        %3594 = vmatprep.subr.mxu0 0.0
        %3595 = vmatpush1.msra.mxu0 0.0
        %3596 = vmatprep.subr.mxu0 0.0
        %3597 = vmatpush1.msra.mxu0 0.0
        %3598 = vmatprep.subr.mxu0 0.0
        %3599 = vmatpush1.msra.mxu0 0.0
        %3600 = vmatprep.subr.mxu0 0.0
        %3601 = vmatpush1.msra.mxu0 0.0
        %3602 = vmatprep.subr.mxu0 0.0
        %3603 = vmatpush1.msra.mxu0 0.0
        %3604 = vmatprep.subr.mxu0 0.0
        %3605 = vmatpush1.msra.mxu0 0.0
        %3606 = vmatprep.subr.mxu0 0.0
        %3607 = vmatpush1.msra.mxu0 0.0
        %3608 = vmatprep.subr.mxu0 0.0
        %3609 = vmatpush1.msra.mxu0 0.0
        %3610 = vmatprep.subr.mxu0 0.0
        %3611 = vmatpush1.msra.mxu0 0.0
        %3612 = vmatprep.subr.mxu0 0.0
        %3613 = vmatpush1.msra.mxu0 0.0
        %3614 = vmatprep.mubr.f32.mxu0 0.0
        %v3615 = vand.u32 %v3245, 4294901760
        %3616 = vmatmul.mubr.f32.gmra.mrb[0].mxu0 %v3615
        %v3617 = vpop.f32.mrb[0].mxu0
        %v3618 = vadd.f32 %v3544, %v3617
        %v3619 = vpop.f32.mrb[0].mxu0
        %3620 = vdwg.mxu0
        %3621 = vmatprep.subr.mxu0 0.0
        %v3622 = vand.u32 %v957, 4294901760
        %3623 = vmatpush1.msra.mxu0 %v3622
        %3624 = vmatprep.subr.mxu0 0.0
        %3625 = vmatpush1.msra.mxu0 0.0
        %3626 = vmatprep.subr.mxu0 0.0
        %3627 = vmatpush1.msra.mxu0 0.0
        %3628 = vmatprep.subr.mxu0 0.0
        %3629 = vmatpush1.msra.mxu0 0.0
        %3630 = vmatprep.subr.mxu0 0.0
        %3631 = vmatpush1.msra.mxu0 0.0
        %3632 = vmatprep.subr.mxu0 0.0
        %3633 = vmatpush1.msra.mxu0 0.0
        %3634 = vmatprep.subr.mxu0 0.0
        %3635 = vmatpush1.msra.mxu0 0.0
        %3636 = vmatprep.subr.mxu0 0.0
        %3637 = vmatpush1.msra.mxu0 0.0
        %3638 = vmatprep.subr.mxu0 0.0
        %3639 = vmatpush1.msra.mxu0 0.0
        %3640 = vmatprep.subr.mxu0 0.0
        %3641 = vmatpush1.msra.mxu0 0.0
        %3642 = vmatprep.subr.mxu0 0.0
        %3643 = vmatpush1.msra.mxu0 0.0
        %3644 = vmatprep.subr.mxu0 0.0
        %3645 = vmatpush1.msra.mxu0 0.0
        %3646 = vmatprep.subr.mxu0 0.0
        %3647 = vmatpush1.msra.mxu0 0.0
        %3648 = vmatprep.subr.mxu0 0.0
        %3649 = vmatpush1.msra.mxu0 0.0
        %3650 = vmatprep.subr.mxu0 0.0
        %3651 = vmatpush1.msra.mxu0 0.0
        %3652 = vmatprep.subr.mxu0 0.0
        %3653 = vmatpush1.msra.mxu0 0.0
        %3654 = vmatprep.subr.mxu0 0.0
        %3655 = vmatpush1.msra.mxu0 0.0
        %3656 = vmatprep.subr.mxu0 0.0
        %3657 = vmatpush1.msra.mxu0 0.0
        %3658 = vmatprep.subr.mxu0 0.0
        %3659 = vmatpush1.msra.mxu0 0.0
        %3660 = vmatprep.subr.mxu0 0.0
        %3661 = vmatpush1.msra.mxu0 0.0
        %3662 = vmatprep.subr.mxu0 0.0
        %3663 = vmatpush1.msra.mxu0 0.0
        %3664 = vmatprep.subr.mxu0 0.0
        %3665 = vmatpush1.msra.mxu0 0.0
        %3666 = vmatprep.subr.mxu0 0.0
        %3667 = vmatpush1.msra.mxu0 0.0
        %3668 = vmatprep.subr.mxu0 0.0
        %3669 = vmatpush1.msra.mxu0 0.0
        %3670 = vmatprep.subr.mxu0 0.0
        %3671 = vmatpush1.msra.mxu0 0.0
        %3672 = vmatprep.subr.mxu0 0.0
        %3673 = vmatpush1.msra.mxu0 0.0
        %3674 = vmatprep.subr.mxu0 0.0
        %3675 = vmatpush1.msra.mxu0 0.0
        %3676 = vmatprep.subr.mxu0 0.0
        %3677 = vmatpush1.msra.mxu0 0.0
        %3678 = vmatprep.subr.mxu0 0.0
        %3679 = vmatpush1.msra.mxu0 0.0
        %3680 = vmatprep.subr.mxu0 0.0
        %3681 = vmatpush1.msra.mxu0 0.0
        %3682 = vmatprep.subr.mxu0 0.0
        %3683 = vmatpush1.msra.mxu0 0.0
        %3684 = vmatprep.subr.mxu0 0.0
        %3685 = vmatpush1.msra.mxu0 0.0
        %3686 = vmatprep.mubr.f32.mxu0 0.0
        %v3687 = vand.u32 %v3245, 4294901760
        %3688 = vmatmul.mubr.f32.gmra.mrb[0].mxu0 %v3687
        %v3689 = vpop.f32.mrb[0].mxu0
        %v3690 = vadd.f32 %v3618, %v3689
        %v3691 = vpop.f32.mrb[0].mxu0
        %3692 = vdwg.mxu0
        %3693 = vrot.lane.b32.xlu0 %v954, 112
        %v3694 = vpop.permute.xlu0 %3693
        %3695 = vrot.lane.b32.xlu0 %v954, 80
        %v3696 = vpop.permute.xlu0 %3695
        %v3697 = vsel %vm964, %v3694, 0
        %v3699 = vsel %vm964, %v3696, 0
        %3701 = vmatprep.subr.mxu0 0.0
        %v3702 = vand.u32 %v3699, 4294901760
        %3703 = vmatpush1.xpose.msra.mxu0 %v3702
        %3704 = vmatprep.subr.mxu0 0.0
        %3705 = vmatpush1.xpose.msra.mxu0 0.0
        %3706 = vmatprep.subr.mxu0 0.0
        %3707 = vmatpush1.xpose.msra.mxu0 0.0
        %3708 = vmatprep.subr.mxu0 0.0
        %3709 = vmatpush1.xpose.msra.mxu0 0.0
        %3710 = vmatprep.subr.mxu0 0.0
        %3711 = vmatpush1.xpose.msra.mxu0 0.0
        %3712 = vmatprep.subr.mxu0 0.0
        %3713 = vmatpush1.xpose.msra.mxu0 0.0
        %3714 = vmatprep.subr.mxu0 0.0
        %3715 = vmatpush1.xpose.msra.mxu0 0.0
        %3716 = vmatprep.subr.mxu0 0.0
        %3717 = vmatpush1.xpose.msra.mxu0 0.0
        %3718 = vmatprep.subr.mxu0 0.0
        %3719 = vmatpush1.xpose.msra.mxu0 0.0
        %3720 = vmatprep.subr.mxu0 0.0
        %3721 = vmatpush1.xpose.msra.mxu0 0.0
        %3722 = vmatprep.subr.mxu0 0.0
        %3723 = vmatpush1.xpose.msra.mxu0 0.0
        %3724 = vmatprep.subr.mxu0 0.0
        %3725 = vmatpush1.xpose.msra.mxu0 0.0
        %3726 = vmatprep.subr.mxu0 0.0
        %3727 = vmatpush1.xpose.msra.mxu0 0.0
        %3728 = vmatprep.subr.mxu0 0.0
        %3729 = vmatpush1.xpose.msra.mxu0 0.0
        %3730 = vmatprep.subr.mxu0 0.0
        %3731 = vmatpush1.xpose.msra.mxu0 0.0
        %3732 = vmatprep.subr.mxu0 0.0
        %3733 = vmatpush1.xpose.msra.mxu0 0.0
        %3734 = vmatprep.subr.mxu0 0.0
        %3735 = vmatpush1.xpose.msra.mxu0 0.0
        %3736 = vmatprep.subr.mxu0 0.0
        %3737 = vmatpush1.xpose.msra.mxu0 0.0
        %3738 = vmatprep.subr.mxu0 0.0
        %3739 = vmatpush1.xpose.msra.mxu0 0.0
        %3740 = vmatprep.subr.mxu0 0.0
        %3741 = vmatpush1.xpose.msra.mxu0 0.0
        %3742 = vmatprep.subr.mxu0 0.0
        %3743 = vmatpush1.xpose.msra.mxu0 0.0
        %3744 = vmatprep.subr.mxu0 0.0
        %3745 = vmatpush1.xpose.msra.mxu0 0.0
        %3746 = vmatprep.subr.mxu0 0.0
        %3747 = vmatpush1.xpose.msra.mxu0 0.0
        %3748 = vmatprep.subr.mxu0 0.0
        %3749 = vmatpush1.xpose.msra.mxu0 0.0
        %3750 = vmatprep.subr.mxu0 0.0
        %3751 = vmatpush1.xpose.msra.mxu0 0.0
        %3752 = vmatprep.subr.mxu0 0.0
        %3753 = vmatpush1.xpose.msra.mxu0 0.0
        %3754 = vmatprep.subr.mxu0 0.0
        %3755 = vmatpush1.xpose.msra.mxu0 0.0
        %3756 = vmatprep.subr.mxu0 0.0
        %3757 = vmatpush1.xpose.msra.mxu0 0.0
        %3758 = vmatprep.subr.mxu0 0.0
        %3759 = vmatpush1.xpose.msra.mxu0 0.0
        %3760 = vmatprep.subr.mxu0 0.0
        %3761 = vmatpush1.xpose.msra.mxu0 0.0
        %3762 = vmatprep.subr.mxu0 0.0
        %3763 = vmatpush1.xpose.msra.mxu0 0.0
        %3764 = vmatprep.subr.mxu0 0.0
        %3765 = vmatpush1.xpose.msra.mxu0 0.0
        %3766 = vmatprep.mubr.f32.mxu0 0.0
        %v3767 = vand.u32 %v3697, 4294901760
        %v3768 = vsub.f32 %v3697, %v3767
        %v3769 = vand.u32 %v3768, 4294901760
        %v3770 = vsub.f32 %v3768, %v3769
        %v3771 = vand.u32 %v3770, 4294901760
        %3772 = vmatmul.mubr.f32.gmra.mrb[0].mxu0 %v3771
        %v3773 = vpop.f32.mrb[0].mxu0
        %v3774 = vadd.f32 0.0, %v3773
        %v3775 = vpop.f32.mrb[0].mxu0
        %3776 = vdwg.mxu0
        %3777 = vmatprep.subr.mxu0 0.0
        %v3778 = vand.u32 %v3699, 4294901760
        %v3779 = vsub.f32 %v3699, %v3778
        %v3780 = vand.u32 %v3779, 4294901760
        %v3781 = vsub.f32 %v3779, %v3780
        %v3782 = vand.u32 %v3781, 4294901760
        %3783 = vmatpush1.xpose.msra.mxu0 %v3782
        %3784 = vmatprep.subr.mxu0 0.0
        %3785 = vmatpush1.xpose.msra.mxu0 0.0
        %3786 = vmatprep.subr.mxu0 0.0
        %3787 = vmatpush1.xpose.msra.mxu0 0.0
        %3788 = vmatprep.subr.mxu0 0.0
        %3789 = vmatpush1.xpose.msra.mxu0 0.0
        %3790 = vmatprep.subr.mxu0 0.0
        %3791 = vmatpush1.xpose.msra.mxu0 0.0
        %3792 = vmatprep.subr.mxu0 0.0
        %3793 = vmatpush1.xpose.msra.mxu0 0.0
        %3794 = vmatprep.subr.mxu0 0.0
        %3795 = vmatpush1.xpose.msra.mxu0 0.0
        %3796 = vmatprep.subr.mxu0 0.0
        %3797 = vmatpush1.xpose.msra.mxu0 0.0
        %3798 = vmatprep.subr.mxu0 0.0
        %3799 = vmatpush1.xpose.msra.mxu0 0.0
        %3800 = vmatprep.subr.mxu0 0.0
        %3801 = vmatpush1.xpose.msra.mxu0 0.0
        %3802 = vmatprep.subr.mxu0 0.0
        %3803 = vmatpush1.xpose.msra.mxu0 0.0
        %3804 = vmatprep.subr.mxu0 0.0
        %3805 = vmatpush1.xpose.msra.mxu0 0.0
        %3806 = vmatprep.subr.mxu0 0.0
        %3807 = vmatpush1.xpose.msra.mxu0 0.0
        %3808 = vmatprep.subr.mxu0 0.0
        %3809 = vmatpush1.xpose.msra.mxu0 0.0
        %3810 = vmatprep.subr.mxu0 0.0
        %3811 = vmatpush1.xpose.msra.mxu0 0.0
        %3812 = vmatprep.subr.mxu0 0.0
        %3813 = vmatpush1.xpose.msra.mxu0 0.0
        %3814 = vmatprep.subr.mxu0 0.0
        %3815 = vmatpush1.xpose.msra.mxu0 0.0
        %3816 = vmatprep.subr.mxu0 0.0
        %3817 = vmatpush1.xpose.msra.mxu0 0.0
        %3818 = vmatprep.subr.mxu0 0.0
        %3819 = vmatpush1.xpose.msra.mxu0 0.0
        %3820 = vmatprep.subr.mxu0 0.0
        %3821 = vmatpush1.xpose.msra.mxu0 0.0
        %3822 = vmatprep.subr.mxu0 0.0
        %3823 = vmatpush1.xpose.msra.mxu0 0.0
        %3824 = vmatprep.subr.mxu0 0.0
        %3825 = vmatpush1.xpose.msra.mxu0 0.0
        %3826 = vmatprep.subr.mxu0 0.0
        %3827 = vmatpush1.xpose.msra.mxu0 0.0
        %3828 = vmatprep.subr.mxu0 0.0
        %3829 = vmatpush1.xpose.msra.mxu0 0.0
        %3830 = vmatprep.subr.mxu0 0.0
        %3831 = vmatpush1.xpose.msra.mxu0 0.0
        %3832 = vmatprep.subr.mxu0 0.0
        %3833 = vmatpush1.xpose.msra.mxu0 0.0
        %3834 = vmatprep.subr.mxu0 0.0
        %3835 = vmatpush1.xpose.msra.mxu0 0.0
        %3836 = vmatprep.subr.mxu0 0.0
        %3837 = vmatpush1.xpose.msra.mxu0 0.0
        %3838 = vmatprep.subr.mxu0 0.0
        %3839 = vmatpush1.xpose.msra.mxu0 0.0
        %3840 = vmatprep.subr.mxu0 0.0
        %3841 = vmatpush1.xpose.msra.mxu0 0.0
        %3842 = vmatprep.subr.mxu0 0.0
        %3843 = vmatpush1.xpose.msra.mxu0 0.0
        %3844 = vmatprep.subr.mxu0 0.0
        %3845 = vmatpush1.xpose.msra.mxu0 0.0
        %3846 = vmatprep.mubr.f32.mxu0 0.0
        %v3847 = vand.u32 %v3697, 4294901760
        %3848 = vmatmul.mubr.f32.gmra.mrb[0].mxu0 %v3847
        %v3849 = vpop.f32.mrb[0].mxu0
        %v3850 = vadd.f32 %v3774, %v3849
        %v3851 = vpop.f32.mrb[0].mxu0
        %3852 = vdwg.mxu0
        %3853 = vmatprep.subr.mxu0 0.0
        %v3854 = vand.u32 %v3699, 4294901760
        %v3855 = vsub.f32 %v3699, %v3854
        %3856 = vmatpush1.xpose.msra.mxu0 %v3855
        %3857 = vmatprep.subr.mxu0 0.0
        %3858 = vmatpush1.xpose.msra.mxu0 0.0
        %3859 = vmatprep.subr.mxu0 0.0
        %3860 = vmatpush1.xpose.msra.mxu0 0.0
        %3861 = vmatprep.subr.mxu0 0.0
        %3862 = vmatpush1.xpose.msra.mxu0 0.0
        %3863 = vmatprep.subr.mxu0 0.0
        %3864 = vmatpush1.xpose.msra.mxu0 0.0
        %3865 = vmatprep.subr.mxu0 0.0
        %3866 = vmatpush1.xpose.msra.mxu0 0.0
        %3867 = vmatprep.subr.mxu0 0.0
        %3868 = vmatpush1.xpose.msra.mxu0 0.0
        %3869 = vmatprep.subr.mxu0 0.0
        %3870 = vmatpush1.xpose.msra.mxu0 0.0
        %3871 = vmatprep.subr.mxu0 0.0
        %3872 = vmatpush1.xpose.msra.mxu0 0.0
        %3873 = vmatprep.subr.mxu0 0.0
        %3874 = vmatpush1.xpose.msra.mxu0 0.0
        %3875 = vmatprep.subr.mxu0 0.0
        %3876 = vmatpush1.xpose.msra.mxu0 0.0
        %3877 = vmatprep.subr.mxu0 0.0
        %3878 = vmatpush1.xpose.msra.mxu0 0.0
        %3879 = vmatprep.subr.mxu0 0.0
        %3880 = vmatpush1.xpose.msra.mxu0 0.0
        %3881 = vmatprep.subr.mxu0 0.0
        %3882 = vmatpush1.xpose.msra.mxu0 0.0
        %3883 = vmatprep.subr.mxu0 0.0
        %3884 = vmatpush1.xpose.msra.mxu0 0.0
        %3885 = vmatprep.subr.mxu0 0.0
        %3886 = vmatpush1.xpose.msra.mxu0 0.0
        %3887 = vmatprep.subr.mxu0 0.0
        %3888 = vmatpush1.xpose.msra.mxu0 0.0
        %3889 = vmatprep.subr.mxu0 0.0
        %3890 = vmatpush1.xpose.msra.mxu0 0.0
        %3891 = vmatprep.subr.mxu0 0.0
        %3892 = vmatpush1.xpose.msra.mxu0 0.0
        %3893 = vmatprep.subr.mxu0 0.0
        %3894 = vmatpush1.xpose.msra.mxu0 0.0
        %3895 = vmatprep.subr.mxu0 0.0
        %3896 = vmatpush1.xpose.msra.mxu0 0.0
        %3897 = vmatprep.subr.mxu0 0.0
        %3898 = vmatpush1.xpose.msra.mxu0 0.0
        %3899 = vmatprep.subr.mxu0 0.0
        %3900 = vmatpush1.xpose.msra.mxu0 0.0
        %3901 = vmatprep.subr.mxu0 0.0
        %3902 = vmatpush1.xpose.msra.mxu0 0.0
        %3903 = vmatprep.subr.mxu0 0.0
        %3904 = vmatpush1.xpose.msra.mxu0 0.0
        %3905 = vmatprep.subr.mxu0 0.0
        %3906 = vmatpush1.xpose.msra.mxu0 0.0
        %3907 = vmatprep.subr.mxu0 0.0
        %3908 = vmatpush1.xpose.msra.mxu0 0.0
        %3909 = vmatprep.subr.mxu0 0.0
        %3910 = vmatpush1.xpose.msra.mxu0 0.0
        %3911 = vmatprep.subr.mxu0 0.0
        %3912 = vmatpush1.xpose.msra.mxu0 0.0
        %3913 = vmatprep.subr.mxu0 0.0
        %3914 = vmatpush1.xpose.msra.mxu0 0.0
        %3915 = vmatprep.subr.mxu0 0.0
        %3916 = vmatpush1.xpose.msra.mxu0 0.0
        %3917 = vmatprep.subr.mxu0 0.0
        %3918 = vmatpush1.xpose.msra.mxu0 0.0
        %3919 = vmatprep.mubr.f32.mxu0 0.0
        %v3920 = vand.u32 %v3697, 4294901760
        %v3921 = vsub.f32 %v3697, %v3920
        %3922 = vmatmul.mubr.f32.gmra.mrb[0].mxu0 %v3921
        %v3923 = vpop.f32.mrb[0].mxu0
        %v3924 = vadd.f32 %v3850, %v3923
        %v3925 = vpop.f32.mrb[0].mxu0
        %3926 = vdwg.mxu0
        %3927 = vmatprep.subr.mxu0 0.0
        %v3928 = vand.u32 %v3699, 4294901760
        %3929 = vmatpush1.xpose.msra.mxu0 %v3928
        %3930 = vmatprep.subr.mxu0 0.0
        %3931 = vmatpush1.xpose.msra.mxu0 0.0
        %3932 = vmatprep.subr.mxu0 0.0
        %3933 = vmatpush1.xpose.msra.mxu0 0.0
        %3934 = vmatprep.subr.mxu0 0.0
        %3935 = vmatpush1.xpose.msra.mxu0 0.0
        %3936 = vmatprep.subr.mxu0 0.0
        %3937 = vmatpush1.xpose.msra.mxu0 0.0
        %3938 = vmatprep.subr.mxu0 0.0
        %3939 = vmatpush1.xpose.msra.mxu0 0.0
        %3940 = vmatprep.subr.mxu0 0.0
        %3941 = vmatpush1.xpose.msra.mxu0 0.0
        %3942 = vmatprep.subr.mxu0 0.0
        %3943 = vmatpush1.xpose.msra.mxu0 0.0
        %3944 = vmatprep.subr.mxu0 0.0
        %3945 = vmatpush1.xpose.msra.mxu0 0.0
        %3946 = vmatprep.subr.mxu0 0.0
        %3947 = vmatpush1.xpose.msra.mxu0 0.0
        %3948 = vmatprep.subr.mxu0 0.0
        %3949 = vmatpush1.xpose.msra.mxu0 0.0
        %3950 = vmatprep.subr.mxu0 0.0
        %3951 = vmatpush1.xpose.msra.mxu0 0.0
        %3952 = vmatprep.subr.mxu0 0.0
        %3953 = vmatpush1.xpose.msra.mxu0 0.0
        %3954 = vmatprep.subr.mxu0 0.0
        %3955 = vmatpush1.xpose.msra.mxu0 0.0
        %3956 = vmatprep.subr.mxu0 0.0
        %3957 = vmatpush1.xpose.msra.mxu0 0.0
        %3958 = vmatprep.subr.mxu0 0.0
        %3959 = vmatpush1.xpose.msra.mxu0 0.0
        %3960 = vmatprep.subr.mxu0 0.0
        %3961 = vmatpush1.xpose.msra.mxu0 0.0
        %3962 = vmatprep.subr.mxu0 0.0
        %3963 = vmatpush1.xpose.msra.mxu0 0.0
        %3964 = vmatprep.subr.mxu0 0.0
        %3965 = vmatpush1.xpose.msra.mxu0 0.0
        %3966 = vmatprep.subr.mxu0 0.0
        %3967 = vmatpush1.xpose.msra.mxu0 0.0
        %3968 = vmatprep.subr.mxu0 0.0
        %3969 = vmatpush1.xpose.msra.mxu0 0.0
        %3970 = vmatprep.subr.mxu0 0.0
        %3971 = vmatpush1.xpose.msra.mxu0 0.0
        %3972 = vmatprep.subr.mxu0 0.0
        %3973 = vmatpush1.xpose.msra.mxu0 0.0
        %3974 = vmatprep.subr.mxu0 0.0
        %3975 = vmatpush1.xpose.msra.mxu0 0.0
        %3976 = vmatprep.subr.mxu0 0.0
        %3977 = vmatpush1.xpose.msra.mxu0 0.0
        %3978 = vmatprep.subr.mxu0 0.0
        %3979 = vmatpush1.xpose.msra.mxu0 0.0
        %3980 = vmatprep.subr.mxu0 0.0
        %3981 = vmatpush1.xpose.msra.mxu0 0.0
        %3982 = vmatprep.subr.mxu0 0.0
        %3983 = vmatpush1.xpose.msra.mxu0 0.0
        %3984 = vmatprep.subr.mxu0 0.0
        %3985 = vmatpush1.xpose.msra.mxu0 0.0
        %3986 = vmatprep.subr.mxu0 0.0
        %3987 = vmatpush1.xpose.msra.mxu0 0.0
        %3988 = vmatprep.subr.mxu0 0.0
        %3989 = vmatpush1.xpose.msra.mxu0 0.0
        %3990 = vmatprep.subr.mxu0 0.0
        %3991 = vmatpush1.xpose.msra.mxu0 0.0
        %3992 = vmatprep.mubr.f32.mxu0 0.0
        %v3993 = vand.u32 %v3697, 4294901760
        %v3994 = vsub.f32 %v3697, %v3993
        %v3995 = vand.u32 %v3994, 4294901760
        %3996 = vmatmul.mubr.f32.gmra.mrb[0].mxu0 %v3995
        %v3997 = vpop.f32.mrb[0].mxu0
        %v3998 = vadd.f32 %v3924, %v3997
        %v3999 = vpop.f32.mrb[0].mxu0
        %4000 = vdwg.mxu0
        %4001 = vmatprep.subr.mxu0 0.0
        %v4002 = vand.u32 %v3699, 4294901760
        %v4003 = vsub.f32 %v3699, %v4002
        %v4004 = vand.u32 %v4003, 4294901760
        %4005 = vmatpush1.xpose.msra.mxu0 %v4004
        %4006 = vmatprep.subr.mxu0 0.0
        %4007 = vmatpush1.xpose.msra.mxu0 0.0
        %4008 = vmatprep.subr.mxu0 0.0
        %4009 = vmatpush1.xpose.msra.mxu0 0.0
        %4010 = vmatprep.subr.mxu0 0.0
        %4011 = vmatpush1.xpose.msra.mxu0 0.0
        %4012 = vmatprep.subr.mxu0 0.0
        %4013 = vmatpush1.xpose.msra.mxu0 0.0
        %4014 = vmatprep.subr.mxu0 0.0
        %4015 = vmatpush1.xpose.msra.mxu0 0.0
        %4016 = vmatprep.subr.mxu0 0.0
        %4017 = vmatpush1.xpose.msra.mxu0 0.0
        %4018 = vmatprep.subr.mxu0 0.0
        %4019 = vmatpush1.xpose.msra.mxu0 0.0
        %4020 = vmatprep.subr.mxu0 0.0
        %4021 = vmatpush1.xpose.msra.mxu0 0.0
        %4022 = vmatprep.subr.mxu0 0.0
        %4023 = vmatpush1.xpose.msra.mxu0 0.0
        %4024 = vmatprep.subr.mxu0 0.0
        %4025 = vmatpush1.xpose.msra.mxu0 0.0
        %4026 = vmatprep.subr.mxu0 0.0
        %4027 = vmatpush1.xpose.msra.mxu0 0.0
        %4028 = vmatprep.subr.mxu0 0.0
        %4029 = vmatpush1.xpose.msra.mxu0 0.0
        %4030 = vmatprep.subr.mxu0 0.0
        %4031 = vmatpush1.xpose.msra.mxu0 0.0
        %4032 = vmatprep.subr.mxu0 0.0
        %4033 = vmatpush1.xpose.msra.mxu0 0.0
        %4034 = vmatprep.subr.mxu0 0.0
        %4035 = vmatpush1.xpose.msra.mxu0 0.0
        %4036 = vmatprep.subr.mxu0 0.0
        %4037 = vmatpush1.xpose.msra.mxu0 0.0
        %4038 = vmatprep.subr.mxu0 0.0
        %4039 = vmatpush1.xpose.msra.mxu0 0.0
        %4040 = vmatprep.subr.mxu0 0.0
        %4041 = vmatpush1.xpose.msra.mxu0 0.0
        %4042 = vmatprep.subr.mxu0 0.0
        %4043 = vmatpush1.xpose.msra.mxu0 0.0
        %4044 = vmatprep.subr.mxu0 0.0
        %4045 = vmatpush1.xpose.msra.mxu0 0.0
        %4046 = vmatprep.subr.mxu0 0.0
        %4047 = vmatpush1.xpose.msra.mxu0 0.0
        %4048 = vmatprep.subr.mxu0 0.0
        %4049 = vmatpush1.xpose.msra.mxu0 0.0
        %4050 = vmatprep.subr.mxu0 0.0
        %4051 = vmatpush1.xpose.msra.mxu0 0.0
        %4052 = vmatprep.subr.mxu0 0.0
        %4053 = vmatpush1.xpose.msra.mxu0 0.0
        %4054 = vmatprep.subr.mxu0 0.0
        %4055 = vmatpush1.xpose.msra.mxu0 0.0
        %4056 = vmatprep.subr.mxu0 0.0
        %4057 = vmatpush1.xpose.msra.mxu0 0.0
        %4058 = vmatprep.subr.mxu0 0.0
        %4059 = vmatpush1.xpose.msra.mxu0 0.0
        %4060 = vmatprep.subr.mxu0 0.0
        %4061 = vmatpush1.xpose.msra.mxu0 0.0
        %4062 = vmatprep.subr.mxu0 0.0
        %4063 = vmatpush1.xpose.msra.mxu0 0.0
        %4064 = vmatprep.subr.mxu0 0.0
        %4065 = vmatpush1.xpose.msra.mxu0 0.0
        %4066 = vmatprep.subr.mxu0 0.0
        %4067 = vmatpush1.xpose.msra.mxu0 0.0
        %4068 = vmatprep.mubr.f32.mxu0 0.0
        %v4069 = vand.u32 %v3697, 4294901760
        %4070 = vmatmul.mubr.f32.gmra.mrb[0].mxu0 %v4069
        %v4071 = vpop.f32.mrb[0].mxu0
        %v4072 = vadd.f32 %v3998, %v4071
        %v4073 = vpop.f32.mrb[0].mxu0
        %4074 = vdwg.mxu0
        %4075 = vmatprep.subr.mxu0 0.0
        %v4076 = vand.u32 %v3699, 4294901760
        %4077 = vmatpush1.xpose.msra.mxu0 %v4076
        %4078 = vmatprep.subr.mxu0 0.0
        %4079 = vmatpush1.xpose.msra.mxu0 0.0
        %4080 = vmatprep.subr.mxu0 0.0
        %4081 = vmatpush1.xpose.msra.mxu0 0.0
        %4082 = vmatprep.subr.mxu0 0.0
        %4083 = vmatpush1.xpose.msra.mxu0 0.0
        %4084 = vmatprep.subr.mxu0 0.0
        %4085 = vmatpush1.xpose.msra.mxu0 0.0
        %4086 = vmatprep.subr.mxu0 0.0
        %4087 = vmatpush1.xpose.msra.mxu0 0.0
        %4088 = vmatprep.subr.mxu0 0.0
        %4089 = vmatpush1.xpose.msra.mxu0 0.0
        %4090 = vmatprep.subr.mxu0 0.0
        %4091 = vmatpush1.xpose.msra.mxu0 0.0
        %4092 = vmatprep.subr.mxu0 0.0
        %4093 = vmatpush1.xpose.msra.mxu0 0.0
        %4094 = vmatprep.subr.mxu0 0.0
        %4095 = vmatpush1.xpose.msra.mxu0 0.0
        %4096 = vmatprep.subr.mxu0 0.0
        %4097 = vmatpush1.xpose.msra.mxu0 0.0
        %4098 = vmatprep.subr.mxu0 0.0
        %4099 = vmatpush1.xpose.msra.mxu0 0.0
        %4100 = vmatprep.subr.mxu0 0.0
        %4101 = vmatpush1.xpose.msra.mxu0 0.0
        %4102 = vmatprep.subr.mxu0 0.0
        %4103 = vmatpush1.xpose.msra.mxu0 0.0
        %4104 = vmatprep.subr.mxu0 0.0
        %4105 = vmatpush1.xpose.msra.mxu0 0.0
        %4106 = vmatprep.subr.mxu0 0.0
        %4107 = vmatpush1.xpose.msra.mxu0 0.0
        %4108 = vmatprep.subr.mxu0 0.0
        %4109 = vmatpush1.xpose.msra.mxu0 0.0
        %4110 = vmatprep.subr.mxu0 0.0
        %4111 = vmatpush1.xpose.msra.mxu0 0.0
        %4112 = vmatprep.subr.mxu0 0.0
        %4113 = vmatpush1.xpose.msra.mxu0 0.0
        %4114 = vmatprep.subr.mxu0 0.0
        %4115 = vmatpush1.xpose.msra.mxu0 0.0
        %4116 = vmatprep.subr.mxu0 0.0
        %4117 = vmatpush1.xpose.msra.mxu0 0.0
        %4118 = vmatprep.subr.mxu0 0.0
        %4119 = vmatpush1.xpose.msra.mxu0 0.0
        %4120 = vmatprep.subr.mxu0 0.0
        %4121 = vmatpush1.xpose.msra.mxu0 0.0
        %4122 = vmatprep.subr.mxu0 0.0
        %4123 = vmatpush1.xpose.msra.mxu0 0.0
        %4124 = vmatprep.subr.mxu0 0.0
        %4125 = vmatpush1.xpose.msra.mxu0 0.0
        %4126 = vmatprep.subr.mxu0 0.0
        %4127 = vmatpush1.xpose.msra.mxu0 0.0
        %4128 = vmatprep.subr.mxu0 0.0
        %4129 = vmatpush1.xpose.msra.mxu0 0.0
        %4130 = vmatprep.subr.mxu0 0.0
        %4131 = vmatpush1.xpose.msra.mxu0 0.0
        %4132 = vmatprep.subr.mxu0 0.0
        %4133 = vmatpush1.xpose.msra.mxu0 0.0
        %4134 = vmatprep.subr.mxu0 0.0
        %4135 = vmatpush1.xpose.msra.mxu0 0.0
        %4136 = vmatprep.subr.mxu0 0.0
        %4137 = vmatpush1.xpose.msra.mxu0 0.0
        %4138 = vmatprep.subr.mxu0 0.0
        %4139 = vmatpush1.xpose.msra.mxu0 0.0
        %4140 = vmatprep.mubr.f32.mxu0 0.0
        %v4141 = vand.u32 %v3697, 4294901760
        %4142 = vmatmul.mubr.f32.gmra.mrb[0].mxu0 %v4141
        %v4143 = vpop.f32.mrb[0].mxu0
        %v4144 = vadd.f32 %v4072, %v4143
        %v4145 = vpop.f32.mrb[0].mxu0
        %4146 = vdwg.mxu0
        %v4147 = vsel %vm964, %v4144, -inf
        %4148 = vmax.xlane.f32.xlu0 %v4147
        %v4149 = vpop.xlane.xlu0 %4148
        %v4150 = vsub.f32 %v4144, %v4149
        %v4151 = vmul.f32 %v4150, 1.442695
        %v4152 = vpow.pop %v4151
        %v4153 = vsel %vm964, %v4152, 0.0
        %4154 = vadd.xlane.f32.xlu0 %v4153
        %v4155 = vpop.xlane.xlu0 %4154
        %v4156 = vrcp.pop %v4155
        %v4157 = vmul.f32 %v4152, %v4156
        %4158 = vrot.lane.b32.xlu0 %v954, 48
        %v4159 = vpop.permute.xlu0 %4158
        %v4162 = vsel %vm964, %v4157, 0
        %4164 = vmatprep.subr.mxu0 0.0
        %v4165 = vand.u32 %v4159, 4294901760
        %4166 = vmatpush1.msra.mxu0 %v4165
        %4167 = vmatprep.subr.mxu0 0.0
        %4168 = vmatpush1.msra.mxu0 0.0
        %4169 = vmatprep.subr.mxu0 0.0
        %4170 = vmatpush1.msra.mxu0 0.0
        %4171 = vmatprep.subr.mxu0 0.0
        %4172 = vmatpush1.msra.mxu0 0.0
        %4173 = vmatprep.subr.mxu0 0.0
        %4174 = vmatpush1.msra.mxu0 0.0
        %4175 = vmatprep.subr.mxu0 0.0
        %4176 = vmatpush1.msra.mxu0 0.0
        %4177 = vmatprep.subr.mxu0 0.0
        %4178 = vmatpush1.msra.mxu0 0.0
        %4179 = vmatprep.subr.mxu0 0.0
        %4180 = vmatpush1.msra.mxu0 0.0
        %4181 = vmatprep.subr.mxu0 0.0
        %4182 = vmatpush1.msra.mxu0 0.0
        %4183 = vmatprep.subr.mxu0 0.0
        %4184 = vmatpush1.msra.mxu0 0.0
        %4185 = vmatprep.subr.mxu0 0.0
        %4186 = vmatpush1.msra.mxu0 0.0
        %4187 = vmatprep.subr.mxu0 0.0
        %4188 = vmatpush1.msra.mxu0 0.0
        %4189 = vmatprep.subr.mxu0 0.0
        %4190 = vmatpush1.msra.mxu0 0.0
        %4191 = vmatprep.subr.mxu0 0.0
        %4192 = vmatpush1.msra.mxu0 0.0
        %4193 = vmatprep.subr.mxu0 0.0
        %4194 = vmatpush1.msra.mxu0 0.0
        %4195 = vmatprep.subr.mxu0 0.0
        %4196 = vmatpush1.msra.mxu0 0.0
        %4197 = vmatprep.subr.mxu0 0.0
        %4198 = vmatpush1.msra.mxu0 0.0
        %4199 = vmatprep.subr.mxu0 0.0
        %4200 = vmatpush1.msra.mxu0 0.0
        %4201 = vmatprep.subr.mxu0 0.0
        %4202 = vmatpush1.msra.mxu0 0.0
        %4203 = vmatprep.subr.mxu0 0.0
        %4204 = vmatpush1.msra.mxu0 0.0
        %4205 = vmatprep.subr.mxu0 0.0
        %4206 = vmatpush1.msra.mxu0 0.0
        %4207 = vmatprep.subr.mxu0 0.0
        %4208 = vmatpush1.msra.mxu0 0.0
        %4209 = vmatprep.subr.mxu0 0.0
        %4210 = vmatpush1.msra.mxu0 0.0
        %4211 = vmatprep.subr.mxu0 0.0
        %4212 = vmatpush1.msra.mxu0 0.0
        %4213 = vmatprep.subr.mxu0 0.0
        %4214 = vmatpush1.msra.mxu0 0.0
        %4215 = vmatprep.subr.mxu0 0.0
        %4216 = vmatpush1.msra.mxu0 0.0
        %4217 = vmatprep.subr.mxu0 0.0
        %4218 = vmatpush1.msra.mxu0 0.0
        %4219 = vmatprep.subr.mxu0 0.0
        %4220 = vmatpush1.msra.mxu0 0.0
        %4221 = vmatprep.subr.mxu0 0.0
        %4222 = vmatpush1.msra.mxu0 0.0
        %4223 = vmatprep.subr.mxu0 0.0
        %4224 = vmatpush1.msra.mxu0 0.0
        %4225 = vmatprep.subr.mxu0 0.0
        %4226 = vmatpush1.msra.mxu0 0.0
        %4227 = vmatprep.subr.mxu0 0.0
        %4228 = vmatpush1.msra.mxu0 0.0
        %4229 = vmatprep.mubr.f32.mxu0 0.0
        %v4230 = vand.u32 %v4162, 4294901760
        %v4231 = vsub.f32 %v4162, %v4230
        %v4232 = vand.u32 %v4231, 4294901760
        %v4233 = vsub.f32 %v4231, %v4232
        %v4234 = vand.u32 %v4233, 4294901760
        %4235 = vmatmul.mubr.f32.gmra.mrb[0].mxu0 %v4234
        %v4236 = vpop.f32.mrb[0].mxu0
        %v4237 = vadd.f32 0.0, %v4236
        %v4238 = vpop.f32.mrb[0].mxu0
        %4239 = vdwg.mxu0
        %4240 = vmatprep.subr.mxu0 0.0
        %v4241 = vand.u32 %v4159, 4294901760
        %v4242 = vsub.f32 %v4159, %v4241
        %v4243 = vand.u32 %v4242, 4294901760
        %v4244 = vsub.f32 %v4242, %v4243
        %v4245 = vand.u32 %v4244, 4294901760
        %4246 = vmatpush1.msra.mxu0 %v4245
        %4247 = vmatprep.subr.mxu0 0.0
        %4248 = vmatpush1.msra.mxu0 0.0
        %4249 = vmatprep.subr.mxu0 0.0
        %4250 = vmatpush1.msra.mxu0 0.0
        %4251 = vmatprep.subr.mxu0 0.0
        %4252 = vmatpush1.msra.mxu0 0.0
        %4253 = vmatprep.subr.mxu0 0.0
        %4254 = vmatpush1.msra.mxu0 0.0
        %4255 = vmatprep.subr.mxu0 0.0
        %4256 = vmatpush1.msra.mxu0 0.0
        %4257 = vmatprep.subr.mxu0 0.0
        %4258 = vmatpush1.msra.mxu0 0.0
        %4259 = vmatprep.subr.mxu0 0.0
        %4260 = vmatpush1.msra.mxu0 0.0
        %4261 = vmatprep.subr.mxu0 0.0
        %4262 = vmatpush1.msra.mxu0 0.0
        %4263 = vmatprep.subr.mxu0 0.0
        %4264 = vmatpush1.msra.mxu0 0.0
        %4265 = vmatprep.subr.mxu0 0.0
        %4266 = vmatpush1.msra.mxu0 0.0
        %4267 = vmatprep.subr.mxu0 0.0
        %4268 = vmatpush1.msra.mxu0 0.0
        %4269 = vmatprep.subr.mxu0 0.0
        %4270 = vmatpush1.msra.mxu0 0.0
        %4271 = vmatprep.subr.mxu0 0.0
        %4272 = vmatpush1.msra.mxu0 0.0
        %4273 = vmatprep.subr.mxu0 0.0
        %4274 = vmatpush1.msra.mxu0 0.0
        %4275 = vmatprep.subr.mxu0 0.0
        %4276 = vmatpush1.msra.mxu0 0.0
        %4277 = vmatprep.subr.mxu0 0.0
        %4278 = vmatpush1.msra.mxu0 0.0
        %4279 = vmatprep.subr.mxu0 0.0
        %4280 = vmatpush1.msra.mxu0 0.0
        %4281 = vmatprep.subr.mxu0 0.0
        %4282 = vmatpush1.msra.mxu0 0.0
        %4283 = vmatprep.subr.mxu0 0.0
        %4284 = vmatpush1.msra.mxu0 0.0
        %4285 = vmatprep.subr.mxu0 0.0
        %4286 = vmatpush1.msra.mxu0 0.0
        %4287 = vmatprep.subr.mxu0 0.0
        %4288 = vmatpush1.msra.mxu0 0.0
        %4289 = vmatprep.subr.mxu0 0.0
        %4290 = vmatpush1.msra.mxu0 0.0
        %4291 = vmatprep.subr.mxu0 0.0
        %4292 = vmatpush1.msra.mxu0 0.0
        %4293 = vmatprep.subr.mxu0 0.0
        %4294 = vmatpush1.msra.mxu0 0.0
        %4295 = vmatprep.subr.mxu0 0.0
        %4296 = vmatpush1.msra.mxu0 0.0
        %4297 = vmatprep.subr.mxu0 0.0
        %4298 = vmatpush1.msra.mxu0 0.0
        %4299 = vmatprep.subr.mxu0 0.0
        %4300 = vmatpush1.msra.mxu0 0.0
        %4301 = vmatprep.subr.mxu0 0.0
        %4302 = vmatpush1.msra.mxu0 0.0
        %4303 = vmatprep.subr.mxu0 0.0
        %4304 = vmatpush1.msra.mxu0 0.0
        %4305 = vmatprep.subr.mxu0 0.0
        %4306 = vmatpush1.msra.mxu0 0.0
        %4307 = vmatprep.subr.mxu0 0.0
        %4308 = vmatpush1.msra.mxu0 0.0
        %4309 = vmatprep.mubr.f32.mxu0 0.0
        %v4310 = vand.u32 %v4162, 4294901760
        %4311 = vmatmul.mubr.f32.gmra.mrb[0].mxu0 %v4310
        %v4312 = vpop.f32.mrb[0].mxu0
        %v4313 = vadd.f32 %v4237, %v4312
        %v4314 = vpop.f32.mrb[0].mxu0
        %4315 = vdwg.mxu0
        %4316 = vmatprep.subr.mxu0 0.0
        %v4317 = vand.u32 %v4159, 4294901760
        %v4318 = vsub.f32 %v4159, %v4317
        %4319 = vmatpush1.msra.mxu0 %v4318
        %4320 = vmatprep.subr.mxu0 0.0
        %4321 = vmatpush1.msra.mxu0 0.0
        %4322 = vmatprep.subr.mxu0 0.0
        %4323 = vmatpush1.msra.mxu0 0.0
        %4324 = vmatprep.subr.mxu0 0.0
        %4325 = vmatpush1.msra.mxu0 0.0
        %4326 = vmatprep.subr.mxu0 0.0
        %4327 = vmatpush1.msra.mxu0 0.0
        %4328 = vmatprep.subr.mxu0 0.0
        %4329 = vmatpush1.msra.mxu0 0.0
        %4330 = vmatprep.subr.mxu0 0.0
        %4331 = vmatpush1.msra.mxu0 0.0
        %4332 = vmatprep.subr.mxu0 0.0
        %4333 = vmatpush1.msra.mxu0 0.0
        %4334 = vmatprep.subr.mxu0 0.0
        %4335 = vmatpush1.msra.mxu0 0.0
        %4336 = vmatprep.subr.mxu0 0.0
        %4337 = vmatpush1.msra.mxu0 0.0
        %4338 = vmatprep.subr.mxu0 0.0
        %4339 = vmatpush1.msra.mxu0 0.0
        %4340 = vmatprep.subr.mxu0 0.0
        %4341 = vmatpush1.msra.mxu0 0.0
        %4342 = vmatprep.subr.mxu0 0.0
        %4343 = vmatpush1.msra.mxu0 0.0
        %4344 = vmatprep.subr.mxu0 0.0
        %4345 = vmatpush1.msra.mxu0 0.0
        %4346 = vmatprep.subr.mxu0 0.0
        %4347 = vmatpush1.msra.mxu0 0.0
        %4348 = vmatprep.subr.mxu0 0.0
        %4349 = vmatpush1.msra.mxu0 0.0
        %4350 = vmatprep.subr.mxu0 0.0
        %4351 = vmatpush1.msra.mxu0 0.0
        %4352 = vmatprep.subr.mxu0 0.0
        %4353 = vmatpush1.msra.mxu0 0.0
        %4354 = vmatprep.subr.mxu0 0.0
        %4355 = vmatpush1.msra.mxu0 0.0
        %4356 = vmatprep.subr.mxu0 0.0
        %4357 = vmatpush1.msra.mxu0 0.0
        %4358 = vmatprep.subr.mxu0 0.0
        %4359 = vmatpush1.msra.mxu0 0.0
        %4360 = vmatprep.subr.mxu0 0.0
        %4361 = vmatpush1.msra.mxu0 0.0
        %4362 = vmatprep.subr.mxu0 0.0
        %4363 = vmatpush1.msra.mxu0 0.0
        %4364 = vmatprep.subr.mxu0 0.0
        %4365 = vmatpush1.msra.mxu0 0.0
        %4366 = vmatprep.subr.mxu0 0.0
        %4367 = vmatpush1.msra.mxu0 0.0
        %4368 = vmatprep.subr.mxu0 0.0
        %4369 = vmatpush1.msra.mxu0 0.0
        %4370 = vmatprep.subr.mxu0 0.0
        %4371 = vmatpush1.msra.mxu0 0.0
        %4372 = vmatprep.subr.mxu0 0.0
        %4373 = vmatpush1.msra.mxu0 0.0
        %4374 = vmatprep.subr.mxu0 0.0
        %4375 = vmatpush1.msra.mxu0 0.0
        %4376 = vmatprep.subr.mxu0 0.0
        %4377 = vmatpush1.msra.mxu0 0.0
        %4378 = vmatprep.subr.mxu0 0.0
        %4379 = vmatpush1.msra.mxu0 0.0
        %4380 = vmatprep.subr.mxu0 0.0
        %4381 = vmatpush1.msra.mxu0 0.0
        %4382 = vmatprep.mubr.f32.mxu0 0.0
        %v4383 = vand.u32 %v4162, 4294901760
        %v4384 = vsub.f32 %v4162, %v4383
        %4385 = vmatmul.mubr.f32.gmra.mrb[0].mxu0 %v4384
        %v4386 = vpop.f32.mrb[0].mxu0
        %v4387 = vadd.f32 %v4313, %v4386
        %v4388 = vpop.f32.mrb[0].mxu0
        %4389 = vdwg.mxu0
        %4390 = vmatprep.subr.mxu0 0.0
        %v4391 = vand.u32 %v4159, 4294901760
        %4392 = vmatpush1.msra.mxu0 %v4391
        %4393 = vmatprep.subr.mxu0 0.0
        %4394 = vmatpush1.msra.mxu0 0.0
        %4395 = vmatprep.subr.mxu0 0.0
        %4396 = vmatpush1.msra.mxu0 0.0
        %4397 = vmatprep.subr.mxu0 0.0
        %4398 = vmatpush1.msra.mxu0 0.0
        %4399 = vmatprep.subr.mxu0 0.0
        %4400 = vmatpush1.msra.mxu0 0.0
        %4401 = vmatprep.subr.mxu0 0.0
        %4402 = vmatpush1.msra.mxu0 0.0
        %4403 = vmatprep.subr.mxu0 0.0
        %4404 = vmatpush1.msra.mxu0 0.0
        %4405 = vmatprep.subr.mxu0 0.0
        %4406 = vmatpush1.msra.mxu0 0.0
        %4407 = vmatprep.subr.mxu0 0.0
        %4408 = vmatpush1.msra.mxu0 0.0
        %4409 = vmatprep.subr.mxu0 0.0
        %4410 = vmatpush1.msra.mxu0 0.0
        %4411 = vmatprep.subr.mxu0 0.0
        %4412 = vmatpush1.msra.mxu0 0.0
        %4413 = vmatprep.subr.mxu0 0.0
        %4414 = vmatpush1.msra.mxu0 0.0
        %4415 = vmatprep.subr.mxu0 0.0
        %4416 = vmatpush1.msra.mxu0 0.0
        %4417 = vmatprep.subr.mxu0 0.0
        %4418 = vmatpush1.msra.mxu0 0.0
        %4419 = vmatprep.subr.mxu0 0.0
        %4420 = vmatpush1.msra.mxu0 0.0
        %4421 = vmatprep.subr.mxu0 0.0
        %4422 = vmatpush1.msra.mxu0 0.0
        %4423 = vmatprep.subr.mxu0 0.0
        %4424 = vmatpush1.msra.mxu0 0.0
        %4425 = vmatprep.subr.mxu0 0.0
        %4426 = vmatpush1.msra.mxu0 0.0
        %4427 = vmatprep.subr.mxu0 0.0
        %4428 = vmatpush1.msra.mxu0 0.0
        %4429 = vmatprep.subr.mxu0 0.0
        %4430 = vmatpush1.msra.mxu0 0.0
        %4431 = vmatprep.subr.mxu0 0.0
        %4432 = vmatpush1.msra.mxu0 0.0
        %4433 = vmatprep.subr.mxu0 0.0
        %4434 = vmatpush1.msra.mxu0 0.0
        %4435 = vmatprep.subr.mxu0 0.0
        %4436 = vmatpush1.msra.mxu0 0.0
        %4437 = vmatprep.subr.mxu0 0.0
        %4438 = vmatpush1.msra.mxu0 0.0
        %4439 = vmatprep.subr.mxu0 0.0
        %4440 = vmatpush1.msra.mxu0 0.0
        %4441 = vmatprep.subr.mxu0 0.0
        %4442 = vmatpush1.msra.mxu0 0.0
        %4443 = vmatprep.subr.mxu0 0.0
        %4444 = vmatpush1.msra.mxu0 0.0
        %4445 = vmatprep.subr.mxu0 0.0
        %4446 = vmatpush1.msra.mxu0 0.0
        %4447 = vmatprep.subr.mxu0 0.0
        %4448 = vmatpush1.msra.mxu0 0.0
        %4449 = vmatprep.subr.mxu0 0.0
        %4450 = vmatpush1.msra.mxu0 0.0
        %4451 = vmatprep.subr.mxu0 0.0
        %4452 = vmatpush1.msra.mxu0 0.0
        %4453 = vmatprep.subr.mxu0 0.0
        %4454 = vmatpush1.msra.mxu0 0.0
        %4455 = vmatprep.mubr.f32.mxu0 0.0
        %v4456 = vand.u32 %v4162, 4294901760
        %v4457 = vsub.f32 %v4162, %v4456
        %v4458 = vand.u32 %v4457, 4294901760
        %4459 = vmatmul.mubr.f32.gmra.mrb[0].mxu0 %v4458
        %v4460 = vpop.f32.mrb[0].mxu0
        %v4461 = vadd.f32 %v4387, %v4460
        %v4462 = vpop.f32.mrb[0].mxu0
        %4463 = vdwg.mxu0
        %4464 = vmatprep.subr.mxu0 0.0
        %v4465 = vand.u32 %v4159, 4294901760
        %v4466 = vsub.f32 %v4159, %v4465
        %v4467 = vand.u32 %v4466, 4294901760
        %4468 = vmatpush1.msra.mxu0 %v4467
        %4469 = vmatprep.subr.mxu0 0.0
        %4470 = vmatpush1.msra.mxu0 0.0
        %4471 = vmatprep.subr.mxu0 0.0
        %4472 = vmatpush1.msra.mxu0 0.0
        %4473 = vmatprep.subr.mxu0 0.0
        %4474 = vmatpush1.msra.mxu0 0.0
        %4475 = vmatprep.subr.mxu0 0.0
        %4476 = vmatpush1.msra.mxu0 0.0
        %4477 = vmatprep.subr.mxu0 0.0
        %4478 = vmatpush1.msra.mxu0 0.0
        %4479 = vmatprep.subr.mxu0 0.0
        %4480 = vmatpush1.msra.mxu0 0.0
        %4481 = vmatprep.subr.mxu0 0.0
        %4482 = vmatpush1.msra.mxu0 0.0
        %4483 = vmatprep.subr.mxu0 0.0
        %4484 = vmatpush1.msra.mxu0 0.0
        %4485 = vmatprep.subr.mxu0 0.0
        %4486 = vmatpush1.msra.mxu0 0.0
        %4487 = vmatprep.subr.mxu0 0.0
        %4488 = vmatpush1.msra.mxu0 0.0
        %4489 = vmatprep.subr.mxu0 0.0
        %4490 = vmatpush1.msra.mxu0 0.0
        %4491 = vmatprep.subr.mxu0 0.0
        %4492 = vmatpush1.msra.mxu0 0.0
        %4493 = vmatprep.subr.mxu0 0.0
        %4494 = vmatpush1.msra.mxu0 0.0
        %4495 = vmatprep.subr.mxu0 0.0
        %4496 = vmatpush1.msra.mxu0 0.0
        %4497 = vmatprep.subr.mxu0 0.0
        %4498 = vmatpush1.msra.mxu0 0.0
        %4499 = vmatprep.subr.mxu0 0.0
        %4500 = vmatpush1.msra.mxu0 0.0
        %4501 = vmatprep.subr.mxu0 0.0
        %4502 = vmatpush1.msra.mxu0 0.0
        %4503 = vmatprep.subr.mxu0 0.0
        %4504 = vmatpush1.msra.mxu0 0.0
        %4505 = vmatprep.subr.mxu0 0.0
        %4506 = vmatpush1.msra.mxu0 0.0
        %4507 = vmatprep.subr.mxu0 0.0
        %4508 = vmatpush1.msra.mxu0 0.0
        %4509 = vmatprep.subr.mxu0 0.0
        %4510 = vmatpush1.msra.mxu0 0.0
        %4511 = vmatprep.subr.mxu0 0.0
        %4512 = vmatpush1.msra.mxu0 0.0
        %4513 = vmatprep.subr.mxu0 0.0
        %4514 = vmatpush1.msra.mxu0 0.0
        %4515 = vmatprep.subr.mxu0 0.0
        %4516 = vmatpush1.msra.mxu0 0.0
        %4517 = vmatprep.subr.mxu0 0.0
        %4518 = vmatpush1.msra.mxu0 0.0
        %4519 = vmatprep.subr.mxu0 0.0
        %4520 = vmatpush1.msra.mxu0 0.0
        %4521 = vmatprep.subr.mxu0 0.0
        %4522 = vmatpush1.msra.mxu0 0.0
        %4523 = vmatprep.subr.mxu0 0.0
        %4524 = vmatpush1.msra.mxu0 0.0
        %4525 = vmatprep.subr.mxu0 0.0
        %4526 = vmatpush1.msra.mxu0 0.0
        %4527 = vmatprep.subr.mxu0 0.0
        %4528 = vmatpush1.msra.mxu0 0.0
        %4529 = vmatprep.subr.mxu0 0.0
        %4530 = vmatpush1.msra.mxu0 0.0
        %4531 = vmatprep.mubr.f32.mxu0 0.0
        %v4532 = vand.u32 %v4162, 4294901760
        %4533 = vmatmul.mubr.f32.gmra.mrb[0].mxu0 %v4532
        %v4534 = vpop.f32.mrb[0].mxu0
        %v4535 = vadd.f32 %v4461, %v4534
        %v4536 = vpop.f32.mrb[0].mxu0
        %4537 = vdwg.mxu0
        %4538 = vmatprep.subr.mxu0 0.0
        %v4539 = vand.u32 %v4159, 4294901760
        %4540 = vmatpush1.msra.mxu0 %v4539
        %4541 = vmatprep.subr.mxu0 0.0
        %4542 = vmatpush1.msra.mxu0 0.0
        %4543 = vmatprep.subr.mxu0 0.0
        %4544 = vmatpush1.msra.mxu0 0.0
        %4545 = vmatprep.subr.mxu0 0.0
        %4546 = vmatpush1.msra.mxu0 0.0
        %4547 = vmatprep.subr.mxu0 0.0
        %4548 = vmatpush1.msra.mxu0 0.0
        %4549 = vmatprep.subr.mxu0 0.0
        %4550 = vmatpush1.msra.mxu0 0.0
        %4551 = vmatprep.subr.mxu0 0.0
        %4552 = vmatpush1.msra.mxu0 0.0
        %4553 = vmatprep.subr.mxu0 0.0
        %4554 = vmatpush1.msra.mxu0 0.0
        %4555 = vmatprep.subr.mxu0 0.0
        %4556 = vmatpush1.msra.mxu0 0.0
        %4557 = vmatprep.subr.mxu0 0.0
        %4558 = vmatpush1.msra.mxu0 0.0
        %4559 = vmatprep.subr.mxu0 0.0
        %4560 = vmatpush1.msra.mxu0 0.0
        %4561 = vmatprep.subr.mxu0 0.0
        %4562 = vmatpush1.msra.mxu0 0.0
        %4563 = vmatprep.subr.mxu0 0.0
        %4564 = vmatpush1.msra.mxu0 0.0
        %4565 = vmatprep.subr.mxu0 0.0
        %4566 = vmatpush1.msra.mxu0 0.0
        %4567 = vmatprep.subr.mxu0 0.0
        %4568 = vmatpush1.msra.mxu0 0.0
        %4569 = vmatprep.subr.mxu0 0.0
        %4570 = vmatpush1.msra.mxu0 0.0
        %4571 = vmatprep.subr.mxu0 0.0
        %4572 = vmatpush1.msra.mxu0 0.0
        %4573 = vmatprep.subr.mxu0 0.0
        %4574 = vmatpush1.msra.mxu0 0.0
        %4575 = vmatprep.subr.mxu0 0.0
        %4576 = vmatpush1.msra.mxu0 0.0
        %4577 = vmatprep.subr.mxu0 0.0
        %4578 = vmatpush1.msra.mxu0 0.0
        %4579 = vmatprep.subr.mxu0 0.0
        %4580 = vmatpush1.msra.mxu0 0.0
        %4581 = vmatprep.subr.mxu0 0.0
        %4582 = vmatpush1.msra.mxu0 0.0
        %4583 = vmatprep.subr.mxu0 0.0
        %4584 = vmatpush1.msra.mxu0 0.0
        %4585 = vmatprep.subr.mxu0 0.0
        %4586 = vmatpush1.msra.mxu0 0.0
        %4587 = vmatprep.subr.mxu0 0.0
        %4588 = vmatpush1.msra.mxu0 0.0
        %4589 = vmatprep.subr.mxu0 0.0
        %4590 = vmatpush1.msra.mxu0 0.0
        %4591 = vmatprep.subr.mxu0 0.0
        %4592 = vmatpush1.msra.mxu0 0.0
        %4593 = vmatprep.subr.mxu0 0.0
        %4594 = vmatpush1.msra.mxu0 0.0
        %4595 = vmatprep.subr.mxu0 0.0
        %4596 = vmatpush1.msra.mxu0 0.0
        %4597 = vmatprep.subr.mxu0 0.0
        %4598 = vmatpush1.msra.mxu0 0.0
        %4599 = vmatprep.subr.mxu0 0.0
        %4600 = vmatpush1.msra.mxu0 0.0
        %4601 = vmatprep.subr.mxu0 0.0
        %4602 = vmatpush1.msra.mxu0 0.0
        %4603 = vmatprep.mubr.f32.mxu0 0.0
        %v4604 = vand.u32 %v4162, 4294901760
        %4605 = vmatmul.mubr.f32.gmra.mrb[0].mxu0 %v4604
        %v4606 = vpop.f32.mrb[0].mxu0
        %v4607 = vadd.f32 %v4535, %v4606
        %v4608 = vpop.f32.mrb[0].mxu0
        %4609 = vdwg.mxu0
        %v4611 = vsel %vm964, %v4607, 0
        %4613 = vmatprep.subr.mxu0 0.0
        %v4614 = vand.u32 %v959, 4294901760
        %4615 = vmatpush1.msra.mxu0 %v4614
        %4616 = vmatprep.subr.mxu0 0.0
        %4617 = vmatpush1.msra.mxu0 0.0
        %4618 = vmatprep.subr.mxu0 0.0
        %4619 = vmatpush1.msra.mxu0 0.0
        %4620 = vmatprep.subr.mxu0 0.0
        %4621 = vmatpush1.msra.mxu0 0.0
        %4622 = vmatprep.subr.mxu0 0.0
        %4623 = vmatpush1.msra.mxu0 0.0
        %4624 = vmatprep.subr.mxu0 0.0
        %4625 = vmatpush1.msra.mxu0 0.0
        %4626 = vmatprep.subr.mxu0 0.0
        %4627 = vmatpush1.msra.mxu0 0.0
        %4628 = vmatprep.subr.mxu0 0.0
        %4629 = vmatpush1.msra.mxu0 0.0
        %4630 = vmatprep.subr.mxu0 0.0
        %4631 = vmatpush1.msra.mxu0 0.0
        %4632 = vmatprep.subr.mxu0 0.0
        %4633 = vmatpush1.msra.mxu0 0.0
        %4634 = vmatprep.subr.mxu0 0.0
        %4635 = vmatpush1.msra.mxu0 0.0
        %4636 = vmatprep.subr.mxu0 0.0
        %4637 = vmatpush1.msra.mxu0 0.0
        %4638 = vmatprep.subr.mxu0 0.0
        %4639 = vmatpush1.msra.mxu0 0.0
        %4640 = vmatprep.subr.mxu0 0.0
        %4641 = vmatpush1.msra.mxu0 0.0
        %4642 = vmatprep.subr.mxu0 0.0
        %4643 = vmatpush1.msra.mxu0 0.0
        %4644 = vmatprep.subr.mxu0 0.0
        %4645 = vmatpush1.msra.mxu0 0.0
        %4646 = vmatprep.subr.mxu0 0.0
        %4647 = vmatpush1.msra.mxu0 0.0
        %4648 = vmatprep.subr.mxu0 0.0
        %4649 = vmatpush1.msra.mxu0 0.0
        %4650 = vmatprep.subr.mxu0 0.0
        %4651 = vmatpush1.msra.mxu0 0.0
        %4652 = vmatprep.subr.mxu0 0.0
        %4653 = vmatpush1.msra.mxu0 0.0
        %4654 = vmatprep.subr.mxu0 0.0
        %4655 = vmatpush1.msra.mxu0 0.0
        %4656 = vmatprep.subr.mxu0 0.0
        %4657 = vmatpush1.msra.mxu0 0.0
        %4658 = vmatprep.subr.mxu0 0.0
        %4659 = vmatpush1.msra.mxu0 0.0
        %4660 = vmatprep.subr.mxu0 0.0
        %4661 = vmatpush1.msra.mxu0 0.0
        %4662 = vmatprep.subr.mxu0 0.0
        %4663 = vmatpush1.msra.mxu0 0.0
        %4664 = vmatprep.subr.mxu0 0.0
        %4665 = vmatpush1.msra.mxu0 0.0
        %4666 = vmatprep.subr.mxu0 0.0
        %4667 = vmatpush1.msra.mxu0 0.0
        %4668 = vmatprep.subr.mxu0 0.0
        %4669 = vmatpush1.msra.mxu0 0.0
        %4670 = vmatprep.subr.mxu0 0.0
        %4671 = vmatpush1.msra.mxu0 0.0
        %4672 = vmatprep.subr.mxu0 0.0
        %4673 = vmatpush1.msra.mxu0 0.0
        %4674 = vmatprep.subr.mxu0 0.0
        %4675 = vmatpush1.msra.mxu0 0.0
        %4676 = vmatprep.subr.mxu0 0.0
        %4677 = vmatpush1.msra.mxu0 0.0
        %4678 = vmatprep.mubr.f32.mxu0 0.0
        %v4679 = vand.u32 %v4611, 4294901760
        %v4680 = vsub.f32 %v4611, %v4679
        %v4681 = vand.u32 %v4680, 4294901760
        %v4682 = vsub.f32 %v4680, %v4681
        %v4683 = vand.u32 %v4682, 4294901760
        %4684 = vmatmul.mubr.f32.gmra.mrb[0].mxu0 %v4683
        %v4685 = vpop.f32.mrb[0].mxu0
        %v4686 = vadd.f32 0.0, %v4685
        %v4687 = vpop.f32.mrb[0].mxu0
        %4688 = vdwg.mxu0
        %4689 = vmatprep.subr.mxu0 0.0
        %v4690 = vand.u32 %v959, 4294901760
        %v4691 = vsub.f32 %v959, %v4690
        %v4692 = vand.u32 %v4691, 4294901760
        %v4693 = vsub.f32 %v4691, %v4692
        %v4694 = vand.u32 %v4693, 4294901760
        %4695 = vmatpush1.msra.mxu0 %v4694
        %4696 = vmatprep.subr.mxu0 0.0
        %4697 = vmatpush1.msra.mxu0 0.0
        %4698 = vmatprep.subr.mxu0 0.0
        %4699 = vmatpush1.msra.mxu0 0.0
        %4700 = vmatprep.subr.mxu0 0.0
        %4701 = vmatpush1.msra.mxu0 0.0
        %4702 = vmatprep.subr.mxu0 0.0
        %4703 = vmatpush1.msra.mxu0 0.0
        %4704 = vmatprep.subr.mxu0 0.0
        %4705 = vmatpush1.msra.mxu0 0.0
        %4706 = vmatprep.subr.mxu0 0.0
        %4707 = vmatpush1.msra.mxu0 0.0
        %4708 = vmatprep.subr.mxu0 0.0
        %4709 = vmatpush1.msra.mxu0 0.0
        %4710 = vmatprep.subr.mxu0 0.0
        %4711 = vmatpush1.msra.mxu0 0.0
        %4712 = vmatprep.subr.mxu0 0.0
        %4713 = vmatpush1.msra.mxu0 0.0
        %4714 = vmatprep.subr.mxu0 0.0
        %4715 = vmatpush1.msra.mxu0 0.0
        %4716 = vmatprep.subr.mxu0 0.0
        %4717 = vmatpush1.msra.mxu0 0.0
        %4718 = vmatprep.subr.mxu0 0.0
        %4719 = vmatpush1.msra.mxu0 0.0
        %4720 = vmatprep.subr.mxu0 0.0
        %4721 = vmatpush1.msra.mxu0 0.0
        %4722 = vmatprep.subr.mxu0 0.0
        %4723 = vmatpush1.msra.mxu0 0.0
        %4724 = vmatprep.subr.mxu0 0.0
        %4725 = vmatpush1.msra.mxu0 0.0
        %4726 = vmatprep.subr.mxu0 0.0
        %4727 = vmatpush1.msra.mxu0 0.0
        %4728 = vmatprep.subr.mxu0 0.0
        %4729 = vmatpush1.msra.mxu0 0.0
        %4730 = vmatprep.subr.mxu0 0.0
        %4731 = vmatpush1.msra.mxu0 0.0
        %4732 = vmatprep.subr.mxu0 0.0
        %4733 = vmatpush1.msra.mxu0 0.0
        %4734 = vmatprep.subr.mxu0 0.0
        %4735 = vmatpush1.msra.mxu0 0.0
        %4736 = vmatprep.subr.mxu0 0.0
        %4737 = vmatpush1.msra.mxu0 0.0
        %4738 = vmatprep.subr.mxu0 0.0
        %4739 = vmatpush1.msra.mxu0 0.0
        %4740 = vmatprep.subr.mxu0 0.0
        %4741 = vmatpush1.msra.mxu0 0.0
        %4742 = vmatprep.subr.mxu0 0.0
        %4743 = vmatpush1.msra.mxu0 0.0
        %4744 = vmatprep.subr.mxu0 0.0
        %4745 = vmatpush1.msra.mxu0 0.0
        %4746 = vmatprep.subr.mxu0 0.0
        %4747 = vmatpush1.msra.mxu0 0.0
        %4748 = vmatprep.subr.mxu0 0.0
        %4749 = vmatpush1.msra.mxu0 0.0
        %4750 = vmatprep.subr.mxu0 0.0
        %4751 = vmatpush1.msra.mxu0 0.0
        %4752 = vmatprep.subr.mxu0 0.0
        %4753 = vmatpush1.msra.mxu0 0.0
        %4754 = vmatprep.subr.mxu0 0.0
        %4755 = vmatpush1.msra.mxu0 0.0
        %4756 = vmatprep.subr.mxu0 0.0
        %4757 = vmatpush1.msra.mxu0 0.0
        %4758 = vmatprep.mubr.f32.mxu0 0.0
        %v4759 = vand.u32 %v4611, 4294901760
        %4760 = vmatmul.mubr.f32.gmra.mrb[0].mxu0 %v4759
        %v4761 = vpop.f32.mrb[0].mxu0
        %v4762 = vadd.f32 %v4686, %v4761
        %v4763 = vpop.f32.mrb[0].mxu0
        %4764 = vdwg.mxu0
        %4765 = vmatprep.subr.mxu0 0.0
        %v4766 = vand.u32 %v959, 4294901760
        %v4767 = vsub.f32 %v959, %v4766
        %4768 = vmatpush1.msra.mxu0 %v4767
        %4769 = vmatprep.subr.mxu0 0.0
        %4770 = vmatpush1.msra.mxu0 0.0
        %4771 = vmatprep.subr.mxu0 0.0
        %4772 = vmatpush1.msra.mxu0 0.0
        %4773 = vmatprep.subr.mxu0 0.0
        %4774 = vmatpush1.msra.mxu0 0.0
        %4775 = vmatprep.subr.mxu0 0.0
        %4776 = vmatpush1.msra.mxu0 0.0
        %4777 = vmatprep.subr.mxu0 0.0
        %4778 = vmatpush1.msra.mxu0 0.0
        %4779 = vmatprep.subr.mxu0 0.0
        %4780 = vmatpush1.msra.mxu0 0.0
        %4781 = vmatprep.subr.mxu0 0.0
        %4782 = vmatpush1.msra.mxu0 0.0
        %4783 = vmatprep.subr.mxu0 0.0
        %4784 = vmatpush1.msra.mxu0 0.0
        %4785 = vmatprep.subr.mxu0 0.0
        %4786 = vmatpush1.msra.mxu0 0.0
        %4787 = vmatprep.subr.mxu0 0.0
        %4788 = vmatpush1.msra.mxu0 0.0
        %4789 = vmatprep.subr.mxu0 0.0
        %4790 = vmatpush1.msra.mxu0 0.0
        %4791 = vmatprep.subr.mxu0 0.0
        %4792 = vmatpush1.msra.mxu0 0.0
        %4793 = vmatprep.subr.mxu0 0.0
        %4794 = vmatpush1.msra.mxu0 0.0
        %4795 = vmatprep.subr.mxu0 0.0
        %4796 = vmatpush1.msra.mxu0 0.0
        %4797 = vmatprep.subr.mxu0 0.0
        %4798 = vmatpush1.msra.mxu0 0.0
        %4799 = vmatprep.subr.mxu0 0.0
        %4800 = vmatpush1.msra.mxu0 0.0
        %4801 = vmatprep.subr.mxu0 0.0
        %4802 = vmatpush1.msra.mxu0 0.0
        %4803 = vmatprep.subr.mxu0 0.0
        %4804 = vmatpush1.msra.mxu0 0.0
        %4805 = vmatprep.subr.mxu0 0.0
        %4806 = vmatpush1.msra.mxu0 0.0
        %4807 = vmatprep.subr.mxu0 0.0
        %4808 = vmatpush1.msra.mxu0 0.0
        %4809 = vmatprep.subr.mxu0 0.0
        %4810 = vmatpush1.msra.mxu0 0.0
        %4811 = vmatprep.subr.mxu0 0.0
        %4812 = vmatpush1.msra.mxu0 0.0
        %4813 = vmatprep.subr.mxu0 0.0
        %4814 = vmatpush1.msra.mxu0 0.0
        %4815 = vmatprep.subr.mxu0 0.0
        %4816 = vmatpush1.msra.mxu0 0.0
        %4817 = vmatprep.subr.mxu0 0.0
        %4818 = vmatpush1.msra.mxu0 0.0
        %4819 = vmatprep.subr.mxu0 0.0
        %4820 = vmatpush1.msra.mxu0 0.0
        %4821 = vmatprep.subr.mxu0 0.0
        %4822 = vmatpush1.msra.mxu0 0.0
        %4823 = vmatprep.subr.mxu0 0.0
        %4824 = vmatpush1.msra.mxu0 0.0
        %4825 = vmatprep.subr.mxu0 0.0
        %4826 = vmatpush1.msra.mxu0 0.0
        %4827 = vmatprep.subr.mxu0 0.0
        %4828 = vmatpush1.msra.mxu0 0.0
        %4829 = vmatprep.subr.mxu0 0.0
        %4830 = vmatpush1.msra.mxu0 0.0
        %4831 = vmatprep.mubr.f32.mxu0 0.0
        %v4832 = vand.u32 %v4611, 4294901760
        %v4833 = vsub.f32 %v4611, %v4832
        %4834 = vmatmul.mubr.f32.gmra.mrb[0].mxu0 %v4833
        %v4835 = vpop.f32.mrb[0].mxu0
        %v4836 = vadd.f32 %v4762, %v4835
        %v4837 = vpop.f32.mrb[0].mxu0
        %4838 = vdwg.mxu0
        %4839 = vmatprep.subr.mxu0 0.0
        %v4840 = vand.u32 %v959, 4294901760
        %4841 = vmatpush1.msra.mxu0 %v4840
        %4842 = vmatprep.subr.mxu0 0.0
        %4843 = vmatpush1.msra.mxu0 0.0
        %4844 = vmatprep.subr.mxu0 0.0
        %4845 = vmatpush1.msra.mxu0 0.0
        %4846 = vmatprep.subr.mxu0 0.0
        %4847 = vmatpush1.msra.mxu0 0.0
        %4848 = vmatprep.subr.mxu0 0.0
        %4849 = vmatpush1.msra.mxu0 0.0
        %4850 = vmatprep.subr.mxu0 0.0
        %4851 = vmatpush1.msra.mxu0 0.0
        %4852 = vmatprep.subr.mxu0 0.0
        %4853 = vmatpush1.msra.mxu0 0.0
        %4854 = vmatprep.subr.mxu0 0.0
        %4855 = vmatpush1.msra.mxu0 0.0
        %4856 = vmatprep.subr.mxu0 0.0
        %4857 = vmatpush1.msra.mxu0 0.0
        %4858 = vmatprep.subr.mxu0 0.0
        %4859 = vmatpush1.msra.mxu0 0.0
        %4860 = vmatprep.subr.mxu0 0.0
        %4861 = vmatpush1.msra.mxu0 0.0
        %4862 = vmatprep.subr.mxu0 0.0
        %4863 = vmatpush1.msra.mxu0 0.0
        %4864 = vmatprep.subr.mxu0 0.0
        %4865 = vmatpush1.msra.mxu0 0.0
        %4866 = vmatprep.subr.mxu0 0.0
        %4867 = vmatpush1.msra.mxu0 0.0
        %4868 = vmatprep.subr.mxu0 0.0
        %4869 = vmatpush1.msra.mxu0 0.0
        %4870 = vmatprep.subr.mxu0 0.0
        %4871 = vmatpush1.msra.mxu0 0.0
        %4872 = vmatprep.subr.mxu0 0.0
        %4873 = vmatpush1.msra.mxu0 0.0
        %4874 = vmatprep.subr.mxu0 0.0
        %4875 = vmatpush1.msra.mxu0 0.0
        %4876 = vmatprep.subr.mxu0 0.0
        %4877 = vmatpush1.msra.mxu0 0.0
        %4878 = vmatprep.subr.mxu0 0.0
        %4879 = vmatpush1.msra.mxu0 0.0
        %4880 = vmatprep.subr.mxu0 0.0
        %4881 = vmatpush1.msra.mxu0 0.0
        %4882 = vmatprep.subr.mxu0 0.0
        %4883 = vmatpush1.msra.mxu0 0.0
        %4884 = vmatprep.subr.mxu0 0.0
        %4885 = vmatpush1.msra.mxu0 0.0
        %4886 = vmatprep.subr.mxu0 0.0
        %4887 = vmatpush1.msra.mxu0 0.0
        %4888 = vmatprep.subr.mxu0 0.0
        %4889 = vmatpush1.msra.mxu0 0.0
        %4890 = vmatprep.subr.mxu0 0.0
        %4891 = vmatpush1.msra.mxu0 0.0
        %4892 = vmatprep.subr.mxu0 0.0
        %4893 = vmatpush1.msra.mxu0 0.0
        %4894 = vmatprep.subr.mxu0 0.0
        %4895 = vmatpush1.msra.mxu0 0.0
        %4896 = vmatprep.subr.mxu0 0.0
        %4897 = vmatpush1.msra.mxu0 0.0
        %4898 = vmatprep.subr.mxu0 0.0
        %4899 = vmatpush1.msra.mxu0 0.0
        %4900 = vmatprep.subr.mxu0 0.0
        %4901 = vmatpush1.msra.mxu0 0.0
        %4902 = vmatprep.subr.mxu0 0.0
        %4903 = vmatpush1.msra.mxu0 0.0
        %4904 = vmatprep.mubr.f32.mxu0 0.0
        %v4905 = vand.u32 %v4611, 4294901760
        %v4906 = vsub.f32 %v4611, %v4905
        %v4907 = vand.u32 %v4906, 4294901760
        %4908 = vmatmul.mubr.f32.gmra.mrb[0].mxu0 %v4907
        %v4909 = vpop.f32.mrb[0].mxu0
        %v4910 = vadd.f32 %v4836, %v4909
        %v4911 = vpop.f32.mrb[0].mxu0
        %4912 = vdwg.mxu0
        %4913 = vmatprep.subr.mxu0 0.0
        %v4914 = vand.u32 %v959, 4294901760
        %v4915 = vsub.f32 %v959, %v4914
        %v4916 = vand.u32 %v4915, 4294901760
        %4917 = vmatpush1.msra.mxu0 %v4916
        %4918 = vmatprep.subr.mxu0 0.0
        %4919 = vmatpush1.msra.mxu0 0.0
        %4920 = vmatprep.subr.mxu0 0.0
        %4921 = vmatpush1.msra.mxu0 0.0
        %4922 = vmatprep.subr.mxu0 0.0
        %4923 = vmatpush1.msra.mxu0 0.0
        %4924 = vmatprep.subr.mxu0 0.0
        %4925 = vmatpush1.msra.mxu0 0.0
        %4926 = vmatprep.subr.mxu0 0.0
        %4927 = vmatpush1.msra.mxu0 0.0
        %4928 = vmatprep.subr.mxu0 0.0
        %4929 = vmatpush1.msra.mxu0 0.0
        %4930 = vmatprep.subr.mxu0 0.0
        %4931 = vmatpush1.msra.mxu0 0.0
        %4932 = vmatprep.subr.mxu0 0.0
        %4933 = vmatpush1.msra.mxu0 0.0
        %4934 = vmatprep.subr.mxu0 0.0
        %4935 = vmatpush1.msra.mxu0 0.0
        %4936 = vmatprep.subr.mxu0 0.0
        %4937 = vmatpush1.msra.mxu0 0.0
        %4938 = vmatprep.subr.mxu0 0.0
        %4939 = vmatpush1.msra.mxu0 0.0
        %4940 = vmatprep.subr.mxu0 0.0
        %4941 = vmatpush1.msra.mxu0 0.0
        %4942 = vmatprep.subr.mxu0 0.0
        %4943 = vmatpush1.msra.mxu0 0.0
        %4944 = vmatprep.subr.mxu0 0.0
        %4945 = vmatpush1.msra.mxu0 0.0
        %4946 = vmatprep.subr.mxu0 0.0
        %4947 = vmatpush1.msra.mxu0 0.0
        %4948 = vmatprep.subr.mxu0 0.0
        %4949 = vmatpush1.msra.mxu0 0.0
        %4950 = vmatprep.subr.mxu0 0.0
        %4951 = vmatpush1.msra.mxu0 0.0
        %4952 = vmatprep.subr.mxu0 0.0
        %4953 = vmatpush1.msra.mxu0 0.0
        %4954 = vmatprep.subr.mxu0 0.0
        %4955 = vmatpush1.msra.mxu0 0.0
        %4956 = vmatprep.subr.mxu0 0.0
        %4957 = vmatpush1.msra.mxu0 0.0
        %4958 = vmatprep.subr.mxu0 0.0
        %4959 = vmatpush1.msra.mxu0 0.0
        %4960 = vmatprep.subr.mxu0 0.0
        %4961 = vmatpush1.msra.mxu0 0.0
        %4962 = vmatprep.subr.mxu0 0.0
        %4963 = vmatpush1.msra.mxu0 0.0
        %4964 = vmatprep.subr.mxu0 0.0
        %4965 = vmatpush1.msra.mxu0 0.0
        %4966 = vmatprep.subr.mxu0 0.0
        %4967 = vmatpush1.msra.mxu0 0.0
        %4968 = vmatprep.subr.mxu0 0.0
        %4969 = vmatpush1.msra.mxu0 0.0
        %4970 = vmatprep.subr.mxu0 0.0
        %4971 = vmatpush1.msra.mxu0 0.0
        %4972 = vmatprep.subr.mxu0 0.0
        %4973 = vmatpush1.msra.mxu0 0.0
        %4974 = vmatprep.subr.mxu0 0.0
        %4975 = vmatpush1.msra.mxu0 0.0
        %4976 = vmatprep.subr.mxu0 0.0
        %4977 = vmatpush1.msra.mxu0 0.0
        %4978 = vmatprep.subr.mxu0 0.0
        %4979 = vmatpush1.msra.mxu0 0.0
        %4980 = vmatprep.mubr.f32.mxu0 0.0
        %v4981 = vand.u32 %v4611, 4294901760
        %4982 = vmatmul.mubr.f32.gmra.mrb[0].mxu0 %v4981
        %v4983 = vpop.f32.mrb[0].mxu0
        %v4984 = vadd.f32 %v4910, %v4983
        %v4985 = vpop.f32.mrb[0].mxu0
        %4986 = vdwg.mxu0
        %4987 = vmatprep.subr.mxu0 0.0
        %v4988 = vand.u32 %v959, 4294901760
        %4989 = vmatpush1.msra.mxu0 %v4988
        %4990 = vmatprep.subr.mxu0 0.0
        %4991 = vmatpush1.msra.mxu0 0.0
        %4992 = vmatprep.subr.mxu0 0.0
        %4993 = vmatpush1.msra.mxu0 0.0
        %4994 = vmatprep.subr.mxu0 0.0
        %4995 = vmatpush1.msra.mxu0 0.0
        %4996 = vmatprep.subr.mxu0 0.0
        %4997 = vmatpush1.msra.mxu0 0.0
        %4998 = vmatprep.subr.mxu0 0.0
        %4999 = vmatpush1.msra.mxu0 0.0
        %5000 = vmatprep.subr.mxu0 0.0
        %5001 = vmatpush1.msra.mxu0 0.0
        %5002 = vmatprep.subr.mxu0 0.0
        %5003 = vmatpush1.msra.mxu0 0.0
        %5004 = vmatprep.subr.mxu0 0.0
        %5005 = vmatpush1.msra.mxu0 0.0
        %5006 = vmatprep.subr.mxu0 0.0
        %5007 = vmatpush1.msra.mxu0 0.0
        %5008 = vmatprep.subr.mxu0 0.0
        %5009 = vmatpush1.msra.mxu0 0.0
        %5010 = vmatprep.subr.mxu0 0.0
        %5011 = vmatpush1.msra.mxu0 0.0
        %5012 = vmatprep.subr.mxu0 0.0
        %5013 = vmatpush1.msra.mxu0 0.0
        %5014 = vmatprep.subr.mxu0 0.0
        %5015 = vmatpush1.msra.mxu0 0.0
        %5016 = vmatprep.subr.mxu0 0.0
        %5017 = vmatpush1.msra.mxu0 0.0
        %5018 = vmatprep.subr.mxu0 0.0
        %5019 = vmatpush1.msra.mxu0 0.0
        %5020 = vmatprep.subr.mxu0 0.0
        %5021 = vmatpush1.msra.mxu0 0.0
        %5022 = vmatprep.subr.mxu0 0.0
        %5023 = vmatpush1.msra.mxu0 0.0
        %5024 = vmatprep.subr.mxu0 0.0
        %5025 = vmatpush1.msra.mxu0 0.0
        %5026 = vmatprep.subr.mxu0 0.0
        %5027 = vmatpush1.msra.mxu0 0.0
        %5028 = vmatprep.subr.mxu0 0.0
        %5029 = vmatpush1.msra.mxu0 0.0
        %5030 = vmatprep.subr.mxu0 0.0
        %5031 = vmatpush1.msra.mxu0 0.0
        %5032 = vmatprep.subr.mxu0 0.0
        %5033 = vmatpush1.msra.mxu0 0.0
        %5034 = vmatprep.subr.mxu0 0.0
        %5035 = vmatpush1.msra.mxu0 0.0
        %5036 = vmatprep.subr.mxu0 0.0
        %5037 = vmatpush1.msra.mxu0 0.0
        %5038 = vmatprep.subr.mxu0 0.0
        %5039 = vmatpush1.msra.mxu0 0.0
        %5040 = vmatprep.subr.mxu0 0.0
        %5041 = vmatpush1.msra.mxu0 0.0
        %5042 = vmatprep.subr.mxu0 0.0
        %5043 = vmatpush1.msra.mxu0 0.0
        %5044 = vmatprep.subr.mxu0 0.0
        %5045 = vmatpush1.msra.mxu0 0.0
        %5046 = vmatprep.subr.mxu0 0.0
        %5047 = vmatpush1.msra.mxu0 0.0
        %5048 = vmatprep.subr.mxu0 0.0
        %5049 = vmatpush1.msra.mxu0 0.0
        %5050 = vmatprep.subr.mxu0 0.0
        %5051 = vmatpush1.msra.mxu0 0.0
        %5052 = vmatprep.mubr.f32.mxu0 0.0
        %v5053 = vand.u32 %v4611, 4294901760
        %5054 = vmatmul.mubr.f32.gmra.mrb[0].mxu0 %v5053
        %v5055 = vpop.f32.mrb[0].mxu0
        %v5056 = vadd.f32 %v4984, %v5055
        %v5057 = vpop.f32.mrb[0].mxu0
        %5058 = vdwg.mxu0
        %v5059 = vadd.f32 %v3690, %v5056
        %5060 = vrot.lane.b32.xlu0 %v954, 104
        %v5061 = vpop.permute.xlu0 %5060
        %5062 = vrot.lane.b32.xlu0 %v954, 72
        %v5063 = vpop.permute.xlu0 %5062
        %v5064 = vsel %vm964, %v5061, 0
        %v5066 = vsel %vm964, %v5063, 0
        %5068 = vmatprep.subr.mxu0 0.0
        %v5069 = vand.u32 %v5066, 4294901760
        %5070 = vmatpush1.xpose.msra.mxu0 %v5069
        %5071 = vmatprep.subr.mxu0 0.0
        %5072 = vmatpush1.xpose.msra.mxu0 0.0
        %5073 = vmatprep.subr.mxu0 0.0
        %5074 = vmatpush1.xpose.msra.mxu0 0.0
        %5075 = vmatprep.subr.mxu0 0.0
        %5076 = vmatpush1.xpose.msra.mxu0 0.0
        %5077 = vmatprep.subr.mxu0 0.0
        %5078 = vmatpush1.xpose.msra.mxu0 0.0
        %5079 = vmatprep.subr.mxu0 0.0
        %5080 = vmatpush1.xpose.msra.mxu0 0.0
        %5081 = vmatprep.subr.mxu0 0.0
        %5082 = vmatpush1.xpose.msra.mxu0 0.0
        %5083 = vmatprep.subr.mxu0 0.0
        %5084 = vmatpush1.xpose.msra.mxu0 0.0
        %5085 = vmatprep.subr.mxu0 0.0
        %5086 = vmatpush1.xpose.msra.mxu0 0.0
        %5087 = vmatprep.subr.mxu0 0.0
        %5088 = vmatpush1.xpose.msra.mxu0 0.0
        %5089 = vmatprep.subr.mxu0 0.0
        %5090 = vmatpush1.xpose.msra.mxu0 0.0
        %5091 = vmatprep.subr.mxu0 0.0
        %5092 = vmatpush1.xpose.msra.mxu0 0.0
        %5093 = vmatprep.subr.mxu0 0.0
        %5094 = vmatpush1.xpose.msra.mxu0 0.0
        %5095 = vmatprep.subr.mxu0 0.0
        %5096 = vmatpush1.xpose.msra.mxu0 0.0
        %5097 = vmatprep.subr.mxu0 0.0
        %5098 = vmatpush1.xpose.msra.mxu0 0.0
        %5099 = vmatprep.subr.mxu0 0.0
        %5100 = vmatpush1.xpose.msra.mxu0 0.0
        %5101 = vmatprep.subr.mxu0 0.0
        %5102 = vmatpush1.xpose.msra.mxu0 0.0
        %5103 = vmatprep.subr.mxu0 0.0
        %5104 = vmatpush1.xpose.msra.mxu0 0.0
        %5105 = vmatprep.subr.mxu0 0.0
        %5106 = vmatpush1.xpose.msra.mxu0 0.0
        %5107 = vmatprep.subr.mxu0 0.0
        %5108 = vmatpush1.xpose.msra.mxu0 0.0
        %5109 = vmatprep.subr.mxu0 0.0
        %5110 = vmatpush1.xpose.msra.mxu0 0.0
        %5111 = vmatprep.subr.mxu0 0.0
        %5112 = vmatpush1.xpose.msra.mxu0 0.0
        %5113 = vmatprep.subr.mxu0 0.0
        %5114 = vmatpush1.xpose.msra.mxu0 0.0
        %5115 = vmatprep.subr.mxu0 0.0
        %5116 = vmatpush1.xpose.msra.mxu0 0.0
        %5117 = vmatprep.subr.mxu0 0.0
        %5118 = vmatpush1.xpose.msra.mxu0 0.0
        %5119 = vmatprep.subr.mxu0 0.0
        %5120 = vmatpush1.xpose.msra.mxu0 0.0
        %5121 = vmatprep.subr.mxu0 0.0
        %5122 = vmatpush1.xpose.msra.mxu0 0.0
        %5123 = vmatprep.subr.mxu0 0.0
        %5124 = vmatpush1.xpose.msra.mxu0 0.0
        %5125 = vmatprep.subr.mxu0 0.0
        %5126 = vmatpush1.xpose.msra.mxu0 0.0
        %5127 = vmatprep.subr.mxu0 0.0
        %5128 = vmatpush1.xpose.msra.mxu0 0.0
        %5129 = vmatprep.subr.mxu0 0.0
        %5130 = vmatpush1.xpose.msra.mxu0 0.0
        %5131 = vmatprep.subr.mxu0 0.0
        %5132 = vmatpush1.xpose.msra.mxu0 0.0
        %5133 = vmatprep.mubr.f32.mxu0 0.0
        %v5134 = vand.u32 %v5064, 4294901760
        %v5135 = vsub.f32 %v5064, %v5134
        %v5136 = vand.u32 %v5135, 4294901760
        %v5137 = vsub.f32 %v5135, %v5136
        %v5138 = vand.u32 %v5137, 4294901760
        %5139 = vmatmul.mubr.f32.gmra.mrb[0].mxu0 %v5138
        %v5140 = vpop.f32.mrb[0].mxu0
        %v5141 = vadd.f32 0.0, %v5140
        %v5142 = vpop.f32.mrb[0].mxu0
        %5143 = vdwg.mxu0
        %5144 = vmatprep.subr.mxu0 0.0
        %v5145 = vand.u32 %v5066, 4294901760
        %v5146 = vsub.f32 %v5066, %v5145
        %v5147 = vand.u32 %v5146, 4294901760
        %v5148 = vsub.f32 %v5146, %v5147
        %v5149 = vand.u32 %v5148, 4294901760
        %5150 = vmatpush1.xpose.msra.mxu0 %v5149
        %5151 = vmatprep.subr.mxu0 0.0
        %5152 = vmatpush1.xpose.msra.mxu0 0.0
        %5153 = vmatprep.subr.mxu0 0.0
        %5154 = vmatpush1.xpose.msra.mxu0 0.0
        %5155 = vmatprep.subr.mxu0 0.0
        %5156 = vmatpush1.xpose.msra.mxu0 0.0
        %5157 = vmatprep.subr.mxu0 0.0
        %5158 = vmatpush1.xpose.msra.mxu0 0.0
        %5159 = vmatprep.subr.mxu0 0.0
        %5160 = vmatpush1.xpose.msra.mxu0 0.0
        %5161 = vmatprep.subr.mxu0 0.0
        %5162 = vmatpush1.xpose.msra.mxu0 0.0
        %5163 = vmatprep.subr.mxu0 0.0
        %5164 = vmatpush1.xpose.msra.mxu0 0.0
        %5165 = vmatprep.subr.mxu0 0.0
        %5166 = vmatpush1.xpose.msra.mxu0 0.0
        %5167 = vmatprep.subr.mxu0 0.0
        %5168 = vmatpush1.xpose.msra.mxu0 0.0
        %5169 = vmatprep.subr.mxu0 0.0
        %5170 = vmatpush1.xpose.msra.mxu0 0.0
        %5171 = vmatprep.subr.mxu0 0.0
        %5172 = vmatpush1.xpose.msra.mxu0 0.0
        %5173 = vmatprep.subr.mxu0 0.0
        %5174 = vmatpush1.xpose.msra.mxu0 0.0
        %5175 = vmatprep.subr.mxu0 0.0
        %5176 = vmatpush1.xpose.msra.mxu0 0.0
        %5177 = vmatprep.subr.mxu0 0.0
        %5178 = vmatpush1.xpose.msra.mxu0 0.0
        %5179 = vmatprep.subr.mxu0 0.0
        %5180 = vmatpush1.xpose.msra.mxu0 0.0
        %5181 = vmatprep.subr.mxu0 0.0
        %5182 = vmatpush1.xpose.msra.mxu0 0.0
        %5183 = vmatprep.subr.mxu0 0.0
        %5184 = vmatpush1.xpose.msra.mxu0 0.0
        %5185 = vmatprep.subr.mxu0 0.0
        %5186 = vmatpush1.xpose.msra.mxu0 0.0
        %5187 = vmatprep.subr.mxu0 0.0
        %5188 = vmatpush1.xpose.msra.mxu0 0.0
        %5189 = vmatprep.subr.mxu0 0.0
        %5190 = vmatpush1.xpose.msra.mxu0 0.0
        %5191 = vmatprep.subr.mxu0 0.0
        %5192 = vmatpush1.xpose.msra.mxu0 0.0
        %5193 = vmatprep.subr.mxu0 0.0
        %5194 = vmatpush1.xpose.msra.mxu0 0.0
        %5195 = vmatprep.subr.mxu0 0.0
        %5196 = vmatpush1.xpose.msra.mxu0 0.0
        %5197 = vmatprep.subr.mxu0 0.0
        %5198 = vmatpush1.xpose.msra.mxu0 0.0
        %5199 = vmatprep.subr.mxu0 0.0
        %5200 = vmatpush1.xpose.msra.mxu0 0.0
        %5201 = vmatprep.subr.mxu0 0.0
        %5202 = vmatpush1.xpose.msra.mxu0 0.0
        %5203 = vmatprep.subr.mxu0 0.0
        %5204 = vmatpush1.xpose.msra.mxu0 0.0
        %5205 = vmatprep.subr.mxu0 0.0
        %5206 = vmatpush1.xpose.msra.mxu0 0.0
        %5207 = vmatprep.subr.mxu0 0.0
        %5208 = vmatpush1.xpose.msra.mxu0 0.0
        %5209 = vmatprep.subr.mxu0 0.0
        %5210 = vmatpush1.xpose.msra.mxu0 0.0
        %5211 = vmatprep.subr.mxu0 0.0
        %5212 = vmatpush1.xpose.msra.mxu0 0.0
        %5213 = vmatprep.mubr.f32.mxu0 0.0
        %v5214 = vand.u32 %v5064, 4294901760
        %5215 = vmatmul.mubr.f32.gmra.mrb[0].mxu0 %v5214
        %v5216 = vpop.f32.mrb[0].mxu0
        %v5217 = vadd.f32 %v5141, %v5216
        %v5218 = vpop.f32.mrb[0].mxu0
        %5219 = vdwg.mxu0
        %5220 = vmatprep.subr.mxu0 0.0
        %v5221 = vand.u32 %v5066, 4294901760
        %v5222 = vsub.f32 %v5066, %v5221
        %5223 = vmatpush1.xpose.msra.mxu0 %v5222
        %5224 = vmatprep.subr.mxu0 0.0
        %5225 = vmatpush1.xpose.msra.mxu0 0.0
        %5226 = vmatprep.subr.mxu0 0.0
        %5227 = vmatpush1.xpose.msra.mxu0 0.0
        %5228 = vmatprep.subr.mxu0 0.0
        %5229 = vmatpush1.xpose.msra.mxu0 0.0
        %5230 = vmatprep.subr.mxu0 0.0
        %5231 = vmatpush1.xpose.msra.mxu0 0.0
        %5232 = vmatprep.subr.mxu0 0.0
        %5233 = vmatpush1.xpose.msra.mxu0 0.0
        %5234 = vmatprep.subr.mxu0 0.0
        %5235 = vmatpush1.xpose.msra.mxu0 0.0
        %5236 = vmatprep.subr.mxu0 0.0
        %5237 = vmatpush1.xpose.msra.mxu0 0.0
        %5238 = vmatprep.subr.mxu0 0.0
        %5239 = vmatpush1.xpose.msra.mxu0 0.0
        %5240 = vmatprep.subr.mxu0 0.0
        %5241 = vmatpush1.xpose.msra.mxu0 0.0
        %5242 = vmatprep.subr.mxu0 0.0
        %5243 = vmatpush1.xpose.msra.mxu0 0.0
        %5244 = vmatprep.subr.mxu0 0.0
        %5245 = vmatpush1.xpose.msra.mxu0 0.0
        %5246 = vmatprep.subr.mxu0 0.0
        %5247 = vmatpush1.xpose.msra.mxu0 0.0
        %5248 = vmatprep.subr.mxu0 0.0
        %5249 = vmatpush1.xpose.msra.mxu0 0.0
        %5250 = vmatprep.subr.mxu0 0.0
        %5251 = vmatpush1.xpose.msra.mxu0 0.0
        %5252 = vmatprep.subr.mxu0 0.0
        %5253 = vmatpush1.xpose.msra.mxu0 0.0
        %5254 = vmatprep.subr.mxu0 0.0
        %5255 = vmatpush1.xpose.msra.mxu0 0.0
        %5256 = vmatprep.subr.mxu0 0.0
        %5257 = vmatpush1.xpose.msra.mxu0 0.0
        %5258 = vmatprep.subr.mxu0 0.0
        %5259 = vmatpush1.xpose.msra.mxu0 0.0
        %5260 = vmatprep.subr.mxu0 0.0
        %5261 = vmatpush1.xpose.msra.mxu0 0.0
        %5262 = vmatprep.subr.mxu0 0.0
        %5263 = vmatpush1.xpose.msra.mxu0 0.0
        %5264 = vmatprep.subr.mxu0 0.0
        %5265 = vmatpush1.xpose.msra.mxu0 0.0
        %5266 = vmatprep.subr.mxu0 0.0
        %5267 = vmatpush1.xpose.msra.mxu0 0.0
        %5268 = vmatprep.subr.mxu0 0.0
        %5269 = vmatpush1.xpose.msra.mxu0 0.0
        %5270 = vmatprep.subr.mxu0 0.0
        %5271 = vmatpush1.xpose.msra.mxu0 0.0
        %5272 = vmatprep.subr.mxu0 0.0
        %5273 = vmatpush1.xpose.msra.mxu0 0.0
        %5274 = vmatprep.subr.mxu0 0.0
        %5275 = vmatpush1.xpose.msra.mxu0 0.0
        %5276 = vmatprep.subr.mxu0 0.0
        %5277 = vmatpush1.xpose.msra.mxu0 0.0
        %5278 = vmatprep.subr.mxu0 0.0
        %5279 = vmatpush1.xpose.msra.mxu0 0.0
        %5280 = vmatprep.subr.mxu0 0.0
        %5281 = vmatpush1.xpose.msra.mxu0 0.0
        %5282 = vmatprep.subr.mxu0 0.0
        %5283 = vmatpush1.xpose.msra.mxu0 0.0
        %5284 = vmatprep.subr.mxu0 0.0
        %5285 = vmatpush1.xpose.msra.mxu0 0.0
        %5286 = vmatprep.mubr.f32.mxu0 0.0
        %v5287 = vand.u32 %v5064, 4294901760
        %v5288 = vsub.f32 %v5064, %v5287
        %5289 = vmatmul.mubr.f32.gmra.mrb[0].mxu0 %v5288
        %v5290 = vpop.f32.mrb[0].mxu0
        %v5291 = vadd.f32 %v5217, %v5290
        %v5292 = vpop.f32.mrb[0].mxu0
        %5293 = vdwg.mxu0
        %5294 = vmatprep.subr.mxu0 0.0
        %v5295 = vand.u32 %v5066, 4294901760
        %5296 = vmatpush1.xpose.msra.mxu0 %v5295
        %5297 = vmatprep.subr.mxu0 0.0
        %5298 = vmatpush1.xpose.msra.mxu0 0.0
        %5299 = vmatprep.subr.mxu0 0.0
        %5300 = vmatpush1.xpose.msra.mxu0 0.0
        %5301 = vmatprep.subr.mxu0 0.0
        %5302 = vmatpush1.xpose.msra.mxu0 0.0
        %5303 = vmatprep.subr.mxu0 0.0
        %5304 = vmatpush1.xpose.msra.mxu0 0.0
        %5305 = vmatprep.subr.mxu0 0.0
        %5306 = vmatpush1.xpose.msra.mxu0 0.0
        %5307 = vmatprep.subr.mxu0 0.0
        %5308 = vmatpush1.xpose.msra.mxu0 0.0
        %5309 = vmatprep.subr.mxu0 0.0
        %5310 = vmatpush1.xpose.msra.mxu0 0.0
        %5311 = vmatprep.subr.mxu0 0.0
        %5312 = vmatpush1.xpose.msra.mxu0 0.0
        %5313 = vmatprep.subr.mxu0 0.0
        %5314 = vmatpush1.xpose.msra.mxu0 0.0
        %5315 = vmatprep.subr.mxu0 0.0
        %5316 = vmatpush1.xpose.msra.mxu0 0.0
        %5317 = vmatprep.subr.mxu0 0.0
        %5318 = vmatpush1.xpose.msra.mxu0 0.0
        %5319 = vmatprep.subr.mxu0 0.0
        %5320 = vmatpush1.xpose.msra.mxu0 0.0
        %5321 = vmatprep.subr.mxu0 0.0
        %5322 = vmatpush1.xpose.msra.mxu0 0.0
        %5323 = vmatprep.subr.mxu0 0.0
        %5324 = vmatpush1.xpose.msra.mxu0 0.0
        %5325 = vmatprep.subr.mxu0 0.0
        %5326 = vmatpush1.xpose.msra.mxu0 0.0
        %5327 = vmatprep.subr.mxu0 0.0
        %5328 = vmatpush1.xpose.msra.mxu0 0.0
        %5329 = vmatprep.subr.mxu0 0.0
        %5330 = vmatpush1.xpose.msra.mxu0 0.0
        %5331 = vmatprep.subr.mxu0 0.0
        %5332 = vmatpush1.xpose.msra.mxu0 0.0
        %5333 = vmatprep.subr.mxu0 0.0
        %5334 = vmatpush1.xpose.msra.mxu0 0.0
        %5335 = vmatprep.subr.mxu0 0.0
        %5336 = vmatpush1.xpose.msra.mxu0 0.0
        %5337 = vmatprep.subr.mxu0 0.0
        %5338 = vmatpush1.xpose.msra.mxu0 0.0
        %5339 = vmatprep.subr.mxu0 0.0
        %5340 = vmatpush1.xpose.msra.mxu0 0.0
        %5341 = vmatprep.subr.mxu0 0.0
        %5342 = vmatpush1.xpose.msra.mxu0 0.0
        %5343 = vmatprep.subr.mxu0 0.0
        %5344 = vmatpush1.xpose.msra.mxu0 0.0
        %5345 = vmatprep.subr.mxu0 0.0
        %5346 = vmatpush1.xpose.msra.mxu0 0.0
        %5347 = vmatprep.subr.mxu0 0.0
        %5348 = vmatpush1.xpose.msra.mxu0 0.0
        %5349 = vmatprep.subr.mxu0 0.0
        %5350 = vmatpush1.xpose.msra.mxu0 0.0
        %5351 = vmatprep.subr.mxu0 0.0
        %5352 = vmatpush1.xpose.msra.mxu0 0.0
        %5353 = vmatprep.subr.mxu0 0.0
        %5354 = vmatpush1.xpose.msra.mxu0 0.0
        %5355 = vmatprep.subr.mxu0 0.0
        %5356 = vmatpush1.xpose.msra.mxu0 0.0
        %5357 = vmatprep.subr.mxu0 0.0
        %5358 = vmatpush1.xpose.msra.mxu0 0.0
        %5359 = vmatprep.mubr.f32.mxu0 0.0
        %v5360 = vand.u32 %v5064, 4294901760
        %v5361 = vsub.f32 %v5064, %v5360
        %v5362 = vand.u32 %v5361, 4294901760
        %5363 = vmatmul.mubr.f32.gmra.mrb[0].mxu0 %v5362
        %v5364 = vpop.f32.mrb[0].mxu0
        %v5365 = vadd.f32 %v5291, %v5364
        %v5366 = vpop.f32.mrb[0].mxu0
        %5367 = vdwg.mxu0
        %5368 = vmatprep.subr.mxu0 0.0
        %v5369 = vand.u32 %v5066, 4294901760
        %v5370 = vsub.f32 %v5066, %v5369
        %v5371 = vand.u32 %v5370, 4294901760
        %5372 = vmatpush1.xpose.msra.mxu0 %v5371
        %5373 = vmatprep.subr.mxu0 0.0
        %5374 = vmatpush1.xpose.msra.mxu0 0.0
        %5375 = vmatprep.subr.mxu0 0.0
        %5376 = vmatpush1.xpose.msra.mxu0 0.0
        %5377 = vmatprep.subr.mxu0 0.0
        %5378 = vmatpush1.xpose.msra.mxu0 0.0
        %5379 = vmatprep.subr.mxu0 0.0
        %5380 = vmatpush1.xpose.msra.mxu0 0.0
        %5381 = vmatprep.subr.mxu0 0.0
        %5382 = vmatpush1.xpose.msra.mxu0 0.0
        %5383 = vmatprep.subr.mxu0 0.0
        %5384 = vmatpush1.xpose.msra.mxu0 0.0
        %5385 = vmatprep.subr.mxu0 0.0
        %5386 = vmatpush1.xpose.msra.mxu0 0.0
        %5387 = vmatprep.subr.mxu0 0.0
        %5388 = vmatpush1.xpose.msra.mxu0 0.0
        %5389 = vmatprep.subr.mxu0 0.0
        %5390 = vmatpush1.xpose.msra.mxu0 0.0
        %5391 = vmatprep.subr.mxu0 0.0
        %5392 = vmatpush1.xpose.msra.mxu0 0.0
        %5393 = vmatprep.subr.mxu0 0.0
        %5394 = vmatpush1.xpose.msra.mxu0 0.0
        %5395 = vmatprep.subr.mxu0 0.0
        %5396 = vmatpush1.xpose.msra.mxu0 0.0
        %5397 = vmatprep.subr.mxu0 0.0
        %5398 = vmatpush1.xpose.msra.mxu0 0.0
        %5399 = vmatprep.subr.mxu0 0.0
        %5400 = vmatpush1.xpose.msra.mxu0 0.0
        %5401 = vmatprep.subr.mxu0 0.0
        %5402 = vmatpush1.xpose.msra.mxu0 0.0
        %5403 = vmatprep.subr.mxu0 0.0
        %5404 = vmatpush1.xpose.msra.mxu0 0.0
        %5405 = vmatprep.subr.mxu0 0.0
        %5406 = vmatpush1.xpose.msra.mxu0 0.0
        %5407 = vmatprep.subr.mxu0 0.0
        %5408 = vmatpush1.xpose.msra.mxu0 0.0
        %5409 = vmatprep.subr.mxu0 0.0
        %5410 = vmatpush1.xpose.msra.mxu0 0.0
        %5411 = vmatprep.subr.mxu0 0.0
        %5412 = vmatpush1.xpose.msra.mxu0 0.0
        %5413 = vmatprep.subr.mxu0 0.0
        %5414 = vmatpush1.xpose.msra.mxu0 0.0
        %5415 = vmatprep.subr.mxu0 0.0
        %5416 = vmatpush1.xpose.msra.mxu0 0.0
        %5417 = vmatprep.subr.mxu0 0.0
        %5418 = vmatpush1.xpose.msra.mxu0 0.0
        %5419 = vmatprep.subr.mxu0 0.0
        %5420 = vmatpush1.xpose.msra.mxu0 0.0
        %5421 = vmatprep.subr.mxu0 0.0
        %5422 = vmatpush1.xpose.msra.mxu0 0.0
        %5423 = vmatprep.subr.mxu0 0.0
        %5424 = vmatpush1.xpose.msra.mxu0 0.0
        %5425 = vmatprep.subr.mxu0 0.0
        %5426 = vmatpush1.xpose.msra.mxu0 0.0
        %5427 = vmatprep.subr.mxu0 0.0
        %5428 = vmatpush1.xpose.msra.mxu0 0.0
        %5429 = vmatprep.subr.mxu0 0.0
        %5430 = vmatpush1.xpose.msra.mxu0 0.0
        %5431 = vmatprep.subr.mxu0 0.0
        %5432 = vmatpush1.xpose.msra.mxu0 0.0
        %5433 = vmatprep.subr.mxu0 0.0
        %5434 = vmatpush1.xpose.msra.mxu0 0.0
        %5435 = vmatprep.mubr.f32.mxu0 0.0
        %v5436 = vand.u32 %v5064, 4294901760
        %5437 = vmatmul.mubr.f32.gmra.mrb[0].mxu0 %v5436
        %v5438 = vpop.f32.mrb[0].mxu0
        %v5439 = vadd.f32 %v5365, %v5438
        %v5440 = vpop.f32.mrb[0].mxu0
        %5441 = vdwg.mxu0
        %5442 = vmatprep.subr.mxu0 0.0
        %v5443 = vand.u32 %v5066, 4294901760
        %5444 = vmatpush1.xpose.msra.mxu0 %v5443
        %5445 = vmatprep.subr.mxu0 0.0
        %5446 = vmatpush1.xpose.msra.mxu0 0.0
        %5447 = vmatprep.subr.mxu0 0.0
        %5448 = vmatpush1.xpose.msra.mxu0 0.0
        %5449 = vmatprep.subr.mxu0 0.0
        %5450 = vmatpush1.xpose.msra.mxu0 0.0
        %5451 = vmatprep.subr.mxu0 0.0
        %5452 = vmatpush1.xpose.msra.mxu0 0.0
        %5453 = vmatprep.subr.mxu0 0.0
        %5454 = vmatpush1.xpose.msra.mxu0 0.0
        %5455 = vmatprep.subr.mxu0 0.0
        %5456 = vmatpush1.xpose.msra.mxu0 0.0
        %5457 = vmatprep.subr.mxu0 0.0
        %5458 = vmatpush1.xpose.msra.mxu0 0.0
        %5459 = vmatprep.subr.mxu0 0.0
        %5460 = vmatpush1.xpose.msra.mxu0 0.0
        %5461 = vmatprep.subr.mxu0 0.0
        %5462 = vmatpush1.xpose.msra.mxu0 0.0
        %5463 = vmatprep.subr.mxu0 0.0
        %5464 = vmatpush1.xpose.msra.mxu0 0.0
        %5465 = vmatprep.subr.mxu0 0.0
        %5466 = vmatpush1.xpose.msra.mxu0 0.0
        %5467 = vmatprep.subr.mxu0 0.0
        %5468 = vmatpush1.xpose.msra.mxu0 0.0
        %5469 = vmatprep.subr.mxu0 0.0
        %5470 = vmatpush1.xpose.msra.mxu0 0.0
        %5471 = vmatprep.subr.mxu0 0.0
        %5472 = vmatpush1.xpose.msra.mxu0 0.0
        %5473 = vmatprep.subr.mxu0 0.0
        %5474 = vmatpush1.xpose.msra.mxu0 0.0
        %5475 = vmatprep.subr.mxu0 0.0
        %5476 = vmatpush1.xpose.msra.mxu0 0.0
        %5477 = vmatprep.subr.mxu0 0.0
        %5478 = vmatpush1.xpose.msra.mxu0 0.0
        %5479 = vmatprep.subr.mxu0 0.0
        %5480 = vmatpush1.xpose.msra.mxu0 0.0
        %5481 = vmatprep.subr.mxu0 0.0
        %5482 = vmatpush1.xpose.msra.mxu0 0.0
        %5483 = vmatprep.subr.mxu0 0.0
        %5484 = vmatpush1.xpose.msra.mxu0 0.0
        %5485 = vmatprep.subr.mxu0 0.0
        %5486 = vmatpush1.xpose.msra.mxu0 0.0
        %5487 = vmatprep.subr.mxu0 0.0
        %5488 = vmatpush1.xpose.msra.mxu0 0.0
        %5489 = vmatprep.subr.mxu0 0.0
        %5490 = vmatpush1.xpose.msra.mxu0 0.0
        %5491 = vmatprep.subr.mxu0 0.0
        %5492 = vmatpush1.xpose.msra.mxu0 0.0
        %5493 = vmatprep.subr.mxu0 0.0
        %5494 = vmatpush1.xpose.msra.mxu0 0.0
        %5495 = vmatprep.subr.mxu0 0.0
        %5496 = vmatpush1.xpose.msra.mxu0 0.0
        %5497 = vmatprep.subr.mxu0 0.0
        %5498 = vmatpush1.xpose.msra.mxu0 0.0
        %5499 = vmatprep.subr.mxu0 0.0
        %5500 = vmatpush1.xpose.msra.mxu0 0.0
        %5501 = vmatprep.subr.mxu0 0.0
        %5502 = vmatpush1.xpose.msra.mxu0 0.0
        %5503 = vmatprep.subr.mxu0 0.0
        %5504 = vmatpush1.xpose.msra.mxu0 0.0
        %5505 = vmatprep.subr.mxu0 0.0
        %5506 = vmatpush1.xpose.msra.mxu0 0.0
        %5507 = vmatprep.mubr.f32.mxu0 0.0
        %v5508 = vand.u32 %v5064, 4294901760
        %5509 = vmatmul.mubr.f32.gmra.mrb[0].mxu0 %v5508
        %v5510 = vpop.f32.mrb[0].mxu0
        %v5511 = vadd.f32 %v5439, %v5510
        %v5512 = vpop.f32.mrb[0].mxu0
        %5513 = vdwg.mxu0
        %v5514 = vsel %vm964, %v5511, -inf
        %5515 = vmax.xlane.f32.xlu0 %v5514
        %v5516 = vpop.xlane.xlu0 %5515
        %v5517 = vsub.f32 %v5511, %v5516
        %v5518 = vmul.f32 %v5517, 1.442695
        %v5519 = vpow.pop %v5518
        %v5520 = vsel %vm964, %v5519, 0.0
        %5521 = vadd.xlane.f32.xlu0 %v5520
        %v5522 = vpop.xlane.xlu0 %5521
        %v5523 = vrcp.pop %v5522
        %v5524 = vmul.f32 %v5519, %v5523
        %5525 = vrot.lane.b32.xlu0 %v954, 40
        %v5526 = vpop.permute.xlu0 %5525
        %v5529 = vsel %vm964, %v5524, 0
        %5531 = vmatprep.subr.mxu0 0.0
        %v5532 = vand.u32 %v5526, 4294901760
        %5533 = vmatpush1.msra.mxu0 %v5532
        %5534 = vmatprep.subr.mxu0 0.0
        %5535 = vmatpush1.msra.mxu0 0.0
        %5536 = vmatprep.subr.mxu0 0.0
        %5537 = vmatpush1.msra.mxu0 0.0
        %5538 = vmatprep.subr.mxu0 0.0
        %5539 = vmatpush1.msra.mxu0 0.0
        %5540 = vmatprep.subr.mxu0 0.0
        %5541 = vmatpush1.msra.mxu0 0.0
        %5542 = vmatprep.subr.mxu0 0.0
        %5543 = vmatpush1.msra.mxu0 0.0
        %5544 = vmatprep.subr.mxu0 0.0
        %5545 = vmatpush1.msra.mxu0 0.0
        %5546 = vmatprep.subr.mxu0 0.0
        %5547 = vmatpush1.msra.mxu0 0.0
        %5548 = vmatprep.subr.mxu0 0.0
        %5549 = vmatpush1.msra.mxu0 0.0
        %5550 = vmatprep.subr.mxu0 0.0
        %5551 = vmatpush1.msra.mxu0 0.0
        %5552 = vmatprep.subr.mxu0 0.0
        %5553 = vmatpush1.msra.mxu0 0.0
        %5554 = vmatprep.subr.mxu0 0.0
        %5555 = vmatpush1.msra.mxu0 0.0
        %5556 = vmatprep.subr.mxu0 0.0
        %5557 = vmatpush1.msra.mxu0 0.0
        %5558 = vmatprep.subr.mxu0 0.0
        %5559 = vmatpush1.msra.mxu0 0.0
        %5560 = vmatprep.subr.mxu0 0.0
        %5561 = vmatpush1.msra.mxu0 0.0
        %5562 = vmatprep.subr.mxu0 0.0
        %5563 = vmatpush1.msra.mxu0 0.0
        %5564 = vmatprep.subr.mxu0 0.0
        %5565 = vmatpush1.msra.mxu0 0.0
        %5566 = vmatprep.subr.mxu0 0.0
        %5567 = vmatpush1.msra.mxu0 0.0
        %5568 = vmatprep.subr.mxu0 0.0
        %5569 = vmatpush1.msra.mxu0 0.0
        %5570 = vmatprep.subr.mxu0 0.0
        %5571 = vmatpush1.msra.mxu0 0.0
        %5572 = vmatprep.subr.mxu0 0.0
        %5573 = vmatpush1.msra.mxu0 0.0
        %5574 = vmatprep.subr.mxu0 0.0
        %5575 = vmatpush1.msra.mxu0 0.0
        %5576 = vmatprep.subr.mxu0 0.0
        %5577 = vmatpush1.msra.mxu0 0.0
        %5578 = vmatprep.subr.mxu0 0.0
        %5579 = vmatpush1.msra.mxu0 0.0
        %5580 = vmatprep.subr.mxu0 0.0
        %5581 = vmatpush1.msra.mxu0 0.0
        %5582 = vmatprep.subr.mxu0 0.0
        %5583 = vmatpush1.msra.mxu0 0.0
        %5584 = vmatprep.subr.mxu0 0.0
        %5585 = vmatpush1.msra.mxu0 0.0
        %5586 = vmatprep.subr.mxu0 0.0
        %5587 = vmatpush1.msra.mxu0 0.0
        %5588 = vmatprep.subr.mxu0 0.0
        %5589 = vmatpush1.msra.mxu0 0.0
        %5590 = vmatprep.subr.mxu0 0.0
        %5591 = vmatpush1.msra.mxu0 0.0
        %5592 = vmatprep.subr.mxu0 0.0
        %5593 = vmatpush1.msra.mxu0 0.0
        %5594 = vmatprep.subr.mxu0 0.0
        %5595 = vmatpush1.msra.mxu0 0.0
        %5596 = vmatprep.mubr.f32.mxu0 0.0
        %v5597 = vand.u32 %v5529, 4294901760
        %v5598 = vsub.f32 %v5529, %v5597
        %v5599 = vand.u32 %v5598, 4294901760
        %v5600 = vsub.f32 %v5598, %v5599
        %v5601 = vand.u32 %v5600, 4294901760
        %5602 = vmatmul.mubr.f32.gmra.mrb[0].mxu0 %v5601
        %v5603 = vpop.f32.mrb[0].mxu0
        %v5604 = vadd.f32 0.0, %v5603
        %v5605 = vpop.f32.mrb[0].mxu0
        %5606 = vdwg.mxu0
        %5607 = vmatprep.subr.mxu0 0.0
        %v5608 = vand.u32 %v5526, 4294901760
        %v5609 = vsub.f32 %v5526, %v5608
        %v5610 = vand.u32 %v5609, 4294901760
        %v5611 = vsub.f32 %v5609, %v5610
        %v5612 = vand.u32 %v5611, 4294901760
        %5613 = vmatpush1.msra.mxu0 %v5612
        %5614 = vmatprep.subr.mxu0 0.0
        %5615 = vmatpush1.msra.mxu0 0.0
        %5616 = vmatprep.subr.mxu0 0.0
        %5617 = vmatpush1.msra.mxu0 0.0
        %5618 = vmatprep.subr.mxu0 0.0
        %5619 = vmatpush1.msra.mxu0 0.0
        %5620 = vmatprep.subr.mxu0 0.0
        %5621 = vmatpush1.msra.mxu0 0.0
        %5622 = vmatprep.subr.mxu0 0.0
        %5623 = vmatpush1.msra.mxu0 0.0
        %5624 = vmatprep.subr.mxu0 0.0
        %5625 = vmatpush1.msra.mxu0 0.0
        %5626 = vmatprep.subr.mxu0 0.0
        %5627 = vmatpush1.msra.mxu0 0.0
        %5628 = vmatprep.subr.mxu0 0.0
        %5629 = vmatpush1.msra.mxu0 0.0
        %5630 = vmatprep.subr.mxu0 0.0
        %5631 = vmatpush1.msra.mxu0 0.0
        %5632 = vmatprep.subr.mxu0 0.0
        %5633 = vmatpush1.msra.mxu0 0.0
        %5634 = vmatprep.subr.mxu0 0.0
        %5635 = vmatpush1.msra.mxu0 0.0
        %5636 = vmatprep.subr.mxu0 0.0
        %5637 = vmatpush1.msra.mxu0 0.0
        %5638 = vmatprep.subr.mxu0 0.0
        %5639 = vmatpush1.msra.mxu0 0.0
        %5640 = vmatprep.subr.mxu0 0.0
        %5641 = vmatpush1.msra.mxu0 0.0
        %5642 = vmatprep.subr.mxu0 0.0
        %5643 = vmatpush1.msra.mxu0 0.0
        %5644 = vmatprep.subr.mxu0 0.0
        %5645 = vmatpush1.msra.mxu0 0.0
        %5646 = vmatprep.subr.mxu0 0.0
        %5647 = vmatpush1.msra.mxu0 0.0
        %5648 = vmatprep.subr.mxu0 0.0
        %5649 = vmatpush1.msra.mxu0 0.0
        %5650 = vmatprep.subr.mxu0 0.0
        %5651 = vmatpush1.msra.mxu0 0.0
        %5652 = vmatprep.subr.mxu0 0.0
        %5653 = vmatpush1.msra.mxu0 0.0
        %5654 = vmatprep.subr.mxu0 0.0
        %5655 = vmatpush1.msra.mxu0 0.0
        %5656 = vmatprep.subr.mxu0 0.0
        %5657 = vmatpush1.msra.mxu0 0.0
        %5658 = vmatprep.subr.mxu0 0.0
        %5659 = vmatpush1.msra.mxu0 0.0
        %5660 = vmatprep.subr.mxu0 0.0
        %5661 = vmatpush1.msra.mxu0 0.0
        %5662 = vmatprep.subr.mxu0 0.0
        %5663 = vmatpush1.msra.mxu0 0.0
        %5664 = vmatprep.subr.mxu0 0.0
        %5665 = vmatpush1.msra.mxu0 0.0
        %5666 = vmatprep.subr.mxu0 0.0
        %5667 = vmatpush1.msra.mxu0 0.0
        %5668 = vmatprep.subr.mxu0 0.0
        %5669 = vmatpush1.msra.mxu0 0.0
        %5670 = vmatprep.subr.mxu0 0.0
        %5671 = vmatpush1.msra.mxu0 0.0
        %5672 = vmatprep.subr.mxu0 0.0
        %5673 = vmatpush1.msra.mxu0 0.0
        %5674 = vmatprep.subr.mxu0 0.0
        %5675 = vmatpush1.msra.mxu0 0.0
        %5676 = vmatprep.mubr.f32.mxu0 0.0
        %v5677 = vand.u32 %v5529, 4294901760
        %5678 = vmatmul.mubr.f32.gmra.mrb[0].mxu0 %v5677
        %v5679 = vpop.f32.mrb[0].mxu0
        %v5680 = vadd.f32 %v5604, %v5679
        %v5681 = vpop.f32.mrb[0].mxu0
        %5682 = vdwg.mxu0
        %5683 = vmatprep.subr.mxu0 0.0
        %v5684 = vand.u32 %v5526, 4294901760
        %v5685 = vsub.f32 %v5526, %v5684
        %5686 = vmatpush1.msra.mxu0 %v5685
        %5687 = vmatprep.subr.mxu0 0.0
        %5688 = vmatpush1.msra.mxu0 0.0
        %5689 = vmatprep.subr.mxu0 0.0
        %5690 = vmatpush1.msra.mxu0 0.0
        %5691 = vmatprep.subr.mxu0 0.0
        %5692 = vmatpush1.msra.mxu0 0.0
        %5693 = vmatprep.subr.mxu0 0.0
        %5694 = vmatpush1.msra.mxu0 0.0
        %5695 = vmatprep.subr.mxu0 0.0
        %5696 = vmatpush1.msra.mxu0 0.0
        %5697 = vmatprep.subr.mxu0 0.0
        %5698 = vmatpush1.msra.mxu0 0.0
        %5699 = vmatprep.subr.mxu0 0.0
        %5700 = vmatpush1.msra.mxu0 0.0
        %5701 = vmatprep.subr.mxu0 0.0
        %5702 = vmatpush1.msra.mxu0 0.0
        %5703 = vmatprep.subr.mxu0 0.0
        %5704 = vmatpush1.msra.mxu0 0.0
        %5705 = vmatprep.subr.mxu0 0.0
        %5706 = vmatpush1.msra.mxu0 0.0
        %5707 = vmatprep.subr.mxu0 0.0
        %5708 = vmatpush1.msra.mxu0 0.0
        %5709 = vmatprep.subr.mxu0 0.0
        %5710 = vmatpush1.msra.mxu0 0.0
        %5711 = vmatprep.subr.mxu0 0.0
        %5712 = vmatpush1.msra.mxu0 0.0
        %5713 = vmatprep.subr.mxu0 0.0
        %5714 = vmatpush1.msra.mxu0 0.0
        %5715 = vmatprep.subr.mxu0 0.0
        %5716 = vmatpush1.msra.mxu0 0.0
        %5717 = vmatprep.subr.mxu0 0.0
        %5718 = vmatpush1.msra.mxu0 0.0
        %5719 = vmatprep.subr.mxu0 0.0
        %5720 = vmatpush1.msra.mxu0 0.0
        %5721 = vmatprep.subr.mxu0 0.0
        %5722 = vmatpush1.msra.mxu0 0.0
        %5723 = vmatprep.subr.mxu0 0.0
        %5724 = vmatpush1.msra.mxu0 0.0
        %5725 = vmatprep.subr.mxu0 0.0
        %5726 = vmatpush1.msra.mxu0 0.0
        %5727 = vmatprep.subr.mxu0 0.0
        %5728 = vmatpush1.msra.mxu0 0.0
        %5729 = vmatprep.subr.mxu0 0.0
        %5730 = vmatpush1.msra.mxu0 0.0
        %5731 = vmatprep.subr.mxu0 0.0
        %5732 = vmatpush1.msra.mxu0 0.0
        %5733 = vmatprep.subr.mxu0 0.0
        %5734 = vmatpush1.msra.mxu0 0.0
        %5735 = vmatprep.subr.mxu0 0.0
        %5736 = vmatpush1.msra.mxu0 0.0
        %5737 = vmatprep.subr.mxu0 0.0
        %5738 = vmatpush1.msra.mxu0 0.0
        %5739 = vmatprep.subr.mxu0 0.0
        %5740 = vmatpush1.msra.mxu0 0.0
        %5741 = vmatprep.subr.mxu0 0.0
        %5742 = vmatpush1.msra.mxu0 0.0
        %5743 = vmatprep.subr.mxu0 0.0
        %5744 = vmatpush1.msra.mxu0 0.0
        %5745 = vmatprep.subr.mxu0 0.0
        %5746 = vmatpush1.msra.mxu0 0.0
        %5747 = vmatprep.subr.mxu0 0.0
        %5748 = vmatpush1.msra.mxu0 0.0
        %5749 = vmatprep.mubr.f32.mxu0 0.0
        %v5750 = vand.u32 %v5529, 4294901760
        %v5751 = vsub.f32 %v5529, %v5750
        %5752 = vmatmul.mubr.f32.gmra.mrb[0].mxu0 %v5751
        %v5753 = vpop.f32.mrb[0].mxu0
        %v5754 = vadd.f32 %v5680, %v5753
        %v5755 = vpop.f32.mrb[0].mxu0
        %5756 = vdwg.mxu0
        %5757 = vmatprep.subr.mxu0 0.0
        %v5758 = vand.u32 %v5526, 4294901760
        %5759 = vmatpush1.msra.mxu0 %v5758
        %5760 = vmatprep.subr.mxu0 0.0
        %5761 = vmatpush1.msra.mxu0 0.0
        %5762 = vmatprep.subr.mxu0 0.0
        %5763 = vmatpush1.msra.mxu0 0.0
        %5764 = vmatprep.subr.mxu0 0.0
        %5765 = vmatpush1.msra.mxu0 0.0
        %5766 = vmatprep.subr.mxu0 0.0
        %5767 = vmatpush1.msra.mxu0 0.0
        %5768 = vmatprep.subr.mxu0 0.0
        %5769 = vmatpush1.msra.mxu0 0.0
        %5770 = vmatprep.subr.mxu0 0.0
        %5771 = vmatpush1.msra.mxu0 0.0
        %5772 = vmatprep.subr.mxu0 0.0
        %5773 = vmatpush1.msra.mxu0 0.0
        %5774 = vmatprep.subr.mxu0 0.0
        %5775 = vmatpush1.msra.mxu0 0.0
        %5776 = vmatprep.subr.mxu0 0.0
        %5777 = vmatpush1.msra.mxu0 0.0
        %5778 = vmatprep.subr.mxu0 0.0
        %5779 = vmatpush1.msra.mxu0 0.0
        %5780 = vmatprep.subr.mxu0 0.0
        %5781 = vmatpush1.msra.mxu0 0.0
        %5782 = vmatprep.subr.mxu0 0.0
        %5783 = vmatpush1.msra.mxu0 0.0
        %5784 = vmatprep.subr.mxu0 0.0
        %5785 = vmatpush1.msra.mxu0 0.0
        %5786 = vmatprep.subr.mxu0 0.0
        %5787 = vmatpush1.msra.mxu0 0.0
        %5788 = vmatprep.subr.mxu0 0.0
        %5789 = vmatpush1.msra.mxu0 0.0
        %5790 = vmatprep.subr.mxu0 0.0
        %5791 = vmatpush1.msra.mxu0 0.0
        %5792 = vmatprep.subr.mxu0 0.0
        %5793 = vmatpush1.msra.mxu0 0.0
        %5794 = vmatprep.subr.mxu0 0.0
        %5795 = vmatpush1.msra.mxu0 0.0
        %5796 = vmatprep.subr.mxu0 0.0
        %5797 = vmatpush1.msra.mxu0 0.0
        %5798 = vmatprep.subr.mxu0 0.0
        %5799 = vmatpush1.msra.mxu0 0.0
        %5800 = vmatprep.subr.mxu0 0.0
        %5801 = vmatpush1.msra.mxu0 0.0
        %5802 = vmatprep.subr.mxu0 0.0
        %5803 = vmatpush1.msra.mxu0 0.0
        %5804 = vmatprep.subr.mxu0 0.0
        %5805 = vmatpush1.msra.mxu0 0.0
        %5806 = vmatprep.subr.mxu0 0.0
        %5807 = vmatpush1.msra.mxu0 0.0
        %5808 = vmatprep.subr.mxu0 0.0
        %5809 = vmatpush1.msra.mxu0 0.0
        %5810 = vmatprep.subr.mxu0 0.0
        %5811 = vmatpush1.msra.mxu0 0.0
        %5812 = vmatprep.subr.mxu0 0.0
        %5813 = vmatpush1.msra.mxu0 0.0
        %5814 = vmatprep.subr.mxu0 0.0
        %5815 = vmatpush1.msra.mxu0 0.0
        %5816 = vmatprep.subr.mxu0 0.0
        %5817 = vmatpush1.msra.mxu0 0.0
        %5818 = vmatprep.subr.mxu0 0.0
        %5819 = vmatpush1.msra.mxu0 0.0
        %5820 = vmatprep.subr.mxu0 0.0
        %5821 = vmatpush1.msra.mxu0 0.0
        %5822 = vmatprep.mubr.f32.mxu0 0.0
        %v5823 = vand.u32 %v5529, 4294901760
        %v5824 = vsub.f32 %v5529, %v5823
        %v5825 = vand.u32 %v5824, 4294901760
        %5826 = vmatmul.mubr.f32.gmra.mrb[0].mxu0 %v5825
        %v5827 = vpop.f32.mrb[0].mxu0
        %v5828 = vadd.f32 %v5754, %v5827
        %v5829 = vpop.f32.mrb[0].mxu0
        %5830 = vdwg.mxu0
        %5831 = vmatprep.subr.mxu0 0.0
        %v5832 = vand.u32 %v5526, 4294901760
        %v5833 = vsub.f32 %v5526, %v5832
        %v5834 = vand.u32 %v5833, 4294901760
        %5835 = vmatpush1.msra.mxu0 %v5834
        %5836 = vmatprep.subr.mxu0 0.0
        %5837 = vmatpush1.msra.mxu0 0.0
        %5838 = vmatprep.subr.mxu0 0.0
        %5839 = vmatpush1.msra.mxu0 0.0
        %5840 = vmatprep.subr.mxu0 0.0
        %5841 = vmatpush1.msra.mxu0 0.0
        %5842 = vmatprep.subr.mxu0 0.0
        %5843 = vmatpush1.msra.mxu0 0.0
        %5844 = vmatprep.subr.mxu0 0.0
        %5845 = vmatpush1.msra.mxu0 0.0
        %5846 = vmatprep.subr.mxu0 0.0
        %5847 = vmatpush1.msra.mxu0 0.0
        %5848 = vmatprep.subr.mxu0 0.0
        %5849 = vmatpush1.msra.mxu0 0.0
        %5850 = vmatprep.subr.mxu0 0.0
        %5851 = vmatpush1.msra.mxu0 0.0
        %5852 = vmatprep.subr.mxu0 0.0
        %5853 = vmatpush1.msra.mxu0 0.0
        %5854 = vmatprep.subr.mxu0 0.0
        %5855 = vmatpush1.msra.mxu0 0.0
        %5856 = vmatprep.subr.mxu0 0.0
        %5857 = vmatpush1.msra.mxu0 0.0
        %5858 = vmatprep.subr.mxu0 0.0
        %5859 = vmatpush1.msra.mxu0 0.0
        %5860 = vmatprep.subr.mxu0 0.0
        %5861 = vmatpush1.msra.mxu0 0.0
        %5862 = vmatprep.subr.mxu0 0.0
        %5863 = vmatpush1.msra.mxu0 0.0
        %5864 = vmatprep.subr.mxu0 0.0
        %5865 = vmatpush1.msra.mxu0 0.0
        %5866 = vmatprep.subr.mxu0 0.0
        %5867 = vmatpush1.msra.mxu0 0.0
        %5868 = vmatprep.subr.mxu0 0.0
        %5869 = vmatpush1.msra.mxu0 0.0
        %5870 = vmatprep.subr.mxu0 0.0
        %5871 = vmatpush1.msra.mxu0 0.0
        %5872 = vmatprep.subr.mxu0 0.0
        %5873 = vmatpush1.msra.mxu0 0.0
        %5874 = vmatprep.subr.mxu0 0.0
        %5875 = vmatpush1.msra.mxu0 0.0
        %5876 = vmatprep.subr.mxu0 0.0
        %5877 = vmatpush1.msra.mxu0 0.0
        %5878 = vmatprep.subr.mxu0 0.0
        %5879 = vmatpush1.msra.mxu0 0.0
        %5880 = vmatprep.subr.mxu0 0.0
        %5881 = vmatpush1.msra.mxu0 0.0
        %5882 = vmatprep.subr.mxu0 0.0
        %5883 = vmatpush1.msra.mxu0 0.0
        %5884 = vmatprep.subr.mxu0 0.0
        %5885 = vmatpush1.msra.mxu0 0.0
        %5886 = vmatprep.subr.mxu0 0.0
        %5887 = vmatpush1.msra.mxu0 0.0
        %5888 = vmatprep.subr.mxu0 0.0
        %5889 = vmatpush1.msra.mxu0 0.0
        %5890 = vmatprep.subr.mxu0 0.0
        %5891 = vmatpush1.msra.mxu0 0.0
        %5892 = vmatprep.subr.mxu0 0.0
        %5893 = vmatpush1.msra.mxu0 0.0
        %5894 = vmatprep.subr.mxu0 0.0
        %5895 = vmatpush1.msra.mxu0 0.0
        %5896 = vmatprep.subr.mxu0 0.0
        %5897 = vmatpush1.msra.mxu0 0.0
        %5898 = vmatprep.mubr.f32.mxu0 0.0
        %v5899 = vand.u32 %v5529, 4294901760
        %5900 = vmatmul.mubr.f32.gmra.mrb[0].mxu0 %v5899
        %v5901 = vpop.f32.mrb[0].mxu0
        %v5902 = vadd.f32 %v5828, %v5901
        %v5903 = vpop.f32.mrb[0].mxu0
        %5904 = vdwg.mxu0
        %5905 = vmatprep.subr.mxu0 0.0
        %v5906 = vand.u32 %v5526, 4294901760
        %5907 = vmatpush1.msra.mxu0 %v5906
        %5908 = vmatprep.subr.mxu0 0.0
        %5909 = vmatpush1.msra.mxu0 0.0
        %5910 = vmatprep.subr.mxu0 0.0
        %5911 = vmatpush1.msra.mxu0 0.0
        %5912 = vmatprep.subr.mxu0 0.0
        %5913 = vmatpush1.msra.mxu0 0.0
        %5914 = vmatprep.subr.mxu0 0.0
        %5915 = vmatpush1.msra.mxu0 0.0
        %5916 = vmatprep.subr.mxu0 0.0
        %5917 = vmatpush1.msra.mxu0 0.0
        %5918 = vmatprep.subr.mxu0 0.0
        %5919 = vmatpush1.msra.mxu0 0.0
        %5920 = vmatprep.subr.mxu0 0.0
        %5921 = vmatpush1.msra.mxu0 0.0
        %5922 = vmatprep.subr.mxu0 0.0
        %5923 = vmatpush1.msra.mxu0 0.0
        %5924 = vmatprep.subr.mxu0 0.0
        %5925 = vmatpush1.msra.mxu0 0.0
        %5926 = vmatprep.subr.mxu0 0.0
        %5927 = vmatpush1.msra.mxu0 0.0
        %5928 = vmatprep.subr.mxu0 0.0
        %5929 = vmatpush1.msra.mxu0 0.0
        %5930 = vmatprep.subr.mxu0 0.0
        %5931 = vmatpush1.msra.mxu0 0.0
        %5932 = vmatprep.subr.mxu0 0.0
        %5933 = vmatpush1.msra.mxu0 0.0
        %5934 = vmatprep.subr.mxu0 0.0
        %5935 = vmatpush1.msra.mxu0 0.0
        %5936 = vmatprep.subr.mxu0 0.0
        %5937 = vmatpush1.msra.mxu0 0.0
        %5938 = vmatprep.subr.mxu0 0.0
        %5939 = vmatpush1.msra.mxu0 0.0
        %5940 = vmatprep.subr.mxu0 0.0
        %5941 = vmatpush1.msra.mxu0 0.0
        %5942 = vmatprep.subr.mxu0 0.0
        %5943 = vmatpush1.msra.mxu0 0.0
        %5944 = vmatprep.subr.mxu0 0.0
        %5945 = vmatpush1.msra.mxu0 0.0
        %5946 = vmatprep.subr.mxu0 0.0
        %5947 = vmatpush1.msra.mxu0 0.0
        %5948 = vmatprep.subr.mxu0 0.0
        %5949 = vmatpush1.msra.mxu0 0.0
        %5950 = vmatprep.subr.mxu0 0.0
        %5951 = vmatpush1.msra.mxu0 0.0
        %5952 = vmatprep.subr.mxu0 0.0
        %5953 = vmatpush1.msra.mxu0 0.0
        %5954 = vmatprep.subr.mxu0 0.0
        %5955 = vmatpush1.msra.mxu0 0.0
        %5956 = vmatprep.subr.mxu0 0.0
        %5957 = vmatpush1.msra.mxu0 0.0
        %5958 = vmatprep.subr.mxu0 0.0
        %5959 = vmatpush1.msra.mxu0 0.0
        %5960 = vmatprep.subr.mxu0 0.0
        %5961 = vmatpush1.msra.mxu0 0.0
        %5962 = vmatprep.subr.mxu0 0.0
        %5963 = vmatpush1.msra.mxu0 0.0
        %5964 = vmatprep.subr.mxu0 0.0
        %5965 = vmatpush1.msra.mxu0 0.0
        %5966 = vmatprep.subr.mxu0 0.0
        %5967 = vmatpush1.msra.mxu0 0.0
        %5968 = vmatprep.subr.mxu0 0.0
        %5969 = vmatpush1.msra.mxu0 0.0
        %5970 = vmatprep.mubr.f32.mxu0 0.0
        %v5971 = vand.u32 %v5529, 4294901760
        %5972 = vmatmul.mubr.f32.gmra.mrb[0].mxu0 %v5971
        %v5973 = vpop.f32.mrb[0].mxu0
        %v5974 = vadd.f32 %v5902, %v5973
        %v5975 = vpop.f32.mrb[0].mxu0
        %5976 = vdwg.mxu0
        %v5978 = vsel %vm964, %v5974, 0
        %5980 = vmatprep.subr.mxu0 0.0
        %v5981 = vand.u32 %v960, 4294901760
        %5982 = vmatpush1.msra.mxu0 %v5981
        %5983 = vmatprep.subr.mxu0 0.0
        %5984 = vmatpush1.msra.mxu0 0.0
        %5985 = vmatprep.subr.mxu0 0.0
        %5986 = vmatpush1.msra.mxu0 0.0
        %5987 = vmatprep.subr.mxu0 0.0
        %5988 = vmatpush1.msra.mxu0 0.0
        %5989 = vmatprep.subr.mxu0 0.0
        %5990 = vmatpush1.msra.mxu0 0.0
        %5991 = vmatprep.subr.mxu0 0.0
        %5992 = vmatpush1.msra.mxu0 0.0
        %5993 = vmatprep.subr.mxu0 0.0
        %5994 = vmatpush1.msra.mxu0 0.0
        %5995 = vmatprep.subr.mxu0 0.0
        %5996 = vmatpush1.msra.mxu0 0.0
        %5997 = vmatprep.subr.mxu0 0.0
        %5998 = vmatpush1.msra.mxu0 0.0
        %5999 = vmatprep.subr.mxu0 0.0
        %6000 = vmatpush1.msra.mxu0 0.0
        %6001 = vmatprep.subr.mxu0 0.0
        %6002 = vmatpush1.msra.mxu0 0.0
        %6003 = vmatprep.subr.mxu0 0.0
        %6004 = vmatpush1.msra.mxu0 0.0
        %6005 = vmatprep.subr.mxu0 0.0
        %6006 = vmatpush1.msra.mxu0 0.0
        %6007 = vmatprep.subr.mxu0 0.0
        %6008 = vmatpush1.msra.mxu0 0.0
        %6009 = vmatprep.subr.mxu0 0.0
        %6010 = vmatpush1.msra.mxu0 0.0
        %6011 = vmatprep.subr.mxu0 0.0
        %6012 = vmatpush1.msra.mxu0 0.0
        %6013 = vmatprep.subr.mxu0 0.0
        %6014 = vmatpush1.msra.mxu0 0.0
        %6015 = vmatprep.subr.mxu0 0.0
        %6016 = vmatpush1.msra.mxu0 0.0
        %6017 = vmatprep.subr.mxu0 0.0
        %6018 = vmatpush1.msra.mxu0 0.0
        %6019 = vmatprep.subr.mxu0 0.0
        %6020 = vmatpush1.msra.mxu0 0.0
        %6021 = vmatprep.subr.mxu0 0.0
        %6022 = vmatpush1.msra.mxu0 0.0
        %6023 = vmatprep.subr.mxu0 0.0
        %6024 = vmatpush1.msra.mxu0 0.0
        %6025 = vmatprep.subr.mxu0 0.0
        %6026 = vmatpush1.msra.mxu0 0.0
        %6027 = vmatprep.subr.mxu0 0.0
        %6028 = vmatpush1.msra.mxu0 0.0
        %6029 = vmatprep.subr.mxu0 0.0
        %6030 = vmatpush1.msra.mxu0 0.0
        %6031 = vmatprep.subr.mxu0 0.0
        %6032 = vmatpush1.msra.mxu0 0.0
        %6033 = vmatprep.subr.mxu0 0.0
        %6034 = vmatpush1.msra.mxu0 0.0
        %6035 = vmatprep.subr.mxu0 0.0
        %6036 = vmatpush1.msra.mxu0 0.0
        %6037 = vmatprep.subr.mxu0 0.0
        %6038 = vmatpush1.msra.mxu0 0.0
        %6039 = vmatprep.subr.mxu0 0.0
        %6040 = vmatpush1.msra.mxu0 0.0
        %6041 = vmatprep.subr.mxu0 0.0
        %6042 = vmatpush1.msra.mxu0 0.0
        %6043 = vmatprep.subr.mxu0 0.0
        %6044 = vmatpush1.msra.mxu0 0.0
        %6045 = vmatprep.mubr.f32.mxu0 0.0
        %v6046 = vand.u32 %v5978, 4294901760
        %v6047 = vsub.f32 %v5978, %v6046
        %v6048 = vand.u32 %v6047, 4294901760
        %v6049 = vsub.f32 %v6047, %v6048
        %v6050 = vand.u32 %v6049, 4294901760
        %6051 = vmatmul.mubr.f32.gmra.mrb[0].mxu0 %v6050
        %v6052 = vpop.f32.mrb[0].mxu0
        %v6053 = vadd.f32 0.0, %v6052
        %v6054 = vpop.f32.mrb[0].mxu0
        %6055 = vdwg.mxu0
        %6056 = vmatprep.subr.mxu0 0.0
        %v6057 = vand.u32 %v960, 4294901760
        %v6058 = vsub.f32 %v960, %v6057
        %v6059 = vand.u32 %v6058, 4294901760
        %v6060 = vsub.f32 %v6058, %v6059
        %v6061 = vand.u32 %v6060, 4294901760
        %6062 = vmatpush1.msra.mxu0 %v6061
        %6063 = vmatprep.subr.mxu0 0.0
        %6064 = vmatpush1.msra.mxu0 0.0
        %6065 = vmatprep.subr.mxu0 0.0
        %6066 = vmatpush1.msra.mxu0 0.0
        %6067 = vmatprep.subr.mxu0 0.0
        %6068 = vmatpush1.msra.mxu0 0.0
        %6069 = vmatprep.subr.mxu0 0.0
        %6070 = vmatpush1.msra.mxu0 0.0
        %6071 = vmatprep.subr.mxu0 0.0
        %6072 = vmatpush1.msra.mxu0 0.0
        %6073 = vmatprep.subr.mxu0 0.0
        %6074 = vmatpush1.msra.mxu0 0.0
        %6075 = vmatprep.subr.mxu0 0.0
        %6076 = vmatpush1.msra.mxu0 0.0
        %6077 = vmatprep.subr.mxu0 0.0
        %6078 = vmatpush1.msra.mxu0 0.0
        %6079 = vmatprep.subr.mxu0 0.0
        %6080 = vmatpush1.msra.mxu0 0.0
        %6081 = vmatprep.subr.mxu0 0.0
        %6082 = vmatpush1.msra.mxu0 0.0
        %6083 = vmatprep.subr.mxu0 0.0
        %6084 = vmatpush1.msra.mxu0 0.0
        %6085 = vmatprep.subr.mxu0 0.0
        %6086 = vmatpush1.msra.mxu0 0.0
        %6087 = vmatprep.subr.mxu0 0.0
        %6088 = vmatpush1.msra.mxu0 0.0
        %6089 = vmatprep.subr.mxu0 0.0
        %6090 = vmatpush1.msra.mxu0 0.0
        %6091 = vmatprep.subr.mxu0 0.0
        %6092 = vmatpush1.msra.mxu0 0.0
        %6093 = vmatprep.subr.mxu0 0.0
        %6094 = vmatpush1.msra.mxu0 0.0
        %6095 = vmatprep.subr.mxu0 0.0
        %6096 = vmatpush1.msra.mxu0 0.0
        %6097 = vmatprep.subr.mxu0 0.0
        %6098 = vmatpush1.msra.mxu0 0.0
        %6099 = vmatprep.subr.mxu0 0.0
        %6100 = vmatpush1.msra.mxu0 0.0
        %6101 = vmatprep.subr.mxu0 0.0
        %6102 = vmatpush1.msra.mxu0 0.0
        %6103 = vmatprep.subr.mxu0 0.0
        %6104 = vmatpush1.msra.mxu0 0.0
        %6105 = vmatprep.subr.mxu0 0.0
        %6106 = vmatpush1.msra.mxu0 0.0
        %6107 = vmatprep.subr.mxu0 0.0
        %6108 = vmatpush1.msra.mxu0 0.0
        %6109 = vmatprep.subr.mxu0 0.0
        %6110 = vmatpush1.msra.mxu0 0.0
        %6111 = vmatprep.subr.mxu0 0.0
        %6112 = vmatpush1.msra.mxu0 0.0
        %6113 = vmatprep.subr.mxu0 0.0
        %6114 = vmatpush1.msra.mxu0 0.0
        %6115 = vmatprep.subr.mxu0 0.0
        %6116 = vmatpush1.msra.mxu0 0.0
        %6117 = vmatprep.subr.mxu0 0.0
        %6118 = vmatpush1.msra.mxu0 0.0
        %6119 = vmatprep.subr.mxu0 0.0
        %6120 = vmatpush1.msra.mxu0 0.0
        %6121 = vmatprep.subr.mxu0 0.0
        %6122 = vmatpush1.msra.mxu0 0.0
        %6123 = vmatprep.subr.mxu0 0.0
        %6124 = vmatpush1.msra.mxu0 0.0
        %6125 = vmatprep.mubr.f32.mxu0 0.0
        %v6126 = vand.u32 %v5978, 4294901760
        %6127 = vmatmul.mubr.f32.gmra.mrb[0].mxu0 %v6126
        %v6128 = vpop.f32.mrb[0].mxu0
        %v6129 = vadd.f32 %v6053, %v6128
        %v6130 = vpop.f32.mrb[0].mxu0
        %6131 = vdwg.mxu0
        %6132 = vmatprep.subr.mxu0 0.0
        %v6133 = vand.u32 %v960, 4294901760
        %v6134 = vsub.f32 %v960, %v6133
        %6135 = vmatpush1.msra.mxu0 %v6134
        %6136 = vmatprep.subr.mxu0 0.0
        %6137 = vmatpush1.msra.mxu0 0.0
        %6138 = vmatprep.subr.mxu0 0.0
        %6139 = vmatpush1.msra.mxu0 0.0
        %6140 = vmatprep.subr.mxu0 0.0
        %6141 = vmatpush1.msra.mxu0 0.0
        %6142 = vmatprep.subr.mxu0 0.0
        %6143 = vmatpush1.msra.mxu0 0.0
        %6144 = vmatprep.subr.mxu0 0.0
        %6145 = vmatpush1.msra.mxu0 0.0
        %6146 = vmatprep.subr.mxu0 0.0
        %6147 = vmatpush1.msra.mxu0 0.0
        %6148 = vmatprep.subr.mxu0 0.0
        %6149 = vmatpush1.msra.mxu0 0.0
        %6150 = vmatprep.subr.mxu0 0.0
        %6151 = vmatpush1.msra.mxu0 0.0
        %6152 = vmatprep.subr.mxu0 0.0
        %6153 = vmatpush1.msra.mxu0 0.0
        %6154 = vmatprep.subr.mxu0 0.0
        %6155 = vmatpush1.msra.mxu0 0.0
        %6156 = vmatprep.subr.mxu0 0.0
        %6157 = vmatpush1.msra.mxu0 0.0
        %6158 = vmatprep.subr.mxu0 0.0
        %6159 = vmatpush1.msra.mxu0 0.0
        %6160 = vmatprep.subr.mxu0 0.0
        %6161 = vmatpush1.msra.mxu0 0.0
        %6162 = vmatprep.subr.mxu0 0.0
        %6163 = vmatpush1.msra.mxu0 0.0
        %6164 = vmatprep.subr.mxu0 0.0
        %6165 = vmatpush1.msra.mxu0 0.0
        %6166 = vmatprep.subr.mxu0 0.0
        %6167 = vmatpush1.msra.mxu0 0.0
        %6168 = vmatprep.subr.mxu0 0.0
        %6169 = vmatpush1.msra.mxu0 0.0
        %6170 = vmatprep.subr.mxu0 0.0
        %6171 = vmatpush1.msra.mxu0 0.0
        %6172 = vmatprep.subr.mxu0 0.0
        %6173 = vmatpush1.msra.mxu0 0.0
        %6174 = vmatprep.subr.mxu0 0.0
        %6175 = vmatpush1.msra.mxu0 0.0
        %6176 = vmatprep.subr.mxu0 0.0
        %6177 = vmatpush1.msra.mxu0 0.0
        %6178 = vmatprep.subr.mxu0 0.0
        %6179 = vmatpush1.msra.mxu0 0.0
        %6180 = vmatprep.subr.mxu0 0.0
        %6181 = vmatpush1.msra.mxu0 0.0
        %6182 = vmatprep.subr.mxu0 0.0
        %6183 = vmatpush1.msra.mxu0 0.0
        %6184 = vmatprep.subr.mxu0 0.0
        %6185 = vmatpush1.msra.mxu0 0.0
        %6186 = vmatprep.subr.mxu0 0.0
        %6187 = vmatpush1.msra.mxu0 0.0
        %6188 = vmatprep.subr.mxu0 0.0
        %6189 = vmatpush1.msra.mxu0 0.0
        %6190 = vmatprep.subr.mxu0 0.0
        %6191 = vmatpush1.msra.mxu0 0.0
        %6192 = vmatprep.subr.mxu0 0.0
        %6193 = vmatpush1.msra.mxu0 0.0
        %6194 = vmatprep.subr.mxu0 0.0
        %6195 = vmatpush1.msra.mxu0 0.0
        %6196 = vmatprep.subr.mxu0 0.0
        %6197 = vmatpush1.msra.mxu0 0.0
        %6198 = vmatprep.mubr.f32.mxu0 0.0
        %v6199 = vand.u32 %v5978, 4294901760
        %v6200 = vsub.f32 %v5978, %v6199
        %6201 = vmatmul.mubr.f32.gmra.mrb[0].mxu0 %v6200
        %v6202 = vpop.f32.mrb[0].mxu0
        %v6203 = vadd.f32 %v6129, %v6202
        %v6204 = vpop.f32.mrb[0].mxu0
        %6205 = vdwg.mxu0
        %6206 = vmatprep.subr.mxu0 0.0
        %v6207 = vand.u32 %v960, 4294901760
        %6208 = vmatpush1.msra.mxu0 %v6207
        %6209 = vmatprep.subr.mxu0 0.0
        %6210 = vmatpush1.msra.mxu0 0.0
        %6211 = vmatprep.subr.mxu0 0.0
        %6212 = vmatpush1.msra.mxu0 0.0
        %6213 = vmatprep.subr.mxu0 0.0
        %6214 = vmatpush1.msra.mxu0 0.0
        %6215 = vmatprep.subr.mxu0 0.0
        %6216 = vmatpush1.msra.mxu0 0.0
        %6217 = vmatprep.subr.mxu0 0.0
        %6218 = vmatpush1.msra.mxu0 0.0
        %6219 = vmatprep.subr.mxu0 0.0
        %6220 = vmatpush1.msra.mxu0 0.0
        %6221 = vmatprep.subr.mxu0 0.0
        %6222 = vmatpush1.msra.mxu0 0.0
        %6223 = vmatprep.subr.mxu0 0.0
        %6224 = vmatpush1.msra.mxu0 0.0
        %6225 = vmatprep.subr.mxu0 0.0
        %6226 = vmatpush1.msra.mxu0 0.0
        %6227 = vmatprep.subr.mxu0 0.0
        %6228 = vmatpush1.msra.mxu0 0.0
        %6229 = vmatprep.subr.mxu0 0.0
        %6230 = vmatpush1.msra.mxu0 0.0
        %6231 = vmatprep.subr.mxu0 0.0
        %6232 = vmatpush1.msra.mxu0 0.0
        %6233 = vmatprep.subr.mxu0 0.0
        %6234 = vmatpush1.msra.mxu0 0.0
        %6235 = vmatprep.subr.mxu0 0.0
        %6236 = vmatpush1.msra.mxu0 0.0
        %6237 = vmatprep.subr.mxu0 0.0
        %6238 = vmatpush1.msra.mxu0 0.0
        %6239 = vmatprep.subr.mxu0 0.0
        %6240 = vmatpush1.msra.mxu0 0.0
        %6241 = vmatprep.subr.mxu0 0.0
        %6242 = vmatpush1.msra.mxu0 0.0
        %6243 = vmatprep.subr.mxu0 0.0
        %6244 = vmatpush1.msra.mxu0 0.0
        %6245 = vmatprep.subr.mxu0 0.0
        %6246 = vmatpush1.msra.mxu0 0.0
        %6247 = vmatprep.subr.mxu0 0.0
        %6248 = vmatpush1.msra.mxu0 0.0
        %6249 = vmatprep.subr.mxu0 0.0
        %6250 = vmatpush1.msra.mxu0 0.0
        %6251 = vmatprep.subr.mxu0 0.0
        %6252 = vmatpush1.msra.mxu0 0.0
        %6253 = vmatprep.subr.mxu0 0.0
        %6254 = vmatpush1.msra.mxu0 0.0
        %6255 = vmatprep.subr.mxu0 0.0
        %6256 = vmatpush1.msra.mxu0 0.0
        %6257 = vmatprep.subr.mxu0 0.0
        %6258 = vmatpush1.msra.mxu0 0.0
        %6259 = vmatprep.subr.mxu0 0.0
        %6260 = vmatpush1.msra.mxu0 0.0
        %6261 = vmatprep.subr.mxu0 0.0
        %6262 = vmatpush1.msra.mxu0 0.0
        %6263 = vmatprep.subr.mxu0 0.0
        %6264 = vmatpush1.msra.mxu0 0.0
        %6265 = vmatprep.subr.mxu0 0.0
        %6266 = vmatpush1.msra.mxu0 0.0
        %6267 = vmatprep.subr.mxu0 0.0
        %6268 = vmatpush1.msra.mxu0 0.0
        %6269 = vmatprep.subr.mxu0 0.0
        %6270 = vmatpush1.msra.mxu0 0.0
        %6271 = vmatprep.mubr.f32.mxu0 0.0
        %v6272 = vand.u32 %v5978, 4294901760
        %v6273 = vsub.f32 %v5978, %v6272
        %v6274 = vand.u32 %v6273, 4294901760
        %6275 = vmatmul.mubr.f32.gmra.mrb[0].mxu0 %v6274
        %v6276 = vpop.f32.mrb[0].mxu0
        %v6277 = vadd.f32 %v6203, %v6276
        %v6278 = vpop.f32.mrb[0].mxu0
        %6279 = vdwg.mxu0
        %6280 = vmatprep.subr.mxu0 0.0
        %v6281 = vand.u32 %v960, 4294901760
        %v6282 = vsub.f32 %v960, %v6281
        %v6283 = vand.u32 %v6282, 4294901760
        %6284 = vmatpush1.msra.mxu0 %v6283
        %6285 = vmatprep.subr.mxu0 0.0
        %6286 = vmatpush1.msra.mxu0 0.0
        %6287 = vmatprep.subr.mxu0 0.0
        %6288 = vmatpush1.msra.mxu0 0.0
        %6289 = vmatprep.subr.mxu0 0.0
        %6290 = vmatpush1.msra.mxu0 0.0
        %6291 = vmatprep.subr.mxu0 0.0
        %6292 = vmatpush1.msra.mxu0 0.0
        %6293 = vmatprep.subr.mxu0 0.0
        %6294 = vmatpush1.msra.mxu0 0.0
        %6295 = vmatprep.subr.mxu0 0.0
        %6296 = vmatpush1.msra.mxu0 0.0
        %6297 = vmatprep.subr.mxu0 0.0
        %6298 = vmatpush1.msra.mxu0 0.0
        %6299 = vmatprep.subr.mxu0 0.0
        %6300 = vmatpush1.msra.mxu0 0.0
        %6301 = vmatprep.subr.mxu0 0.0
        %6302 = vmatpush1.msra.mxu0 0.0
        %6303 = vmatprep.subr.mxu0 0.0
        %6304 = vmatpush1.msra.mxu0 0.0
        %6305 = vmatprep.subr.mxu0 0.0
        %6306 = vmatpush1.msra.mxu0 0.0
        %6307 = vmatprep.subr.mxu0 0.0
        %6308 = vmatpush1.msra.mxu0 0.0
        %6309 = vmatprep.subr.mxu0 0.0
        %6310 = vmatpush1.msra.mxu0 0.0
        %6311 = vmatprep.subr.mxu0 0.0
        %6312 = vmatpush1.msra.mxu0 0.0
        %6313 = vmatprep.subr.mxu0 0.0
        %6314 = vmatpush1.msra.mxu0 0.0
        %6315 = vmatprep.subr.mxu0 0.0
        %6316 = vmatpush1.msra.mxu0 0.0
        %6317 = vmatprep.subr.mxu0 0.0
        %6318 = vmatpush1.msra.mxu0 0.0
        %6319 = vmatprep.subr.mxu0 0.0
        %6320 = vmatpush1.msra.mxu0 0.0
        %6321 = vmatprep.subr.mxu0 0.0
        %6322 = vmatpush1.msra.mxu0 0.0
        %6323 = vmatprep.subr.mxu0 0.0
        %6324 = vmatpush1.msra.mxu0 0.0
        %6325 = vmatprep.subr.mxu0 0.0
        %6326 = vmatpush1.msra.mxu0 0.0
        %6327 = vmatprep.subr.mxu0 0.0
        %6328 = vmatpush1.msra.mxu0 0.0
        %6329 = vmatprep.subr.mxu0 0.0
        %6330 = vmatpush1.msra.mxu0 0.0
        %6331 = vmatprep.subr.mxu0 0.0
        %6332 = vmatpush1.msra.mxu0 0.0
        %6333 = vmatprep.subr.mxu0 0.0
        %6334 = vmatpush1.msra.mxu0 0.0
        %6335 = vmatprep.subr.mxu0 0.0
        %6336 = vmatpush1.msra.mxu0 0.0
        %6337 = vmatprep.subr.mxu0 0.0
        %6338 = vmatpush1.msra.mxu0 0.0
        %6339 = vmatprep.subr.mxu0 0.0
        %6340 = vmatpush1.msra.mxu0 0.0
        %6341 = vmatprep.subr.mxu0 0.0
        %6342 = vmatpush1.msra.mxu0 0.0
        %6343 = vmatprep.subr.mxu0 0.0
        %6344 = vmatpush1.msra.mxu0 0.0
        %6345 = vmatprep.subr.mxu0 0.0
        %6346 = vmatpush1.msra.mxu0 0.0
        %6347 = vmatprep.mubr.f32.mxu0 0.0
        %v6348 = vand.u32 %v5978, 4294901760
        %6349 = vmatmul.mubr.f32.gmra.mrb[0].mxu0 %v6348
        %v6350 = vpop.f32.mrb[0].mxu0
        %v6351 = vadd.f32 %v6277, %v6350
        %v6352 = vpop.f32.mrb[0].mxu0
        %6353 = vdwg.mxu0
        %6354 = vmatprep.subr.mxu0 0.0
        %v6355 = vand.u32 %v960, 4294901760
        %6356 = vmatpush1.msra.mxu0 %v6355
        %6357 = vmatprep.subr.mxu0 0.0
        %6358 = vmatpush1.msra.mxu0 0.0
        %6359 = vmatprep.subr.mxu0 0.0
        %6360 = vmatpush1.msra.mxu0 0.0
        %6361 = vmatprep.subr.mxu0 0.0
        %6362 = vmatpush1.msra.mxu0 0.0
        %6363 = vmatprep.subr.mxu0 0.0
        %6364 = vmatpush1.msra.mxu0 0.0
        %6365 = vmatprep.subr.mxu0 0.0
        %6366 = vmatpush1.msra.mxu0 0.0
        %6367 = vmatprep.subr.mxu0 0.0
        %6368 = vmatpush1.msra.mxu0 0.0
        %6369 = vmatprep.subr.mxu0 0.0
        %6370 = vmatpush1.msra.mxu0 0.0
        %6371 = vmatprep.subr.mxu0 0.0
        %6372 = vmatpush1.msra.mxu0 0.0
        %6373 = vmatprep.subr.mxu0 0.0
        %6374 = vmatpush1.msra.mxu0 0.0
        %6375 = vmatprep.subr.mxu0 0.0
        %6376 = vmatpush1.msra.mxu0 0.0
        %6377 = vmatprep.subr.mxu0 0.0
        %6378 = vmatpush1.msra.mxu0 0.0
        %6379 = vmatprep.subr.mxu0 0.0
        %6380 = vmatpush1.msra.mxu0 0.0
        %6381 = vmatprep.subr.mxu0 0.0
        %6382 = vmatpush1.msra.mxu0 0.0
        %6383 = vmatprep.subr.mxu0 0.0
        %6384 = vmatpush1.msra.mxu0 0.0
        %6385 = vmatprep.subr.mxu0 0.0
        %6386 = vmatpush1.msra.mxu0 0.0
        %6387 = vmatprep.subr.mxu0 0.0
        %6388 = vmatpush1.msra.mxu0 0.0
        %6389 = vmatprep.subr.mxu0 0.0
        %6390 = vmatpush1.msra.mxu0 0.0
        %6391 = vmatprep.subr.mxu0 0.0
        %6392 = vmatpush1.msra.mxu0 0.0
        %6393 = vmatprep.subr.mxu0 0.0
        %6394 = vmatpush1.msra.mxu0 0.0
        %6395 = vmatprep.subr.mxu0 0.0
        %6396 = vmatpush1.msra.mxu0 0.0
        %6397 = vmatprep.subr.mxu0 0.0
        %6398 = vmatpush1.msra.mxu0 0.0
        %6399 = vmatprep.subr.mxu0 0.0
        %6400 = vmatpush1.msra.mxu0 0.0
        %6401 = vmatprep.subr.mxu0 0.0
        %6402 = vmatpush1.msra.mxu0 0.0
        %6403 = vmatprep.subr.mxu0 0.0
        %6404 = vmatpush1.msra.mxu0 0.0
        %6405 = vmatprep.subr.mxu0 0.0
        %6406 = vmatpush1.msra.mxu0 0.0
        %6407 = vmatprep.subr.mxu0 0.0
        %6408 = vmatpush1.msra.mxu0 0.0
        %6409 = vmatprep.subr.mxu0 0.0
        %6410 = vmatpush1.msra.mxu0 0.0
        %6411 = vmatprep.subr.mxu0 0.0
        %6412 = vmatpush1.msra.mxu0 0.0
        %6413 = vmatprep.subr.mxu0 0.0
        %6414 = vmatpush1.msra.mxu0 0.0
        %6415 = vmatprep.subr.mxu0 0.0
        %6416 = vmatpush1.msra.mxu0 0.0
        %6417 = vmatprep.subr.mxu0 0.0
        %6418 = vmatpush1.msra.mxu0 0.0
        %6419 = vmatprep.mubr.f32.mxu0 0.0
        %v6420 = vand.u32 %v5978, 4294901760
        %6421 = vmatmul.mubr.f32.gmra.mrb[0].mxu0 %v6420
        %v6422 = vpop.f32.mrb[0].mxu0
        %v6423 = vadd.f32 %v6351, %v6422
        %v6424 = vpop.f32.mrb[0].mxu0
        %6425 = vdwg.mxu0
        %v6426 = vadd.f32 %v5059, %v6423
        %v6427 = vld [vmem:[%s4] sm:$0x1]
        %v6429 = vlaneseq
        %v6430 = vshrl.u32 %v6429, 7
        %v6431 = vsub.s32 0, %v6430
        %v6432 = vrot.slane %v6427, %v6431
        %v6434 = vadd.f32 %v6426, %v6432
        %v6435 = vadd.f32 %v6434, %v456
        %v6436 = vld [vmem:[%s9] sm:$0x1]
        %v6437 = vld [vmem:[%s10] sm:$0x1]
        %v6438 = vsel %vm468, %v6435, 0.0
        %6439 = vadd.xlane.f32.xlu0 %v6438
        %v6440 = vpop.xlane.xlu0 %6439
        %v6441 = vrcp.pop 32.0
        %v6442 = vmul.f32 %v6440, %v6441
        %v6443 = vsub.f32 %v6435, %v6442
        %v6444 = vmul.f32 %v6443, %v6443
        %v6445 = vsel %vm468, %v6444, 0.0
        %6446 = vadd.xlane.f32.xlu0 %v6445
        %v6447 = vpop.xlane.xlu0 %6446
        %v6448 = vmul.f32 %v6447, %v6441
        %v6449 = vadd.f32 %v6448, 1e-05
        %v6450 = vrsqrt.pop %v6449
        %v6451 = vmul.f32 %v6443, %v6450
        %v6453 = vlaneseq
        %v6454 = vshrl.u32 %v6453, 7
        %v6455 = vsub.s32 0, %v6454
        %v6456 = vrot.slane %v6436, %v6455
        %v6458 = vmul.f32 %v6451, %v6456
        %v6460 = vlaneseq
        %v6461 = vshrl.u32 %v6460, 7
        %v6462 = vsub.s32 0, %v6461
        %v6463 = vrot.slane %v6437, %v6462
        %v6465 = vadd.f32 %v6458, %v6463
        %v6466 = vld [vmem:[%s5] sm:$0xff]
        %v6467 = vld [vmem:[%s5 + $0x8] sm:$0xff]
        %v6468 = vld [vmem:[%s5 + $0x10] sm:$0xff]
        %v6469 = vld [vmem:[%s5 + $0x18] sm:$0xff]
        %v6470 = vld [vmem:[%s6] sm:$0x1]
        %v6472 = vlaneseq
        %v6473 = vshrl.u32 %v6472, 7
        %v6474 = vsub.s32 0, %v6473
        %v6475 = vrot.slane %v6470, %v6474
        %v6478 = vsel %vm468, %v6465, 0
        %6480 = vmatprep.subr.mxu0 0.0
        %v6481 = vand.u32 %v6466, 4294901760
        %6482 = vmatpush1.msra.mxu0 %v6481
        %6483 = vmatprep.subr.mxu0 0.0
        %v6484 = vand.u32 %v6467, 4294901760
        %6485 = vmatpush1.msra.mxu0 %v6484
        %6486 = vmatprep.subr.mxu0 0.0
        %v6487 = vand.u32 %v6468, 4294901760
        %6488 = vmatpush1.msra.mxu0 %v6487
        %6489 = vmatprep.subr.mxu0 0.0
        %v6490 = vand.u32 %v6469, 4294901760
        %6491 = vmatpush1.msra.mxu0 %v6490
        %6492 = vmatprep.subr.mxu0 0.0
        %6493 = vmatpush1.msra.mxu0 0.0
        %6494 = vmatprep.subr.mxu0 0.0
        %6495 = vmatpush1.msra.mxu0 0.0
        %6496 = vmatprep.subr.mxu0 0.0
        %6497 = vmatpush1.msra.mxu0 0.0
        %6498 = vmatprep.subr.mxu0 0.0
        %6499 = vmatpush1.msra.mxu0 0.0
        %6500 = vmatprep.subr.mxu0 0.0
        %6501 = vmatpush1.msra.mxu0 0.0
        %6502 = vmatprep.subr.mxu0 0.0
        %6503 = vmatpush1.msra.mxu0 0.0
        %6504 = vmatprep.subr.mxu0 0.0
        %6505 = vmatpush1.msra.mxu0 0.0
        %6506 = vmatprep.subr.mxu0 0.0
        %6507 = vmatpush1.msra.mxu0 0.0
        %6508 = vmatprep.subr.mxu0 0.0
        %6509 = vmatpush1.msra.mxu0 0.0
        %6510 = vmatprep.subr.mxu0 0.0
        %6511 = vmatpush1.msra.mxu0 0.0
        %6512 = vmatprep.subr.mxu0 0.0
        %6513 = vmatpush1.msra.mxu0 0.0
        %6514 = vmatprep.subr.mxu0 0.0
        %6515 = vmatpush1.msra.mxu0 0.0
        %6516 = vmatprep.subr.mxu0 0.0
        %6517 = vmatpush1.msra.mxu0 0.0
        %6518 = vmatprep.subr.mxu0 0.0
        %6519 = vmatpush1.msra.mxu0 0.0
        %6520 = vmatprep.subr.mxu0 0.0
        %6521 = vmatpush1.msra.mxu0 0.0
        %6522 = vmatprep.subr.mxu0 0.0
        %6523 = vmatpush1.msra.mxu0 0.0
        %6524 = vmatprep.subr.mxu0 0.0
        %6525 = vmatpush1.msra.mxu0 0.0
        %6526 = vmatprep.subr.mxu0 0.0
        %6527 = vmatpush1.msra.mxu0 0.0
        %6528 = vmatprep.subr.mxu0 0.0
        %6529 = vmatpush1.msra.mxu0 0.0
        %6530 = vmatprep.subr.mxu0 0.0
        %6531 = vmatpush1.msra.mxu0 0.0
        %6532 = vmatprep.subr.mxu0 0.0
        %6533 = vmatpush1.msra.mxu0 0.0
        %6534 = vmatprep.subr.mxu0 0.0
        %6535 = vmatpush1.msra.mxu0 0.0
        %6536 = vmatprep.subr.mxu0 0.0
        %6537 = vmatpush1.msra.mxu0 0.0
        %6538 = vmatprep.subr.mxu0 0.0
        %6539 = vmatpush1.msra.mxu0 0.0
        %6540 = vmatprep.subr.mxu0 0.0
        %6541 = vmatpush1.msra.mxu0 0.0
        %6542 = vmatprep.subr.mxu0 0.0
        %6543 = vmatpush1.msra.mxu0 0.0
        %6544 = vmatprep.subr.mxu0 0.0
        %6545 = vmatpush1.msra.mxu0 0.0
        %6546 = vmatprep.subr.mxu0 0.0
        %6547 = vmatpush1.msra.mxu0 0.0
        %6548 = vmatprep.mubr.f32.mxu0 0.0
        %v6549 = vand.u32 %v6478, 4294901760
        %v6550 = vsub.f32 %v6478, %v6549
        %v6551 = vand.u32 %v6550, 4294901760
        %v6552 = vsub.f32 %v6550, %v6551
        %v6553 = vand.u32 %v6552, 4294901760
        %6554 = vmatmul.mubr.f32.gmra.mrb[0].mxu0 %v6553
        %v6555 = vpop.f32.mrb[0].mxu0
        %v6556 = vadd.f32 %v6475, %v6555
        %v6557 = vpop.f32.mrb[0].mxu0
        %6558 = vdwg.mxu0
        %6559 = vmatprep.subr.mxu0 0.0
        %v6560 = vand.u32 %v6466, 4294901760
        %v6561 = vsub.f32 %v6466, %v6560
        %v6562 = vand.u32 %v6561, 4294901760
        %v6563 = vsub.f32 %v6561, %v6562
        %v6564 = vand.u32 %v6563, 4294901760
        %6565 = vmatpush1.msra.mxu0 %v6564
        %6566 = vmatprep.subr.mxu0 0.0
        %v6567 = vand.u32 %v6467, 4294901760
        %v6568 = vsub.f32 %v6467, %v6567
        %v6569 = vand.u32 %v6568, 4294901760
        %v6570 = vsub.f32 %v6568, %v6569
        %v6571 = vand.u32 %v6570, 4294901760
        %6572 = vmatpush1.msra.mxu0 %v6571
        %6573 = vmatprep.subr.mxu0 0.0
        %v6574 = vand.u32 %v6468, 4294901760
        %v6575 = vsub.f32 %v6468, %v6574
        %v6576 = vand.u32 %v6575, 4294901760
        %v6577 = vsub.f32 %v6575, %v6576
        %v6578 = vand.u32 %v6577, 4294901760
        %6579 = vmatpush1.msra.mxu0 %v6578
        %6580 = vmatprep.subr.mxu0 0.0
        %v6581 = vand.u32 %v6469, 4294901760
        %v6582 = vsub.f32 %v6469, %v6581
        %v6583 = vand.u32 %v6582, 4294901760
        %v6584 = vsub.f32 %v6582, %v6583
        %v6585 = vand.u32 %v6584, 4294901760
        %6586 = vmatpush1.msra.mxu0 %v6585
        %6587 = vmatprep.subr.mxu0 0.0
        %6588 = vmatpush1.msra.mxu0 0.0
        %6589 = vmatprep.subr.mxu0 0.0
        %6590 = vmatpush1.msra.mxu0 0.0
        %6591 = vmatprep.subr.mxu0 0.0
        %6592 = vmatpush1.msra.mxu0 0.0
        %6593 = vmatprep.subr.mxu0 0.0
        %6594 = vmatpush1.msra.mxu0 0.0
        %6595 = vmatprep.subr.mxu0 0.0
        %6596 = vmatpush1.msra.mxu0 0.0
        %6597 = vmatprep.subr.mxu0 0.0
        %6598 = vmatpush1.msra.mxu0 0.0
        %6599 = vmatprep.subr.mxu0 0.0
        %6600 = vmatpush1.msra.mxu0 0.0
        %6601 = vmatprep.subr.mxu0 0.0
        %6602 = vmatpush1.msra.mxu0 0.0
        %6603 = vmatprep.subr.mxu0 0.0
        %6604 = vmatpush1.msra.mxu0 0.0
        %6605 = vmatprep.subr.mxu0 0.0
        %6606 = vmatpush1.msra.mxu0 0.0
        %6607 = vmatprep.subr.mxu0 0.0
        %6608 = vmatpush1.msra.mxu0 0.0
        %6609 = vmatprep.subr.mxu0 0.0
        %6610 = vmatpush1.msra.mxu0 0.0
        %6611 = vmatprep.subr.mxu0 0.0
        %6612 = vmatpush1.msra.mxu0 0.0
        %6613 = vmatprep.subr.mxu0 0.0
        %6614 = vmatpush1.msra.mxu0 0.0
        %6615 = vmatprep.subr.mxu0 0.0
        %6616 = vmatpush1.msra.mxu0 0.0
        %6617 = vmatprep.subr.mxu0 0.0
        %6618 = vmatpush1.msra.mxu0 0.0
        %6619 = vmatprep.subr.mxu0 0.0
        %6620 = vmatpush1.msra.mxu0 0.0
        %6621 = vmatprep.subr.mxu0 0.0
        %6622 = vmatpush1.msra.mxu0 0.0
        %6623 = vmatprep.subr.mxu0 0.0
        %6624 = vmatpush1.msra.mxu0 0.0
        %6625 = vmatprep.subr.mxu0 0.0
        %6626 = vmatpush1.msra.mxu0 0.0
        %6627 = vmatprep.subr.mxu0 0.0
        %6628 = vmatpush1.msra.mxu0 0.0
        %6629 = vmatprep.subr.mxu0 0.0
        %6630 = vmatpush1.msra.mxu0 0.0
        %6631 = vmatprep.subr.mxu0 0.0
        %6632 = vmatpush1.msra.mxu0 0.0
        %6633 = vmatprep.subr.mxu0 0.0
        %6634 = vmatpush1.msra.mxu0 0.0
        %6635 = vmatprep.subr.mxu0 0.0
        %6636 = vmatpush1.msra.mxu0 0.0
        %6637 = vmatprep.subr.mxu0 0.0
        %6638 = vmatpush1.msra.mxu0 0.0
        %6639 = vmatprep.subr.mxu0 0.0
        %6640 = vmatpush1.msra.mxu0 0.0
        %6641 = vmatprep.subr.mxu0 0.0
        %6642 = vmatpush1.msra.mxu0 0.0
        %6643 = vmatprep.mubr.f32.mxu0 0.0
        %v6644 = vand.u32 %v6478, 4294901760
        %6645 = vmatmul.mubr.f32.gmra.mrb[0].mxu0 %v6644
        %v6646 = vpop.f32.mrb[0].mxu0
        %v6647 = vadd.f32 %v6556, %v6646
        %v6648 = vpop.f32.mrb[0].mxu0
        %6649 = vdwg.mxu0
        %6650 = vmatprep.subr.mxu0 0.0
        %v6651 = vand.u32 %v6466, 4294901760
        %v6652 = vsub.f32 %v6466, %v6651
        %6653 = vmatpush1.msra.mxu0 %v6652
        %6654 = vmatprep.subr.mxu0 0.0
        %v6655 = vand.u32 %v6467, 4294901760
        %v6656 = vsub.f32 %v6467, %v6655
        %6657 = vmatpush1.msra.mxu0 %v6656
        %6658 = vmatprep.subr.mxu0 0.0
        %v6659 = vand.u32 %v6468, 4294901760
        %v6660 = vsub.f32 %v6468, %v6659
        %6661 = vmatpush1.msra.mxu0 %v6660
        %6662 = vmatprep.subr.mxu0 0.0
        %v6663 = vand.u32 %v6469, 4294901760
        %v6664 = vsub.f32 %v6469, %v6663
        %6665 = vmatpush1.msra.mxu0 %v6664
        %6666 = vmatprep.subr.mxu0 0.0
        %6667 = vmatpush1.msra.mxu0 0.0
        %6668 = vmatprep.subr.mxu0 0.0
        %6669 = vmatpush1.msra.mxu0 0.0
        %6670 = vmatprep.subr.mxu0 0.0
        %6671 = vmatpush1.msra.mxu0 0.0
        %6672 = vmatprep.subr.mxu0 0.0
        %6673 = vmatpush1.msra.mxu0 0.0
        %6674 = vmatprep.subr.mxu0 0.0
        %6675 = vmatpush1.msra.mxu0 0.0
        %6676 = vmatprep.subr.mxu0 0.0
        %6677 = vmatpush1.msra.mxu0 0.0
        %6678 = vmatprep.subr.mxu0 0.0
        %6679 = vmatpush1.msra.mxu0 0.0
        %6680 = vmatprep.subr.mxu0 0.0
        %6681 = vmatpush1.msra.mxu0 0.0
        %6682 = vmatprep.subr.mxu0 0.0
        %6683 = vmatpush1.msra.mxu0 0.0
        %6684 = vmatprep.subr.mxu0 0.0
        %6685 = vmatpush1.msra.mxu0 0.0
        %6686 = vmatprep.subr.mxu0 0.0
        %6687 = vmatpush1.msra.mxu0 0.0
        %6688 = vmatprep.subr.mxu0 0.0
        %6689 = vmatpush1.msra.mxu0 0.0
        %6690 = vmatprep.subr.mxu0 0.0
        %6691 = vmatpush1.msra.mxu0 0.0
        %6692 = vmatprep.subr.mxu0 0.0
        %6693 = vmatpush1.msra.mxu0 0.0
        %6694 = vmatprep.subr.mxu0 0.0
        %6695 = vmatpush1.msra.mxu0 0.0
        %6696 = vmatprep.subr.mxu0 0.0
        %6697 = vmatpush1.msra.mxu0 0.0
        %6698 = vmatprep.subr.mxu0 0.0
        %6699 = vmatpush1.msra.mxu0 0.0
        %6700 = vmatprep.subr.mxu0 0.0
        %6701 = vmatpush1.msra.mxu0 0.0
        %6702 = vmatprep.subr.mxu0 0.0
        %6703 = vmatpush1.msra.mxu0 0.0
        %6704 = vmatprep.subr.mxu0 0.0
        %6705 = vmatpush1.msra.mxu0 0.0
        %6706 = vmatprep.subr.mxu0 0.0
        %6707 = vmatpush1.msra.mxu0 0.0
        %6708 = vmatprep.subr.mxu0 0.0
        %6709 = vmatpush1.msra.mxu0 0.0
        %6710 = vmatprep.subr.mxu0 0.0
        %6711 = vmatpush1.msra.mxu0 0.0
        %6712 = vmatprep.subr.mxu0 0.0
        %6713 = vmatpush1.msra.mxu0 0.0
        %6714 = vmatprep.subr.mxu0 0.0
        %6715 = vmatpush1.msra.mxu0 0.0
        %6716 = vmatprep.subr.mxu0 0.0
        %6717 = vmatpush1.msra.mxu0 0.0
        %6718 = vmatprep.subr.mxu0 0.0
        %6719 = vmatpush1.msra.mxu0 0.0
        %6720 = vmatprep.subr.mxu0 0.0
        %6721 = vmatpush1.msra.mxu0 0.0
        %6722 = vmatprep.mubr.f32.mxu0 0.0
        %v6723 = vand.u32 %v6478, 4294901760
        %v6724 = vsub.f32 %v6478, %v6723
        %6725 = vmatmul.mubr.f32.gmra.mrb[0].mxu0 %v6724
        %v6726 = vpop.f32.mrb[0].mxu0
        %v6727 = vadd.f32 %v6647, %v6726
        %v6728 = vpop.f32.mrb[0].mxu0
        %6729 = vdwg.mxu0
        %6730 = vmatprep.subr.mxu0 0.0
        %v6731 = vand.u32 %v6466, 4294901760
        %6732 = vmatpush1.msra.mxu0 %v6731
        %6733 = vmatprep.subr.mxu0 0.0
        %v6734 = vand.u32 %v6467, 4294901760
        %6735 = vmatpush1.msra.mxu0 %v6734
        %6736 = vmatprep.subr.mxu0 0.0
        %v6737 = vand.u32 %v6468, 4294901760
        %6738 = vmatpush1.msra.mxu0 %v6737
        %6739 = vmatprep.subr.mxu0 0.0
        %v6740 = vand.u32 %v6469, 4294901760
        %6741 = vmatpush1.msra.mxu0 %v6740
        %6742 = vmatprep.subr.mxu0 0.0
        %6743 = vmatpush1.msra.mxu0 0.0
        %6744 = vmatprep.subr.mxu0 0.0
        %6745 = vmatpush1.msra.mxu0 0.0
        %6746 = vmatprep.subr.mxu0 0.0
        %6747 = vmatpush1.msra.mxu0 0.0
        %6748 = vmatprep.subr.mxu0 0.0
        %6749 = vmatpush1.msra.mxu0 0.0
        %6750 = vmatprep.subr.mxu0 0.0
        %6751 = vmatpush1.msra.mxu0 0.0
        %6752 = vmatprep.subr.mxu0 0.0
        %6753 = vmatpush1.msra.mxu0 0.0
        %6754 = vmatprep.subr.mxu0 0.0
        %6755 = vmatpush1.msra.mxu0 0.0
        %6756 = vmatprep.subr.mxu0 0.0
        %6757 = vmatpush1.msra.mxu0 0.0
        %6758 = vmatprep.subr.mxu0 0.0
        %6759 = vmatpush1.msra.mxu0 0.0
        %6760 = vmatprep.subr.mxu0 0.0
        %6761 = vmatpush1.msra.mxu0 0.0
        %6762 = vmatprep.subr.mxu0 0.0
        %6763 = vmatpush1.msra.mxu0 0.0
        %6764 = vmatprep.subr.mxu0 0.0
        %6765 = vmatpush1.msra.mxu0 0.0
        %6766 = vmatprep.subr.mxu0 0.0
        %6767 = vmatpush1.msra.mxu0 0.0
        %6768 = vmatprep.subr.mxu0 0.0
        %6769 = vmatpush1.msra.mxu0 0.0
        %6770 = vmatprep.subr.mxu0 0.0
        %6771 = vmatpush1.msra.mxu0 0.0
        %6772 = vmatprep.subr.mxu0 0.0
        %6773 = vmatpush1.msra.mxu0 0.0
        %6774 = vmatprep.subr.mxu0 0.0
        %6775 = vmatpush1.msra.mxu0 0.0
        %6776 = vmatprep.subr.mxu0 0.0
        %6777 = vmatpush1.msra.mxu0 0.0
        %6778 = vmatprep.subr.mxu0 0.0
        %6779 = vmatpush1.msra.mxu0 0.0
        %6780 = vmatprep.subr.mxu0 0.0
        %6781 = vmatpush1.msra.mxu0 0.0
        %6782 = vmatprep.subr.mxu0 0.0
        %6783 = vmatpush1.msra.mxu0 0.0
        %6784 = vmatprep.subr.mxu0 0.0
        %6785 = vmatpush1.msra.mxu0 0.0
        %6786 = vmatprep.subr.mxu0 0.0
        %6787 = vmatpush1.msra.mxu0 0.0
        %6788 = vmatprep.subr.mxu0 0.0
        %6789 = vmatpush1.msra.mxu0 0.0
        %6790 = vmatprep.subr.mxu0 0.0
        %6791 = vmatpush1.msra.mxu0 0.0
        %6792 = vmatprep.subr.mxu0 0.0
        %6793 = vmatpush1.msra.mxu0 0.0
        %6794 = vmatprep.subr.mxu0 0.0
        %6795 = vmatpush1.msra.mxu0 0.0
        %6796 = vmatprep.subr.mxu0 0.0
        %6797 = vmatpush1.msra.mxu0 0.0
        %6798 = vmatprep.mubr.f32.mxu0 0.0
        %v6799 = vand.u32 %v6478, 4294901760
        %v6800 = vsub.f32 %v6478, %v6799
        %v6801 = vand.u32 %v6800, 4294901760
        %6802 = vmatmul.mubr.f32.gmra.mrb[0].mxu0 %v6801
        %v6803 = vpop.f32.mrb[0].mxu0
        %v6804 = vadd.f32 %v6727, %v6803
        %v6805 = vpop.f32.mrb[0].mxu0
        %6806 = vdwg.mxu0
        %6807 = vmatprep.subr.mxu0 0.0
        %v6808 = vand.u32 %v6466, 4294901760
        %v6809 = vsub.f32 %v6466, %v6808
        %v6810 = vand.u32 %v6809, 4294901760
        %6811 = vmatpush1.msra.mxu0 %v6810
        %6812 = vmatprep.subr.mxu0 0.0
        %v6813 = vand.u32 %v6467, 4294901760
        %v6814 = vsub.f32 %v6467, %v6813
        %v6815 = vand.u32 %v6814, 4294901760
        %6816 = vmatpush1.msra.mxu0 %v6815
        %6817 = vmatprep.subr.mxu0 0.0
        %v6818 = vand.u32 %v6468, 4294901760
        %v6819 = vsub.f32 %v6468, %v6818
        %v6820 = vand.u32 %v6819, 4294901760
        %6821 = vmatpush1.msra.mxu0 %v6820
        %6822 = vmatprep.subr.mxu0 0.0
        %v6823 = vand.u32 %v6469, 4294901760
        %v6824 = vsub.f32 %v6469, %v6823
        %v6825 = vand.u32 %v6824, 4294901760
        %6826 = vmatpush1.msra.mxu0 %v6825
        %6827 = vmatprep.subr.mxu0 0.0
        %6828 = vmatpush1.msra.mxu0 0.0
        %6829 = vmatprep.subr.mxu0 0.0
        %6830 = vmatpush1.msra.mxu0 0.0
        %6831 = vmatprep.subr.mxu0 0.0
        %6832 = vmatpush1.msra.mxu0 0.0
        %6833 = vmatprep.subr.mxu0 0.0
        %6834 = vmatpush1.msra.mxu0 0.0
        %6835 = vmatprep.subr.mxu0 0.0
        %6836 = vmatpush1.msra.mxu0 0.0
        %6837 = vmatprep.subr.mxu0 0.0
        %6838 = vmatpush1.msra.mxu0 0.0
        %6839 = vmatprep.subr.mxu0 0.0
        %6840 = vmatpush1.msra.mxu0 0.0
        %6841 = vmatprep.subr.mxu0 0.0
        %6842 = vmatpush1.msra.mxu0 0.0
        %6843 = vmatprep.subr.mxu0 0.0
        %6844 = vmatpush1.msra.mxu0 0.0
        %6845 = vmatprep.subr.mxu0 0.0
        %6846 = vmatpush1.msra.mxu0 0.0
        %6847 = vmatprep.subr.mxu0 0.0
        %6848 = vmatpush1.msra.mxu0 0.0
        %6849 = vmatprep.subr.mxu0 0.0
        %6850 = vmatpush1.msra.mxu0 0.0
        %6851 = vmatprep.subr.mxu0 0.0
        %6852 = vmatpush1.msra.mxu0 0.0
        %6853 = vmatprep.subr.mxu0 0.0
        %6854 = vmatpush1.msra.mxu0 0.0
        %6855 = vmatprep.subr.mxu0 0.0
        %6856 = vmatpush1.msra.mxu0 0.0
        %6857 = vmatprep.subr.mxu0 0.0
        %6858 = vmatpush1.msra.mxu0 0.0
        %6859 = vmatprep.subr.mxu0 0.0
        %6860 = vmatpush1.msra.mxu0 0.0
        %6861 = vmatprep.subr.mxu0 0.0
        %6862 = vmatpush1.msra.mxu0 0.0
        %6863 = vmatprep.subr.mxu0 0.0
        %6864 = vmatpush1.msra.mxu0 0.0
        %6865 = vmatprep.subr.mxu0 0.0
        %6866 = vmatpush1.msra.mxu0 0.0
        %6867 = vmatprep.subr.mxu0 0.0
        %6868 = vmatpush1.msra.mxu0 0.0
        %6869 = vmatprep.subr.mxu0 0.0
        %6870 = vmatpush1.msra.mxu0 0.0
        %6871 = vmatprep.subr.mxu0 0.0
        %6872 = vmatpush1.msra.mxu0 0.0
        %6873 = vmatprep.subr.mxu0 0.0
        %6874 = vmatpush1.msra.mxu0 0.0
        %6875 = vmatprep.subr.mxu0 0.0
        %6876 = vmatpush1.msra.mxu0 0.0
        %6877 = vmatprep.subr.mxu0 0.0
        %6878 = vmatpush1.msra.mxu0 0.0
        %6879 = vmatprep.subr.mxu0 0.0
        %6880 = vmatpush1.msra.mxu0 0.0
        %6881 = vmatprep.subr.mxu0 0.0
        %6882 = vmatpush1.msra.mxu0 0.0
        %6883 = vmatprep.mubr.f32.mxu0 0.0
        %v6884 = vand.u32 %v6478, 4294901760
        %6885 = vmatmul.mubr.f32.gmra.mrb[0].mxu0 %v6884
        %v6886 = vpop.f32.mrb[0].mxu0
        %v6887 = vadd.f32 %v6804, %v6886
        %v6888 = vpop.f32.mrb[0].mxu0
        %6889 = vdwg.mxu0
        %6890 = vmatprep.subr.mxu0 0.0
        %v6891 = vand.u32 %v6466, 4294901760
        %6892 = vmatpush1.msra.mxu0 %v6891
        %6893 = vmatprep.subr.mxu0 0.0
        %v6894 = vand.u32 %v6467, 4294901760
        %6895 = vmatpush1.msra.mxu0 %v6894
        %6896 = vmatprep.subr.mxu0 0.0
        %v6897 = vand.u32 %v6468, 4294901760
        %6898 = vmatpush1.msra.mxu0 %v6897
        %6899 = vmatprep.subr.mxu0 0.0
        %v6900 = vand.u32 %v6469, 4294901760
        %6901 = vmatpush1.msra.mxu0 %v6900
        %6902 = vmatprep.subr.mxu0 0.0
        %6903 = vmatpush1.msra.mxu0 0.0
        %6904 = vmatprep.subr.mxu0 0.0
        %6905 = vmatpush1.msra.mxu0 0.0
        %6906 = vmatprep.subr.mxu0 0.0
        %6907 = vmatpush1.msra.mxu0 0.0
        %6908 = vmatprep.subr.mxu0 0.0
        %6909 = vmatpush1.msra.mxu0 0.0
        %6910 = vmatprep.subr.mxu0 0.0
        %6911 = vmatpush1.msra.mxu0 0.0
        %6912 = vmatprep.subr.mxu0 0.0
        %6913 = vmatpush1.msra.mxu0 0.0
        %6914 = vmatprep.subr.mxu0 0.0
        %6915 = vmatpush1.msra.mxu0 0.0
        %6916 = vmatprep.subr.mxu0 0.0
        %6917 = vmatpush1.msra.mxu0 0.0
        %6918 = vmatprep.subr.mxu0 0.0
        %6919 = vmatpush1.msra.mxu0 0.0
        %6920 = vmatprep.subr.mxu0 0.0
        %6921 = vmatpush1.msra.mxu0 0.0
        %6922 = vmatprep.subr.mxu0 0.0
        %6923 = vmatpush1.msra.mxu0 0.0
        %6924 = vmatprep.subr.mxu0 0.0
        %6925 = vmatpush1.msra.mxu0 0.0
        %6926 = vmatprep.subr.mxu0 0.0
        %6927 = vmatpush1.msra.mxu0 0.0
        %6928 = vmatprep.subr.mxu0 0.0
        %6929 = vmatpush1.msra.mxu0 0.0
        %6930 = vmatprep.subr.mxu0 0.0
        %6931 = vmatpush1.msra.mxu0 0.0
        %6932 = vmatprep.subr.mxu0 0.0
        %6933 = vmatpush1.msra.mxu0 0.0
        %6934 = vmatprep.subr.mxu0 0.0
        %6935 = vmatpush1.msra.mxu0 0.0
        %6936 = vmatprep.subr.mxu0 0.0
        %6937 = vmatpush1.msra.mxu0 0.0
        %6938 = vmatprep.subr.mxu0 0.0
        %6939 = vmatpush1.msra.mxu0 0.0
        %6940 = vmatprep.subr.mxu0 0.0
        %6941 = vmatpush1.msra.mxu0 0.0
        %6942 = vmatprep.subr.mxu0 0.0
        %6943 = vmatpush1.msra.mxu0 0.0
        %6944 = vmatprep.subr.mxu0 0.0
        %6945 = vmatpush1.msra.mxu0 0.0
        %6946 = vmatprep.subr.mxu0 0.0
        %6947 = vmatpush1.msra.mxu0 0.0
        %6948 = vmatprep.subr.mxu0 0.0
        %6949 = vmatpush1.msra.mxu0 0.0
        %6950 = vmatprep.subr.mxu0 0.0
        %6951 = vmatpush1.msra.mxu0 0.0
        %6952 = vmatprep.subr.mxu0 0.0
        %6953 = vmatpush1.msra.mxu0 0.0
        %6954 = vmatprep.subr.mxu0 0.0
        %6955 = vmatpush1.msra.mxu0 0.0
        %6956 = vmatprep.subr.mxu0 0.0
        %6957 = vmatpush1.msra.mxu0 0.0
        %6958 = vmatprep.mubr.f32.mxu0 0.0
        %v6959 = vand.u32 %v6478, 4294901760
        %6960 = vmatmul.mubr.f32.gmra.mrb[0].mxu0 %v6959
        %v6961 = vpop.f32.mrb[0].mxu0
        %v6962 = vadd.f32 %v6887, %v6961
        %v6963 = vpop.f32.mrb[0].mxu0
        %6964 = vdwg.mxu0
        %v6965 = vmax.f32 %v6962, 0.0
        %v6966 = vld [vmem:[%s7] sm:$0xff]
        %v6967 = vld [vmem:[%s7 + $0x8] sm:$0xff]
        %v6968 = vld [vmem:[%s7 + $0x10] sm:$0xff]
        %v6969 = vld [vmem:[%s7 + $0x18] sm:$0xff]
        %v6970 = vld [vmem:[%s7 + $0x20] sm:$0xff]
        %v6971 = vld [vmem:[%s7 + $0x28] sm:$0xff]
        %v6972 = vld [vmem:[%s7 + $0x30] sm:$0xff]
        %v6973 = vld [vmem:[%s7 + $0x38] sm:$0xff]
        %v6974 = vld [vmem:[%s8] sm:$0x1]
        %v6976 = vlaneseq
        %v6977 = vshrl.u32 %v6976, 7
        %v6978 = vsub.s32 0, %v6977
        %v6979 = vrot.slane %v6974, %v6978
        %vm6981 = vcmask 523264
        %v6983 = vsel %vm6981, %v6965, 0
        %6985 = vmatprep.subr.mxu0 0.0
        %v6986 = vand.u32 %v6966, 4294901760
        %6987 = vmatpush1.msra.mxu0 %v6986
        %6988 = vmatprep.subr.mxu0 0.0
        %v6989 = vand.u32 %v6967, 4294901760
        %6990 = vmatpush1.msra.mxu0 %v6989
        %6991 = vmatprep.subr.mxu0 0.0
        %v6992 = vand.u32 %v6968, 4294901760
        %6993 = vmatpush1.msra.mxu0 %v6992
        %6994 = vmatprep.subr.mxu0 0.0
        %v6995 = vand.u32 %v6969, 4294901760
        %6996 = vmatpush1.msra.mxu0 %v6995
        %6997 = vmatprep.subr.mxu0 0.0
        %v6998 = vand.u32 %v6970, 4294901760
        %6999 = vmatpush1.msra.mxu0 %v6998
        %7000 = vmatprep.subr.mxu0 0.0
        %v7001 = vand.u32 %v6971, 4294901760
        %7002 = vmatpush1.msra.mxu0 %v7001
        %7003 = vmatprep.subr.mxu0 0.0
        %v7004 = vand.u32 %v6972, 4294901760
        %7005 = vmatpush1.msra.mxu0 %v7004
        %7006 = vmatprep.subr.mxu0 0.0
        %v7007 = vand.u32 %v6973, 4294901760
        %7008 = vmatpush1.msra.mxu0 %v7007
        %7009 = vmatprep.subr.mxu0 0.0
        %7010 = vmatpush1.msra.mxu0 0.0
        %7011 = vmatprep.subr.mxu0 0.0
        %7012 = vmatpush1.msra.mxu0 0.0
        %7013 = vmatprep.subr.mxu0 0.0
        %7014 = vmatpush1.msra.mxu0 0.0
        %7015 = vmatprep.subr.mxu0 0.0
        %7016 = vmatpush1.msra.mxu0 0.0
        %7017 = vmatprep.subr.mxu0 0.0
        %7018 = vmatpush1.msra.mxu0 0.0
        %7019 = vmatprep.subr.mxu0 0.0
        %7020 = vmatpush1.msra.mxu0 0.0
        %7021 = vmatprep.subr.mxu0 0.0
        %7022 = vmatpush1.msra.mxu0 0.0
        %7023 = vmatprep.subr.mxu0 0.0
        %7024 = vmatpush1.msra.mxu0 0.0
        %7025 = vmatprep.subr.mxu0 0.0
        %7026 = vmatpush1.msra.mxu0 0.0
        %7027 = vmatprep.subr.mxu0 0.0
        %7028 = vmatpush1.msra.mxu0 0.0
        %7029 = vmatprep.subr.mxu0 0.0
        %7030 = vmatpush1.msra.mxu0 0.0
        %7031 = vmatprep.subr.mxu0 0.0
        %7032 = vmatpush1.msra.mxu0 0.0
        %7033 = vmatprep.subr.mxu0 0.0
        %7034 = vmatpush1.msra.mxu0 0.0
        %7035 = vmatprep.subr.mxu0 0.0
        %7036 = vmatpush1.msra.mxu0 0.0
        %7037 = vmatprep.subr.mxu0 0.0
        %7038 = vmatpush1.msra.mxu0 0.0
        %7039 = vmatprep.subr.mxu0 0.0
        %7040 = vmatpush1.msra.mxu0 0.0
        %7041 = vmatprep.subr.mxu0 0.0
        %7042 = vmatpush1.msra.mxu0 0.0
        %7043 = vmatprep.subr.mxu0 0.0
        %7044 = vmatpush1.msra.mxu0 0.0
        %7045 = vmatprep.subr.mxu0 0.0
        %7046 = vmatpush1.msra.mxu0 0.0
        %7047 = vmatprep.subr.mxu0 0.0
        %7048 = vmatpush1.msra.mxu0 0.0
        %7049 = vmatprep.subr.mxu0 0.0
        %7050 = vmatpush1.msra.mxu0 0.0
        %7051 = vmatprep.subr.mxu0 0.0
        %7052 = vmatpush1.msra.mxu0 0.0
        %7053 = vmatprep.subr.mxu0 0.0
        %7054 = vmatpush1.msra.mxu0 0.0
        %7055 = vmatprep.subr.mxu0 0.0
        %7056 = vmatpush1.msra.mxu0 0.0
        %7057 = vmatprep.mubr.f32.mxu0 0.0
        %v7058 = vand.u32 %v6983, 4294901760
        %v7059 = vsub.f32 %v6983, %v7058
        %v7060 = vand.u32 %v7059, 4294901760
        %v7061 = vsub.f32 %v7059, %v7060
        %v7062 = vand.u32 %v7061, 4294901760
        %7063 = vmatmul.mubr.f32.gmra.mrb[0].mxu0 %v7062
        %v7064 = vpop.f32.mrb[0].mxu0
        %v7065 = vadd.f32 %v6979, %v7064
        %v7066 = vpop.f32.mrb[0].mxu0
        %7067 = vdwg.mxu0
        %7068 = vmatprep.subr.mxu0 0.0
        %v7069 = vand.u32 %v6966, 4294901760
        %v7070 = vsub.f32 %v6966, %v7069
        %v7071 = vand.u32 %v7070, 4294901760
        %v7072 = vsub.f32 %v7070, %v7071
        %v7073 = vand.u32 %v7072, 4294901760
        %7074 = vmatpush1.msra.mxu0 %v7073
        %7075 = vmatprep.subr.mxu0 0.0
        %v7076 = vand.u32 %v6967, 4294901760
        %v7077 = vsub.f32 %v6967, %v7076
        %v7078 = vand.u32 %v7077, 4294901760
        %v7079 = vsub.f32 %v7077, %v7078
        %v7080 = vand.u32 %v7079, 4294901760
        %7081 = vmatpush1.msra.mxu0 %v7080
        %7082 = vmatprep.subr.mxu0 0.0
        %v7083 = vand.u32 %v6968, 4294901760
        %v7084 = vsub.f32 %v6968, %v7083
        %v7085 = vand.u32 %v7084, 4294901760
        %v7086 = vsub.f32 %v7084, %v7085
        %v7087 = vand.u32 %v7086, 4294901760
        %7088 = vmatpush1.msra.mxu0 %v7087
        %7089 = vmatprep.subr.mxu0 0.0
        %v7090 = vand.u32 %v6969, 4294901760
        %v7091 = vsub.f32 %v6969, %v7090
        %v7092 = vand.u32 %v7091, 4294901760
        %v7093 = vsub.f32 %v7091, %v7092
        %v7094 = vand.u32 %v7093, 4294901760
        %7095 = vmatpush1.msra.mxu0 %v7094
        %7096 = vmatprep.subr.mxu0 0.0
        %v7097 = vand.u32 %v6970, 4294901760
        %v7098 = vsub.f32 %v6970, %v7097
        %v7099 = vand.u32 %v7098, 4294901760
        %v7100 = vsub.f32 %v7098, %v7099
        %v7101 = vand.u32 %v7100, 4294901760
        %7102 = vmatpush1.msra.mxu0 %v7101
        %7103 = vmatprep.subr.mxu0 0.0
        %v7104 = vand.u32 %v6971, 4294901760
        %v7105 = vsub.f32 %v6971, %v7104
        %v7106 = vand.u32 %v7105, 4294901760
        %v7107 = vsub.f32 %v7105, %v7106
        %v7108 = vand.u32 %v7107, 4294901760
        %7109 = vmatpush1.msra.mxu0 %v7108
        %7110 = vmatprep.subr.mxu0 0.0
        %v7111 = vand.u32 %v6972, 4294901760
        %v7112 = vsub.f32 %v6972, %v7111
        %v7113 = vand.u32 %v7112, 4294901760
        %v7114 = vsub.f32 %v7112, %v7113
        %v7115 = vand.u32 %v7114, 4294901760
        %7116 = vmatpush1.msra.mxu0 %v7115
        %7117 = vmatprep.subr.mxu0 0.0
        %v7118 = vand.u32 %v6973, 4294901760
        %v7119 = vsub.f32 %v6973, %v7118
        %v7120 = vand.u32 %v7119, 4294901760
        %v7121 = vsub.f32 %v7119, %v7120
        %v7122 = vand.u32 %v7121, 4294901760
        %7123 = vmatpush1.msra.mxu0 %v7122
        %7124 = vmatprep.subr.mxu0 0.0
        %7125 = vmatpush1.msra.mxu0 0.0
        %7126 = vmatprep.subr.mxu0 0.0
        %7127 = vmatpush1.msra.mxu0 0.0
        %7128 = vmatprep.subr.mxu0 0.0
        %7129 = vmatpush1.msra.mxu0 0.0
        %7130 = vmatprep.subr.mxu0 0.0
        %7131 = vmatpush1.msra.mxu0 0.0
        %7132 = vmatprep.subr.mxu0 0.0
        %7133 = vmatpush1.msra.mxu0 0.0
        %7134 = vmatprep.subr.mxu0 0.0
        %7135 = vmatpush1.msra.mxu0 0.0
        %7136 = vmatprep.subr.mxu0 0.0
        %7137 = vmatpush1.msra.mxu0 0.0
        %7138 = vmatprep.subr.mxu0 0.0
        %7139 = vmatpush1.msra.mxu0 0.0
        %7140 = vmatprep.subr.mxu0 0.0
        %7141 = vmatpush1.msra.mxu0 0.0
        %7142 = vmatprep.subr.mxu0 0.0
        %7143 = vmatpush1.msra.mxu0 0.0
        %7144 = vmatprep.subr.mxu0 0.0
        %7145 = vmatpush1.msra.mxu0 0.0
        %7146 = vmatprep.subr.mxu0 0.0
        %7147 = vmatpush1.msra.mxu0 0.0
        %7148 = vmatprep.subr.mxu0 0.0
        %7149 = vmatpush1.msra.mxu0 0.0
        %7150 = vmatprep.subr.mxu0 0.0
        %7151 = vmatpush1.msra.mxu0 0.0
        %7152 = vmatprep.subr.mxu0 0.0
        %7153 = vmatpush1.msra.mxu0 0.0
        %7154 = vmatprep.subr.mxu0 0.0
        %7155 = vmatpush1.msra.mxu0 0.0
        %7156 = vmatprep.subr.mxu0 0.0
        %7157 = vmatpush1.msra.mxu0 0.0
        %7158 = vmatprep.subr.mxu0 0.0
        %7159 = vmatpush1.msra.mxu0 0.0
        %7160 = vmatprep.subr.mxu0 0.0
        %7161 = vmatpush1.msra.mxu0 0.0
        %7162 = vmatprep.subr.mxu0 0.0
        %7163 = vmatpush1.msra.mxu0 0.0
        %7164 = vmatprep.subr.mxu0 0.0
        %7165 = vmatpush1.msra.mxu0 0.0
        %7166 = vmatprep.subr.mxu0 0.0
        %7167 = vmatpush1.msra.mxu0 0.0
        %7168 = vmatprep.subr.mxu0 0.0
        %7169 = vmatpush1.msra.mxu0 0.0
        %7170 = vmatprep.subr.mxu0 0.0
        %7171 = vmatpush1.msra.mxu0 0.0
        %7172 = vmatprep.mubr.f32.mxu0 0.0
        %v7173 = vand.u32 %v6983, 4294901760
        %7174 = vmatmul.mubr.f32.gmra.mrb[0].mxu0 %v7173
        %v7175 = vpop.f32.mrb[0].mxu0
        %v7176 = vadd.f32 %v7065, %v7175
        %v7177 = vpop.f32.mrb[0].mxu0
        %7178 = vdwg.mxu0
        %7179 = vmatprep.subr.mxu0 0.0
        %v7180 = vand.u32 %v6966, 4294901760
        %v7181 = vsub.f32 %v6966, %v7180
        %7182 = vmatpush1.msra.mxu0 %v7181
        %7183 = vmatprep.subr.mxu0 0.0
        %v7184 = vand.u32 %v6967, 4294901760
        %v7185 = vsub.f32 %v6967, %v7184
        %7186 = vmatpush1.msra.mxu0 %v7185
        %7187 = vmatprep.subr.mxu0 0.0
        %v7188 = vand.u32 %v6968, 4294901760
        %v7189 = vsub.f32 %v6968, %v7188
        %7190 = vmatpush1.msra.mxu0 %v7189
        %7191 = vmatprep.subr.mxu0 0.0
        %v7192 = vand.u32 %v6969, 4294901760
        %v7193 = vsub.f32 %v6969, %v7192
        %7194 = vmatpush1.msra.mxu0 %v7193
        %7195 = vmatprep.subr.mxu0 0.0
        %v7196 = vand.u32 %v6970, 4294901760
        %v7197 = vsub.f32 %v6970, %v7196
        %7198 = vmatpush1.msra.mxu0 %v7197
        %7199 = vmatprep.subr.mxu0 0.0
        %v7200 = vand.u32 %v6971, 4294901760
        %v7201 = vsub.f32 %v6971, %v7200
        %7202 = vmatpush1.msra.mxu0 %v7201
        %7203 = vmatprep.subr.mxu0 0.0
        %v7204 = vand.u32 %v6972, 4294901760
        %v7205 = vsub.f32 %v6972, %v7204
        %7206 = vmatpush1.msra.mxu0 %v7205
        %7207 = vmatprep.subr.mxu0 0.0
        %v7208 = vand.u32 %v6973, 4294901760
        %v7209 = vsub.f32 %v6973, %v7208
        %7210 = vmatpush1.msra.mxu0 %v7209
        %7211 = vmatprep.subr.mxu0 0.0
        %7212 = vmatpush1.msra.mxu0 0.0
        %7213 = vmatprep.subr.mxu0 0.0
        %7214 = vmatpush1.msra.mxu0 0.0
        %7215 = vmatprep.subr.mxu0 0.0
        %7216 = vmatpush1.msra.mxu0 0.0
        %7217 = vmatprep.subr.mxu0 0.0
        %7218 = vmatpush1.msra.mxu0 0.0
        %7219 = vmatprep.subr.mxu0 0.0
        %7220 = vmatpush1.msra.mxu0 0.0
        %7221 = vmatprep.subr.mxu0 0.0
        %7222 = vmatpush1.msra.mxu0 0.0
        %7223 = vmatprep.subr.mxu0 0.0
        %7224 = vmatpush1.msra.mxu0 0.0
        %7225 = vmatprep.subr.mxu0 0.0
        %7226 = vmatpush1.msra.mxu0 0.0
        %7227 = vmatprep.subr.mxu0 0.0
        %7228 = vmatpush1.msra.mxu0 0.0
        %7229 = vmatprep.subr.mxu0 0.0
        %7230 = vmatpush1.msra.mxu0 0.0
        %7231 = vmatprep.subr.mxu0 0.0
        %7232 = vmatpush1.msra.mxu0 0.0
        %7233 = vmatprep.subr.mxu0 0.0
        %7234 = vmatpush1.msra.mxu0 0.0
        %7235 = vmatprep.subr.mxu0 0.0
        %7236 = vmatpush1.msra.mxu0 0.0
        %7237 = vmatprep.subr.mxu0 0.0
        %7238 = vmatpush1.msra.mxu0 0.0
        %7239 = vmatprep.subr.mxu0 0.0
        %7240 = vmatpush1.msra.mxu0 0.0
        %7241 = vmatprep.subr.mxu0 0.0
        %7242 = vmatpush1.msra.mxu0 0.0
        %7243 = vmatprep.subr.mxu0 0.0
        %7244 = vmatpush1.msra.mxu0 0.0
        %7245 = vmatprep.subr.mxu0 0.0
        %7246 = vmatpush1.msra.mxu0 0.0
        %7247 = vmatprep.subr.mxu0 0.0
        %7248 = vmatpush1.msra.mxu0 0.0
        %7249 = vmatprep.subr.mxu0 0.0
        %7250 = vmatpush1.msra.mxu0 0.0
        %7251 = vmatprep.subr.mxu0 0.0
        %7252 = vmatpush1.msra.mxu0 0.0
        %7253 = vmatprep.subr.mxu0 0.0
        %7254 = vmatpush1.msra.mxu0 0.0
        %7255 = vmatprep.subr.mxu0 0.0
        %7256 = vmatpush1.msra.mxu0 0.0
        %7257 = vmatprep.subr.mxu0 0.0
        %7258 = vmatpush1.msra.mxu0 0.0
        %7259 = vmatprep.mubr.f32.mxu0 0.0
        %v7260 = vand.u32 %v6983, 4294901760
        %v7261 = vsub.f32 %v6983, %v7260
        %7262 = vmatmul.mubr.f32.gmra.mrb[0].mxu0 %v7261
        %v7263 = vpop.f32.mrb[0].mxu0
        %v7264 = vadd.f32 %v7176, %v7263
        %v7265 = vpop.f32.mrb[0].mxu0
        %7266 = vdwg.mxu0
        %7267 = vmatprep.subr.mxu0 0.0
        %v7268 = vand.u32 %v6966, 4294901760
        %7269 = vmatpush1.msra.mxu0 %v7268
        %7270 = vmatprep.subr.mxu0 0.0
        %v7271 = vand.u32 %v6967, 4294901760
        %7272 = vmatpush1.msra.mxu0 %v7271
        %7273 = vmatprep.subr.mxu0 0.0
        %v7274 = vand.u32 %v6968, 4294901760
        %7275 = vmatpush1.msra.mxu0 %v7274
        %7276 = vmatprep.subr.mxu0 0.0
        %v7277 = vand.u32 %v6969, 4294901760
        %7278 = vmatpush1.msra.mxu0 %v7277
        %7279 = vmatprep.subr.mxu0 0.0
        %v7280 = vand.u32 %v6970, 4294901760
        %7281 = vmatpush1.msra.mxu0 %v7280
        %7282 = vmatprep.subr.mxu0 0.0
        %v7283 = vand.u32 %v6971, 4294901760
        %7284 = vmatpush1.msra.mxu0 %v7283
        %7285 = vmatprep.subr.mxu0 0.0
        %v7286 = vand.u32 %v6972, 4294901760
        %7287 = vmatpush1.msra.mxu0 %v7286
        %7288 = vmatprep.subr.mxu0 0.0
        %v7289 = vand.u32 %v6973, 4294901760
        %7290 = vmatpush1.msra.mxu0 %v7289
        %7291 = vmatprep.subr.mxu0 0.0
        %7292 = vmatpush1.msra.mxu0 0.0
        %7293 = vmatprep.subr.mxu0 0.0
        %7294 = vmatpush1.msra.mxu0 0.0
        %7295 = vmatprep.subr.mxu0 0.0
        %7296 = vmatpush1.msra.mxu0 0.0
        %7297 = vmatprep.subr.mxu0 0.0
        %7298 = vmatpush1.msra.mxu0 0.0
        %7299 = vmatprep.subr.mxu0 0.0
        %7300 = vmatpush1.msra.mxu0 0.0
        %7301 = vmatprep.subr.mxu0 0.0
        %7302 = vmatpush1.msra.mxu0 0.0
        %7303 = vmatprep.subr.mxu0 0.0
        %7304 = vmatpush1.msra.mxu0 0.0
        %7305 = vmatprep.subr.mxu0 0.0
        %7306 = vmatpush1.msra.mxu0 0.0
        %7307 = vmatprep.subr.mxu0 0.0
        %7308 = vmatpush1.msra.mxu0 0.0
        %7309 = vmatprep.subr.mxu0 0.0
        %7310 = vmatpush1.msra.mxu0 0.0
        %7311 = vmatprep.subr.mxu0 0.0
        %7312 = vmatpush1.msra.mxu0 0.0
        %7313 = vmatprep.subr.mxu0 0.0
        %7314 = vmatpush1.msra.mxu0 0.0
        %7315 = vmatprep.subr.mxu0 0.0
        %7316 = vmatpush1.msra.mxu0 0.0
        %7317 = vmatprep.subr.mxu0 0.0
        %7318 = vmatpush1.msra.mxu0 0.0
        %7319 = vmatprep.subr.mxu0 0.0
        %7320 = vmatpush1.msra.mxu0 0.0
        %7321 = vmatprep.subr.mxu0 0.0
        %7322 = vmatpush1.msra.mxu0 0.0
        %7323 = vmatprep.subr.mxu0 0.0
        %7324 = vmatpush1.msra.mxu0 0.0
        %7325 = vmatprep.subr.mxu0 0.0
        %7326 = vmatpush1.msra.mxu0 0.0
        %7327 = vmatprep.subr.mxu0 0.0
        %7328 = vmatpush1.msra.mxu0 0.0
        %7329 = vmatprep.subr.mxu0 0.0
        %7330 = vmatpush1.msra.mxu0 0.0
        %7331 = vmatprep.subr.mxu0 0.0
        %7332 = vmatpush1.msra.mxu0 0.0
        %7333 = vmatprep.subr.mxu0 0.0
        %7334 = vmatpush1.msra.mxu0 0.0
        %7335 = vmatprep.subr.mxu0 0.0
        %7336 = vmatpush1.msra.mxu0 0.0
        %7337 = vmatprep.subr.mxu0 0.0
        %7338 = vmatpush1.msra.mxu0 0.0
        %7339 = vmatprep.mubr.f32.mxu0 0.0
        %v7340 = vand.u32 %v6983, 4294901760
        %v7341 = vsub.f32 %v6983, %v7340
        %v7342 = vand.u32 %v7341, 4294901760
        %7343 = vmatmul.mubr.f32.gmra.mrb[0].mxu0 %v7342
        %v7344 = vpop.f32.mrb[0].mxu0
        %v7345 = vadd.f32 %v7264, %v7344
        %v7346 = vpop.f32.mrb[0].mxu0
        %7347 = vdwg.mxu0
        %7348 = vmatprep.subr.mxu0 0.0
        %v7349 = vand.u32 %v6966, 4294901760
        %v7350 = vsub.f32 %v6966, %v7349
        %v7351 = vand.u32 %v7350, 4294901760
        %7352 = vmatpush1.msra.mxu0 %v7351
        %7353 = vmatprep.subr.mxu0 0.0
        %v7354 = vand.u32 %v6967, 4294901760
        %v7355 = vsub.f32 %v6967, %v7354
        %v7356 = vand.u32 %v7355, 4294901760
        %7357 = vmatpush1.msra.mxu0 %v7356
        %7358 = vmatprep.subr.mxu0 0.0
        %v7359 = vand.u32 %v6968, 4294901760
        %v7360 = vsub.f32 %v6968, %v7359
        %v7361 = vand.u32 %v7360, 4294901760
        %7362 = vmatpush1.msra.mxu0 %v7361
        %7363 = vmatprep.subr.mxu0 0.0
        %v7364 = vand.u32 %v6969, 4294901760
        %v7365 = vsub.f32 %v6969, %v7364
        %v7366 = vand.u32 %v7365, 4294901760
        %7367 = vmatpush1.msra.mxu0 %v7366
        %7368 = vmatprep.subr.mxu0 0.0
        %v7369 = vand.u32 %v6970, 4294901760
        %v7370 = vsub.f32 %v6970, %v7369
        %v7371 = vand.u32 %v7370, 4294901760
        %7372 = vmatpush1.msra.mxu0 %v7371
        %7373 = vmatprep.subr.mxu0 0.0
        %v7374 = vand.u32 %v6971, 4294901760
        %v7375 = vsub.f32 %v6971, %v7374
        %v7376 = vand.u32 %v7375, 4294901760
        %7377 = vmatpush1.msra.mxu0 %v7376
        %7378 = vmatprep.subr.mxu0 0.0
        %v7379 = vand.u32 %v6972, 4294901760
        %v7380 = vsub.f32 %v6972, %v7379
        %v7381 = vand.u32 %v7380, 4294901760
        %7382 = vmatpush1.msra.mxu0 %v7381
        %7383 = vmatprep.subr.mxu0 0.0
        %v7384 = vand.u32 %v6973, 4294901760
        %v7385 = vsub.f32 %v6973, %v7384
        %v7386 = vand.u32 %v7385, 4294901760
        %7387 = vmatpush1.msra.mxu0 %v7386
        %7388 = vmatprep.subr.mxu0 0.0
        %7389 = vmatpush1.msra.mxu0 0.0
        %7390 = vmatprep.subr.mxu0 0.0
        %7391 = vmatpush1.msra.mxu0 0.0
        %7392 = vmatprep.subr.mxu0 0.0
        %7393 = vmatpush1.msra.mxu0 0.0
        %7394 = vmatprep.subr.mxu0 0.0
        %7395 = vmatpush1.msra.mxu0 0.0
        %7396 = vmatprep.subr.mxu0 0.0
        %7397 = vmatpush1.msra.mxu0 0.0
        %7398 = vmatprep.subr.mxu0 0.0
        %7399 = vmatpush1.msra.mxu0 0.0
        %7400 = vmatprep.subr.mxu0 0.0
        %7401 = vmatpush1.msra.mxu0 0.0
        %7402 = vmatprep.subr.mxu0 0.0
        %7403 = vmatpush1.msra.mxu0 0.0
        %7404 = vmatprep.subr.mxu0 0.0
        %7405 = vmatpush1.msra.mxu0 0.0
        %7406 = vmatprep.subr.mxu0 0.0
        %7407 = vmatpush1.msra.mxu0 0.0
        %7408 = vmatprep.subr.mxu0 0.0
        %7409 = vmatpush1.msra.mxu0 0.0
        %7410 = vmatprep.subr.mxu0 0.0
        %7411 = vmatpush1.msra.mxu0 0.0
        %7412 = vmatprep.subr.mxu0 0.0
        %7413 = vmatpush1.msra.mxu0 0.0
        %7414 = vmatprep.subr.mxu0 0.0
        %7415 = vmatpush1.msra.mxu0 0.0
        %7416 = vmatprep.subr.mxu0 0.0
        %7417 = vmatpush1.msra.mxu0 0.0
        %7418 = vmatprep.subr.mxu0 0.0
        %7419 = vmatpush1.msra.mxu0 0.0
        %7420 = vmatprep.subr.mxu0 0.0
        %7421 = vmatpush1.msra.mxu0 0.0
        %7422 = vmatprep.subr.mxu0 0.0
        %7423 = vmatpush1.msra.mxu0 0.0
        %7424 = vmatprep.subr.mxu0 0.0
        %7425 = vmatpush1.msra.mxu0 0.0
        %7426 = vmatprep.subr.mxu0 0.0
        %7427 = vmatpush1.msra.mxu0 0.0
        %7428 = vmatprep.subr.mxu0 0.0
        %7429 = vmatpush1.msra.mxu0 0.0
        %7430 = vmatprep.subr.mxu0 0.0
        %7431 = vmatpush1.msra.mxu0 0.0
        %7432 = vmatprep.subr.mxu0 0.0
        %7433 = vmatpush1.msra.mxu0 0.0
        %7434 = vmatprep.subr.mxu0 0.0
        %7435 = vmatpush1.msra.mxu0 0.0
        %7436 = vmatprep.mubr.f32.mxu0 0.0
        %v7437 = vand.u32 %v6983, 4294901760
        %7438 = vmatmul.mubr.f32.gmra.mrb[0].mxu0 %v7437
        %v7439 = vpop.f32.mrb[0].mxu0
        %v7440 = vadd.f32 %v7345, %v7439
        %v7441 = vpop.f32.mrb[0].mxu0
        %7442 = vdwg.mxu0
        %7443 = vmatprep.subr.mxu0 0.0
        %v7444 = vand.u32 %v6966, 4294901760
        %7445 = vmatpush1.msra.mxu0 %v7444
        %7446 = vmatprep.subr.mxu0 0.0
        %v7447 = vand.u32 %v6967, 4294901760
        %7448 = vmatpush1.msra.mxu0 %v7447
        %7449 = vmatprep.subr.mxu0 0.0
        %v7450 = vand.u32 %v6968, 4294901760
        %7451 = vmatpush1.msra.mxu0 %v7450
        %7452 = vmatprep.subr.mxu0 0.0
        %v7453 = vand.u32 %v6969, 4294901760
        %7454 = vmatpush1.msra.mxu0 %v7453
        %7455 = vmatprep.subr.mxu0 0.0
        %v7456 = vand.u32 %v6970, 4294901760
        %7457 = vmatpush1.msra.mxu0 %v7456
        %7458 = vmatprep.subr.mxu0 0.0
        %v7459 = vand.u32 %v6971, 4294901760
        %7460 = vmatpush1.msra.mxu0 %v7459
        %7461 = vmatprep.subr.mxu0 0.0
        %v7462 = vand.u32 %v6972, 4294901760
        %7463 = vmatpush1.msra.mxu0 %v7462
        %7464 = vmatprep.subr.mxu0 0.0
        %v7465 = vand.u32 %v6973, 4294901760
        %7466 = vmatpush1.msra.mxu0 %v7465
        %7467 = vmatprep.subr.mxu0 0.0
        %7468 = vmatpush1.msra.mxu0 0.0
        %7469 = vmatprep.subr.mxu0 0.0
        %7470 = vmatpush1.msra.mxu0 0.0
        %7471 = vmatprep.subr.mxu0 0.0
        %7472 = vmatpush1.msra.mxu0 0.0
        %7473 = vmatprep.subr.mxu0 0.0
        %7474 = vmatpush1.msra.mxu0 0.0
        %7475 = vmatprep.subr.mxu0 0.0
        %7476 = vmatpush1.msra.mxu0 0.0
        %7477 = vmatprep.subr.mxu0 0.0
        %7478 = vmatpush1.msra.mxu0 0.0
        %7479 = vmatprep.subr.mxu0 0.0
        %7480 = vmatpush1.msra.mxu0 0.0
        %7481 = vmatprep.subr.mxu0 0.0
        %7482 = vmatpush1.msra.mxu0 0.0
        %7483 = vmatprep.subr.mxu0 0.0
        %7484 = vmatpush1.msra.mxu0 0.0
        %7485 = vmatprep.subr.mxu0 0.0
        %7486 = vmatpush1.msra.mxu0 0.0
        %7487 = vmatprep.subr.mxu0 0.0
        %7488 = vmatpush1.msra.mxu0 0.0
        %7489 = vmatprep.subr.mxu0 0.0
        %7490 = vmatpush1.msra.mxu0 0.0
        %7491 = vmatprep.subr.mxu0 0.0
        %7492 = vmatpush1.msra.mxu0 0.0
        %7493 = vmatprep.subr.mxu0 0.0
        %7494 = vmatpush1.msra.mxu0 0.0
        %7495 = vmatprep.subr.mxu0 0.0
        %7496 = vmatpush1.msra.mxu0 0.0
        %7497 = vmatprep.subr.mxu0 0.0
        %7498 = vmatpush1.msra.mxu0 0.0
        %7499 = vmatprep.subr.mxu0 0.0
        %7500 = vmatpush1.msra.mxu0 0.0
        %7501 = vmatprep.subr.mxu0 0.0
        %7502 = vmatpush1.msra.mxu0 0.0
        %7503 = vmatprep.subr.mxu0 0.0
        %7504 = vmatpush1.msra.mxu0 0.0
        %7505 = vmatprep.subr.mxu0 0.0
        %7506 = vmatpush1.msra.mxu0 0.0
        %7507 = vmatprep.subr.mxu0 0.0
        %7508 = vmatpush1.msra.mxu0 0.0
        %7509 = vmatprep.subr.mxu0 0.0
        %7510 = vmatpush1.msra.mxu0 0.0
        %7511 = vmatprep.subr.mxu0 0.0
        %7512 = vmatpush1.msra.mxu0 0.0
        %7513 = vmatprep.subr.mxu0 0.0
        %7514 = vmatpush1.msra.mxu0 0.0
        %7515 = vmatprep.mubr.f32.mxu0 0.0
        %v7516 = vand.u32 %v6983, 4294901760
        %7517 = vmatmul.mubr.f32.gmra.mrb[0].mxu0 %v7516
        %v7518 = vpop.f32.mrb[0].mxu0
        %v7519 = vadd.f32 %v7440, %v7518
        %v7520 = vpop.f32.mrb[0].mxu0
        %7521 = vdwg.mxu0
        %v7522 = vadd.f32 %v7519, %v6465
        %v7523 = vld [vmem:[%s11] sm:$0x1]
        %v7524 = vld [vmem:[%s12] sm:$0x1]
        %v7525 = vsel %vm468, %v7522, 0.0
        %7526 = vadd.xlane.f32.xlu0 %v7525
        %v7527 = vpop.xlane.xlu0 %7526
        %v7528 = vmul.f32 %v7527, %v6441
        %v7529 = vsub.f32 %v7522, %v7528
        %v7530 = vmul.f32 %v7529, %v7529
        %v7531 = vsel %vm468, %v7530, 0.0
        %7532 = vadd.xlane.f32.xlu0 %v7531
        %v7533 = vpop.xlane.xlu0 %7532
        %v7534 = vmul.f32 %v7533, %v6441
        %v7535 = vadd.f32 %v7534, 1e-05
        %v7536 = vrsqrt.pop %v7535
        %v7537 = vmul.f32 %v7529, %v7536
        %v7539 = vlaneseq
        %v7540 = vshrl.u32 %v7539, 7
        %v7541 = vsub.s32 0, %v7540
        %v7542 = vrot.slane %v7523, %v7541
        %v7544 = vmul.f32 %v7537, %v7542
        %v7546 = vlaneseq
        %v7547 = vshrl.u32 %v7546, 7
        %v7548 = vsub.s32 0, %v7547
        %v7549 = vrot.slane %v7524, %v7548
        %v7551 = vadd.f32 %v7544, %v7549
        %7552 = vst.msk [vmem:[%s455] sm:$0xff] %vm468, %v7551
        %s7553 = sand.u32 %s316, 1
        %s7554 = scalar_lea.sflag [#allocation4], %s7553
        %s7555 = sand.u32 %s316, 1
        %s7556 = smul.addr %s7555, 8
        %s7557 = scalar_lea.vmem [#allocation5], %s7556
        // Predicated region
        $region77: #{tpu_custom_call.1} parent=71 // pred_check
          %p7558 = pneg %p326
        $region78: #{tpu_custom_call.1} parent=71 // pred_check_branch
          %7560 = sbr.rel (%p7558) target = $region80
        $region79: #{tpu_custom_call.1} parent=71 // pred_region
          %s7562 = ssub.s32 128, 128
          %7563 = vsyncadd %s7554, %s7562
          %s7564 = smul.addr %s30, 128
          %s7565 = scalar_lea.hbm %s13, %s7564
          %s7567 = sshll.u32 %s7557, 4
          %s7568 = int_to_ptr.vmem [resolvable:$true] %s7567
          %7570 = dma.vmem_to_hbm [thread:$0]  %s7568, 128, %s7565, %s7554
        $region80: #{tpu_custom_call.1} parent=71 // pred_fallthru
          _
      $region72: #{tpu_custom_call.1} parent=5 // pred_fallthru
        _
      %p7571 = scmp.le.s32.totalorder 2, %s25
      // Predicated region
      $region81: #{tpu_custom_call.1} parent=5 // pred_check
        %p7572 = pneg %p7571
      $region82: #{tpu_custom_call.1} parent=5 // pred_check_branch
        %7574 = sbr.rel (%p7572) target = $region84
      $region83: #{tpu_custom_call.1} parent=5 // pred_region
        %s7575 = ssub.s32 %s25, 2
        // Predicated region
        $region85: #{tpu_custom_call.1} parent=83 // pred_check
          %p7576 = pneg %p332
        $region86: #{tpu_custom_call.1} parent=83 // pred_check_branch
          %7578 = sbr.rel (%p7576) target = $region88
        $region87: #{tpu_custom_call.1} parent=83 // pred_region
          %s7579 = sand.u32 %s317, 1
          %s7580 = scalar_lea.sflag [#allocation4], %s7579
          %s7581 = sand.u32 %s317, 1
          %s7582 = smul.addr %s7581, 8
          %s7583 = scalar_lea.vmem [#allocation5], %s7582
          %7584 = dma.done %s7580, 128
        $region88: #{tpu_custom_call.1} parent=83 // pred_fallthru
          _
      $region84: #{tpu_custom_call.1} parent=5 // pred_fallthru
        _
    $region6: #{tpu_custom_call.1} parent=1 // loop_footer
      %s29 = sadd.s32 1, %s25
    $region7: #{tpu_custom_call.1} parent=1 // loop_footer_branch
      %24 = sbr.rel target = $region3
    $region8: #{tpu_custom_call.1} parent=1 // loop_exit
      _
    %7585 = vsyncpa [#allocation3], 1
    %s7586 = scalar_lea.sflag [#allocation3], 1
    %7587 = vsyncpa %s7586, 1
    %7588 = vsyncpa [#allocation4], 1
    %s7589 = scalar_lea.sflag [#allocation4], 1
    %7590 = vsyncpa %s7589, 1

</llo_original>
